<compile_context>
chip_gen: v7x
topology: tpu7x:2x2x1
jax: 0.10.0
libtpu: 0.0.40
codegen_flags: <defaults>
</compile_context>

<pallas_src>
import functools

import jax
import jax.numpy as jnp
from jax.experimental import pallas as pl
from jax.experimental.pallas import tpu as pltpu


# ---------------------------------------------------------------------------
# Fused kernel: BiLSTM + dual attention per tweet, running sum over tweets,
# mean + classifier on the last grid step.
# ---------------------------------------------------------------------------
def dan_kernel(
    emb_ref, img_ref,                        # per-tweet inputs
    wih_ref, whh_ref, blstm_ref,             # packed BiLSTM weights (both dirs)
    wee_ref, w512_ref, wuh_ref, wvh_ref,     # packed attention weights
    wc1_ref, bc1_ref, wc2_ref, bc2_ref,      # classifier
    out_ref,                                 # (1, 2) logits
    # scratch
    xf_ref, xr_ref, uf_ref, ur_ref, tu_ref, tv_ref, pv_ref, accu_ref, accv_ref,
    *, num_tweets,
):
    f32 = jnp.float32
    n = pl.program_id(0)

    T, H = uf_ref.shape            # fix_length, LSTM hidden (= E // 2)
    E = 2 * H
    NV = tv_ref.shape[0]           # 49 image regions

    @pl.when(n == 0)
    def _():
        accu_ref[...] = jnp.zeros_like(accu_ref)
        accv_ref[...] = jnp.zeros_like(accv_ref)

    emb = emb_ref[0]               # (T, E)
    v = img_ref[0]                 # (49, 512)

    # ----------------------------- BiLSTM ----------------------------------
    # Batched input projections for both directions (one MXU pass each),
    # biases (b_ih + b_hh) folded in.
    xf_ref[...] = jnp.dot(emb, wih_ref[0], preferred_element_type=f32) + blstm_ref[0]
    xr_ref[...] = jnp.dot(emb, wih_ref[1], preferred_element_type=f32) + blstm_ref[1]
    whh_f = whh_ref[0]             # (H, 4H)
    whh_r = whh_ref[1]

    def gate_acts(pre, h, whh):
        g = pre + jnp.dot(h, whh, preferred_element_type=f32)      # (1, 4H)
        i = jax.nn.sigmoid(g[:, 0:H])
        f = jax.nn.sigmoid(g[:, H:2 * H])
        gg = jnp.tanh(g[:, 2 * H:3 * H])
        o = jax.nn.sigmoid(g[:, 3 * H:4 * H])
        return i, f, gg, o

    def lstm_step(t, carry):
        hf, cf, hr, cr = carry
        # forward direction at position t
        i, f, g, o = gate_acts(xf_ref[pl.ds(t, 1), :], hf, whh_f)
        cf = f * cf + i * g
        hf = o * jnp.tanh(cf)
        uf_ref[pl.ds(t, 1), :] = hf
        # backward direction at position T - 1 - t
        tr = T - 1 - t
        i, f, g, o = gate_acts(xr_ref[pl.ds(tr, 1), :], hr, whh_r)
        cr = f * cr + i * g
        hr = o * jnp.tanh(cr)
        ur_ref[pl.ds(tr, 1), :] = hr
        return hf, cf, hr, cr

    zh = jnp.zeros((1, H), f32)
    jax.lax.fori_loop(0, T, lstm_step, (zh, zh, zh, zh), unroll=True)

    u = jnp.concatenate([uf_ref[...], ur_ref[...]], axis=-1)       # (T, E)

    # ------------------------ dual attention setup --------------------------
    p_t = w512_ref[0]              # (512, E)   P (pre-transposed)
    wv_t = w512_ref[1]             # (512, E)   W_v
    wu_t = wee_ref[0]              # (E, E)     W_u
    wum_t = wee_ref[1]             # (E, E)     W_um
    wvm_t = wee_ref[2]             # (E, E)     W_vm

    u0 = jnp.mean(u, axis=0, keepdims=True)                        # (1, E)
    v0 = jnp.tanh(jnp.dot(jnp.mean(v, axis=0, keepdims=True), p_t,
                          preferred_element_type=f32))             # (1, E)
    m0 = u0 * v0

    # Loop-invariant projections, batched on the MXU (hoisted out of loops).
    tu_ref[...] = jnp.tanh(jnp.dot(u, wu_t, preferred_element_type=f32))   # (T, E)
    tv_ref[...] = jnp.tanh(jnp.dot(v, wv_t, preferred_element_type=f32))   # (49, E)
    pv_ref[...] = jnp.dot(v, p_t, preferred_element_type=f32)              # (49, E)
    pv = pv_ref[...]

    wuh_t = wuh_ref[...]           # (E, T)
    wvh_t = wvh_ref[...]           # (E, 49)

    def softmax_row(logits):
        mx = jnp.max(logits, axis=-1, keepdims=True)
        e = jnp.exp(logits - mx)
        return e / jnp.sum(e, axis=-1, keepdims=True)

    # -------------------------- text attention ------------------------------
    def text_step(t, m_u):
        h = tu_ref[pl.ds(t, 1), :] * jnp.tanh(
            jnp.dot(m_u, wum_t, preferred_element_type=f32))
        a = softmax_row(jnp.dot(h, wuh_t, preferred_element_type=f32))      # (1, T)
        return m_u + jnp.dot(a, u, preferred_element_type=f32)

    m_u = jax.lax.fori_loop(0, T, text_step, m0, unroll=True)

    # -------------------------- image attention -----------------------------
    def img_step(k, m_v):
        h = tv_ref[pl.ds(k, 1), :] * jnp.tanh(
            jnp.dot(m_v, wvm_t, preferred_element_type=f32))
        a = softmax_row(jnp.dot(h, wvh_t, preferred_element_type=f32))      # (1, 49)
        return m_v + jnp.tanh(jnp.dot(a, pv, preferred_element_type=f32))

    m_v = jax.lax.fori_loop(0, NV, img_step, m0)

    # Running sum over tweets (mean taken on the last grid step).
    accu_ref[...] += m_u
    accv_ref[...] += m_v

    # ------------------- mean over tweets + classifier ----------------------
    @pl.when(n == num_tweets - 1)
    def _():
        inv = 1.0 / num_tweets
        mu = accu_ref[...] * inv
        mv = accv_ref[...] * inv
        # classifier on concat([mu, mv]) via split weights (no lane concat)
        hid = (jnp.dot(mu, wc1_ref[0:E, :], preferred_element_type=f32)
               + jnp.dot(mv, wc1_ref[E:2 * E, :], preferred_element_type=f32)
               + bc1_ref[...])
        hid = jnp.maximum(hid, 0.0)
        out_ref[...] = (jnp.dot(hid, wc2_ref[...], preferred_element_type=f32)
                        + bc2_ref[...])


# ---------------------------------------------------------------------------
# Wrapper
# ---------------------------------------------------------------------------
def dan_forward(token_ids, images, params):
    """token_ids: (N, T) int32, images: (N, 49, 512) f32 -> (1, 2) logits."""
    # Embedding gather (host-side JAX glue; padding row of the table is zero).
    emb = jnp.take(params["embedding"], token_ids, axis=0).astype(jnp.float32)
    N, T, E = emb.shape
    H = E // 2
    NV = images.shape[1]

    operands = [
        emb, images,
        params["wih_t"], params["whh_t"], params["blstm"],
        params["wee"], params["w512"], params["wuh_t"], params["wvh_t"],
        params["wc1_t"], params["bc1"], params["wc2_t"], params["bc2"],
    ]

    def resident(shape):            # full-array block, constant index map
        nd = len(shape)
        return pl.BlockSpec(tuple(shape), lambda n, _nd=nd: (0,) * _nd)

    in_specs = [
        pl.BlockSpec((1, T, E), lambda n: (n, 0, 0)),      # one tweet embedding
        pl.BlockSpec((1, NV, 512), lambda n: (n, 0, 0)),   # one tweet image map
    ] + [resident(op.shape) for op in operands[2:]]

    kernel = functools.partial(dan_kernel, num_tweets=N)

    return pl.pallas_call(
        kernel,
        out_shape=jax.ShapeDtypeStruct((1, 2), jnp.float32),
        grid=(N,),
        in_specs=in_specs,
        out_specs=pl.BlockSpec((1, 2), lambda n: (0, 0)),
        scratch_shapes=[
            pltpu.VMEM((T, 4 * H), jnp.float32),   # xf : fwd LSTM input proj
            pltpu.VMEM((T, 4 * H), jnp.float32),   # xr : bwd LSTM input proj
            pltpu.VMEM((T, H), jnp.float32),       # uf : fwd hidden states
            pltpu.VMEM((T, H), jnp.float32),       # ur : bwd hidden states
            pltpu.VMEM((T, E), jnp.float32),       # tu : tanh(u @ W_u^T)
            pltpu.VMEM((NV, E), jnp.float32),      # tv : tanh(v @ W_v^T)
            pltpu.VMEM((NV, E), jnp.float32),      # pv : v @ P^T
            pltpu.VMEM((1, E), jnp.float32),       # sum of m_u over tweets
            pltpu.VMEM((1, E), jnp.float32),       # sum of m_v over tweets
        ],
        compiler_params=pltpu.CompilerParams(
            dimension_semantics=("arbitrary",)),
    )(*operands)


# ---------------------------------------------------------------------------
# Parameter init (packed / pre-transposed layout)
# ---------------------------------------------------------------------------
def init_params(key, vocab_size, embedding_size, fix_length):
    E = embedding_size
    H = E // 2
    ks = jax.random.split(key, 16)

    def uni(k, shape, fan_in):
        bound = 1.0 / jnp.sqrt(jnp.float32(fan_in))
        return jax.random.uniform(k, shape, jnp.float32, -bound, bound)

    pad_idx = vocab_size + 1
    emb = jax.random.normal(ks[0], (vocab_size + 2, E), jnp.float32) * 0.5
    emb = emb.at[pad_idx].set(0.0)                        # padding_idx row = 0

    # BiLSTM: direction 0 = forward, 1 = backward; weights as (in, 4H).
    wih_t = uni(ks[1], (2, E, 4 * H), E)
    whh_t = uni(ks[2], (2, H, 4 * H), H)
    blstm = uni(ks[3], (2, 1, 4 * H), H)                  # b_ih + b_hh folded

    # Attention weights, pre-transposed to (in, out).
    wee = jnp.stack([uni(ks[4], (E, E), E),               # W_u^T
                     uni(ks[5], (E, E), E),               # W_um^T
                     uni(ks[6], (E, E), E)])              # W_vm^T
    w512 = jnp.stack([uni(ks[7], (512, E), 512),          # P^T
                      uni(ks[8], (512, E), 512)])         # W_v^T
    wuh_t = uni(ks[9], (E, fix_length), E)                # W_uh^T
    wvh_t = uni(ks[10], (E, 49), E)                       # W_vh^T

    # Classifier.
    wc1_t = uni(ks[11], (2 * E, E), 2 * E)
    bc1 = uni(ks[12], (1, E), 2 * E)
    wc2_t = uni(ks[13], (E, 2), E)
    bc2 = uni(ks[14], (1, 2), E)

    return dict(embedding=emb, wih_t=wih_t, whh_t=whh_t, blstm=blstm,
                wee=wee, w512=w512, wuh_t=wuh_t, wvh_t=wvh_t,
                wc1_t=wc1_t, bc1=bc1, wc2_t=wc2_t, bc2=bc2)


# ---------------------------------------------------------------------------
# Host-side tokenization (mirrors DAN.embedding_lookup — Python dict lookup)
# ---------------------------------------------------------------------------
def embedding_lookup_ids(tweet_words, word2id, fix_length, padding_idx):
    ids = []
    for i, word in enumerate(tweet_words):
        if i == fix_length:
            break
        ids.append(word2id.get(word, padding_idx - 1))
    ids += [padding_idx] * (fix_length - len(ids))
    return ids


# ---------------------------------------------------------------------------
# Pure-JAX reference matching the PyTorch forward
# ---------------------------------------------------------------------------
def dan_reference(token_ids, images, params):
    emb_table = params["embedding"]
    E = emb_table.shape[1]
    H = E // 2
    wih_t, whh_t, blstm = params["wih_t"], params["whh_t"], params["blstm"]
    wu_t, wum_t, wvm_t = params["wee"][0], params["wee"][1], params["wee"][2]
    p_t, wv_t = params["w512"][0], params["w512"][1]
    wuh_t, wvh_t = params["wuh_t"], params["wvh_t"]

    def lstm_dir(x, d):
        def step(carry, x_t):
            h, c = carry
            g = x_t @ wih_t[d] + blstm[d, 0] + h @ whh_t[d]
            i = jax.nn.sigmoid(g[0:H])
            f = jax.nn.sigmoid(g[H:2 * H])
            gg = jnp.tanh(g[2 * H:3 * H])
            o = jax.nn.sigmoid(g[3 * H:4 * H])
            c = f * c + i * gg
            h = o * jnp.tanh(c)
            return (h, c), h
        _, hs = jax.lax.scan(step, (jnp.zeros(H), jnp.zeros(H)), x)
        return hs

    reps = []
    for n in range(token_ids.shape[0]):
        x = emb_table[token_ids[n]]                          # (T, E)
        hf = lstm_dir(x, 0)
        hr = lstm_dir(x[::-1], 1)[::-1]
        u = jnp.concatenate([hf, hr], axis=-1)               # (T, E)
        v = images[n]                                        # (49, 512)
        u0 = jnp.mean(u, axis=0, keepdims=True)
        v0 = jnp.tanh(jnp.mean(v, axis=0, keepdims=True) @ p_t)
        m0 = u0 * v0
        m_u = m0
        for t in range(u.shape[0]):
            h = jnp.tanh(u[t] @ wu_t) * jnp.tanh(m_u @ wum_t)
            a = jax.nn.softmax(h @ wuh_t, axis=-1)
            m_u = m_u + a @ u
        m_v = m0
        for k in range(v.shape[0]):
            h = jnp.tanh(v[k] @ wv_t) * jnp.tanh(m_v @ wvm_t)
            a = jax.nn.softmax(h @ wvh_t, axis=-1)
            m_v = m_v + jnp.tanh((a @ v) @ p_t)
        reps.append(jnp.concatenate([m_u, m_v], axis=-1))
    m = jnp.mean(jnp.concatenate(reps, axis=0), axis=0, keepdims=True)
    hid = jnp.maximum(m @ params["wc1_t"] + params["bc1"], 0.0)
    return hid @ params["wc2_t"] + params["bc2"]


if __name__ == "__main__":
    VOCAB_SIZE = 50
    EMB_SIZE = 64           # embedding_size (even -> BiLSTM hidden = 32)
    FIX_LENGTH = 8          # fix_length
    N_TWEETS = 3            # tweets per user (module caps at 100)
    PAD_IDX = VOCAB_SIZE + 1

    key = jax.random.PRNGKey(0)
    k_params, k_img = jax.random.split(key)

    params = init_params(k_params, VOCAB_SIZE, EMB_SIZE, FIX_LENGTH)

    # word2id + tweets, processed on the host exactly like DAN.embedding_lookup.
    word2id = {f"w{i}": i for i in range(VOCAB_SIZE)}
    tweets = [
        ["w1", "w5", "w7", "unknown_word", "w3"],
        ["w10", "w2"],
        ["w4", "w4", "w9", "w8", "w12", "w13", "w14", "w15", "w16", "w17"],
    ][:100]
    token_ids = jnp.array(
        [embedding_lookup_ids(t, word2id, FIX_LENGTH, PAD_IDX) for t in tweets],
        dtype=jnp.int32)

    # One 7x7x512 feature map per tweet, already viewed as (49, 512).
    images = jax.random.normal(k_img, (N_TWEETS, 49, 512), jnp.float32)

    out = dan_forward(token_ids, images, params)
    out = jax.block_until_ready(out)

    ref = dan_reference(token_ids, images, params)
    assert out.shape == (1, 2)
    assert jnp.allclose(out, ref, atol=5e-3, rtol=5e-3), (out, ref)

    print("KERNEL_OK")
</pallas_src>

<mosaic_0001>
module attributes {stable_mosaic.version = 11 : i64} {
  func.func @dan_kernel(%arg0: i32, %arg1: memref<1x8x64xf32, #tpu.memory_space<vmem>>, %arg2: memref<1x49x512xf32, #tpu.memory_space<vmem>>, %arg3: memref<2x64x128xf32, #tpu.memory_space<vmem>>, %arg4: memref<2x32x128xf32, #tpu.memory_space<vmem>>, %arg5: memref<2x1x128xf32, #tpu.memory_space<vmem>>, %arg6: memref<3x64x64xf32, #tpu.memory_space<vmem>>, %arg7: memref<2x512x64xf32, #tpu.memory_space<vmem>>, %arg8: memref<64x8xf32, #tpu.memory_space<vmem>>, %arg9: memref<64x49xf32, #tpu.memory_space<vmem>>, %arg10: memref<128x64xf32, #tpu.memory_space<vmem>>, %arg11: memref<1x64xf32, #tpu.memory_space<vmem>>, %arg12: memref<64x2xf32, #tpu.memory_space<vmem>>, %arg13: memref<1x2xf32, #tpu.memory_space<vmem>>, %arg14: memref<1x2xf32, #tpu.memory_space<vmem>>, %arg15: memref<8x128xf32, #tpu.memory_space<vmem>>, %arg16: memref<8x128xf32, #tpu.memory_space<vmem>>, %arg17: memref<8x32xf32, #tpu.memory_space<vmem>>, %arg18: memref<8x32xf32, #tpu.memory_space<vmem>>, %arg19: memref<8x64xf32, #tpu.memory_space<vmem>>, %arg20: memref<49x64xf32, #tpu.memory_space<vmem>>, %arg21: memref<49x64xf32, #tpu.memory_space<vmem>>, %arg22: memref<1x64xf32, #tpu.memory_space<vmem>>, %arg23: memref<1x64xf32, #tpu.memory_space<vmem>>) attributes {dimension_semantics = [#tpu.dimension_semantics<arbitrary>], iteration_bounds = array<i64: 3>, scalar_prefetch = 0 : i64, scratch_operands = 9 : i64, tpu.core_type = #tpu.core_type<tc>, window_params = [{transform_indices = @transform_0, window_bounds = array<i64: 1, 8, 64>}, {transform_indices = @transform_1, window_bounds = array<i64: 1, 49, 512>}, {pipeline_mode = #tpu.pipeline_mode<synchronous>, transform_indices = @transform_2, window_bounds = array<i64: 2, 64, 128>}, {pipeline_mode = #tpu.pipeline_mode<synchronous>, transform_indices = @transform_3, window_bounds = array<i64: 2, 32, 128>}, {pipeline_mode = #tpu.pipeline_mode<synchronous>, transform_indices = @transform_4, window_bounds = array<i64: 2, 1, 128>}, {pipeline_mode = #tpu.pipeline_mode<synchronous>, transform_indices = @transform_5, window_bounds = array<i64: 3, 64, 64>}, {pipeline_mode = #tpu.pipeline_mode<synchronous>, transform_indices = @transform_6, window_bounds = array<i64: 2, 512, 64>}, {pipeline_mode = #tpu.pipeline_mode<synchronous>, transform_indices = @transform_7, window_bounds = array<i64: 64, 8>}, {pipeline_mode = #tpu.pipeline_mode<synchronous>, transform_indices = @transform_8, window_bounds = array<i64: 64, 49>}, {pipeline_mode = #tpu.pipeline_mode<synchronous>, transform_indices = @transform_9, window_bounds = array<i64: 128, 64>}, {pipeline_mode = #tpu.pipeline_mode<synchronous>, transform_indices = @transform_10, window_bounds = array<i64: 1, 64>}, {pipeline_mode = #tpu.pipeline_mode<synchronous>, transform_indices = @transform_11, window_bounds = array<i64: 64, 2>}, {pipeline_mode = #tpu.pipeline_mode<synchronous>, transform_indices = @transform_12, window_bounds = array<i64: 1, 2>}, {pipeline_mode = #tpu.pipeline_mode<synchronous>, transform_indices = @transform_13, window_bounds = array<i64: 1, 2>}]} {
    %c0_i32 = arith.constant 0 : i32
    %0 = arith.cmpi eq, %arg0, %c0_i32 : i32
    %1 = arith.extui %0 : i1 to i32
    %c0_i32_0 = arith.constant 0 : i32
    %2 = arith.cmpi ne, %1, %c0_i32_0 : i32
    scf.if %2 {
      %cst_242 = arith.constant 0.000000e+00 : f32
      %714 = vector.broadcast %cst_242 : f32 to vector<1x64xf32>
      %c0_243 = arith.constant 0 : index
      %c0_244 = arith.constant 0 : index
      %715 = vector.load %arg22[%c0_243, %c0_244] : memref<1x64xf32, #tpu.memory_space<vmem>>, vector<1x64xf32>
      tpu.vector_store %arg22[%c0_243, %c0_244], %714 {strides = array<i32>} : memref<1x64xf32, #tpu.memory_space<vmem>>, vector<1x64xf32>,
      %cst_245 = arith.constant 0.000000e+00 : f32
      %716 = vector.broadcast %cst_245 : f32 to vector<1x64xf32>
      %c0_246 = arith.constant 0 : index
      %c0_247 = arith.constant 0 : index
      %717 = vector.load %arg23[%c0_246, %c0_247] : memref<1x64xf32, #tpu.memory_space<vmem>>, vector<1x64xf32>
      tpu.vector_store %arg23[%c0_246, %c0_247], %716 {strides = array<i32>} : memref<1x64xf32, #tpu.memory_space<vmem>>, vector<1x64xf32>,
    } else {
    }
    %c0 = arith.constant 0 : index
    %c0_1 = arith.constant 0 : index
    %c0_2 = arith.constant 0 : index
    %3 = vector.load %arg1[%c0, %c0_1, %c0_2] : memref<1x8x64xf32, #tpu.memory_space<vmem>>, vector<1x8x64xf32>
    %4 = vector.shape_cast %3 : vector<1x8x64xf32> to vector<8x64xf32>
    %c0_3 = arith.constant 0 : index
    %c0_4 = arith.constant 0 : index
    %c0_5 = arith.constant 0 : index
    %5 = vector.load %arg2[%c0_3, %c0_4, %c0_5] : memref<1x49x512xf32, #tpu.memory_space<vmem>>, vector<1x49x512xf32>
    %6 = vector.shape_cast %5 : vector<1x49x512xf32> to vector<49x512xf32>
    %c0_6 = arith.constant 0 : index
    %c0_7 = arith.constant 0 : index
    %c0_8 = arith.constant 0 : index
    %7 = vector.load %arg3[%c0_6, %c0_7, %c0_8] : memref<2x64x128xf32, #tpu.memory_space<vmem>>, vector<1x64x128xf32>
    %8 = vector.shape_cast %7 : vector<1x64x128xf32> to vector<64x128xf32>
    %cst = arith.constant dense<0.000000e+00> : vector<8x128xf32>
    %9 = tpu.matmul %4, %8, %cst {dimension_numbers = #tpu.dot_dimension_numbers<[1], [0], [0], [1], [0, 0, 1, 1], [], []>} : vector<8x64xf32>, vector<64x128xf32>, vector<8x128xf32> -> vector<8x128xf32>
    %c0_9 = arith.constant 0 : index
    %c0_10 = arith.constant 0 : index
    %c0_11 = arith.constant 0 : index
    %10 = vector.load %arg5[%c0_9, %c0_10, %c0_11] : memref<2x1x128xf32, #tpu.memory_space<vmem>>, vector<1x1x128xf32>
    %11 = vector.shape_cast %10 : vector<1x1x128xf32> to vector<1x128xf32>
    %12 = vector.broadcast %11 : vector<1x128xf32> to vector<8x128xf32>
    %13 = arith.addf %9, %12 : vector<8x128xf32>
    %c0_12 = arith.constant 0 : index
    %c0_13 = arith.constant 0 : index
    %14 = vector.load %arg15[%c0_12, %c0_13] : memref<8x128xf32, #tpu.memory_space<vmem>>, vector<8x128xf32>
    tpu.vector_store %arg15[%c0_12, %c0_13], %13 {strides = array<i32>} : memref<8x128xf32, #tpu.memory_space<vmem>>, vector<8x128xf32>,
    %c1 = arith.constant 1 : index
    %c0_14 = arith.constant 0 : index
    %c0_15 = arith.constant 0 : index
    %15 = vector.load %arg3[%c1, %c0_14, %c0_15] : memref<2x64x128xf32, #tpu.memory_space<vmem>>, vector<1x64x128xf32>
    %16 = vector.shape_cast %15 : vector<1x64x128xf32> to vector<64x128xf32>
    %cst_16 = arith.constant dense<0.000000e+00> : vector<8x128xf32>
    %17 = tpu.matmul %4, %16, %cst_16 {dimension_numbers = #tpu.dot_dimension_numbers<[1], [0], [0], [1], [0, 0, 1, 1], [], []>} : vector<8x64xf32>, vector<64x128xf32>, vector<8x128xf32> -> vector<8x128xf32>
    %c1_17 = arith.constant 1 : index
    %c0_18 = arith.constant 0 : index
    %c0_19 = arith.constant 0 : index
    %18 = vector.load %arg5[%c1_17, %c0_18, %c0_19] : memref<2x1x128xf32, #tpu.memory_space<vmem>>, vector<1x1x128xf32>
    %19 = vector.shape_cast %18 : vector<1x1x128xf32> to vector<1x128xf32>
    %20 = vector.broadcast %19 : vector<1x128xf32> to vector<8x128xf32>
    %21 = arith.addf %17, %20 : vector<8x128xf32>
    %c0_20 = arith.constant 0 : index
    %c0_21 = arith.constant 0 : index
    %22 = vector.load %arg16[%c0_20, %c0_21] : memref<8x128xf32, #tpu.memory_space<vmem>>, vector<8x128xf32>
    tpu.vector_store %arg16[%c0_20, %c0_21], %21 {strides = array<i32>} : memref<8x128xf32, #tpu.memory_space<vmem>>, vector<8x128xf32>,
    %c0_22 = arith.constant 0 : index
    %c0_23 = arith.constant 0 : index
    %c0_24 = arith.constant 0 : index
    %23 = vector.load %arg4[%c0_22, %c0_23, %c0_24] : memref<2x32x128xf32, #tpu.memory_space<vmem>>, vector<1x32x128xf32>
    %24 = vector.shape_cast %23 : vector<1x32x128xf32> to vector<32x128xf32>
    %c1_25 = arith.constant 1 : index
    %c0_26 = arith.constant 0 : index
    %c0_27 = arith.constant 0 : index
    %25 = vector.load %arg4[%c1_25, %c0_26, %c0_27] : memref<2x32x128xf32, #tpu.memory_space<vmem>>, vector<1x32x128xf32>
    %26 = vector.shape_cast %25 : vector<1x32x128xf32> to vector<32x128xf32>
    %cst_28 = arith.constant 0.000000e+00 : f32
    %27 = vector.broadcast %cst_28 : f32 to vector<1x32xf32>
    %c0_i32_29 = arith.constant 0 : i32
    %28 = arith.index_cast %c0_i32_29 : i32 to index
    %c0_30 = arith.constant 0 : index
    %29 = vector.load %arg15[%28, %c0_30] : memref<8x128xf32, #tpu.memory_space<vmem>>, vector<1x128xf32>
    %cst_31 = arith.constant dense<0.000000e+00> : vector<1x128xf32>
    %30 = tpu.matmul %27, %24, %cst_31 {dimension_numbers = #tpu.dot_dimension_numbers<[1], [0], [0], [1], [0, 0, 1, 1], [], []>} : vector<1x32xf32>, vector<32x128xf32>, vector<1x128xf32> -> vector<1x128xf32>
    %31 = arith.addf %29, %30 : vector<1x128xf32>
    %32 = vector.extract_strided_slice %31 {offsets = [0, 0], sizes = [1, 32], strides = [1, 1]} : vector<1x128xf32> to vector<1x32xf32>
    %33 = arith.negf %32 : vector<1x32xf32>
    %34 = math.exp %33 : vector<1x32xf32>
    %cst_32 = arith.constant 1.000000e+00 : f32
    %35 = vector.broadcast %cst_32 : f32 to vector<1x32xf32>
    %36 = arith.addf %35, %34 : vector<1x32xf32>
    %37 = arith.divf %35, %36 : vector<1x32xf32>
    %38 = vector.extract_strided_slice %31 {offsets = [0, 32], sizes = [1, 32], strides = [1, 1]} : vector<1x128xf32> to vector<1x32xf32>
    %39 = arith.negf %38 : vector<1x32xf32>
    %40 = math.exp %39 : vector<1x32xf32>
    %cst_33 = arith.constant 1.000000e+00 : f32
    %41 = vector.broadcast %cst_33 : f32 to vector<1x32xf32>
    %42 = arith.addf %41, %40 : vector<1x32xf32>
    %43 = arith.divf %41, %42 : vector<1x32xf32>
    %44 = vector.extract_strided_slice %31 {offsets = [0, 64], sizes = [1, 32], strides = [1, 1]} : vector<1x128xf32> to vector<1x32xf32>
    %45 = math.tanh %44 : vector<1x32xf32>
    %46 = vector.extract_strided_slice %31 {offsets = [0, 96], sizes = [1, 32], strides = [1, 1]} : vector<1x128xf32> to vector<1x32xf32>
    %47 = arith.negf %46 : vector<1x32xf32>
    %48 = math.exp %47 : vector<1x32xf32>
    %cst_34 = arith.constant 1.000000e+00 : f32
    %49 = vector.broadcast %cst_34 : f32 to vector<1x32xf32>
    %50 = arith.addf %49, %48 : vector<1x32xf32>
    %51 = arith.divf %49, %50 : vector<1x32xf32>
    %52 = arith.mulf %43, %27 : vector<1x32xf32>
    %53 = arith.mulf %37, %45 : vector<1x32xf32>
    %54 = arith.addf %52, %53 : vector<1x32xf32>
    %55 = math.tanh %54 : vector<1x32xf32>
    %56 = arith.mulf %51, %55 : vector<1x32xf32>
    %57 = arith.index_cast %c0_i32_29 : i32 to index
    %c0_35 = arith.constant 0 : index
    %58 = vector.load %arg17[%57, %c0_35] : memref<8x32xf32, #tpu.memory_space<vmem>>, vector<1x32xf32>
    tpu.vector_store %arg17[%57, %c0_35], %56 {strides = array<i32>} : memref<8x32xf32, #tpu.memory_space<vmem>>, vector<1x32xf32>,
    %c7_i32 = arith.constant 7 : i32
    %59 = arith.subi %c7_i32, %c0_i32_29 : i32
    %60 = arith.index_cast %59 : i32 to index
    %c0_36 = arith.constant 0 : index
    %61 = vector.load %arg16[%60, %c0_36] : memref<8x128xf32, #tpu.memory_space<vmem>>, vector<1x128xf32>
    %cst_37 = arith.constant dense<0.000000e+00> : vector<1x128xf32>
    %62 = tpu.matmul %27, %26, %cst_37 {dimension_numbers = #tpu.dot_dimension_numbers<[1], [0], [0], [1], [0, 0, 1, 1], [], []>} : vector<1x32xf32>, vector<32x128xf32>, vector<1x128xf32> -> vector<1x128xf32>
    %63 = arith.addf %61, %62 : vector<1x128xf32>
    %64 = vector.extract_strided_slice %63 {offsets = [0, 0], sizes = [1, 32], strides = [1, 1]} : vector<1x128xf32> to vector<1x32xf32>
    %65 = arith.negf %64 : vector<1x32xf32>
    %66 = math.exp %65 : vector<1x32xf32>
    %cst_38 = arith.constant 1.000000e+00 : f32
    %67 = vector.broadcast %cst_38 : f32 to vector<1x32xf32>
    %68 = arith.addf %67, %66 : vector<1x32xf32>
    %69 = arith.divf %67, %68 : vector<1x32xf32>
    %70 = vector.extract_strided_slice %63 {offsets = [0, 32], sizes = [1, 32], strides = [1, 1]} : vector<1x128xf32> to vector<1x32xf32>
    %71 = arith.negf %70 : vector<1x32xf32>
    %72 = math.exp %71 : vector<1x32xf32>
    %cst_39 = arith.constant 1.000000e+00 : f32
    %73 = vector.broadcast %cst_39 : f32 to vector<1x32xf32>
    %74 = arith.addf %73, %72 : vector<1x32xf32>
    %75 = arith.divf %73, %74 : vector<1x32xf32>
    %76 = vector.extract_strided_slice %63 {offsets = [0, 64], sizes = [1, 32], strides = [1, 1]} : vector<1x128xf32> to vector<1x32xf32>
    %77 = math.tanh %76 : vector<1x32xf32>
    %78 = vector.extract_strided_slice %63 {offsets = [0, 96], sizes = [1, 32], strides = [1, 1]} : vector<1x128xf32> to vector<1x32xf32>
    %79 = arith.negf %78 : vector<1x32xf32>
    %80 = math.exp %79 : vector<1x32xf32>
    %cst_40 = arith.constant 1.000000e+00 : f32
    %81 = vector.broadcast %cst_40 : f32 to vector<1x32xf32>
    %82 = arith.addf %81, %80 : vector<1x32xf32>
    %83 = arith.divf %81, %82 : vector<1x32xf32>
    %84 = arith.mulf %75, %27 : vector<1x32xf32>
    %85 = arith.mulf %69, %77 : vector<1x32xf32>
    %86 = arith.addf %84, %85 : vector<1x32xf32>
    %87 = math.tanh %86 : vector<1x32xf32>
    %88 = arith.mulf %83, %87 : vector<1x32xf32>
    %89 = arith.index_cast %59 : i32 to index
    %c0_41 = arith.constant 0 : index
    %90 = vector.load %arg18[%89, %c0_41] : memref<8x32xf32, #tpu.memory_space<vmem>>, vector<1x32xf32>
    tpu.vector_store %arg18[%89, %c0_41], %88 {strides = array<i32>} : memref<8x32xf32, #tpu.memory_space<vmem>>, vector<1x32xf32>,
    %c1_i32 = arith.constant 1 : i32
    %91 = arith.index_cast %c1_i32 : i32 to index
    %c0_42 = arith.constant 0 : index
    %92 = vector.load %arg15[%91, %c0_42] : memref<8x128xf32, #tpu.memory_space<vmem>>, vector<1x128xf32>
    %cst_43 = arith.constant dense<0.000000e+00> : vector<1x128xf32>
    %93 = tpu.matmul %56, %24, %cst_43 {dimension_numbers = #tpu.dot_dimension_numbers<[1], [0], [0], [1], [0, 0, 1, 1], [], []>} : vector<1x32xf32>, vector<32x128xf32>, vector<1x128xf32> -> vector<1x128xf32>
    %94 = arith.addf %92, %93 : vector<1x128xf32>
    %95 = vector.extract_strided_slice %94 {offsets = [0, 0], sizes = [1, 32], strides = [1, 1]} : vector<1x128xf32> to vector<1x32xf32>
    %96 = arith.negf %95 : vector<1x32xf32>
    %97 = math.exp %96 : vector<1x32xf32>
    %cst_44 = arith.constant 1.000000e+00 : f32
    %98 = vector.broadcast %cst_44 : f32 to vector<1x32xf32>
    %99 = arith.addf %98, %97 : vector<1x32xf32>
    %100 = arith.divf %98, %99 : vector<1x32xf32>
    %101 = vector.extract_strided_slice %94 {offsets = [0, 32], sizes = [1, 32], strides = [1, 1]} : vector<1x128xf32> to vector<1x32xf32>
    %102 = arith.negf %101 : vector<1x32xf32>
    %103 = math.exp %102 : vector<1x32xf32>
    %cst_45 = arith.constant 1.000000e+00 : f32
    %104 = vector.broadcast %cst_45 : f32 to vector<1x32xf32>
    %105 = arith.addf %104, %103 : vector<1x32xf32>
    %106 = arith.divf %104, %105 : vector<1x32xf32>
    %107 = vector.extract_strided_slice %94 {offsets = [0, 64], sizes = [1, 32], strides = [1, 1]} : vector<1x128xf32> to vector<1x32xf32>
    %108 = math.tanh %107 : vector<1x32xf32>
    %109 = vector.extract_strided_slice %94 {offsets = [0, 96], sizes = [1, 32], strides = [1, 1]} : vector<1x128xf32> to vector<1x32xf32>
    %110 = arith.negf %109 : vector<1x32xf32>
    %111 = math.exp %110 : vector<1x32xf32>
    %cst_46 = arith.constant 1.000000e+00 : f32
    %112 = vector.broadcast %cst_46 : f32 to vector<1x32xf32>
    %113 = arith.addf %112, %111 : vector<1x32xf32>
    %114 = arith.divf %112, %113 : vector<1x32xf32>
    %115 = arith.mulf %106, %54 : vector<1x32xf32>
    %116 = arith.mulf %100, %108 : vector<1x32xf32>
    %117 = arith.addf %115, %116 : vector<1x32xf32>
    %118 = math.tanh %117 : vector<1x32xf32>
    %119 = arith.mulf %114, %118 : vector<1x32xf32>
    %120 = arith.index_cast %c1_i32 : i32 to index
    %c0_47 = arith.constant 0 : index
    %121 = vector.load %arg17[%120, %c0_47] : memref<8x32xf32, #tpu.memory_space<vmem>>, vector<1x32xf32>
    tpu.vector_store %arg17[%120, %c0_47], %119 {strides = array<i32>} : memref<8x32xf32, #tpu.memory_space<vmem>>, vector<1x32xf32>,
    %c7_i32_48 = arith.constant 7 : i32
    %122 = arith.subi %c7_i32_48, %c1_i32 : i32
    %123 = arith.index_cast %122 : i32 to index
    %c0_49 = arith.constant 0 : index
    %124 = vector.load %arg16[%123, %c0_49] : memref<8x128xf32, #tpu.memory_space<vmem>>, vector<1x128xf32>
    %cst_50 = arith.constant dense<0.000000e+00> : vector<1x128xf32>
    %125 = tpu.matmul %88, %26, %cst_50 {dimension_numbers = #tpu.dot_dimension_numbers<[1], [0], [0], [1], [0, 0, 1, 1], [], []>} : vector<1x32xf32>, vector<32x128xf32>, vector<1x128xf32> -> vector<1x128xf32>
    %126 = arith.addf %124, %125 : vector<1x128xf32>
    %127 = vector.extract_strided_slice %126 {offsets = [0, 0], sizes = [1, 32], strides = [1, 1]} : vector<1x128xf32> to vector<1x32xf32>
    %128 = arith.negf %127 : vector<1x32xf32>
    %129 = math.exp %128 : vector<1x32xf32>
    %cst_51 = arith.constant 1.000000e+00 : f32
    %130 = vector.broadcast %cst_51 : f32 to vector<1x32xf32>
    %131 = arith.addf %130, %129 : vector<1x32xf32>
    %132 = arith.divf %130, %131 : vector<1x32xf32>
    %133 = vector.extract_strided_slice %126 {offsets = [0, 32], sizes = [1, 32], strides = [1, 1]} : vector<1x128xf32> to vector<1x32xf32>
    %134 = arith.negf %133 : vector<1x32xf32>
    %135 = math.exp %134 : vector<1x32xf32>
    %cst_52 = arith.constant 1.000000e+00 : f32
    %136 = vector.broadcast %cst_52 : f32 to vector<1x32xf32>
    %137 = arith.addf %136, %135 : vector<1x32xf32>
    %138 = arith.divf %136, %137 : vector<1x32xf32>
    %139 = vector.extract_strided_slice %126 {offsets = [0, 64], sizes = [1, 32], strides = [1, 1]} : vector<1x128xf32> to vector<1x32xf32>
    %140 = math.tanh %139 : vector<1x32xf32>
    %141 = vector.extract_strided_slice %126 {offsets = [0, 96], sizes = [1, 32], strides = [1, 1]} : vector<1x128xf32> to vector<1x32xf32>
    %142 = arith.negf %141 : vector<1x32xf32>
    %143 = math.exp %142 : vector<1x32xf32>
    %cst_53 = arith.constant 1.000000e+00 : f32
    %144 = vector.broadcast %cst_53 : f32 to vector<1x32xf32>
    %145 = arith.addf %144, %143 : vector<1x32xf32>
    %146 = arith.divf %144, %145 : vector<1x32xf32>
    %147 = arith.mulf %138, %86 : vector<1x32xf32>
    %148 = arith.mulf %132, %140 : vector<1x32xf32>
    %149 = arith.addf %147, %148 : vector<1x32xf32>
    %150 = math.tanh %149 : vector<1x32xf32>
    %151 = arith.mulf %146, %150 : vector<1x32xf32>
    %152 = arith.index_cast %122 : i32 to index
    %c0_54 = arith.constant 0 : index
    %153 = vector.load %arg18[%152, %c0_54] : memref<8x32xf32, #tpu.memory_space<vmem>>, vector<1x32xf32>
    tpu.vector_store %arg18[%152, %c0_54], %151 {strides = array<i32>} : memref<8x32xf32, #tpu.memory_space<vmem>>, vector<1x32xf32>,
    %c2_i32 = arith.constant 2 : i32
    %154 = arith.index_cast %c2_i32 : i32 to index
    %c0_55 = arith.constant 0 : index
    %155 = vector.load %arg15[%154, %c0_55] : memref<8x128xf32, #tpu.memory_space<vmem>>, vector<1x128xf32>
    %cst_56 = arith.constant dense<0.000000e+00> : vector<1x128xf32>
    %156 = tpu.matmul %119, %24, %cst_56 {dimension_numbers = #tpu.dot_dimension_numbers<[1], [0], [0], [1], [0, 0, 1, 1], [], []>} : vector<1x32xf32>, vector<32x128xf32>, vector<1x128xf32> -> vector<1x128xf32>
    %157 = arith.addf %155, %156 : vector<1x128xf32>
    %158 = vector.extract_strided_slice %157 {offsets = [0, 0], sizes = [1, 32], strides = [1, 1]} : vector<1x128xf32> to vector<1x32xf32>
    %159 = arith.negf %158 : vector<1x32xf32>
    %160 = math.exp %159 : vector<1x32xf32>
    %cst_57 = arith.constant 1.000000e+00 : f32
    %161 = vector.broadcast %cst_57 : f32 to vector<1x32xf32>
    %162 = arith.addf %161, %160 : vector<1x32xf32>
    %163 = arith.divf %161, %162 : vector<1x32xf32>
    %164 = vector.extract_strided_slice %157 {offsets = [0, 32], sizes = [1, 32], strides = [1, 1]} : vector<1x128xf32> to vector<1x32xf32>
    %165 = arith.negf %164 : vector<1x32xf32>
    %166 = math.exp %165 : vector<1x32xf32>
    %cst_58 = arith.constant 1.000000e+00 : f32
    %167 = vector.broadcast %cst_58 : f32 to vector<1x32xf32>
    %168 = arith.addf %167, %166 : vector<1x32xf32>
    %169 = arith.divf %167, %168 : vector<1x32xf32>
    %170 = vector.extract_strided_slice %157 {offsets = [0, 64], sizes = [1, 32], strides = [1, 1]} : vector<1x128xf32> to vector<1x32xf32>
    %171 = math.tanh %170 : vector<1x32xf32>
    %172 = vector.extract_strided_slice %157 {offsets = [0, 96], sizes = [1, 32], strides = [1, 1]} : vector<1x128xf32> to vector<1x32xf32>
    %173 = arith.negf %172 : vector<1x32xf32>
    %174 = math.exp %173 : vector<1x32xf32>
    %cst_59 = arith.constant 1.000000e+00 : f32
    %175 = vector.broadcast %cst_59 : f32 to vector<1x32xf32>
    %176 = arith.addf %175, %174 : vector<1x32xf32>
    %177 = arith.divf %175, %176 : vector<1x32xf32>
    %178 = arith.mulf %169, %117 : vector<1x32xf32>
    %179 = arith.mulf %163, %171 : vector<1x32xf32>
    %180 = arith.addf %178, %179 : vector<1x32xf32>
    %181 = math.tanh %180 : vector<1x32xf32>
    %182 = arith.mulf %177, %181 : vector<1x32xf32>
    %183 = arith.index_cast %c2_i32 : i32 to index
    %c0_60 = arith.constant 0 : index
    %184 = vector.load %arg17[%183, %c0_60] : memref<8x32xf32, #tpu.memory_space<vmem>>, vector<1x32xf32>
    tpu.vector_store %arg17[%183, %c0_60], %182 {strides = array<i32>} : memref<8x32xf32, #tpu.memory_space<vmem>>, vector<1x32xf32>,
    %c7_i32_61 = arith.constant 7 : i32
    %185 = arith.subi %c7_i32_61, %c2_i32 : i32
    %186 = arith.index_cast %185 : i32 to index
    %c0_62 = arith.constant 0 : index
    %187 = vector.load %arg16[%186, %c0_62] : memref<8x128xf32, #tpu.memory_space<vmem>>, vector<1x128xf32>
    %cst_63 = arith.constant dense<0.000000e+00> : vector<1x128xf32>
    %188 = tpu.matmul %151, %26, %cst_63 {dimension_numbers = #tpu.dot_dimension_numbers<[1], [0], [0], [1], [0, 0, 1, 1], [], []>} : vector<1x32xf32>, vector<32x128xf32>, vector<1x128xf32> -> vector<1x128xf32>
    %189 = arith.addf %187, %188 : vector<1x128xf32>
    %190 = vector.extract_strided_slice %189 {offsets = [0, 0], sizes = [1, 32], strides = [1, 1]} : vector<1x128xf32> to vector<1x32xf32>
    %191 = arith.negf %190 : vector<1x32xf32>
    %192 = math.exp %191 : vector<1x32xf32>
    %cst_64 = arith.constant 1.000000e+00 : f32
    %193 = vector.broadcast %cst_64 : f32 to vector<1x32xf32>
    %194 = arith.addf %193, %192 : vector<1x32xf32>
    %195 = arith.divf %193, %194 : vector<1x32xf32>
    %196 = vector.extract_strided_slice %189 {offsets = [0, 32], sizes = [1, 32], strides = [1, 1]} : vector<1x128xf32> to vector<1x32xf32>
    %197 = arith.negf %196 : vector<1x32xf32>
    %198 = math.exp %197 : vector<1x32xf32>
    %cst_65 = arith.constant 1.000000e+00 : f32
    %199 = vector.broadcast %cst_65 : f32 to vector<1x32xf32>
    %200 = arith.addf %199, %198 : vector<1x32xf32>
    %201 = arith.divf %199, %200 : vector<1x32xf32>
    %202 = vector.extract_strided_slice %189 {offsets = [0, 64], sizes = [1, 32], strides = [1, 1]} : vector<1x128xf32> to vector<1x32xf32>
    %203 = math.tanh %202 : vector<1x32xf32>
    %204 = vector.extract_strided_slice %189 {offsets = [0, 96], sizes = [1, 32], strides = [1, 1]} : vector<1x128xf32> to vector<1x32xf32>
    %205 = arith.negf %204 : vector<1x32xf32>
    %206 = math.exp %205 : vector<1x32xf32>
    %cst_66 = arith.constant 1.000000e+00 : f32
    %207 = vector.broadcast %cst_66 : f32 to vector<1x32xf32>
    %208 = arith.addf %207, %206 : vector<1x32xf32>
    %209 = arith.divf %207, %208 : vector<1x32xf32>
    %210 = arith.mulf %201, %149 : vector<1x32xf32>
    %211 = arith.mulf %195, %203 : vector<1x32xf32>
    %212 = arith.addf %210, %211 : vector<1x32xf32>
    %213 = math.tanh %212 : vector<1x32xf32>
    %214 = arith.mulf %209, %213 : vector<1x32xf32>
    %215 = arith.index_cast %185 : i32 to index
    %c0_67 = arith.constant 0 : index
    %216 = vector.load %arg18[%215, %c0_67] : memref<8x32xf32, #tpu.memory_space<vmem>>, vector<1x32xf32>
    tpu.vector_store %arg18[%215, %c0_67], %214 {strides = array<i32>} : memref<8x32xf32, #tpu.memory_space<vmem>>, vector<1x32xf32>,
    %c3_i32 = arith.constant 3 : i32
    %217 = arith.index_cast %c3_i32 : i32 to index
    %c0_68 = arith.constant 0 : index
    %218 = vector.load %arg15[%217, %c0_68] : memref<8x128xf32, #tpu.memory_space<vmem>>, vector<1x128xf32>
    %cst_69 = arith.constant dense<0.000000e+00> : vector<1x128xf32>
    %219 = tpu.matmul %182, %24, %cst_69 {dimension_numbers = #tpu.dot_dimension_numbers<[1], [0], [0], [1], [0, 0, 1, 1], [], []>} : vector<1x32xf32>, vector<32x128xf32>, vector<1x128xf32> -> vector<1x128xf32>
    %220 = arith.addf %218, %219 : vector<1x128xf32>
    %221 = vector.extract_strided_slice %220 {offsets = [0, 0], sizes = [1, 32], strides = [1, 1]} : vector<1x128xf32> to vector<1x32xf32>
    %222 = arith.negf %221 : vector<1x32xf32>
    %223 = math.exp %222 : vector<1x32xf32>
    %cst_70 = arith.constant 1.000000e+00 : f32
    %224 = vector.broadcast %cst_70 : f32 to vector<1x32xf32>
    %225 = arith.addf %224, %223 : vector<1x32xf32>
    %226 = arith.divf %224, %225 : vector<1x32xf32>
    %227 = vector.extract_strided_slice %220 {offsets = [0, 32], sizes = [1, 32], strides = [1, 1]} : vector<1x128xf32> to vector<1x32xf32>
    %228 = arith.negf %227 : vector<1x32xf32>
    %229 = math.exp %228 : vector<1x32xf32>
    %cst_71 = arith.constant 1.000000e+00 : f32
    %230 = vector.broadcast %cst_71 : f32 to vector<1x32xf32>
    %231 = arith.addf %230, %229 : vector<1x32xf32>
    %232 = arith.divf %230, %231 : vector<1x32xf32>
    %233 = vector.extract_strided_slice %220 {offsets = [0, 64], sizes = [1, 32], strides = [1, 1]} : vector<1x128xf32> to vector<1x32xf32>
    %234 = math.tanh %233 : vector<1x32xf32>
    %235 = vector.extract_strided_slice %220 {offsets = [0, 96], sizes = [1, 32], strides = [1, 1]} : vector<1x128xf32> to vector<1x32xf32>
    %236 = arith.negf %235 : vector<1x32xf32>
    %237 = math.exp %236 : vector<1x32xf32>
    %cst_72 = arith.constant 1.000000e+00 : f32
    %238 = vector.broadcast %cst_72 : f32 to vector<1x32xf32>
    %239 = arith.addf %238, %237 : vector<1x32xf32>
    %240 = arith.divf %238, %239 : vector<1x32xf32>
    %241 = arith.mulf %232, %180 : vector<1x32xf32>
    %242 = arith.mulf %226, %234 : vector<1x32xf32>
    %243 = arith.addf %241, %242 : vector<1x32xf32>
    %244 = math.tanh %243 : vector<1x32xf32>
    %245 = arith.mulf %240, %244 : vector<1x32xf32>
    %246 = arith.index_cast %c3_i32 : i32 to index
    %c0_73 = arith.constant 0 : index
    %247 = vector.load %arg17[%246, %c0_73] : memref<8x32xf32, #tpu.memory_space<vmem>>, vector<1x32xf32>
    tpu.vector_store %arg17[%246, %c0_73], %245 {strides = array<i32>} : memref<8x32xf32, #tpu.memory_space<vmem>>, vector<1x32xf32>,
    %c7_i32_74 = arith.constant 7 : i32
    %248 = arith.subi %c7_i32_74, %c3_i32 : i32
    %249 = arith.index_cast %248 : i32 to index
    %c0_75 = arith.constant 0 : index
    %250 = vector.load %arg16[%249, %c0_75] : memref<8x128xf32, #tpu.memory_space<vmem>>, vector<1x128xf32>
    %cst_76 = arith.constant dense<0.000000e+00> : vector<1x128xf32>
    %251 = tpu.matmul %214, %26, %cst_76 {dimension_numbers = #tpu.dot_dimension_numbers<[1], [0], [0], [1], [0, 0, 1, 1], [], []>} : vector<1x32xf32>, vector<32x128xf32>, vector<1x128xf32> -> vector<1x128xf32>
    %252 = arith.addf %250, %251 : vector<1x128xf32>
    %253 = vector.extract_strided_slice %252 {offsets = [0, 0], sizes = [1, 32], strides = [1, 1]} : vector<1x128xf32> to vector<1x32xf32>
    %254 = arith.negf %253 : vector<1x32xf32>
    %255 = math.exp %254 : vector<1x32xf32>
    %cst_77 = arith.constant 1.000000e+00 : f32
    %256 = vector.broadcast %cst_77 : f32 to vector<1x32xf32>
    %257 = arith.addf %256, %255 : vector<1x32xf32>
    %258 = arith.divf %256, %257 : vector<1x32xf32>
    %259 = vector.extract_strided_slice %252 {offsets = [0, 32], sizes = [1, 32], strides = [1, 1]} : vector<1x128xf32> to vector<1x32xf32>
    %260 = arith.negf %259 : vector<1x32xf32>
    %261 = math.exp %260 : vector<1x32xf32>
    %cst_78 = arith.constant 1.000000e+00 : f32
    %262 = vector.broadcast %cst_78 : f32 to vector<1x32xf32>
    %263 = arith.addf %262, %261 : vector<1x32xf32>
    %264 = arith.divf %262, %263 : vector<1x32xf32>
    %265 = vector.extract_strided_slice %252 {offsets = [0, 64], sizes = [1, 32], strides = [1, 1]} : vector<1x128xf32> to vector<1x32xf32>
    %266 = math.tanh %265 : vector<1x32xf32>
    %267 = vector.extract_strided_slice %252 {offsets = [0, 96], sizes = [1, 32], strides = [1, 1]} : vector<1x128xf32> to vector<1x32xf32>
    %268 = arith.negf %267 : vector<1x32xf32>
    %269 = math.exp %268 : vector<1x32xf32>
    %cst_79 = arith.constant 1.000000e+00 : f32
    %270 = vector.broadcast %cst_79 : f32 to vector<1x32xf32>
    %271 = arith.addf %270, %269 : vector<1x32xf32>
    %272 = arith.divf %270, %271 : vector<1x32xf32>
    %273 = arith.mulf %264, %212 : vector<1x32xf32>
    %274 = arith.mulf %258, %266 : vector<1x32xf32>
    %275 = arith.addf %273, %274 : vector<1x32xf32>
    %276 = math.tanh %275 : vector<1x32xf32>
    %277 = arith.mulf %272, %276 : vector<1x32xf32>
    %278 = arith.index_cast %248 : i32 to index
    %c0_80 = arith.constant 0 : index
    %279 = vector.load %arg18[%278, %c0_80] : memref<8x32xf32, #tpu.memory_space<vmem>>, vector<1x32xf32>
    tpu.vector_store %arg18[%278, %c0_80], %277 {strides = array<i32>} : memref<8x32xf32, #tpu.memory_space<vmem>>, vector<1x32xf32>,
    %c4_i32 = arith.constant 4 : i32
    %280 = arith.index_cast %c4_i32 : i32 to index
    %c0_81 = arith.constant 0 : index
    %281 = vector.load %arg15[%280, %c0_81] : memref<8x128xf32, #tpu.memory_space<vmem>>, vector<1x128xf32>
    %cst_82 = arith.constant dense<0.000000e+00> : vector<1x128xf32>
    %282 = tpu.matmul %245, %24, %cst_82 {dimension_numbers = #tpu.dot_dimension_numbers<[1], [0], [0], [1], [0, 0, 1, 1], [], []>} : vector<1x32xf32>, vector<32x128xf32>, vector<1x128xf32> -> vector<1x128xf32>
    %283 = arith.addf %281, %282 : vector<1x128xf32>
    %284 = vector.extract_strided_slice %283 {offsets = [0, 0], sizes = [1, 32], strides = [1, 1]} : vector<1x128xf32> to vector<1x32xf32>
    %285 = arith.negf %284 : vector<1x32xf32>
    %286 = math.exp %285 : vector<1x32xf32>
    %cst_83 = arith.constant 1.000000e+00 : f32
    %287 = vector.broadcast %cst_83 : f32 to vector<1x32xf32>
    %288 = arith.addf %287, %286 : vector<1x32xf32>
    %289 = arith.divf %287, %288 : vector<1x32xf32>
    %290 = vector.extract_strided_slice %283 {offsets = [0, 32], sizes = [1, 32], strides = [1, 1]} : vector<1x128xf32> to vector<1x32xf32>
    %291 = arith.negf %290 : vector<1x32xf32>
    %292 = math.exp %291 : vector<1x32xf32>
    %cst_84 = arith.constant 1.000000e+00 : f32
    %293 = vector.broadcast %cst_84 : f32 to vector<1x32xf32>
    %294 = arith.addf %293, %292 : vector<1x32xf32>
    %295 = arith.divf %293, %294 : vector<1x32xf32>
    %296 = vector.extract_strided_slice %283 {offsets = [0, 64], sizes = [1, 32], strides = [1, 1]} : vector<1x128xf32> to vector<1x32xf32>
    %297 = math.tanh %296 : vector<1x32xf32>
    %298 = vector.extract_strided_slice %283 {offsets = [0, 96], sizes = [1, 32], strides = [1, 1]} : vector<1x128xf32> to vector<1x32xf32>
    %299 = arith.negf %298 : vector<1x32xf32>
    %300 = math.exp %299 : vector<1x32xf32>
    %cst_85 = arith.constant 1.000000e+00 : f32
    %301 = vector.broadcast %cst_85 : f32 to vector<1x32xf32>
    %302 = arith.addf %301, %300 : vector<1x32xf32>
    %303 = arith.divf %301, %302 : vector<1x32xf32>
    %304 = arith.mulf %295, %243 : vector<1x32xf32>
    %305 = arith.mulf %289, %297 : vector<1x32xf32>
    %306 = arith.addf %304, %305 : vector<1x32xf32>
    %307 = math.tanh %306 : vector<1x32xf32>
    %308 = arith.mulf %303, %307 : vector<1x32xf32>
    %309 = arith.index_cast %c4_i32 : i32 to index
    %c0_86 = arith.constant 0 : index
    %310 = vector.load %arg17[%309, %c0_86] : memref<8x32xf32, #tpu.memory_space<vmem>>, vector<1x32xf32>
    tpu.vector_store %arg17[%309, %c0_86], %308 {strides = array<i32>} : memref<8x32xf32, #tpu.memory_space<vmem>>, vector<1x32xf32>,
    %c7_i32_87 = arith.constant 7 : i32
    %311 = arith.subi %c7_i32_87, %c4_i32 : i32
    %312 = arith.index_cast %311 : i32 to index
    %c0_88 = arith.constant 0 : index
    %313 = vector.load %arg16[%312, %c0_88] : memref<8x128xf32, #tpu.memory_space<vmem>>, vector<1x128xf32>
    %cst_89 = arith.constant dense<0.000000e+00> : vector<1x128xf32>
    %314 = tpu.matmul %277, %26, %cst_89 {dimension_numbers = #tpu.dot_dimension_numbers<[1], [0], [0], [1], [0, 0, 1, 1], [], []>} : vector<1x32xf32>, vector<32x128xf32>, vector<1x128xf32> -> vector<1x128xf32>
    %315 = arith.addf %313, %314 : vector<1x128xf32>
    %316 = vector.extract_strided_slice %315 {offsets = [0, 0], sizes = [1, 32], strides = [1, 1]} : vector<1x128xf32> to vector<1x32xf32>
    %317 = arith.negf %316 : vector<1x32xf32>
    %318 = math.exp %317 : vector<1x32xf32>
    %cst_90 = arith.constant 1.000000e+00 : f32
    %319 = vector.broadcast %cst_90 : f32 to vector<1x32xf32>
    %320 = arith.addf %319, %318 : vector<1x32xf32>
    %321 = arith.divf %319, %320 : vector<1x32xf32>
    %322 = vector.extract_strided_slice %315 {offsets = [0, 32], sizes = [1, 32], strides = [1, 1]} : vector<1x128xf32> to vector<1x32xf32>
    %323 = arith.negf %322 : vector<1x32xf32>
    %324 = math.exp %323 : vector<1x32xf32>
    %cst_91 = arith.constant 1.000000e+00 : f32
    %325 = vector.broadcast %cst_91 : f32 to vector<1x32xf32>
    %326 = arith.addf %325, %324 : vector<1x32xf32>
    %327 = arith.divf %325, %326 : vector<1x32xf32>
    %328 = vector.extract_strided_slice %315 {offsets = [0, 64], sizes = [1, 32], strides = [1, 1]} : vector<1x128xf32> to vector<1x32xf32>
    %329 = math.tanh %328 : vector<1x32xf32>
    %330 = vector.extract_strided_slice %315 {offsets = [0, 96], sizes = [1, 32], strides = [1, 1]} : vector<1x128xf32> to vector<1x32xf32>
    %331 = arith.negf %330 : vector<1x32xf32>
    %332 = math.exp %331 : vector<1x32xf32>
    %cst_92 = arith.constant 1.000000e+00 : f32
    %333 = vector.broadcast %cst_92 : f32 to vector<1x32xf32>
    %334 = arith.addf %333, %332 : vector<1x32xf32>
    %335 = arith.divf %333, %334 : vector<1x32xf32>
    %336 = arith.mulf %327, %275 : vector<1x32xf32>
    %337 = arith.mulf %321, %329 : vector<1x32xf32>
    %338 = arith.addf %336, %337 : vector<1x32xf32>
    %339 = math.tanh %338 : vector<1x32xf32>
    %340 = arith.mulf %335, %339 : vector<1x32xf32>
    %341 = arith.index_cast %311 : i32 to index
    %c0_93 = arith.constant 0 : index
    %342 = vector.load %arg18[%341, %c0_93] : memref<8x32xf32, #tpu.memory_space<vmem>>, vector<1x32xf32>
    tpu.vector_store %arg18[%341, %c0_93], %340 {strides = array<i32>} : memref<8x32xf32, #tpu.memory_space<vmem>>, vector<1x32xf32>,
    %c5_i32 = arith.constant 5 : i32
    %343 = arith.index_cast %c5_i32 : i32 to index
    %c0_94 = arith.constant 0 : index
    %344 = vector.load %arg15[%343, %c0_94] : memref<8x128xf32, #tpu.memory_space<vmem>>, vector<1x128xf32>
    %cst_95 = arith.constant dense<0.000000e+00> : vector<1x128xf32>
    %345 = tpu.matmul %308, %24, %cst_95 {dimension_numbers = #tpu.dot_dimension_numbers<[1], [0], [0], [1], [0, 0, 1, 1], [], []>} : vector<1x32xf32>, vector<32x128xf32>, vector<1x128xf32> -> vector<1x128xf32>
    %346 = arith.addf %344, %345 : vector<1x128xf32>
    %347 = vector.extract_strided_slice %346 {offsets = [0, 0], sizes = [1, 32], strides = [1, 1]} : vector<1x128xf32> to vector<1x32xf32>
    %348 = arith.negf %347 : vector<1x32xf32>
    %349 = math.exp %348 : vector<1x32xf32>
    %cst_96 = arith.constant 1.000000e+00 : f32
    %350 = vector.broadcast %cst_96 : f32 to vector<1x32xf32>
    %351 = arith.addf %350, %349 : vector<1x32xf32>
    %352 = arith.divf %350, %351 : vector<1x32xf32>
    %353 = vector.extract_strided_slice %346 {offsets = [0, 32], sizes = [1, 32], strides = [1, 1]} : vector<1x128xf32> to vector<1x32xf32>
    %354 = arith.negf %353 : vector<1x32xf32>
    %355 = math.exp %354 : vector<1x32xf32>
    %cst_97 = arith.constant 1.000000e+00 : f32
    %356 = vector.broadcast %cst_97 : f32 to vector<1x32xf32>
    %357 = arith.addf %356, %355 : vector<1x32xf32>
    %358 = arith.divf %356, %357 : vector<1x32xf32>
    %359 = vector.extract_strided_slice %346 {offsets = [0, 64], sizes = [1, 32], strides = [1, 1]} : vector<1x128xf32> to vector<1x32xf32>
    %360 = math.tanh %359 : vector<1x32xf32>
    %361 = vector.extract_strided_slice %346 {offsets = [0, 96], sizes = [1, 32], strides = [1, 1]} : vector<1x128xf32> to vector<1x32xf32>
    %362 = arith.negf %361 : vector<1x32xf32>
    %363 = math.exp %362 : vector<1x32xf32>
    %cst_98 = arith.constant 1.000000e+00 : f32
    %364 = vector.broadcast %cst_98 : f32 to vector<1x32xf32>
    %365 = arith.addf %364, %363 : vector<1x32xf32>
    %366 = arith.divf %364, %365 : vector<1x32xf32>
    %367 = arith.mulf %358, %306 : vector<1x32xf32>
    %368 = arith.mulf %352, %360 : vector<1x32xf32>
    %369 = arith.addf %367, %368 : vector<1x32xf32>
    %370 = math.tanh %369 : vector<1x32xf32>
    %371 = arith.mulf %366, %370 : vector<1x32xf32>
    %372 = arith.index_cast %c5_i32 : i32 to index
    %c0_99 = arith.constant 0 : index
    %373 = vector.load %arg17[%372, %c0_99] : memref<8x32xf32, #tpu.memory_space<vmem>>, vector<1x32xf32>
    tpu.vector_store %arg17[%372, %c0_99], %371 {strides = array<i32>} : memref<8x32xf32, #tpu.memory_space<vmem>>, vector<1x32xf32>,
    %c7_i32_100 = arith.constant 7 : i32
    %374 = arith.subi %c7_i32_100, %c5_i32 : i32
    %375 = arith.index_cast %374 : i32 to index
    %c0_101 = arith.constant 0 : index
    %376 = vector.load %arg16[%375, %c0_101] : memref<8x128xf32, #tpu.memory_space<vmem>>, vector<1x128xf32>
    %cst_102 = arith.constant dense<0.000000e+00> : vector<1x128xf32>
    %377 = tpu.matmul %340, %26, %cst_102 {dimension_numbers = #tpu.dot_dimension_numbers<[1], [0], [0], [1], [0, 0, 1, 1], [], []>} : vector<1x32xf32>, vector<32x128xf32>, vector<1x128xf32> -> vector<1x128xf32>
    %378 = arith.addf %376, %377 : vector<1x128xf32>
    %379 = vector.extract_strided_slice %378 {offsets = [0, 0], sizes = [1, 32], strides = [1, 1]} : vector<1x128xf32> to vector<1x32xf32>
    %380 = arith.negf %379 : vector<1x32xf32>
    %381 = math.exp %380 : vector<1x32xf32>
    %cst_103 = arith.constant 1.000000e+00 : f32
    %382 = vector.broadcast %cst_103 : f32 to vector<1x32xf32>
    %383 = arith.addf %382, %381 : vector<1x32xf32>
    %384 = arith.divf %382, %383 : vector<1x32xf32>
    %385 = vector.extract_strided_slice %378 {offsets = [0, 32], sizes = [1, 32], strides = [1, 1]} : vector<1x128xf32> to vector<1x32xf32>
    %386 = arith.negf %385 : vector<1x32xf32>
    %387 = math.exp %386 : vector<1x32xf32>
    %cst_104 = arith.constant 1.000000e+00 : f32
    %388 = vector.broadcast %cst_104 : f32 to vector<1x32xf32>
    %389 = arith.addf %388, %387 : vector<1x32xf32>
    %390 = arith.divf %388, %389 : vector<1x32xf32>
    %391 = vector.extract_strided_slice %378 {offsets = [0, 64], sizes = [1, 32], strides = [1, 1]} : vector<1x128xf32> to vector<1x32xf32>
    %392 = math.tanh %391 : vector<1x32xf32>
    %393 = vector.extract_strided_slice %378 {offsets = [0, 96], sizes = [1, 32], strides = [1, 1]} : vector<1x128xf32> to vector<1x32xf32>
    %394 = arith.negf %393 : vector<1x32xf32>
    %395 = math.exp %394 : vector<1x32xf32>
    %cst_105 = arith.constant 1.000000e+00 : f32
    %396 = vector.broadcast %cst_105 : f32 to vector<1x32xf32>
    %397 = arith.addf %396, %395 : vector<1x32xf32>
    %398 = arith.divf %396, %397 : vector<1x32xf32>
    %399 = arith.mulf %390, %338 : vector<1x32xf32>
    %400 = arith.mulf %384, %392 : vector<1x32xf32>
    %401 = arith.addf %399, %400 : vector<1x32xf32>
    %402 = math.tanh %401 : vector<1x32xf32>
    %403 = arith.mulf %398, %402 : vector<1x32xf32>
    %404 = arith.index_cast %374 : i32 to index
    %c0_106 = arith.constant 0 : index
    %405 = vector.load %arg18[%404, %c0_106] : memref<8x32xf32, #tpu.memory_space<vmem>>, vector<1x32xf32>
    tpu.vector_store %arg18[%404, %c0_106], %403 {strides = array<i32>} : memref<8x32xf32, #tpu.memory_space<vmem>>, vector<1x32xf32>,
    %c6_i32 = arith.constant 6 : i32
    %406 = arith.index_cast %c6_i32 : i32 to index
    %c0_107 = arith.constant 0 : index
    %407 = vector.load %arg15[%406, %c0_107] : memref<8x128xf32, #tpu.memory_space<vmem>>, vector<1x128xf32>
    %cst_108 = arith.constant dense<0.000000e+00> : vector<1x128xf32>
    %408 = tpu.matmul %371, %24, %cst_108 {dimension_numbers = #tpu.dot_dimension_numbers<[1], [0], [0], [1], [0, 0, 1, 1], [], []>} : vector<1x32xf32>, vector<32x128xf32>, vector<1x128xf32> -> vector<1x128xf32>
    %409 = arith.addf %407, %408 : vector<1x128xf32>
    %410 = vector.extract_strided_slice %409 {offsets = [0, 0], sizes = [1, 32], strides = [1, 1]} : vector<1x128xf32> to vector<1x32xf32>
    %411 = arith.negf %410 : vector<1x32xf32>
    %412 = math.exp %411 : vector<1x32xf32>
    %cst_109 = arith.constant 1.000000e+00 : f32
    %413 = vector.broadcast %cst_109 : f32 to vector<1x32xf32>
    %414 = arith.addf %413, %412 : vector<1x32xf32>
    %415 = arith.divf %413, %414 : vector<1x32xf32>
    %416 = vector.extract_strided_slice %409 {offsets = [0, 32], sizes = [1, 32], strides = [1, 1]} : vector<1x128xf32> to vector<1x32xf32>
    %417 = arith.negf %416 : vector<1x32xf32>
    %418 = math.exp %417 : vector<1x32xf32>
    %cst_110 = arith.constant 1.000000e+00 : f32
    %419 = vector.broadcast %cst_110 : f32 to vector<1x32xf32>
    %420 = arith.addf %419, %418 : vector<1x32xf32>
    %421 = arith.divf %419, %420 : vector<1x32xf32>
    %422 = vector.extract_strided_slice %409 {offsets = [0, 64], sizes = [1, 32], strides = [1, 1]} : vector<1x128xf32> to vector<1x32xf32>
    %423 = math.tanh %422 : vector<1x32xf32>
    %424 = vector.extract_strided_slice %409 {offsets = [0, 96], sizes = [1, 32], strides = [1, 1]} : vector<1x128xf32> to vector<1x32xf32>
    %425 = arith.negf %424 : vector<1x32xf32>
    %426 = math.exp %425 : vector<1x32xf32>
    %cst_111 = arith.constant 1.000000e+00 : f32
    %427 = vector.broadcast %cst_111 : f32 to vector<1x32xf32>
    %428 = arith.addf %427, %426 : vector<1x32xf32>
    %429 = arith.divf %427, %428 : vector<1x32xf32>
    %430 = arith.mulf %421, %369 : vector<1x32xf32>
    %431 = arith.mulf %415, %423 : vector<1x32xf32>
    %432 = arith.addf %430, %431 : vector<1x32xf32>
    %433 = math.tanh %432 : vector<1x32xf32>
    %434 = arith.mulf %429, %433 : vector<1x32xf32>
    %435 = arith.index_cast %c6_i32 : i32 to index
    %c0_112 = arith.constant 0 : index
    %436 = vector.load %arg17[%435, %c0_112] : memref<8x32xf32, #tpu.memory_space<vmem>>, vector<1x32xf32>
    tpu.vector_store %arg17[%435, %c0_112], %434 {strides = array<i32>} : memref<8x32xf32, #tpu.memory_space<vmem>>, vector<1x32xf32>,
    %c7_i32_113 = arith.constant 7 : i32
    %437 = arith.subi %c7_i32_113, %c6_i32 : i32
    %438 = arith.index_cast %437 : i32 to index
    %c0_114 = arith.constant 0 : index
    %439 = vector.load %arg16[%438, %c0_114] : memref<8x128xf32, #tpu.memory_space<vmem>>, vector<1x128xf32>
    %cst_115 = arith.constant dense<0.000000e+00> : vector<1x128xf32>
    %440 = tpu.matmul %403, %26, %cst_115 {dimension_numbers = #tpu.dot_dimension_numbers<[1], [0], [0], [1], [0, 0, 1, 1], [], []>} : vector<1x32xf32>, vector<32x128xf32>, vector<1x128xf32> -> vector<1x128xf32>
    %441 = arith.addf %439, %440 : vector<1x128xf32>
    %442 = vector.extract_strided_slice %441 {offsets = [0, 0], sizes = [1, 32], strides = [1, 1]} : vector<1x128xf32> to vector<1x32xf32>
    %443 = arith.negf %442 : vector<1x32xf32>
    %444 = math.exp %443 : vector<1x32xf32>
    %cst_116 = arith.constant 1.000000e+00 : f32
    %445 = vector.broadcast %cst_116 : f32 to vector<1x32xf32>
    %446 = arith.addf %445, %444 : vector<1x32xf32>
    %447 = arith.divf %445, %446 : vector<1x32xf32>
    %448 = vector.extract_strided_slice %441 {offsets = [0, 32], sizes = [1, 32], strides = [1, 1]} : vector<1x128xf32> to vector<1x32xf32>
    %449 = arith.negf %448 : vector<1x32xf32>
    %450 = math.exp %449 : vector<1x32xf32>
    %cst_117 = arith.constant 1.000000e+00 : f32
    %451 = vector.broadcast %cst_117 : f32 to vector<1x32xf32>
    %452 = arith.addf %451, %450 : vector<1x32xf32>
    %453 = arith.divf %451, %452 : vector<1x32xf32>
    %454 = vector.extract_strided_slice %441 {offsets = [0, 64], sizes = [1, 32], strides = [1, 1]} : vector<1x128xf32> to vector<1x32xf32>
    %455 = math.tanh %454 : vector<1x32xf32>
    %456 = vector.extract_strided_slice %441 {offsets = [0, 96], sizes = [1, 32], strides = [1, 1]} : vector<1x128xf32> to vector<1x32xf32>
    %457 = arith.negf %456 : vector<1x32xf32>
    %458 = math.exp %457 : vector<1x32xf32>
    %cst_118 = arith.constant 1.000000e+00 : f32
    %459 = vector.broadcast %cst_118 : f32 to vector<1x32xf32>
    %460 = arith.addf %459, %458 : vector<1x32xf32>
    %461 = arith.divf %459, %460 : vector<1x32xf32>
    %462 = arith.mulf %453, %401 : vector<1x32xf32>
    %463 = arith.mulf %447, %455 : vector<1x32xf32>
    %464 = arith.addf %462, %463 : vector<1x32xf32>
    %465 = math.tanh %464 : vector<1x32xf32>
    %466 = arith.mulf %461, %465 : vector<1x32xf32>
    %467 = arith.index_cast %437 : i32 to index
    %c0_119 = arith.constant 0 : index
    %468 = vector.load %arg18[%467, %c0_119] : memref<8x32xf32, #tpu.memory_space<vmem>>, vector<1x32xf32>
    tpu.vector_store %arg18[%467, %c0_119], %466 {strides = array<i32>} : memref<8x32xf32, #tpu.memory_space<vmem>>, vector<1x32xf32>,
    %c7_i32_120 = arith.constant 7 : i32
    %469 = arith.index_cast %c7_i32_120 : i32 to index
    %c0_121 = arith.constant 0 : index
    %470 = vector.load %arg15[%469, %c0_121] : memref<8x128xf32, #tpu.memory_space<vmem>>, vector<1x128xf32>
    %cst_122 = arith.constant dense<0.000000e+00> : vector<1x128xf32>
    %471 = tpu.matmul %434, %24, %cst_122 {dimension_numbers = #tpu.dot_dimension_numbers<[1], [0], [0], [1], [0, 0, 1, 1], [], []>} : vector<1x32xf32>, vector<32x128xf32>, vector<1x128xf32> -> vector<1x128xf32>
    %472 = arith.addf %470, %471 : vector<1x128xf32>
    %473 = vector.extract_strided_slice %472 {offsets = [0, 0], sizes = [1, 32], strides = [1, 1]} : vector<1x128xf32> to vector<1x32xf32>
    %474 = arith.negf %473 : vector<1x32xf32>
    %475 = math.exp %474 : vector<1x32xf32>
    %cst_123 = arith.constant 1.000000e+00 : f32
    %476 = vector.broadcast %cst_123 : f32 to vector<1x32xf32>
    %477 = arith.addf %476, %475 : vector<1x32xf32>
    %478 = arith.divf %476, %477 : vector<1x32xf32>
    %479 = vector.extract_strided_slice %472 {offsets = [0, 32], sizes = [1, 32], strides = [1, 1]} : vector<1x128xf32> to vector<1x32xf32>
    %480 = arith.negf %479 : vector<1x32xf32>
    %481 = math.exp %480 : vector<1x32xf32>
    %cst_124 = arith.constant 1.000000e+00 : f32
    %482 = vector.broadcast %cst_124 : f32 to vector<1x32xf32>
    %483 = arith.addf %482, %481 : vector<1x32xf32>
    %484 = arith.divf %482, %483 : vector<1x32xf32>
    %485 = vector.extract_strided_slice %472 {offsets = [0, 64], sizes = [1, 32], strides = [1, 1]} : vector<1x128xf32> to vector<1x32xf32>
    %486 = math.tanh %485 : vector<1x32xf32>
    %487 = vector.extract_strided_slice %472 {offsets = [0, 96], sizes = [1, 32], strides = [1, 1]} : vector<1x128xf32> to vector<1x32xf32>
    %488 = arith.negf %487 : vector<1x32xf32>
    %489 = math.exp %488 : vector<1x32xf32>
    %cst_125 = arith.constant 1.000000e+00 : f32
    %490 = vector.broadcast %cst_125 : f32 to vector<1x32xf32>
    %491 = arith.addf %490, %489 : vector<1x32xf32>
    %492 = arith.divf %490, %491 : vector<1x32xf32>
    %493 = arith.mulf %484, %432 : vector<1x32xf32>
    %494 = arith.mulf %478, %486 : vector<1x32xf32>
    %495 = arith.addf %493, %494 : vector<1x32xf32>
    %496 = math.tanh %495 : vector<1x32xf32>
    %497 = arith.mulf %492, %496 : vector<1x32xf32>
    %498 = arith.index_cast %c7_i32_120 : i32 to index
    %c0_126 = arith.constant 0 : index
    %499 = vector.load %arg17[%498, %c0_126] : memref<8x32xf32, #tpu.memory_space<vmem>>, vector<1x32xf32>
    tpu.vector_store %arg17[%498, %c0_126], %497 {strides = array<i32>} : memref<8x32xf32, #tpu.memory_space<vmem>>, vector<1x32xf32>,
    %c7_i32_127 = arith.constant 7 : i32
    %500 = arith.subi %c7_i32_127, %c7_i32_120 : i32
    %501 = arith.index_cast %500 : i32 to index
    %c0_128 = arith.constant 0 : index
    %502 = vector.load %arg16[%501, %c0_128] : memref<8x128xf32, #tpu.memory_space<vmem>>, vector<1x128xf32>
    %cst_129 = arith.constant dense<0.000000e+00> : vector<1x128xf32>
    %503 = tpu.matmul %466, %26, %cst_129 {dimension_numbers = #tpu.dot_dimension_numbers<[1], [0], [0], [1], [0, 0, 1, 1], [], []>} : vector<1x32xf32>, vector<32x128xf32>, vector<1x128xf32> -> vector<1x128xf32>
    %504 = arith.addf %502, %503 : vector<1x128xf32>
    %505 = vector.extract_strided_slice %504 {offsets = [0, 0], sizes = [1, 32], strides = [1, 1]} : vector<1x128xf32> to vector<1x32xf32>
    %506 = arith.negf %505 : vector<1x32xf32>
    %507 = math.exp %506 : vector<1x32xf32>
    %cst_130 = arith.constant 1.000000e+00 : f32
    %508 = vector.broadcast %cst_130 : f32 to vector<1x32xf32>
    %509 = arith.addf %508, %507 : vector<1x32xf32>
    %510 = arith.divf %508, %509 : vector<1x32xf32>
    %511 = vector.extract_strided_slice %504 {offsets = [0, 32], sizes = [1, 32], strides = [1, 1]} : vector<1x128xf32> to vector<1x32xf32>
    %512 = arith.negf %511 : vector<1x32xf32>
    %513 = math.exp %512 : vector<1x32xf32>
    %cst_131 = arith.constant 1.000000e+00 : f32
    %514 = vector.broadcast %cst_131 : f32 to vector<1x32xf32>
    %515 = arith.addf %514, %513 : vector<1x32xf32>
    %516 = arith.divf %514, %515 : vector<1x32xf32>
    %517 = vector.extract_strided_slice %504 {offsets = [0, 64], sizes = [1, 32], strides = [1, 1]} : vector<1x128xf32> to vector<1x32xf32>
    %518 = math.tanh %517 : vector<1x32xf32>
    %519 = vector.extract_strided_slice %504 {offsets = [0, 96], sizes = [1, 32], strides = [1, 1]} : vector<1x128xf32> to vector<1x32xf32>
    %520 = arith.negf %519 : vector<1x32xf32>
    %521 = math.exp %520 : vector<1x32xf32>
    %cst_132 = arith.constant 1.000000e+00 : f32
    %522 = vector.broadcast %cst_132 : f32 to vector<1x32xf32>
    %523 = arith.addf %522, %521 : vector<1x32xf32>
    %524 = arith.divf %522, %523 : vector<1x32xf32>
    %525 = arith.mulf %516, %464 : vector<1x32xf32>
    %526 = arith.mulf %510, %518 : vector<1x32xf32>
    %527 = arith.addf %525, %526 : vector<1x32xf32>
    %528 = math.tanh %527 : vector<1x32xf32>
    %529 = arith.mulf %524, %528 : vector<1x32xf32>
    %530 = arith.index_cast %500 : i32 to index
    %c0_133 = arith.constant 0 : index
    %531 = vector.load %arg18[%530, %c0_133] : memref<8x32xf32, #tpu.memory_space<vmem>>, vector<1x32xf32>
    tpu.vector_store %arg18[%530, %c0_133], %529 {strides = array<i32>} : memref<8x32xf32, #tpu.memory_space<vmem>>, vector<1x32xf32>,
    %c8_i32 = arith.constant 8 : i32
    %c0_134 = arith.constant 0 : index
    %c0_135 = arith.constant 0 : index
    %532 = vector.load %arg17[%c0_134, %c0_135] : memref<8x32xf32, #tpu.memory_space<vmem>>, vector<8x32xf32>
    %c0_136 = arith.constant 0 : index
    %c0_137 = arith.constant 0 : index
    %533 = vector.load %arg18[%c0_136, %c0_137] : memref<8x32xf32, #tpu.memory_space<vmem>>, vector<8x32xf32>
    %534 = tpu.concatenate %532, %533 in 1 : vector<8x32xf32>, vector<8x32xf32> -> vector<8x64xf32>
    %c0_138 = arith.constant 0 : index
    %c0_139 = arith.constant 0 : index
    %c0_140 = arith.constant 0 : index
    %535 = vector.load %arg7[%c0_138, %c0_139, %c0_140] : memref<2x512x64xf32, #tpu.memory_space<vmem>>, vector<1x512x64xf32>
    %536 = vector.shape_cast %535 : vector<1x512x64xf32> to vector<512x64xf32>
    %c1_141 = arith.constant 1 : index
    %c0_142 = arith.constant 0 : index
    %c0_143 = arith.constant 0 : index
    %537 = vector.load %arg7[%c1_141, %c0_142, %c0_143] : memref<2x512x64xf32, #tpu.memory_space<vmem>>, vector<1x512x64xf32>
    %538 = vector.shape_cast %537 : vector<1x512x64xf32> to vector<512x64xf32>
    %c0_144 = arith.constant 0 : index
    %c0_145 = arith.constant 0 : index
    %c0_146 = arith.constant 0 : index
    %539 = vector.load %arg6[%c0_144, %c0_145, %c0_146] : memref<3x64x64xf32, #tpu.memory_space<vmem>>, vector<1x64x64xf32>
    %540 = vector.shape_cast %539 : vector<1x64x64xf32> to vector<64x64xf32>
    %c1_147 = arith.constant 1 : index
    %c0_148 = arith.constant 0 : index
    %c0_149 = arith.constant 0 : index
    %541 = vector.load %arg6[%c1_147, %c0_148, %c0_149] : memref<3x64x64xf32, #tpu.memory_space<vmem>>, vector<1x64x64xf32>
    %542 = vector.shape_cast %541 : vector<1x64x64xf32> to vector<64x64xf32>
    %c2 = arith.constant 2 : index
    %c0_150 = arith.constant 0 : index
    %c0_151 = arith.constant 0 : index
    %543 = vector.load %arg6[%c2, %c0_150, %c0_151] : memref<3x64x64xf32, #tpu.memory_space<vmem>>, vector<1x64x64xf32>
    %544 = vector.shape_cast %543 : vector<1x64x64xf32> to vector<64x64xf32>
    %cst_152 = arith.constant dense<0.000000e+00> : vector<64xf32>
    %545 = vector.multi_reduction <add>, %534, %cst_152 [0] : vector<8x64xf32> to vector<64xf32>
    %546 = vector.shape_cast %545 : vector<64xf32> to vector<1x64xf32>
    %cst_153 = arith.constant 8.000000e+00 : f32
    %547 = vector.broadcast %cst_153 : f32 to vector<1x64xf32>
    %548 = arith.divf %546, %547 : vector<1x64xf32>
    %cst_154 = arith.constant dense<0.000000e+00> : vector<512xf32>
    %549 = vector.multi_reduction <add>, %6, %cst_154 [0] : vector<49x512xf32> to vector<512xf32>
    %550 = vector.shape_cast %549 : vector<512xf32> to vector<1x512xf32>
    %cst_155 = arith.constant 4.900000e+01 : f32
    %551 = vector.broadcast %cst_155 : f32 to vector<1x512xf32>
    %552 = arith.divf %550, %551 : vector<1x512xf32>
    %cst_156 = arith.constant dense<0.000000e+00> : vector<1x64xf32>
    %553 = tpu.matmul %552, %536, %cst_156 {dimension_numbers = #tpu.dot_dimension_numbers<[1], [0], [0], [1], [0, 0, 1, 1], [], []>} : vector<1x512xf32>, vector<512x64xf32>, vector<1x64xf32> -> vector<1x64xf32>
    %554 = math.tanh %553 : vector<1x64xf32>
    %555 = arith.mulf %548, %554 : vector<1x64xf32>
    %cst_157 = arith.constant dense<0.000000e+00> : vector<8x64xf32>
    %556 = tpu.matmul %534, %540, %cst_157 {dimension_numbers = #tpu.dot_dimension_numbers<[1], [0], [0], [1], [0, 0, 1, 1], [], []>} : vector<8x64xf32>, vector<64x64xf32>, vector<8x64xf32> -> vector<8x64xf32>
    %557 = math.tanh %556 : vector<8x64xf32>
    %c0_158 = arith.constant 0 : index
    %c0_159 = arith.constant 0 : index
    %558 = vector.load %arg19[%c0_158, %c0_159] : memref<8x64xf32, #tpu.memory_space<vmem>>, vector<8x64xf32>
    tpu.vector_store %arg19[%c0_158, %c0_159], %557 {strides = array<i32>} : memref<8x64xf32, #tpu.memory_space<vmem>>, vector<8x64xf32>,
    %cst_160 = arith.constant dense<0.000000e+00> : vector<49x64xf32>
    %559 = tpu.matmul %6, %538, %cst_160 {dimension_numbers = #tpu.dot_dimension_numbers<[1], [0], [0], [1], [0, 0, 1, 1], [], []>} : vector<49x512xf32>, vector<512x64xf32>, vector<49x64xf32> -> vector<49x64xf32>
    %560 = math.tanh %559 : vector<49x64xf32>
    %c0_161 = arith.constant 0 : index
    %c0_162 = arith.constant 0 : index
    %561 = vector.load %arg20[%c0_161, %c0_162] : memref<49x64xf32, #tpu.memory_space<vmem>>, vector<49x64xf32>
    tpu.vector_store %arg20[%c0_161, %c0_162], %560 {strides = array<i32>} : memref<49x64xf32, #tpu.memory_space<vmem>>, vector<49x64xf32>,
    %cst_163 = arith.constant dense<0.000000e+00> : vector<49x64xf32>
    %562 = tpu.matmul %6, %536, %cst_163 {dimension_numbers = #tpu.dot_dimension_numbers<[1], [0], [0], [1], [0, 0, 1, 1], [], []>} : vector<49x512xf32>, vector<512x64xf32>, vector<49x64xf32> -> vector<49x64xf32>
    %c0_164 = arith.constant 0 : index
    %c0_165 = arith.constant 0 : index
    %563 = vector.load %arg21[%c0_164, %c0_165] : memref<49x64xf32, #tpu.memory_space<vmem>>, vector<49x64xf32>
    tpu.vector_store %arg21[%c0_164, %c0_165], %562 {strides = array<i32>} : memref<49x64xf32, #tpu.memory_space<vmem>>, vector<49x64xf32>,
    %c0_166 = arith.constant 0 : index
    %c0_167 = arith.constant 0 : index
    %564 = vector.load %arg21[%c0_166, %c0_167] : memref<49x64xf32, #tpu.memory_space<vmem>>, vector<49x64xf32>
    %c0_168 = arith.constant 0 : index
    %c0_169 = arith.constant 0 : index
    %565 = vector.load %arg8[%c0_168, %c0_169] : memref<64x8xf32, #tpu.memory_space<vmem>>, vector<64x8xf32>
    %c0_170 = arith.constant 0 : index
    %c0_171 = arith.constant 0 : index
    %566 = vector.load %arg9[%c0_170, %c0_171] : memref<64x49xf32, #tpu.memory_space<vmem>>, vector<64x49xf32>
    %c0_i32_172 = arith.constant 0 : i32
    %567 = arith.index_cast %c0_i32_172 : i32 to index
    %c0_173 = arith.constant 0 : index
    %568 = vector.load %arg19[%567, %c0_173] : memref<8x64xf32, #tpu.memory_space<vmem>>, vector<1x64xf32>
    %cst_174 = arith.constant dense<0.000000e+00> : vector<1x64xf32>
    %569 = tpu.matmul %555, %542, %cst_174 {dimension_numbers = #tpu.dot_dimension_numbers<[1], [0], [0], [1], [0, 0, 1, 1], [], []>} : vector<1x64xf32>, vector<64x64xf32>, vector<1x64xf32> -> vector<1x64xf32>
    %570 = math.tanh %569 : vector<1x64xf32>
    %571 = arith.mulf %568, %570 : vector<1x64xf32>
    %cst_175 = arith.constant dense<0.000000e+00> : vector<1x8xf32>
    %572 = tpu.matmul %571, %565, %cst_175 {dimension_numbers = #tpu.dot_dimension_numbers<[1], [0], [0], [1], [0, 0, 1, 1], [], []>} : vector<1x64xf32>, vector<64x8xf32>, vector<1x8xf32> -> vector<1x8xf32>
    %cst_176 = arith.constant dense<0xFF800000> : vector<1xf32>
    %573 = vector.multi_reduction <maximumf>, %572, %cst_176 [1] : vector<1x8xf32> to vector<1xf32>
    %574 = vector.shape_cast %573 : vector<1xf32> to vector<1x1xf32>
    %575 = vector.broadcast %574 : vector<1x1xf32> to vector<1x8xf32>
    %576 = arith.subf %572, %575 : vector<1x8xf32>
    %577 = math.exp %576 : vector<1x8xf32>
    %cst_177 = arith.constant dense<0.000000e+00> : vector<1xf32>
    %578 = vector.multi_reduction <add>, %577, %cst_177 [1] : vector<1x8xf32> to vector<1xf32>
    %579 = vector.shape_cast %578 : vector<1xf32> to vector<1x1xf32>
    %580 = vector.broadcast %579 : vector<1x1xf32> to vector<1x8xf32>
    %581 = arith.divf %577, %580 : vector<1x8xf32>
    %cst_178 = arith.constant dense<0.000000e+00> : vector<1x64xf32>
    %582 = tpu.matmul %581, %534, %cst_178 {dimension_numbers = #tpu.dot_dimension_numbers<[1], [0], [0], [1], [0, 0, 1, 1], [], []>} : vector<1x8xf32>, vector<8x64xf32>, vector<1x64xf32> -> vector<1x64xf32>
    %583 = arith.addf %555, %582 : vector<1x64xf32>
    %c1_i32_179 = arith.constant 1 : i32
    %584 = arith.index_cast %c1_i32_179 : i32 to index
    %c0_180 = arith.constant 0 : index
    %585 = vector.load %arg19[%584, %c0_180] : memref<8x64xf32, #tpu.memory_space<vmem>>, vector<1x64xf32>
    %cst_181 = arith.constant dense<0.000000e+00> : vector<1x64xf32>
    %586 = tpu.matmul %583, %542, %cst_181 {dimension_numbers = #tpu.dot_dimension_numbers<[1], [0], [0], [1], [0, 0, 1, 1], [], []>} : vector<1x64xf32>, vector<64x64xf32>, vector<1x64xf32> -> vector<1x64xf32>
    %587 = math.tanh %586 : vector<1x64xf32>
    %588 = arith.mulf %585, %587 : vector<1x64xf32>
    %cst_182 = arith.constant dense<0.000000e+00> : vector<1x8xf32>
    %589 = tpu.matmul %588, %565, %cst_182 {dimension_numbers = #tpu.dot_dimension_numbers<[1], [0], [0], [1], [0, 0, 1, 1], [], []>} : vector<1x64xf32>, vector<64x8xf32>, vector<1x8xf32> -> vector<1x8xf32>
    %cst_183 = arith.constant dense<0xFF800000> : vector<1xf32>
    %590 = vector.multi_reduction <maximumf>, %589, %cst_183 [1] : vector<1x8xf32> to vector<1xf32>
    %591 = vector.shape_cast %590 : vector<1xf32> to vector<1x1xf32>
    %592 = vector.broadcast %591 : vector<1x1xf32> to vector<1x8xf32>
    %593 = arith.subf %589, %592 : vector<1x8xf32>
    %594 = math.exp %593 : vector<1x8xf32>
    %cst_184 = arith.constant dense<0.000000e+00> : vector<1xf32>
    %595 = vector.multi_reduction <add>, %594, %cst_184 [1] : vector<1x8xf32> to vector<1xf32>
    %596 = vector.shape_cast %595 : vector<1xf32> to vector<1x1xf32>
    %597 = vector.broadcast %596 : vector<1x1xf32> to vector<1x8xf32>
    %598 = arith.divf %594, %597 : vector<1x8xf32>
    %cst_185 = arith.constant dense<0.000000e+00> : vector<1x64xf32>
    %599 = tpu.matmul %598, %534, %cst_185 {dimension_numbers = #tpu.dot_dimension_numbers<[1], [0], [0], [1], [0, 0, 1, 1], [], []>} : vector<1x8xf32>, vector<8x64xf32>, vector<1x64xf32> -> vector<1x64xf32>
    %600 = arith.addf %583, %599 : vector<1x64xf32>
    %c2_i32_186 = arith.constant 2 : i32
    %601 = arith.index_cast %c2_i32_186 : i32 to index
    %c0_187 = arith.constant 0 : index
    %602 = vector.load %arg19[%601, %c0_187] : memref<8x64xf32, #tpu.memory_space<vmem>>, vector<1x64xf32>
    %cst_188 = arith.constant dense<0.000000e+00> : vector<1x64xf32>
    %603 = tpu.matmul %600, %542, %cst_188 {dimension_numbers = #tpu.dot_dimension_numbers<[1], [0], [0], [1], [0, 0, 1, 1], [], []>} : vector<1x64xf32>, vector<64x64xf32>, vector<1x64xf32> -> vector<1x64xf32>
    %604 = math.tanh %603 : vector<1x64xf32>
    %605 = arith.mulf %602, %604 : vector<1x64xf32>
    %cst_189 = arith.constant dense<0.000000e+00> : vector<1x8xf32>
    %606 = tpu.matmul %605, %565, %cst_189 {dimension_numbers = #tpu.dot_dimension_numbers<[1], [0], [0], [1], [0, 0, 1, 1], [], []>} : vector<1x64xf32>, vector<64x8xf32>, vector<1x8xf32> -> vector<1x8xf32>
    %cst_190 = arith.constant dense<0xFF800000> : vector<1xf32>
    %607 = vector.multi_reduction <maximumf>, %606, %cst_190 [1] : vector<1x8xf32> to vector<1xf32>
    %608 = vector.shape_cast %607 : vector<1xf32> to vector<1x1xf32>
    %609 = vector.broadcast %608 : vector<1x1xf32> to vector<1x8xf32>
    %610 = arith.subf %606, %609 : vector<1x8xf32>
    %611 = math.exp %610 : vector<1x8xf32>
    %cst_191 = arith.constant dense<0.000000e+00> : vector<1xf32>
    %612 = vector.multi_reduction <add>, %611, %cst_191 [1] : vector<1x8xf32> to vector<1xf32>
    %613 = vector.shape_cast %612 : vector<1xf32> to vector<1x1xf32>
    %614 = vector.broadcast %613 : vector<1x1xf32> to vector<1x8xf32>
    %615 = arith.divf %611, %614 : vector<1x8xf32>
    %cst_192 = arith.constant dense<0.000000e+00> : vector<1x64xf32>
    %616 = tpu.matmul %615, %534, %cst_192 {dimension_numbers = #tpu.dot_dimension_numbers<[1], [0], [0], [1], [0, 0, 1, 1], [], []>} : vector<1x8xf32>, vector<8x64xf32>, vector<1x64xf32> -> vector<1x64xf32>
    %617 = arith.addf %600, %616 : vector<1x64xf32>
    %c3_i32_193 = arith.constant 3 : i32
    %618 = arith.index_cast %c3_i32_193 : i32 to index
    %c0_194 = arith.constant 0 : index
    %619 = vector.load %arg19[%618, %c0_194] : memref<8x64xf32, #tpu.memory_space<vmem>>, vector<1x64xf32>
    %cst_195 = arith.constant dense<0.000000e+00> : vector<1x64xf32>
    %620 = tpu.matmul %617, %542, %cst_195 {dimension_numbers = #tpu.dot_dimension_numbers<[1], [0], [0], [1], [0, 0, 1, 1], [], []>} : vector<1x64xf32>, vector<64x64xf32>, vector<1x64xf32> -> vector<1x64xf32>
    %621 = math.tanh %620 : vector<1x64xf32>
    %622 = arith.mulf %619, %621 : vector<1x64xf32>
    %cst_196 = arith.constant dense<0.000000e+00> : vector<1x8xf32>
    %623 = tpu.matmul %622, %565, %cst_196 {dimension_numbers = #tpu.dot_dimension_numbers<[1], [0], [0], [1], [0, 0, 1, 1], [], []>} : vector<1x64xf32>, vector<64x8xf32>, vector<1x8xf32> -> vector<1x8xf32>
    %cst_197 = arith.constant dense<0xFF800000> : vector<1xf32>
    %624 = vector.multi_reduction <maximumf>, %623, %cst_197 [1] : vector<1x8xf32> to vector<1xf32>
    %625 = vector.shape_cast %624 : vector<1xf32> to vector<1x1xf32>
    %626 = vector.broadcast %625 : vector<1x1xf32> to vector<1x8xf32>
    %627 = arith.subf %623, %626 : vector<1x8xf32>
    %628 = math.exp %627 : vector<1x8xf32>
    %cst_198 = arith.constant dense<0.000000e+00> : vector<1xf32>
    %629 = vector.multi_reduction <add>, %628, %cst_198 [1] : vector<1x8xf32> to vector<1xf32>
    %630 = vector.shape_cast %629 : vector<1xf32> to vector<1x1xf32>
    %631 = vector.broadcast %630 : vector<1x1xf32> to vector<1x8xf32>
    %632 = arith.divf %628, %631 : vector<1x8xf32>
    %cst_199 = arith.constant dense<0.000000e+00> : vector<1x64xf32>
    %633 = tpu.matmul %632, %534, %cst_199 {dimension_numbers = #tpu.dot_dimension_numbers<[1], [0], [0], [1], [0, 0, 1, 1], [], []>} : vector<1x8xf32>, vector<8x64xf32>, vector<1x64xf32> -> vector<1x64xf32>
    %634 = arith.addf %617, %633 : vector<1x64xf32>
    %c4_i32_200 = arith.constant 4 : i32
    %635 = arith.index_cast %c4_i32_200 : i32 to index
    %c0_201 = arith.constant 0 : index
    %636 = vector.load %arg19[%635, %c0_201] : memref<8x64xf32, #tpu.memory_space<vmem>>, vector<1x64xf32>
    %cst_202 = arith.constant dense<0.000000e+00> : vector<1x64xf32>
    %637 = tpu.matmul %634, %542, %cst_202 {dimension_numbers = #tpu.dot_dimension_numbers<[1], [0], [0], [1], [0, 0, 1, 1], [], []>} : vector<1x64xf32>, vector<64x64xf32>, vector<1x64xf32> -> vector<1x64xf32>
    %638 = math.tanh %637 : vector<1x64xf32>
    %639 = arith.mulf %636, %638 : vector<1x64xf32>
    %cst_203 = arith.constant dense<0.000000e+00> : vector<1x8xf32>
    %640 = tpu.matmul %639, %565, %cst_203 {dimension_numbers = #tpu.dot_dimension_numbers<[1], [0], [0], [1], [0, 0, 1, 1], [], []>} : vector<1x64xf32>, vector<64x8xf32>, vector<1x8xf32> -> vector<1x8xf32>
    %cst_204 = arith.constant dense<0xFF800000> : vector<1xf32>
    %641 = vector.multi_reduction <maximumf>, %640, %cst_204 [1] : vector<1x8xf32> to vector<1xf32>
    %642 = vector.shape_cast %641 : vector<1xf32> to vector<1x1xf32>
    %643 = vector.broadcast %642 : vector<1x1xf32> to vector<1x8xf32>
    %644 = arith.subf %640, %643 : vector<1x8xf32>
    %645 = math.exp %644 : vector<1x8xf32>
    %cst_205 = arith.constant dense<0.000000e+00> : vector<1xf32>
    %646 = vector.multi_reduction <add>, %645, %cst_205 [1] : vector<1x8xf32> to vector<1xf32>
    %647 = vector.shape_cast %646 : vector<1xf32> to vector<1x1xf32>
    %648 = vector.broadcast %647 : vector<1x1xf32> to vector<1x8xf32>
    %649 = arith.divf %645, %648 : vector<1x8xf32>
    %cst_206 = arith.constant dense<0.000000e+00> : vector<1x64xf32>
    %650 = tpu.matmul %649, %534, %cst_206 {dimension_numbers = #tpu.dot_dimension_numbers<[1], [0], [0], [1], [0, 0, 1, 1], [], []>} : vector<1x8xf32>, vector<8x64xf32>, vector<1x64xf32> -> vector<1x64xf32>
    %651 = arith.addf %634, %650 : vector<1x64xf32>
    %c5_i32_207 = arith.constant 5 : i32
    %652 = arith.index_cast %c5_i32_207 : i32 to index
    %c0_208 = arith.constant 0 : index
    %653 = vector.load %arg19[%652, %c0_208] : memref<8x64xf32, #tpu.memory_space<vmem>>, vector<1x64xf32>
    %cst_209 = arith.constant dense<0.000000e+00> : vector<1x64xf32>
    %654 = tpu.matmul %651, %542, %cst_209 {dimension_numbers = #tpu.dot_dimension_numbers<[1], [0], [0], [1], [0, 0, 1, 1], [], []>} : vector<1x64xf32>, vector<64x64xf32>, vector<1x64xf32> -> vector<1x64xf32>
    %655 = math.tanh %654 : vector<1x64xf32>
    %656 = arith.mulf %653, %655 : vector<1x64xf32>
    %cst_210 = arith.constant dense<0.000000e+00> : vector<1x8xf32>
    %657 = tpu.matmul %656, %565, %cst_210 {dimension_numbers = #tpu.dot_dimension_numbers<[1], [0], [0], [1], [0, 0, 1, 1], [], []>} : vector<1x64xf32>, vector<64x8xf32>, vector<1x8xf32> -> vector<1x8xf32>
    %cst_211 = arith.constant dense<0xFF800000> : vector<1xf32>
    %658 = vector.multi_reduction <maximumf>, %657, %cst_211 [1] : vector<1x8xf32> to vector<1xf32>
    %659 = vector.shape_cast %658 : vector<1xf32> to vector<1x1xf32>
    %660 = vector.broadcast %659 : vector<1x1xf32> to vector<1x8xf32>
    %661 = arith.subf %657, %660 : vector<1x8xf32>
    %662 = math.exp %661 : vector<1x8xf32>
    %cst_212 = arith.constant dense<0.000000e+00> : vector<1xf32>
    %663 = vector.multi_reduction <add>, %662, %cst_212 [1] : vector<1x8xf32> to vector<1xf32>
    %664 = vector.shape_cast %663 : vector<1xf32> to vector<1x1xf32>
    %665 = vector.broadcast %664 : vector<1x1xf32> to vector<1x8xf32>
    %666 = arith.divf %662, %665 : vector<1x8xf32>
    %cst_213 = arith.constant dense<0.000000e+00> : vector<1x64xf32>
    %667 = tpu.matmul %666, %534, %cst_213 {dimension_numbers = #tpu.dot_dimension_numbers<[1], [0], [0], [1], [0, 0, 1, 1], [], []>} : vector<1x8xf32>, vector<8x64xf32>, vector<1x64xf32> -> vector<1x64xf32>
    %668 = arith.addf %651, %667 : vector<1x64xf32>
    %c6_i32_214 = arith.constant 6 : i32
    %669 = arith.index_cast %c6_i32_214 : i32 to index
    %c0_215 = arith.constant 0 : index
    %670 = vector.load %arg19[%669, %c0_215] : memref<8x64xf32, #tpu.memory_space<vmem>>, vector<1x64xf32>
    %cst_216 = arith.constant dense<0.000000e+00> : vector<1x64xf32>
    %671 = tpu.matmul %668, %542, %cst_216 {dimension_numbers = #tpu.dot_dimension_numbers<[1], [0], [0], [1], [0, 0, 1, 1], [], []>} : vector<1x64xf32>, vector<64x64xf32>, vector<1x64xf32> -> vector<1x64xf32>
    %672 = math.tanh %671 : vector<1x64xf32>
    %673 = arith.mulf %670, %672 : vector<1x64xf32>
    %cst_217 = arith.constant dense<0.000000e+00> : vector<1x8xf32>
    %674 = tpu.matmul %673, %565, %cst_217 {dimension_numbers = #tpu.dot_dimension_numbers<[1], [0], [0], [1], [0, 0, 1, 1], [], []>} : vector<1x64xf32>, vector<64x8xf32>, vector<1x8xf32> -> vector<1x8xf32>
    %cst_218 = arith.constant dense<0xFF800000> : vector<1xf32>
    %675 = vector.multi_reduction <maximumf>, %674, %cst_218 [1] : vector<1x8xf32> to vector<1xf32>
    %676 = vector.shape_cast %675 : vector<1xf32> to vector<1x1xf32>
    %677 = vector.broadcast %676 : vector<1x1xf32> to vector<1x8xf32>
    %678 = arith.subf %674, %677 : vector<1x8xf32>
    %679 = math.exp %678 : vector<1x8xf32>
    %cst_219 = arith.constant dense<0.000000e+00> : vector<1xf32>
    %680 = vector.multi_reduction <add>, %679, %cst_219 [1] : vector<1x8xf32> to vector<1xf32>
    %681 = vector.shape_cast %680 : vector<1xf32> to vector<1x1xf32>
    %682 = vector.broadcast %681 : vector<1x1xf32> to vector<1x8xf32>
    %683 = arith.divf %679, %682 : vector<1x8xf32>
    %cst_220 = arith.constant dense<0.000000e+00> : vector<1x64xf32>
    %684 = tpu.matmul %683, %534, %cst_220 {dimension_numbers = #tpu.dot_dimension_numbers<[1], [0], [0], [1], [0, 0, 1, 1], [], []>} : vector<1x8xf32>, vector<8x64xf32>, vector<1x64xf32> -> vector<1x64xf32>
    %685 = arith.addf %668, %684 : vector<1x64xf32>
    %c7_i32_221 = arith.constant 7 : i32
    %686 = arith.index_cast %c7_i32_221 : i32 to index
    %c0_222 = arith.constant 0 : index
    %687 = vector.load %arg19[%686, %c0_222] : memref<8x64xf32, #tpu.memory_space<vmem>>, vector<1x64xf32>
    %cst_223 = arith.constant dense<0.000000e+00> : vector<1x64xf32>
    %688 = tpu.matmul %685, %542, %cst_223 {dimension_numbers = #tpu.dot_dimension_numbers<[1], [0], [0], [1], [0, 0, 1, 1], [], []>} : vector<1x64xf32>, vector<64x64xf32>, vector<1x64xf32> -> vector<1x64xf32>
    %689 = math.tanh %688 : vector<1x64xf32>
    %690 = arith.mulf %687, %689 : vector<1x64xf32>
    %cst_224 = arith.constant dense<0.000000e+00> : vector<1x8xf32>
    %691 = tpu.matmul %690, %565, %cst_224 {dimension_numbers = #tpu.dot_dimension_numbers<[1], [0], [0], [1], [0, 0, 1, 1], [], []>} : vector<1x64xf32>, vector<64x8xf32>, vector<1x8xf32> -> vector<1x8xf32>
    %cst_225 = arith.constant dense<0xFF800000> : vector<1xf32>
    %692 = vector.multi_reduction <maximumf>, %691, %cst_225 [1] : vector<1x8xf32> to vector<1xf32>
    %693 = vector.shape_cast %692 : vector<1xf32> to vector<1x1xf32>
    %694 = vector.broadcast %693 : vector<1x1xf32> to vector<1x8xf32>
    %695 = arith.subf %691, %694 : vector<1x8xf32>
    %696 = math.exp %695 : vector<1x8xf32>
    %cst_226 = arith.constant dense<0.000000e+00> : vector<1xf32>
    %697 = vector.multi_reduction <add>, %696, %cst_226 [1] : vector<1x8xf32> to vector<1xf32>
    %698 = vector.shape_cast %697 : vector<1xf32> to vector<1x1xf32>
    %699 = vector.broadcast %698 : vector<1x1xf32> to vector<1x8xf32>
    %700 = arith.divf %696, %699 : vector<1x8xf32>
    %cst_227 = arith.constant dense<0.000000e+00> : vector<1x64xf32>
    %701 = tpu.matmul %700, %534, %cst_227 {dimension_numbers = #tpu.dot_dimension_numbers<[1], [0], [0], [1], [0, 0, 1, 1], [], []>} : vector<1x8xf32>, vector<8x64xf32>, vector<1x64xf32> -> vector<1x64xf32>
    %702 = arith.addf %685, %701 : vector<1x64xf32>
    %c8_i32_228 = arith.constant 8 : i32
    %c0_i32_229 = arith.constant 0 : i32
    %c49_i32 = arith.constant 49 : i32
    %703 = arith.addi %c0_i32_229, %c49_i32 : i32
    %c1_i32_230 = arith.constant 1 : i32
    %704 = scf.for %arg24 = %c0_i32_229 to %703 step %c1_i32_230 iter_args(%arg25 = %555) -> (vector<1x64xf32>)  : i32 {
      %714 = arith.index_cast %arg24 : i32 to index
      %c0_242 = arith.constant 0 : index
      %715 = vector.load %arg20[%714, %c0_242] : memref<49x64xf32, #tpu.memory_space<vmem>>, vector<1x64xf32>
      %cst_243 = arith.constant dense<0.000000e+00> : vector<1x64xf32>
      %716 = tpu.matmul %arg25, %544, %cst_243 {dimension_numbers = #tpu.dot_dimension_numbers<[1], [0], [0], [1], [0, 0, 1, 1], [], []>} : vector<1x64xf32>, vector<64x64xf32>, vector<1x64xf32> -> vector<1x64xf32>
      %717 = math.tanh %716 : vector<1x64xf32>
      %718 = arith.mulf %715, %717 : vector<1x64xf32>
      %cst_244 = arith.constant dense<0.000000e+00> : vector<1x49xf32>
      %719 = tpu.matmul %718, %566, %cst_244 {dimension_numbers = #tpu.dot_dimension_numbers<[1], [0], [0], [1], [0, 0, 1, 1], [], []>} : vector<1x64xf32>, vector<64x49xf32>, vector<1x49xf32> -> vector<1x49xf32>
      %cst_245 = arith.constant dense<0xFF800000> : vector<1xf32>
      %720 = vector.multi_reduction <maximumf>, %719, %cst_245 [1] : vector<1x49xf32> to vector<1xf32>
      %721 = vector.shape_cast %720 : vector<1xf32> to vector<1x1xf32>
      %722 = vector.broadcast %721 : vector<1x1xf32> to vector<1x49xf32>
      %723 = arith.subf %719, %722 : vector<1x49xf32>
      %724 = math.exp %723 : vector<1x49xf32>
      %cst_246 = arith.constant dense<0.000000e+00> : vector<1xf32>
      %725 = vector.multi_reduction <add>, %724, %cst_246 [1] : vector<1x49xf32> to vector<1xf32>
      %726 = vector.shape_cast %725 : vector<1xf32> to vector<1x1xf32>
      %727 = vector.broadcast %726 : vector<1x1xf32> to vector<1x49xf32>
      %728 = arith.divf %724, %727 : vector<1x49xf32>
      %cst_247 = arith.constant dense<0.000000e+00> : vector<1x64xf32>
      %729 = tpu.matmul %728, %564, %cst_247 {dimension_numbers = #tpu.dot_dimension_numbers<[1], [0], [0], [1], [0, 0, 1, 1], [], []>} : vector<1x49xf32>, vector<49x64xf32>, vector<1x64xf32> -> vector<1x64xf32>
      %730 = math.tanh %729 : vector<1x64xf32>
      %731 = arith.addf %arg25, %730 : vector<1x64xf32>
      scf.yield %731 : vector<1x64xf32>
    }
    %c49_i32_231 = arith.constant 49 : i32
    %c0_232 = arith.constant 0 : index
    %c0_233 = arith.constant 0 : index
    %705 = vector.load %arg22[%c0_232, %c0_233] : memref<1x64xf32, #tpu.memory_space<vmem>>, vector<1x64xf32>
    %706 = arith.addf %705, %702 : vector<1x64xf32>
    %c0_234 = arith.constant 0 : index
    %c0_235 = arith.constant 0 : index
    %707 = vector.load %arg22[%c0_234, %c0_235] : memref<1x64xf32, #tpu.memory_space<vmem>>, vector<1x64xf32>
    tpu.vector_store %arg22[%c0_234, %c0_235], %706 {strides = array<i32>} : memref<1x64xf32, #tpu.memory_space<vmem>>, vector<1x64xf32>,
    %c0_236 = arith.constant 0 : index
    %c0_237 = arith.constant 0 : index
    %708 = vector.load %arg23[%c0_236, %c0_237] : memref<1x64xf32, #tpu.memory_space<vmem>>, vector<1x64xf32>
    %709 = arith.addf %708, %704 : vector<1x64xf32>
    %c0_238 = arith.constant 0 : index
    %c0_239 = arith.constant 0 : index
    %710 = vector.load %arg23[%c0_238, %c0_239] : memref<1x64xf32, #tpu.memory_space<vmem>>, vector<1x64xf32>
    tpu.vector_store %arg23[%c0_238, %c0_239], %709 {strides = array<i32>} : memref<1x64xf32, #tpu.memory_space<vmem>>, vector<1x64xf32>,
    %c2_i32_240 = arith.constant 2 : i32
    %711 = arith.cmpi eq, %arg0, %c2_i32_240 : i32
    %712 = arith.extui %711 : i1 to i32
    %c0_i32_241 = arith.constant 0 : i32
    %713 = arith.cmpi ne, %712, %c0_i32_241 : i32
    scf.if %713 {
      %c0_242 = arith.constant 0 : index
      %c0_243 = arith.constant 0 : index
      %714 = vector.load %arg22[%c0_242, %c0_243] : memref<1x64xf32, #tpu.memory_space<vmem>>, vector<1x64xf32>
      %cst_244 = arith.constant 0.333333343 : f32
      %715 = vector.broadcast %cst_244 : f32 to vector<1x64xf32>
      %716 = arith.mulf %714, %715 : vector<1x64xf32>
      %c0_245 = arith.constant 0 : index
      %c0_246 = arith.constant 0 : index
      %717 = vector.load %arg23[%c0_245, %c0_246] : memref<1x64xf32, #tpu.memory_space<vmem>>, vector<1x64xf32>
      %cst_247 = arith.constant 0.333333343 : f32
      %718 = vector.broadcast %cst_247 : f32 to vector<1x64xf32>
      %719 = arith.mulf %717, %718 : vector<1x64xf32>
      %c0_248 = arith.constant 0 : index
      %c0_249 = arith.constant 0 : index
      %720 = vector.load %arg10[%c0_248, %c0_249] : memref<128x64xf32, #tpu.memory_space<vmem>>, vector<64x64xf32>
      %cst_250 = arith.constant dense<0.000000e+00> : vector<1x64xf32>
      %721 = tpu.matmul %716, %720, %cst_250 {dimension_numbers = #tpu.dot_dimension_numbers<[1], [0], [0], [1], [0, 0, 1, 1], [], []>} : vector<1x64xf32>, vector<64x64xf32>, vector<1x64xf32> -> vector<1x64xf32>
      %c64 = arith.constant 64 : index
      %c0_251 = arith.constant 0 : index
      %722 = vector.load %arg10[%c64, %c0_251] : memref<128x64xf32, #tpu.memory_space<vmem>>, vector<64x64xf32>
      %cst_252 = arith.constant dense<0.000000e+00> : vector<1x64xf32>
      %723 = tpu.matmul %719, %722, %cst_252 {dimension_numbers = #tpu.dot_dimension_numbers<[1], [0], [0], [1], [0, 0, 1, 1], [], []>} : vector<1x64xf32>, vector<64x64xf32>, vector<1x64xf32> -> vector<1x64xf32>
      %724 = arith.addf %721, %723 : vector<1x64xf32>
      %c0_253 = arith.constant 0 : index
      %c0_254 = arith.constant 0 : index
      %725 = vector.load %arg11[%c0_253, %c0_254] : memref<1x64xf32, #tpu.memory_space<vmem>>, vector<1x64xf32>
      %726 = arith.addf %724, %725 : vector<1x64xf32>
      %cst_255 = arith.constant 0.000000e+00 : f32
      %727 = vector.broadcast %cst_255 : f32 to vector<1x64xf32>
      %728 = arith.maximumf %726, %727 : vector<1x64xf32>
      %c0_256 = arith.constant 0 : index
      %c0_257 = arith.constant 0 : index
      %729 = vector.load %arg12[%c0_256, %c0_257] : memref<64x2xf32, #tpu.memory_space<vmem>>, vector<64x2xf32>
      %cst_258 = arith.constant dense<0.000000e+00> : vector<1x2xf32>
      %730 = tpu.matmul %728, %729, %cst_258 {dimension_numbers = #tpu.dot_dimension_numbers<[1], [0], [0], [1], [0, 0, 1, 1], [], []>} : vector<1x64xf32>, vector<64x2xf32>, vector<1x2xf32> -> vector<1x2xf32>
      %c0_259 = arith.constant 0 : index
      %c0_260 = arith.constant 0 : index
      %731 = vector.load %arg13[%c0_259, %c0_260] : memref<1x2xf32, #tpu.memory_space<vmem>>, vector<1x2xf32>
      %732 = arith.addf %730, %731 : vector<1x2xf32>
      %c0_261 = arith.constant 0 : index
      %c0_262 = arith.constant 0 : index
      %733 = vector.load %arg14[%c0_261, %c0_262] : memref<1x2xf32, #tpu.memory_space<vmem>>, vector<1x2xf32>
      tpu.vector_store %arg14[%c0_261, %c0_262], %732 {strides = array<i32>} : memref<1x2xf32, #tpu.memory_space<vmem>>, vector<1x2xf32>,
    } else {
    }
    return
  }
  func.func @transform_0(%arg0: i32) -> (i32, i32, i32) {
    %c0_i32 = arith.constant 0 : i32
    %c0_i32_0 = arith.constant 0 : i32
    %c0_i32_1 = arith.constant 0 : i32
    return %arg0, %c0_i32, %c0_i32_0 : i32, i32, i32
  }
  func.func @transform_1(%arg0: i32) -> (i32, i32, i32) {
    %c0_i32 = arith.constant 0 : i32
    %c0_i32_0 = arith.constant 0 : i32
    %c0_i32_1 = arith.constant 0 : i32
    return %arg0, %c0_i32, %c0_i32_0 : i32, i32, i32
  }
  func.func @transform_2(%arg0: i32) -> (i32, i32, i32) {
    %c0_i32 = arith.constant 0 : i32
    %c0_i32_0 = arith.constant 0 : i32
    %c0_i32_1 = arith.constant 0 : i32
    %c0_i32_2 = arith.constant 0 : i32
    return %c0_i32, %c0_i32_0, %c0_i32_1 : i32, i32, i32
  }
  func.func @transform_3(%arg0: i32) -> (i32, i32, i32) {
    %c0_i32 = arith.constant 0 : i32
    %c0_i32_0 = arith.constant 0 : i32
    %c0_i32_1 = arith.constant 0 : i32
    %c0_i32_2 = arith.constant 0 : i32
    return %c0_i32, %c0_i32_0, %c0_i32_1 : i32, i32, i32
  }
  func.func @transform_4(%arg0: i32) -> (i32, i32, i32) {
    %c0_i32 = arith.constant 0 : i32
    %c0_i32_0 = arith.constant 0 : i32
    %c0_i32_1 = arith.constant 0 : i32
    %c0_i32_2 = arith.constant 0 : i32
    return %c0_i32, %c0_i32_0, %c0_i32_1 : i32, i32, i32
  }
  func.func @transform_5(%arg0: i32) -> (i32, i32, i32) {
    %c0_i32 = arith.constant 0 : i32
    %c0_i32_0 = arith.constant 0 : i32
    %c0_i32_1 = arith.constant 0 : i32
    %c0_i32_2 = arith.constant 0 : i32
    return %c0_i32, %c0_i32_0, %c0_i32_1 : i32, i32, i32
  }
  func.func @transform_6(%arg0: i32) -> (i32, i32, i32) {
    %c0_i32 = arith.constant 0 : i32
    %c0_i32_0 = arith.constant 0 : i32
    %c0_i32_1 = arith.constant 0 : i32
    %c0_i32_2 = arith.constant 0 : i32
    return %c0_i32, %c0_i32_0, %c0_i32_1 : i32, i32, i32
  }
  func.func @transform_7(%arg0: i32) -> (i32, i32) {
    %c0_i32 = arith.constant 0 : i32
    %c0_i32_0 = arith.constant 0 : i32
    %c0_i32_1 = arith.constant 0 : i32
    return %c0_i32, %c0_i32_0 : i32, i32
  }
  func.func @transform_8(%arg0: i32) -> (i32, i32) {
    %c0_i32 = arith.constant 0 : i32
    %c0_i32_0 = arith.constant 0 : i32
    %c0_i32_1 = arith.constant 0 : i32
    return %c0_i32, %c0_i32_0 : i32, i32
  }
  func.func @transform_9(%arg0: i32) -> (i32, i32) {
    %c0_i32 = arith.constant 0 : i32
    %c0_i32_0 = arith.constant 0 : i32
    %c0_i32_1 = arith.constant 0 : i32
    return %c0_i32, %c0_i32_0 : i32, i32
  }
  func.func @transform_10(%arg0: i32) -> (i32, i32) {
    %c0_i32 = arith.constant 0 : i32
    %c0_i32_0 = arith.constant 0 : i32
    %c0_i32_1 = arith.constant 0 : i32
    return %c0_i32, %c0_i32_0 : i32, i32
  }
  func.func @transform_11(%arg0: i32) -> (i32, i32) {
    %c0_i32 = arith.constant 0 : i32
    %c0_i32_0 = arith.constant 0 : i32
    %c0_i32_1 = arith.constant 0 : i32
    return %c0_i32, %c0_i32_0 : i32, i32
  }
  func.func @transform_12(%arg0: i32) -> (i32, i32) {
    %c0_i32 = arith.constant 0 : i32
    %c0_i32_0 = arith.constant 0 : i32
    %c0_i32_1 = arith.constant 0 : i32
    return %c0_i32, %c0_i32_0 : i32, i32
  }
  func.func @transform_13(%arg0: i32) -> (i32, i32) {
    %c0_i32 = arith.constant 0 : i32
    %c0_i32_0 = arith.constant 0 : i32
    %c0_i32_1 = arith.constant 0 : i32
    return %c0_i32, %c0_i32_0 : i32, i32
  }
}

</mosaic_0001>

<llo_original>
// kernel: tpu_custom_call.1
$region0: #{tpu_custom_call.1}
  #allocation0 [shape = 'u32[]', space=smem, size = 0x4, offset = 0x4, fixed_abs, tag = 'smem constant byte address 0x4 - core index']
  #allocation1 [shape = 'u32[144,128]{1,0:T(1,128)}', space=vmem, size = 0x12000, scoped, tag = 'internal scratch']
  #allocation2 [shape = 'f32[8,128]{1,0:T(8,128)}', space=vmem, size = 0x1000, scoped, tag = 'scratch operand']
  #allocation3 [shape = 'f32[8,128]{1,0:T(8,128)}', space=vmem, size = 0x1000, scoped, tag = 'scratch operand']
  #allocation4 [shape = 'f32[8,32]{1,0:T(8,128)}', space=vmem, size = 0x1000, scoped, tag = 'scratch operand']
  #allocation5 [shape = 'f32[8,32]{1,0:T(8,128)}', space=vmem, size = 0x1000, scoped, tag = 'scratch operand']
  #allocation6 [shape = 'f32[8,64]{1,0:T(8,128)}', space=vmem, size = 0x1000, scoped, tag = 'scratch operand']
  #allocation7 [shape = 'f32[49,64]{1,0:T(8,128)}', space=vmem, size = 0x7000, scoped, tag = 'scratch operand']
  #allocation8 [shape = 'f32[49,64]{1,0:T(8,128)}', space=vmem, size = 0x7000, scoped, tag = 'scratch operand']
  #allocation9 [shape = 'f32[1,64]{1,0:T(1,128)}', space=vmem, size = 0x200, scoped, tag = 'scratch operand']
  #allocation10 [shape = 'f32[1,64]{1,0:T(1,128)}', space=vmem, size = 0x200, scoped, tag = 'scratch operand']
  %s0 = inlined_call_operand.vmem [shape: f32[3,8,64], index: 0, kind: input, shape index: {}]
  %s1 = inlined_call_operand.vmem [shape: f32[3,49,512], index: 1, kind: input, shape index: {}]
  %s2 = inlined_call_operand.vmem [shape: f32[2,64,128], index: 2, kind: input, shape index: {}]
  %s3 = inlined_call_operand.vmem [shape: f32[2,32,128], index: 3, kind: input, shape index: {}]
  %s4 = inlined_call_operand.vmem [shape: f32[2,1,128], index: 4, kind: input, shape index: {}]
  %s5 = inlined_call_operand.vmem [shape: f32[3,64,64], index: 5, kind: input, shape index: {}]
  %s6 = inlined_call_operand.vmem [shape: f32[2,512,64], index: 6, kind: input, shape index: {}]
  %s7 = inlined_call_operand.vmem [shape: f32[64,8], index: 7, kind: input, shape index: {}]
  %s8 = inlined_call_operand.vmem [shape: f32[64,49], index: 8, kind: input, shape index: {}]
  %s9 = inlined_call_operand.vmem [shape: f32[128,64], index: 9, kind: input, shape index: {}]
  %s10 = inlined_call_operand.vmem [shape: f32[1,64], index: 10, kind: input, shape index: {}]
  %s11 = inlined_call_operand.vmem [shape: f32[64,2], index: 11, kind: input, shape index: {}]
  %s12 = inlined_call_operand.vmem [shape: f32[1,2], index: 12, kind: input, shape index: {}]
  %s13 = inlined_call_operand.hbm [shape: f32[1,2], index: 13, kind: output, shape index: {}]
  %s14 = sld [smem:[#allocation0]]
  $region100: #{tpu_custom_call.1} parent=0
    _
  %s16 = ssub.s32 1, %s14
  %s17 = scalar_select 0, %s16, %s14
  $region1: #{tpu_custom_call.1} parent=0
    #allocation11 [shape = 'u8[512]{0}', space=vmem, size = 0x400, scoped, tag = 'output window, operand 0, single buffered']
    #allocation12 [shape = 's32[2]{0}', space=sflag, size = 0x8, scoped, tag = 'scoped memory for tpu_custom_call.1']
    %18 = vsyncpa [#allocation12], 0
    loop: start=0, step=1, limit=5
    $region2: #{tpu_custom_call.1} parent=1 // loop_pre_header
      _
    $region3: #{tpu_custom_call.1} parent=1 // loop_header
      %s20 = sphi 0, %s24
      %p21 = scmp.ge.s32.totalorder %s20, 5
      %s30 = sphi 0, %s32
      %s33 = sphi 0, %s30
      %s34 = sphi 0, %s33
      %s50 = sphi 0, %s34
      %s56 = sphi 0, %s58
      %s59 = sphi 0, %s56
      %s60 = sphi 0, %s59
      %s76 = sphi 0, %s60
      %s80 = sphi 0, %s80
      %s82 = sphi 0, %s80
      %s83 = sphi 0, %s82
      %s97 = sphi 0, %s83
      %s101 = sphi 0, %s101
      %s103 = sphi 0, %s101
      %s104 = sphi 0, %s103
      %s118 = sphi 0, %s104
      %s122 = sphi 0, %s122
      %s124 = sphi 0, %s122
      %s125 = sphi 0, %s124
      %s139 = sphi 0, %s125
      %s143 = sphi 0, %s143
      %s145 = sphi 0, %s143
      %s146 = sphi 0, %s145
      %s160 = sphi 0, %s146
      %s164 = sphi 0, %s164
      %s166 = sphi 0, %s164
      %s167 = sphi 0, %s166
      %s181 = sphi 0, %s167
      %s185 = sphi 0, %s185
      %s187 = sphi 0, %s185
      %s188 = sphi 0, %s187
      %s202 = sphi 0, %s188
      %s206 = sphi 0, %s206
      %s208 = sphi 0, %s206
      %s209 = sphi 0, %s208
      %s223 = sphi 0, %s209
      %s227 = sphi 0, %s227
      %s229 = sphi 0, %s227
      %s230 = sphi 0, %s229
      %s244 = sphi 0, %s230
      %s248 = sphi 0, %s248
      %s250 = sphi 0, %s248
      %s251 = sphi 0, %s250
      %s265 = sphi 0, %s251
      %s269 = sphi 0, %s269
      %s271 = sphi 0, %s269
      %s272 = sphi 0, %s271
      %s286 = sphi 0, %s272
      %s290 = sphi 0, %s290
      %s292 = sphi 0, %s290
      %s293 = sphi 0, %s292
      %s307 = sphi 0, %s293
      %s311 = sphi 0, %s311
      %s313 = sphi 0, %s311
      %s314 = sphi 0, %s313
      %s328 = sphi 0, %s314
    $region4: #{tpu_custom_call.1} parent=1 // loop_header_branch
      %23 = sbr.rel (%p21) target = $region8
    $region5: #{tpu_custom_call.1} parent=1 // loop_body
      %s25 = ssub.s32 %s20, 1
      %s26 = ssub.s32 %s20, 2
      %s27 = sadd.s32 %s20, 1
      %s28 = ssub.s32 %s20, %s27
      %p29 = scmp.eq.s32.totalorder %s28, 0
      %s31 = sadd.s32 %s30, 1
      %s32 = scalar_select %p29, %s30, %s31
      %p35 = pneg %p29
      %p36 = scmp.eq.s32.totalorder %s20, 2
      %p37 = por %p35, %p36
      %p38 = scmp.ne.s32.totalorder %s30, %s33
      %p39 = scmp.eq.s32.totalorder %s20, 0
      %p40 = por %p38, %p39
      %p41 = scmp.ne.s32.totalorder %s30, %s33
      %p42 = scmp.eq.s32.totalorder %s25, 2
      %p43 = por %p41, %p42
      %p44 = scmp.ne.s32.totalorder %s33, %s34
      %p45 = scmp.eq.s32.totalorder %s25, 0
      %p46 = por %p44, %p45
      %p47 = scmp.ne.s32.totalorder %s33, %s34
      %p48 = scmp.eq.s32.totalorder %s26, 2
      %p49 = por %p47, %p48
      %p51 = scmp.ne.s32.totalorder %s34, %s50
      %p52 = scmp.eq.s32.totalorder %s26, 0
      %p53 = por %p51, %p52
      %s54 = ssub.s32 %s20, %s27
      %p55 = scmp.eq.s32.totalorder %s54, 0
      %s57 = sadd.s32 %s56, 1
      %s58 = scalar_select %p55, %s56, %s57
      %p61 = pneg %p55
      %p62 = scmp.eq.s32.totalorder %s20, 2
      %p63 = por %p61, %p62
      %p64 = scmp.ne.s32.totalorder %s56, %s59
      %p65 = scmp.eq.s32.totalorder %s20, 0
      %p66 = por %p64, %p65
      %p67 = scmp.ne.s32.totalorder %s56, %s59
      %p68 = scmp.eq.s32.totalorder %s25, 2
      %p69 = por %p67, %p68
      %p70 = scmp.ne.s32.totalorder %s59, %s60
      %p71 = scmp.eq.s32.totalorder %s25, 0
      %p72 = por %p70, %p71
      %p73 = scmp.ne.s32.totalorder %s59, %s60
      %p74 = scmp.eq.s32.totalorder %s26, 2
      %p75 = por %p73, %p74
      %p77 = scmp.ne.s32.totalorder %s60, %s76
      %p78 = scmp.eq.s32.totalorder %s26, 0
      %p79 = por %p77, %p78
      %s81 = sadd.s32 %s80, 1
      %p84 = scmp.eq.s32.totalorder %s20, 2
      %p85 = scmp.ne.s32.totalorder %s80, %s82
      %p86 = scmp.eq.s32.totalorder %s20, 0
      %p87 = por %p85, %p86
      %p88 = scmp.ne.s32.totalorder %s80, %s82
      %p89 = scmp.eq.s32.totalorder %s25, 2
      %p90 = por %p88, %p89
      %p91 = scmp.ne.s32.totalorder %s82, %s83
      %p92 = scmp.eq.s32.totalorder %s25, 0
      %p93 = por %p91, %p92
      %p94 = scmp.ne.s32.totalorder %s82, %s83
      %p95 = scmp.eq.s32.totalorder %s26, 2
      %p96 = por %p94, %p95
      %p98 = scmp.ne.s32.totalorder %s83, %s97
      %p99 = scmp.eq.s32.totalorder %s26, 0
      %p100 = por %p98, %p99
      %s102 = sadd.s32 %s101, 1
      %p105 = scmp.eq.s32.totalorder %s20, 2
      %p106 = scmp.ne.s32.totalorder %s101, %s103
      %p107 = scmp.eq.s32.totalorder %s20, 0
      %p108 = por %p106, %p107
      %p109 = scmp.ne.s32.totalorder %s101, %s103
      %p110 = scmp.eq.s32.totalorder %s25, 2
      %p111 = por %p109, %p110
      %p112 = scmp.ne.s32.totalorder %s103, %s104
      %p113 = scmp.eq.s32.totalorder %s25, 0
      %p114 = por %p112, %p113
      %p115 = scmp.ne.s32.totalorder %s103, %s104
      %p116 = scmp.eq.s32.totalorder %s26, 2
      %p117 = por %p115, %p116
      %p119 = scmp.ne.s32.totalorder %s104, %s118
      %p120 = scmp.eq.s32.totalorder %s26, 0
      %p121 = por %p119, %p120
      %s123 = sadd.s32 %s122, 1
      %p126 = scmp.eq.s32.totalorder %s20, 2
      %p127 = scmp.ne.s32.totalorder %s122, %s124
      %p128 = scmp.eq.s32.totalorder %s20, 0
      %p129 = por %p127, %p128
      %p130 = scmp.ne.s32.totalorder %s122, %s124
      %p131 = scmp.eq.s32.totalorder %s25, 2
      %p132 = por %p130, %p131
      %p133 = scmp.ne.s32.totalorder %s124, %s125
      %p134 = scmp.eq.s32.totalorder %s25, 0
      %p135 = por %p133, %p134
      %p136 = scmp.ne.s32.totalorder %s124, %s125
      %p137 = scmp.eq.s32.totalorder %s26, 2
      %p138 = por %p136, %p137
      %p140 = scmp.ne.s32.totalorder %s125, %s139
      %p141 = scmp.eq.s32.totalorder %s26, 0
      %p142 = por %p140, %p141
      %s144 = sadd.s32 %s143, 1
      %p147 = scmp.eq.s32.totalorder %s20, 2
      %p148 = scmp.ne.s32.totalorder %s143, %s145
      %p149 = scmp.eq.s32.totalorder %s20, 0
      %p150 = por %p148, %p149
      %p151 = scmp.ne.s32.totalorder %s143, %s145
      %p152 = scmp.eq.s32.totalorder %s25, 2
      %p153 = por %p151, %p152
      %p154 = scmp.ne.s32.totalorder %s145, %s146
      %p155 = scmp.eq.s32.totalorder %s25, 0
      %p156 = por %p154, %p155
      %p157 = scmp.ne.s32.totalorder %s145, %s146
      %p158 = scmp.eq.s32.totalorder %s26, 2
      %p159 = por %p157, %p158
      %p161 = scmp.ne.s32.totalorder %s146, %s160
      %p162 = scmp.eq.s32.totalorder %s26, 0
      %p163 = por %p161, %p162
      %s165 = sadd.s32 %s164, 1
      %p168 = scmp.eq.s32.totalorder %s20, 2
      %p169 = scmp.ne.s32.totalorder %s164, %s166
      %p170 = scmp.eq.s32.totalorder %s20, 0
      %p171 = por %p169, %p170
      %p172 = scmp.ne.s32.totalorder %s164, %s166
      %p173 = scmp.eq.s32.totalorder %s25, 2
      %p174 = por %p172, %p173
      %p175 = scmp.ne.s32.totalorder %s166, %s167
      %p176 = scmp.eq.s32.totalorder %s25, 0
      %p177 = por %p175, %p176
      %p178 = scmp.ne.s32.totalorder %s166, %s167
      %p179 = scmp.eq.s32.totalorder %s26, 2
      %p180 = por %p178, %p179
      %p182 = scmp.ne.s32.totalorder %s167, %s181
      %p183 = scmp.eq.s32.totalorder %s26, 0
      %p184 = por %p182, %p183
      %s186 = sadd.s32 %s185, 1
      %p189 = scmp.eq.s32.totalorder %s20, 2
      %p190 = scmp.ne.s32.totalorder %s185, %s187
      %p191 = scmp.eq.s32.totalorder %s20, 0
      %p192 = por %p190, %p191
      %p193 = scmp.ne.s32.totalorder %s185, %s187
      %p194 = scmp.eq.s32.totalorder %s25, 2
      %p195 = por %p193, %p194
      %p196 = scmp.ne.s32.totalorder %s187, %s188
      %p197 = scmp.eq.s32.totalorder %s25, 0
      %p198 = por %p196, %p197
      %p199 = scmp.ne.s32.totalorder %s187, %s188
      %p200 = scmp.eq.s32.totalorder %s26, 2
      %p201 = por %p199, %p200
      %p203 = scmp.ne.s32.totalorder %s188, %s202
      %p204 = scmp.eq.s32.totalorder %s26, 0
      %p205 = por %p203, %p204
      %s207 = sadd.s32 %s206, 1
      %p210 = scmp.eq.s32.totalorder %s20, 2
      %p211 = scmp.ne.s32.totalorder %s206, %s208
      %p212 = scmp.eq.s32.totalorder %s20, 0
      %p213 = por %p211, %p212
      %p214 = scmp.ne.s32.totalorder %s206, %s208
      %p215 = scmp.eq.s32.totalorder %s25, 2
      %p216 = por %p214, %p215
      %p217 = scmp.ne.s32.totalorder %s208, %s209
      %p218 = scmp.eq.s32.totalorder %s25, 0
      %p219 = por %p217, %p218
      %p220 = scmp.ne.s32.totalorder %s208, %s209
      %p221 = scmp.eq.s32.totalorder %s26, 2
      %p222 = por %p220, %p221
      %p224 = scmp.ne.s32.totalorder %s209, %s223
      %p225 = scmp.eq.s32.totalorder %s26, 0
      %p226 = por %p224, %p225
      %s228 = sadd.s32 %s227, 1
      %p231 = scmp.eq.s32.totalorder %s20, 2
      %p232 = scmp.ne.s32.totalorder %s227, %s229
      %p233 = scmp.eq.s32.totalorder %s20, 0
      %p234 = por %p232, %p233
      %p235 = scmp.ne.s32.totalorder %s227, %s229
      %p236 = scmp.eq.s32.totalorder %s25, 2
      %p237 = por %p235, %p236
      %p238 = scmp.ne.s32.totalorder %s229, %s230
      %p239 = scmp.eq.s32.totalorder %s25, 0
      %p240 = por %p238, %p239
      %p241 = scmp.ne.s32.totalorder %s229, %s230
      %p242 = scmp.eq.s32.totalorder %s26, 2
      %p243 = por %p241, %p242
      %p245 = scmp.ne.s32.totalorder %s230, %s244
      %p246 = scmp.eq.s32.totalorder %s26, 0
      %p247 = por %p245, %p246
      %s249 = sadd.s32 %s248, 1
      %p252 = scmp.eq.s32.totalorder %s20, 2
      %p253 = scmp.ne.s32.totalorder %s248, %s250
      %p254 = scmp.eq.s32.totalorder %s20, 0
      %p255 = por %p253, %p254
      %p256 = scmp.ne.s32.totalorder %s248, %s250
      %p257 = scmp.eq.s32.totalorder %s25, 2
      %p258 = por %p256, %p257
      %p259 = scmp.ne.s32.totalorder %s250, %s251
      %p260 = scmp.eq.s32.totalorder %s25, 0
      %p261 = por %p259, %p260
      %p262 = scmp.ne.s32.totalorder %s250, %s251
      %p263 = scmp.eq.s32.totalorder %s26, 2
      %p264 = por %p262, %p263
      %p266 = scmp.ne.s32.totalorder %s251, %s265
      %p267 = scmp.eq.s32.totalorder %s26, 0
      %p268 = por %p266, %p267
      %s270 = sadd.s32 %s269, 1
      %p273 = scmp.eq.s32.totalorder %s20, 2
      %p274 = scmp.ne.s32.totalorder %s269, %s271
      %p275 = scmp.eq.s32.totalorder %s20, 0
      %p276 = por %p274, %p275
      %p277 = scmp.ne.s32.totalorder %s269, %s271
      %p278 = scmp.eq.s32.totalorder %s25, 2
      %p279 = por %p277, %p278
      %p280 = scmp.ne.s32.totalorder %s271, %s272
      %p281 = scmp.eq.s32.totalorder %s25, 0
      %p282 = por %p280, %p281
      %p283 = scmp.ne.s32.totalorder %s271, %s272
      %p284 = scmp.eq.s32.totalorder %s26, 2
      %p285 = por %p283, %p284
      %p287 = scmp.ne.s32.totalorder %s272, %s286
      %p288 = scmp.eq.s32.totalorder %s26, 0
      %p289 = por %p287, %p288
      %s291 = sadd.s32 %s290, 1
      %p294 = scmp.eq.s32.totalorder %s20, 2
      %p295 = scmp.ne.s32.totalorder %s290, %s292
      %p296 = scmp.eq.s32.totalorder %s20, 0
      %p297 = por %p295, %p296
      %p298 = scmp.ne.s32.totalorder %s290, %s292
      %p299 = scmp.eq.s32.totalorder %s25, 2
      %p300 = por %p298, %p299
      %p301 = scmp.ne.s32.totalorder %s292, %s293
      %p302 = scmp.eq.s32.totalorder %s25, 0
      %p303 = por %p301, %p302
      %p304 = scmp.ne.s32.totalorder %s292, %s293
      %p305 = scmp.eq.s32.totalorder %s26, 2
      %p306 = por %p304, %p305
      %p308 = scmp.ne.s32.totalorder %s293, %s307
      %p309 = scmp.eq.s32.totalorder %s26, 0
      %p310 = por %p308, %p309
      %s312 = sadd.s32 %s311, 1
      %p315 = scmp.eq.s32.totalorder %s20, 2
      %p316 = scmp.ne.s32.totalorder %s311, %s313
      %p317 = scmp.eq.s32.totalorder %s20, 0
      %p318 = por %p316, %p317
      %p319 = scmp.ne.s32.totalorder %s311, %s313
      %p320 = scmp.eq.s32.totalorder %s25, 2
      %p321 = por %p319, %p320
      %p322 = scmp.ne.s32.totalorder %s313, %s314
      %p323 = scmp.eq.s32.totalorder %s25, 0
      %p324 = por %p322, %p323
      %p325 = scmp.ne.s32.totalorder %s313, %s314
      %p326 = scmp.eq.s32.totalorder %s26, 2
      %p327 = por %p325, %p326
      %p329 = scmp.ne.s32.totalorder %s314, %s328
      %p330 = scmp.eq.s32.totalorder %s26, 0
      %p331 = por %p329, %p330
      %p332 = scmp.le.s32.totalorder 1, %s20
      %p333 = scmp.lt.s32.totalorder %s20, 4
      %p334 = pnand %p332, %p333
      %p335 = pneg %p334
      // Predicated region
      $region9: #{tpu_custom_call.1} parent=5 // pred_check
        _
      $region10: #{tpu_custom_call.1} parent=5 // pred_check_branch
        %337 = sbr.rel (%p334) target = $region12
      $region11: #{tpu_custom_call.1} parent=5 // pred_region
        %s338 = ssub.s32 %s20, 1
        // Predicated region
        $region13: #{tpu_custom_call.1} parent=11 // pred_check
          %p339 = pneg %p93
        $region14: #{tpu_custom_call.1} parent=11 // pred_check_branch
          %341 = sbr.rel (%p339) target = $region16
        $region15: #{tpu_custom_call.1} parent=11 // pred_region
          _
        $region16: #{tpu_custom_call.1} parent=11 // pred_fallthru
          _
        // Predicated region
        $region17: #{tpu_custom_call.1} parent=11 // pred_check
          %p342 = pneg %p114
        $region18: #{tpu_custom_call.1} parent=11 // pred_check_branch
          %344 = sbr.rel (%p342) target = $region20
        $region19: #{tpu_custom_call.1} parent=11 // pred_region
          _
        $region20: #{tpu_custom_call.1} parent=11 // pred_fallthru
          _
        // Predicated region
        $region21: #{tpu_custom_call.1} parent=11 // pred_check
          %p345 = pneg %p135
        $region22: #{tpu_custom_call.1} parent=11 // pred_check_branch
          %347 = sbr.rel (%p345) target = $region24
        $region23: #{tpu_custom_call.1} parent=11 // pred_region
          _
        $region24: #{tpu_custom_call.1} parent=11 // pred_fallthru
          _
        // Predicated region
        $region25: #{tpu_custom_call.1} parent=11 // pred_check
          %p348 = pneg %p156
        $region26: #{tpu_custom_call.1} parent=11 // pred_check_branch
          %350 = sbr.rel (%p348) target = $region28
        $region27: #{tpu_custom_call.1} parent=11 // pred_region
          _
        $region28: #{tpu_custom_call.1} parent=11 // pred_fallthru
          _
        // Predicated region
        $region29: #{tpu_custom_call.1} parent=11 // pred_check
          %p351 = pneg %p177
        $region30: #{tpu_custom_call.1} parent=11 // pred_check_branch
          %353 = sbr.rel (%p351) target = $region32
        $region31: #{tpu_custom_call.1} parent=11 // pred_region
          _
        $region32: #{tpu_custom_call.1} parent=11 // pred_fallthru
          _
        // Predicated region
        $region33: #{tpu_custom_call.1} parent=11 // pred_check
          %p354 = pneg %p198
        $region34: #{tpu_custom_call.1} parent=11 // pred_check_branch
          %356 = sbr.rel (%p354) target = $region36
        $region35: #{tpu_custom_call.1} parent=11 // pred_region
          _
        $region36: #{tpu_custom_call.1} parent=11 // pred_fallthru
          _
        // Predicated region
        $region37: #{tpu_custom_call.1} parent=11 // pred_check
          %p357 = pneg %p219
        $region38: #{tpu_custom_call.1} parent=11 // pred_check_branch
          %359 = sbr.rel (%p357) target = $region40
        $region39: #{tpu_custom_call.1} parent=11 // pred_region
          _
        $region40: #{tpu_custom_call.1} parent=11 // pred_fallthru
          _
        // Predicated region
        $region41: #{tpu_custom_call.1} parent=11 // pred_check
          %p360 = pneg %p240
        $region42: #{tpu_custom_call.1} parent=11 // pred_check_branch
          %362 = sbr.rel (%p360) target = $region44
        $region43: #{tpu_custom_call.1} parent=11 // pred_region
          _
        $region44: #{tpu_custom_call.1} parent=11 // pred_fallthru
          _
        // Predicated region
        $region45: #{tpu_custom_call.1} parent=11 // pred_check
          %p363 = pneg %p261
        $region46: #{tpu_custom_call.1} parent=11 // pred_check_branch
          %365 = sbr.rel (%p363) target = $region48
        $region47: #{tpu_custom_call.1} parent=11 // pred_region
          _
        $region48: #{tpu_custom_call.1} parent=11 // pred_fallthru
          _
        // Predicated region
        $region49: #{tpu_custom_call.1} parent=11 // pred_check
          %p366 = pneg %p282
        $region50: #{tpu_custom_call.1} parent=11 // pred_check_branch
          %368 = sbr.rel (%p366) target = $region52
        $region51: #{tpu_custom_call.1} parent=11 // pred_region
          _
        $region52: #{tpu_custom_call.1} parent=11 // pred_fallthru
          _
        // Predicated region
        $region53: #{tpu_custom_call.1} parent=11 // pred_check
          %p369 = pneg %p303
        $region54: #{tpu_custom_call.1} parent=11 // pred_check_branch
          %371 = sbr.rel (%p369) target = $region56
        $region55: #{tpu_custom_call.1} parent=11 // pred_region
          _
        $region56: #{tpu_custom_call.1} parent=11 // pred_fallthru
          _
      $region12: #{tpu_custom_call.1} parent=5 // pred_fallthru
        _
      %p372 = scmp.lt.s32.totalorder %s20, 3
      // Predicated region
      $region57: #{tpu_custom_call.1} parent=5 // pred_check
        %p373 = pneg %p372
      $region58: #{tpu_custom_call.1} parent=5 // pred_check_branch
        %375 = sbr.rel (%p373) target = $region60
      $region59: #{tpu_custom_call.1} parent=5 // pred_region
        // Predicated region
        $region61: #{tpu_custom_call.1} parent=59 // pred_check
          %p376 = pneg %p40
        $region62: #{tpu_custom_call.1} parent=59 // pred_check_branch
          %378 = sbr.rel (%p376) target = $region64
        $region63: #{tpu_custom_call.1} parent=59 // pred_region
          %p379 = scmp.lt.s32.totalorder %s20, 2
          %s380 = scalar_select %p379, %s20, 2
          %s381 = smul.addr %s380, 8
          %s382 = scalar_lea.vmem %s0, %s381
        $region64: #{tpu_custom_call.1} parent=59 // pred_fallthru
          _
        // Predicated region
        $region65: #{tpu_custom_call.1} parent=59 // pred_check
          %p383 = pneg %p66
        $region66: #{tpu_custom_call.1} parent=59 // pred_check_branch
          %385 = sbr.rel (%p383) target = $region68
        $region67: #{tpu_custom_call.1} parent=59 // pred_region
          %p386 = scmp.lt.s32.totalorder %s20, 2
          %s387 = scalar_select %p386, %s20, 2
          %s388 = smul.addr %s387, 28
          %s389 = smul.addr %s388, 8
          %s390 = scalar_lea.vmem %s1, %s389
        $region68: #{tpu_custom_call.1} parent=59 // pred_fallthru
          _
      $region60: #{tpu_custom_call.1} parent=5 // pred_fallthru
        _
      %p391 = scmp.le.s32.totalorder 1, %s20
      %p392 = scmp.lt.s32.totalorder %s20, 4
      %p393 = pnand %p391, %p392
      %p394 = pneg %p393
      // Predicated region
      $region69: #{tpu_custom_call.1} parent=5 // pred_check
        _
      $region70: #{tpu_custom_call.1} parent=5 // pred_check_branch
        %396 = sbr.rel (%p393) target = $region72
      $region71: #{tpu_custom_call.1} parent=5 // pred_region
        %s397 = ssub.s32 %s20, 1
        %p398 = scmp.lt.s32.totalorder %s25, 2
        %s399 = scalar_select %p398, %s25, 2
        %s400 = smul.addr %s399, 8
        %s401 = scalar_lea.vmem %s0, %s400
        %p402 = pneg %p46
        %p403 = pneg %p43
        %p404 = scmp.lt.s32.totalorder %s25, 2
        %s405 = scalar_select %p404, %s25, 2
        %s406 = smul.addr %s405, 28
        %s407 = smul.addr %s406, 8
        %s408 = scalar_lea.vmem %s1, %s407
        %p409 = pneg %p72
        %p410 = pneg %p69
        %p411 = pneg %p93
        %p412 = pneg %p90
        %p413 = pneg %p114
        %p414 = pneg %p111
        %p415 = pneg %p135
        %p416 = pneg %p132
        %p417 = pneg %p156
        %p418 = pneg %p153
        %p419 = pneg %p177
        %p420 = pneg %p174
        %p421 = pneg %p198
        %p422 = pneg %p195
        %p423 = pneg %p219
        %p424 = pneg %p216
        %p425 = pneg %p240
        %p426 = pneg %p237
        %p427 = pneg %p261
        %p428 = pneg %p258
        %p429 = pneg %p282
        %p430 = pneg %p279
        %p431 = pneg %p303
        %p432 = pneg %p300
        %p433 = pneg %p324
        %p434 = pneg %p321
        %p435 = scmp.lt.s32.totalorder %s25, 2
        %s436 = scalar_select %p435, %s25, 2
        %s437 = smul.addr %s436, 8
        %s438 = scalar_lea.vmem %s0, %s437
        %p439 = scmp.lt.s32.totalorder %s25, 2
        %s440 = scalar_select %p439, %s25, 2
        %s441 = smul.addr %s440, 28
        %s442 = smul.addr %s441, 8
        %s443 = scalar_lea.vmem %s1, %s442
        %p444 = scmp.eq.s32.totalorder %s25, 0
        // Predicated region
        $region73: #{tpu_custom_call.1} parent=71 // pred_check
          %p445 = pneg %p444
        $region74: #{tpu_custom_call.1} parent=71 // pred_check_branch
          %447 = sbr.rel (%p445) target = $region76
        $region75: #{tpu_custom_call.1} parent=71 // pred_region
          %vm448 = vcmask 516096
          %449 = vst.msk [vmem:[#allocation9] sm:$0x1] %vm448, 0.0
          %450 = vst.msk [vmem:[#allocation10] sm:$0x1] %vm448, 0.0
        $region76: #{tpu_custom_call.1} parent=71 // pred_fallthru
          _
        %v451 = vld [vmem:[%s438] sm:$0xff]
        %v452 = vld [vmem:[%s443] sm:$0xff]
        %v453 = vld [vmem:[%s443 + $0x8] sm:$0xff]
        %v454 = vld [vmem:[%s443 + $0x10] sm:$0xff]
        %v455 = vld [vmem:[%s443 + $0x18] sm:$0xff]
        %v456 = vld [vmem:[%s443 + $0x20] sm:$0xff]
        %v457 = vld [vmem:[%s443 + $0x28] sm:$0xff]
        %v458 = vld [vmem:[%s443 + $0x30] sm:$0xff]
        %v459 = vld [vmem:[%s443 + $0x38] sm:$0xff]
        %v460 = vld [vmem:[%s443 + $0x40] sm:$0xff]
        %v461 = vld [vmem:[%s443 + $0x48] sm:$0xff]
        %v462 = vld [vmem:[%s443 + $0x50] sm:$0xff]
        %v463 = vld [vmem:[%s443 + $0x58] sm:$0xff]
        %v464 = vld [vmem:[%s443 + $0x60] sm:$0xff]
        %v465 = vld [vmem:[%s443 + $0x68] sm:$0xff]
        %v466 = vld [vmem:[%s443 + $0x70] sm:$0xff]
        %v467 = vld [vmem:[%s443 + $0x78] sm:$0xff]
        %v468 = vld [vmem:[%s443 + $0x80] sm:$0xff]
        %v469 = vld [vmem:[%s443 + $0x88] sm:$0xff]
        %v470 = vld [vmem:[%s443 + $0x90] sm:$0xff]
        %v471 = vld [vmem:[%s443 + $0x98] sm:$0xff]
        %v472 = vld [vmem:[%s443 + $0xa0] sm:$0xff]
        %v473 = vld [vmem:[%s443 + $0xa8] sm:$0xff]
        %v474 = vld [vmem:[%s443 + $0xb0] sm:$0xff]
        %v475 = vld [vmem:[%s443 + $0xb8] sm:$0xff]
        %v476 = vld [vmem:[%s443 + $0xc0] sm:$0x1]
        %v477 = vld [vmem:[%s443 + $0xc8] sm:$0x1]
        %v478 = vld [vmem:[%s443 + $0xd0] sm:$0x1]
        %v479 = vld [vmem:[%s443 + $0xd8] sm:$0x1]
        %v480 = vld [vmem:[%s2] sm:$0xff]
        %v481 = vld [vmem:[%s2 + $0x8] sm:$0xff]
        %v482 = vld [vmem:[%s2 + $0x10] sm:$0xff]
        %v483 = vld [vmem:[%s2 + $0x18] sm:$0xff]
        %v484 = vld [vmem:[%s2 + $0x20] sm:$0xff]
        %v485 = vld [vmem:[%s2 + $0x28] sm:$0xff]
        %v486 = vld [vmem:[%s2 + $0x30] sm:$0xff]
        %v487 = vld [vmem:[%s2 + $0x38] sm:$0xff]
        %v488 = vld [vmem:[%s4] sm:$0x1]
        %v490 = vlaneseq
        %v491 = vshrl.u32 %v490, 7
        %v492 = vsub.s32 0, %v491
        %v493 = vrot.slane %v488, %v492
        %vm495 = vcmask 523264
        %v497 = vsel %vm495, %v451, 0
        %499 = vmatprep.subr.mxu0 0.0
        %500 = vmatpush1.msra.mxu0 %v480
        %501 = vmatprep.subr.mxu0 0.0
        %502 = vmatpush1.msra.mxu0 %v481
        %503 = vmatprep.subr.mxu0 0.0
        %504 = vmatpush1.msra.mxu0 %v482
        %505 = vmatprep.subr.mxu0 0.0
        %506 = vmatpush1.msra.mxu0 %v483
        %507 = vmatprep.subr.mxu0 0.0
        %508 = vmatpush1.msra.mxu0 %v484
        %509 = vmatprep.subr.mxu0 0.0
        %510 = vmatpush1.msra.mxu0 %v485
        %511 = vmatprep.subr.mxu0 0.0
        %512 = vmatpush1.msra.mxu0 %v486
        %513 = vmatprep.subr.mxu0 0.0
        %514 = vmatpush1.msra.mxu0 %v487
        %515 = vmatprep.subr.mxu0 0.0
        %516 = vmatpush1.msra.mxu0 0.0
        %517 = vmatprep.subr.mxu0 0.0
        %518 = vmatpush1.msra.mxu0 0.0
        %519 = vmatprep.subr.mxu0 0.0
        %520 = vmatpush1.msra.mxu0 0.0
        %521 = vmatprep.subr.mxu0 0.0
        %522 = vmatpush1.msra.mxu0 0.0
        %523 = vmatprep.subr.mxu0 0.0
        %524 = vmatpush1.msra.mxu0 0.0
        %525 = vmatprep.subr.mxu0 0.0
        %526 = vmatpush1.msra.mxu0 0.0
        %527 = vmatprep.subr.mxu0 0.0
        %528 = vmatpush1.msra.mxu0 0.0
        %529 = vmatprep.subr.mxu0 0.0
        %530 = vmatpush1.msra.mxu0 0.0
        %531 = vmatprep.subr.mxu0 0.0
        %532 = vmatpush1.msra.mxu0 0.0
        %533 = vmatprep.subr.mxu0 0.0
        %534 = vmatpush1.msra.mxu0 0.0
        %535 = vmatprep.subr.mxu0 0.0
        %536 = vmatpush1.msra.mxu0 0.0
        %537 = vmatprep.subr.mxu0 0.0
        %538 = vmatpush1.msra.mxu0 0.0
        %539 = vmatprep.subr.mxu0 0.0
        %540 = vmatpush1.msra.mxu0 0.0
        %541 = vmatprep.subr.mxu0 0.0
        %542 = vmatpush1.msra.mxu0 0.0
        %543 = vmatprep.subr.mxu0 0.0
        %544 = vmatpush1.msra.mxu0 0.0
        %545 = vmatprep.subr.mxu0 0.0
        %546 = vmatpush1.msra.mxu0 0.0
        %547 = vmatprep.subr.mxu0 0.0
        %548 = vmatpush1.msra.mxu0 0.0
        %549 = vmatprep.subr.mxu0 0.0
        %550 = vmatpush1.msra.mxu0 0.0
        %551 = vmatprep.subr.mxu0 0.0
        %552 = vmatpush1.msra.mxu0 0.0
        %553 = vmatprep.subr.mxu0 0.0
        %554 = vmatpush1.msra.mxu0 0.0
        %555 = vmatprep.subr.mxu0 0.0
        %556 = vmatpush1.msra.mxu0 0.0
        %557 = vmatprep.subr.mxu0 0.0
        %558 = vmatpush1.msra.mxu0 0.0
        %559 = vmatprep.subr.mxu0 0.0
        %560 = vmatpush1.msra.mxu0 0.0
        %561 = vmatprep.subr.mxu0 0.0
        %562 = vmatpush1.msra.mxu0 0.0
        %563 = vmatprep.mubr.f32.mxu0 0.0
        %564 = vmatmul.mubr.f32.gmra.mrb[0].mxu0 %v497
        %v565 = vpop.f32.mrb[0].mxu0
        %v566 = vadd.f32 %v493, %v565
        %v567 = vpop.f32.mrb[0].mxu0
        %568 = vdwg.mxu0
        %569 = vst [vmem:[#allocation2] sm:$0xff] %v566
        %s570 = scalar_lea.vmem %s2, 64
        %v571 = vld [vmem:[%s570] sm:$0xff]
        %v572 = vld [vmem:[%s570 + $0x8] sm:$0xff]
        %v573 = vld [vmem:[%s570 + $0x10] sm:$0xff]
        %v574 = vld [vmem:[%s570 + $0x18] sm:$0xff]
        %v575 = vld [vmem:[%s570 + $0x20] sm:$0xff]
        %v576 = vld [vmem:[%s570 + $0x28] sm:$0xff]
        %v577 = vld [vmem:[%s570 + $0x30] sm:$0xff]
        %v578 = vld [vmem:[%s570 + $0x38] sm:$0xff]
        %s579 = scalar_lea.vmem %s4, 1
        %v580 = vld [vmem:[%s579] sm:$0x1]
        %v582 = vlaneseq
        %v583 = vshrl.u32 %v582, 7
        %v584 = vsub.s32 0, %v583
        %v585 = vrot.slane %v580, %v584
        %587 = vmatprep.subr.mxu0 0.0
        %588 = vmatpush1.msra.mxu0 %v571
        %589 = vmatprep.subr.mxu0 0.0
        %590 = vmatpush1.msra.mxu0 %v572
        %591 = vmatprep.subr.mxu0 0.0
        %592 = vmatpush1.msra.mxu0 %v573
        %593 = vmatprep.subr.mxu0 0.0
        %594 = vmatpush1.msra.mxu0 %v574
        %595 = vmatprep.subr.mxu0 0.0
        %596 = vmatpush1.msra.mxu0 %v575
        %597 = vmatprep.subr.mxu0 0.0
        %598 = vmatpush1.msra.mxu0 %v576
        %599 = vmatprep.subr.mxu0 0.0
        %600 = vmatpush1.msra.mxu0 %v577
        %601 = vmatprep.subr.mxu0 0.0
        %602 = vmatpush1.msra.mxu0 %v578
        %603 = vmatprep.subr.mxu0 0.0
        %604 = vmatpush1.msra.mxu0 0.0
        %605 = vmatprep.subr.mxu0 0.0
        %606 = vmatpush1.msra.mxu0 0.0
        %607 = vmatprep.subr.mxu0 0.0
        %608 = vmatpush1.msra.mxu0 0.0
        %609 = vmatprep.subr.mxu0 0.0
        %610 = vmatpush1.msra.mxu0 0.0
        %611 = vmatprep.subr.mxu0 0.0
        %612 = vmatpush1.msra.mxu0 0.0
        %613 = vmatprep.subr.mxu0 0.0
        %614 = vmatpush1.msra.mxu0 0.0
        %615 = vmatprep.subr.mxu0 0.0
        %616 = vmatpush1.msra.mxu0 0.0
        %617 = vmatprep.subr.mxu0 0.0
        %618 = vmatpush1.msra.mxu0 0.0
        %619 = vmatprep.subr.mxu0 0.0
        %620 = vmatpush1.msra.mxu0 0.0
        %621 = vmatprep.subr.mxu0 0.0
        %622 = vmatpush1.msra.mxu0 0.0
        %623 = vmatprep.subr.mxu0 0.0
        %624 = vmatpush1.msra.mxu0 0.0
        %625 = vmatprep.subr.mxu0 0.0
        %626 = vmatpush1.msra.mxu0 0.0
        %627 = vmatprep.subr.mxu0 0.0
        %628 = vmatpush1.msra.mxu0 0.0
        %629 = vmatprep.subr.mxu0 0.0
        %630 = vmatpush1.msra.mxu0 0.0
        %631 = vmatprep.subr.mxu0 0.0
        %632 = vmatpush1.msra.mxu0 0.0
        %633 = vmatprep.subr.mxu0 0.0
        %634 = vmatpush1.msra.mxu0 0.0
        %635 = vmatprep.subr.mxu0 0.0
        %636 = vmatpush1.msra.mxu0 0.0
        %637 = vmatprep.subr.mxu0 0.0
        %638 = vmatpush1.msra.mxu0 0.0
        %639 = vmatprep.subr.mxu0 0.0
        %640 = vmatpush1.msra.mxu0 0.0
        %641 = vmatprep.subr.mxu0 0.0
        %642 = vmatpush1.msra.mxu0 0.0
        %643 = vmatprep.subr.mxu0 0.0
        %644 = vmatpush1.msra.mxu0 0.0
        %645 = vmatprep.subr.mxu0 0.0
        %646 = vmatpush1.msra.mxu0 0.0
        %647 = vmatprep.subr.mxu0 0.0
        %648 = vmatpush1.msra.mxu0 0.0
        %649 = vmatprep.subr.mxu0 0.0
        %650 = vmatpush1.msra.mxu0 0.0
        %651 = vmatprep.mubr.f32.mxu0 0.0
        %652 = vmatmul.mubr.f32.gmra.mrb[0].mxu0 %v497
        %v653 = vpop.f32.mrb[0].mxu0
        %v654 = vadd.f32 %v585, %v653
        %v655 = vpop.f32.mrb[0].mxu0
        %656 = vdwg.mxu0
        %657 = vst [vmem:[#allocation3] sm:$0xff] %v654
        %v658 = vld [vmem:[%s3] sm:$0xff]
        %v659 = vld [vmem:[%s3 + $0x8] sm:$0xff]
        %v660 = vld [vmem:[%s3 + $0x10] sm:$0xff]
        %v661 = vld [vmem:[%s3 + $0x18] sm:$0xff]
        %s662 = scalar_lea.vmem %s3, 32
        %v663 = vld [vmem:[%s662] sm:$0xff]
        %v664 = vld [vmem:[%s662 + $0x8] sm:$0xff]
        %v665 = vld [vmem:[%s662 + $0x10] sm:$0xff]
        %v666 = vld [vmem:[%s662 + $0x18] sm:$0xff]
        %v667 = vld [vmem:[#allocation2] sm:$0x1]
        %vm668 = vcmask 261120
        %v670 = vsel %vm668, 0.0, 0
        %672 = vmatprep.subr.mxu0 0.0
        %673 = vmatpush1.msra.mxu0 %v658
        %674 = vmatprep.subr.mxu0 0.0
        %675 = vmatpush1.msra.mxu0 %v659
        %676 = vmatprep.subr.mxu0 0.0
        %677 = vmatpush1.msra.mxu0 %v660
        %678 = vmatprep.subr.mxu0 0.0
        %679 = vmatpush1.msra.mxu0 %v661
        %680 = vmatprep.subr.mxu0 0.0
        %681 = vmatpush1.msra.mxu0 0.0
        %682 = vmatprep.subr.mxu0 0.0
        %683 = vmatpush1.msra.mxu0 0.0
        %684 = vmatprep.subr.mxu0 0.0
        %685 = vmatpush1.msra.mxu0 0.0
        %686 = vmatprep.subr.mxu0 0.0
        %687 = vmatpush1.msra.mxu0 0.0
        %688 = vmatprep.subr.mxu0 0.0
        %689 = vmatpush1.msra.mxu0 0.0
        %690 = vmatprep.subr.mxu0 0.0
        %691 = vmatpush1.msra.mxu0 0.0
        %692 = vmatprep.subr.mxu0 0.0
        %693 = vmatpush1.msra.mxu0 0.0
        %694 = vmatprep.subr.mxu0 0.0
        %695 = vmatpush1.msra.mxu0 0.0
        %696 = vmatprep.subr.mxu0 0.0
        %697 = vmatpush1.msra.mxu0 0.0
        %698 = vmatprep.subr.mxu0 0.0
        %699 = vmatpush1.msra.mxu0 0.0
        %700 = vmatprep.subr.mxu0 0.0
        %701 = vmatpush1.msra.mxu0 0.0
        %702 = vmatprep.subr.mxu0 0.0
        %703 = vmatpush1.msra.mxu0 0.0
        %704 = vmatprep.subr.mxu0 0.0
        %705 = vmatpush1.msra.mxu0 0.0
        %706 = vmatprep.subr.mxu0 0.0
        %707 = vmatpush1.msra.mxu0 0.0
        %708 = vmatprep.subr.mxu0 0.0
        %709 = vmatpush1.msra.mxu0 0.0
        %710 = vmatprep.subr.mxu0 0.0
        %711 = vmatpush1.msra.mxu0 0.0
        %712 = vmatprep.subr.mxu0 0.0
        %713 = vmatpush1.msra.mxu0 0.0
        %714 = vmatprep.subr.mxu0 0.0
        %715 = vmatpush1.msra.mxu0 0.0
        %716 = vmatprep.subr.mxu0 0.0
        %717 = vmatpush1.msra.mxu0 0.0
        %718 = vmatprep.subr.mxu0 0.0
        %719 = vmatpush1.msra.mxu0 0.0
        %720 = vmatprep.subr.mxu0 0.0
        %721 = vmatpush1.msra.mxu0 0.0
        %722 = vmatprep.subr.mxu0 0.0
        %723 = vmatpush1.msra.mxu0 0.0
        %724 = vmatprep.subr.mxu0 0.0
        %725 = vmatpush1.msra.mxu0 0.0
        %726 = vmatprep.subr.mxu0 0.0
        %727 = vmatpush1.msra.mxu0 0.0
        %728 = vmatprep.subr.mxu0 0.0
        %729 = vmatpush1.msra.mxu0 0.0
        %730 = vmatprep.subr.mxu0 0.0
        %731 = vmatpush1.msra.mxu0 0.0
        %732 = vmatprep.subr.mxu0 0.0
        %733 = vmatpush1.msra.mxu0 0.0
        %734 = vmatprep.subr.mxu0 0.0
        %735 = vmatpush1.msra.mxu0 0.0
        %736 = vmatprep.mubr.f32.mxu0 0.0
        %737 = vmatmul.mubr.f32.gmra.mrb[0].mxu0 %v670
        %v738 = vpop.f32.mrb[0].mxu0
        %v739 = vadd.f32 0.0, %v738
        %v740 = vpop.f32.mrb[0].mxu0
        %741 = vdwg.mxu0
        %v742 = vadd.f32 %v667, %v739
        %v743 = vxor.u32 %v742, 2147483648
        %v744 = vmul.f32 %v743, 1.442695
        %v745 = vpow.pop %v744
        %v746 = vadd.f32 %v745, 1.0
        %v747 = vrcp.pop %v746
        %v748 = vmul.f32 1.0, %v747
        %v749 = vtanh.pop %v742
        %v750 = vmul.f32 %v748, 0.0
        %752 = vrot.lane.b32.xlu0 %v749, 64
        %v753 = vpop.permute.xlu0 %752
        %v755 = vmul.f32 %v748, %v753
        %757 = vrot.lane.b32.xlu0 %v755, 32
        %v758 = vpop.permute.xlu0 %757
        %v760 = vadd.f32 %v750, %v758
        %v761 = vtanh.pop %v760
        %763 = vrot.lane.b32.xlu0 %v761, 64
        %v764 = vpop.permute.xlu0 %763
        %v766 = vmul.f32 %v748, %v764
        %768 = vrot.lane.b32.xlu0 %v766, 32
        %v769 = vpop.permute.xlu0 %768
        %vm771 = vcmask 253952
        %772 = vst.msk [vmem:[#allocation4] sm:$0x1] %vm771, %v769
        %v773 = vld [vmem:[#allocation3 + $0x7] sm:$0x1]
        %774 = vmatprep.subr.mxu0 0.0
        %775 = vmatpush1.msra.mxu0 %v663
        %776 = vmatprep.subr.mxu0 0.0
        %777 = vmatpush1.msra.mxu0 %v664
        %778 = vmatprep.subr.mxu0 0.0
        %779 = vmatpush1.msra.mxu0 %v665
        %780 = vmatprep.subr.mxu0 0.0
        %781 = vmatpush1.msra.mxu0 %v666
        %782 = vmatprep.subr.mxu0 0.0
        %783 = vmatpush1.msra.mxu0 0.0
        %784 = vmatprep.subr.mxu0 0.0
        %785 = vmatpush1.msra.mxu0 0.0
        %786 = vmatprep.subr.mxu0 0.0
        %787 = vmatpush1.msra.mxu0 0.0
        %788 = vmatprep.subr.mxu0 0.0
        %789 = vmatpush1.msra.mxu0 0.0
        %790 = vmatprep.subr.mxu0 0.0
        %791 = vmatpush1.msra.mxu0 0.0
        %792 = vmatprep.subr.mxu0 0.0
        %793 = vmatpush1.msra.mxu0 0.0
        %794 = vmatprep.subr.mxu0 0.0
        %795 = vmatpush1.msra.mxu0 0.0
        %796 = vmatprep.subr.mxu0 0.0
        %797 = vmatpush1.msra.mxu0 0.0
        %798 = vmatprep.subr.mxu0 0.0
        %799 = vmatpush1.msra.mxu0 0.0
        %800 = vmatprep.subr.mxu0 0.0
        %801 = vmatpush1.msra.mxu0 0.0
        %802 = vmatprep.subr.mxu0 0.0
        %803 = vmatpush1.msra.mxu0 0.0
        %804 = vmatprep.subr.mxu0 0.0
        %805 = vmatpush1.msra.mxu0 0.0
        %806 = vmatprep.subr.mxu0 0.0
        %807 = vmatpush1.msra.mxu0 0.0
        %808 = vmatprep.subr.mxu0 0.0
        %809 = vmatpush1.msra.mxu0 0.0
        %810 = vmatprep.subr.mxu0 0.0
        %811 = vmatpush1.msra.mxu0 0.0
        %812 = vmatprep.subr.mxu0 0.0
        %813 = vmatpush1.msra.mxu0 0.0
        %814 = vmatprep.subr.mxu0 0.0
        %815 = vmatpush1.msra.mxu0 0.0
        %816 = vmatprep.subr.mxu0 0.0
        %817 = vmatpush1.msra.mxu0 0.0
        %818 = vmatprep.subr.mxu0 0.0
        %819 = vmatpush1.msra.mxu0 0.0
        %820 = vmatprep.subr.mxu0 0.0
        %821 = vmatpush1.msra.mxu0 0.0
        %822 = vmatprep.subr.mxu0 0.0
        %823 = vmatpush1.msra.mxu0 0.0
        %824 = vmatprep.subr.mxu0 0.0
        %825 = vmatpush1.msra.mxu0 0.0
        %826 = vmatprep.subr.mxu0 0.0
        %827 = vmatpush1.msra.mxu0 0.0
        %828 = vmatprep.subr.mxu0 0.0
        %829 = vmatpush1.msra.mxu0 0.0
        %830 = vmatprep.subr.mxu0 0.0
        %831 = vmatpush1.msra.mxu0 0.0
        %832 = vmatprep.subr.mxu0 0.0
        %833 = vmatpush1.msra.mxu0 0.0
        %834 = vmatprep.subr.mxu0 0.0
        %835 = vmatpush1.msra.mxu0 0.0
        %836 = vmatprep.subr.mxu0 0.0
        %837 = vmatpush1.msra.mxu0 0.0
        %838 = vmatprep.mubr.f32.mxu0 0.0
        %839 = vmatmul.mubr.f32.gmra.mrb[0].mxu0 %v670
        %v840 = vpop.f32.mrb[0].mxu0
        %v841 = vadd.f32 0.0, %v840
        %v842 = vpop.f32.mrb[0].mxu0
        %843 = vdwg.mxu0
        %v844 = vadd.f32 %v773, %v841
        %v845 = vxor.u32 %v844, 2147483648
        %v846 = vmul.f32 %v845, 1.442695
        %v847 = vpow.pop %v846
        %v848 = vadd.f32 %v847, 1.0
        %v849 = vrcp.pop %v848
        %v850 = vmul.f32 1.0, %v849
        %v851 = vtanh.pop %v844
        %v852 = vmul.f32 %v850, 0.0
        %854 = vrot.lane.b32.xlu0 %v851, 64
        %v855 = vpop.permute.xlu0 %854
        %v857 = vmul.f32 %v850, %v855
        %859 = vrot.lane.b32.xlu0 %v857, 32
        %v860 = vpop.permute.xlu0 %859
        %v862 = vadd.f32 %v852, %v860
        %v863 = vtanh.pop %v862
        %865 = vrot.lane.b32.xlu0 %v863, 64
        %v866 = vpop.permute.xlu0 %865
        %v868 = vmul.f32 %v850, %v866
        %870 = vrot.lane.b32.xlu0 %v868, 32
        %v871 = vpop.permute.xlu0 %870
        %873 = vst.msk [vmem:[#allocation5 + $0x7] sm:$0x1] %vm771, %v871
        %v874 = vld [vmem:[#allocation2 + $0x1] sm:$0x1]
        %v875 = vsel %vm668, %v769, 0
        %877 = vmatprep.subr.mxu0 0.0
        %878 = vmatpush1.msra.mxu0 %v658
        %879 = vmatprep.subr.mxu0 0.0
        %880 = vmatpush1.msra.mxu0 %v659
        %881 = vmatprep.subr.mxu0 0.0
        %882 = vmatpush1.msra.mxu0 %v660
        %883 = vmatprep.subr.mxu0 0.0
        %884 = vmatpush1.msra.mxu0 %v661
        %885 = vmatprep.subr.mxu0 0.0
        %886 = vmatpush1.msra.mxu0 0.0
        %887 = vmatprep.subr.mxu0 0.0
        %888 = vmatpush1.msra.mxu0 0.0
        %889 = vmatprep.subr.mxu0 0.0
        %890 = vmatpush1.msra.mxu0 0.0
        %891 = vmatprep.subr.mxu0 0.0
        %892 = vmatpush1.msra.mxu0 0.0
        %893 = vmatprep.subr.mxu0 0.0
        %894 = vmatpush1.msra.mxu0 0.0
        %895 = vmatprep.subr.mxu0 0.0
        %896 = vmatpush1.msra.mxu0 0.0
        %897 = vmatprep.subr.mxu0 0.0
        %898 = vmatpush1.msra.mxu0 0.0
        %899 = vmatprep.subr.mxu0 0.0
        %900 = vmatpush1.msra.mxu0 0.0
        %901 = vmatprep.subr.mxu0 0.0
        %902 = vmatpush1.msra.mxu0 0.0
        %903 = vmatprep.subr.mxu0 0.0
        %904 = vmatpush1.msra.mxu0 0.0
        %905 = vmatprep.subr.mxu0 0.0
        %906 = vmatpush1.msra.mxu0 0.0
        %907 = vmatprep.subr.mxu0 0.0
        %908 = vmatpush1.msra.mxu0 0.0
        %909 = vmatprep.subr.mxu0 0.0
        %910 = vmatpush1.msra.mxu0 0.0
        %911 = vmatprep.subr.mxu0 0.0
        %912 = vmatpush1.msra.mxu0 0.0
        %913 = vmatprep.subr.mxu0 0.0
        %914 = vmatpush1.msra.mxu0 0.0
        %915 = vmatprep.subr.mxu0 0.0
        %916 = vmatpush1.msra.mxu0 0.0
        %917 = vmatprep.subr.mxu0 0.0
        %918 = vmatpush1.msra.mxu0 0.0
        %919 = vmatprep.subr.mxu0 0.0
        %920 = vmatpush1.msra.mxu0 0.0
        %921 = vmatprep.subr.mxu0 0.0
        %922 = vmatpush1.msra.mxu0 0.0
        %923 = vmatprep.subr.mxu0 0.0
        %924 = vmatpush1.msra.mxu0 0.0
        %925 = vmatprep.subr.mxu0 0.0
        %926 = vmatpush1.msra.mxu0 0.0
        %927 = vmatprep.subr.mxu0 0.0
        %928 = vmatpush1.msra.mxu0 0.0
        %929 = vmatprep.subr.mxu0 0.0
        %930 = vmatpush1.msra.mxu0 0.0
        %931 = vmatprep.subr.mxu0 0.0
        %932 = vmatpush1.msra.mxu0 0.0
        %933 = vmatprep.subr.mxu0 0.0
        %934 = vmatpush1.msra.mxu0 0.0
        %935 = vmatprep.subr.mxu0 0.0
        %936 = vmatpush1.msra.mxu0 0.0
        %937 = vmatprep.subr.mxu0 0.0
        %938 = vmatpush1.msra.mxu0 0.0
        %939 = vmatprep.subr.mxu0 0.0
        %940 = vmatpush1.msra.mxu0 0.0
        %941 = vmatprep.mubr.f32.mxu0 0.0
        %942 = vmatmul.mubr.f32.gmra.mrb[0].mxu0 %v875
        %v943 = vpop.f32.mrb[0].mxu0
        %v944 = vadd.f32 0.0, %v943
        %v945 = vpop.f32.mrb[0].mxu0
        %946 = vdwg.mxu0
        %v947 = vadd.f32 %v874, %v944
        %v948 = vxor.u32 %v947, 2147483648
        %v949 = vmul.f32 %v948, 1.442695
        %v950 = vpow.pop %v949
        %v951 = vadd.f32 %v950, 1.0
        %v952 = vrcp.pop %v951
        %v953 = vmul.f32 1.0, %v952
        %v954 = vtanh.pop %v947
        %v955 = vmul.f32 %v953, %v760
        %957 = vrot.lane.b32.xlu0 %v954, 64
        %v958 = vpop.permute.xlu0 %957
        %v960 = vmul.f32 %v953, %v958
        %962 = vrot.lane.b32.xlu0 %v960, 32
        %v963 = vpop.permute.xlu0 %962
        %v965 = vadd.f32 %v955, %v963
        %v966 = vtanh.pop %v965
        %968 = vrot.lane.b32.xlu0 %v966, 64
        %v969 = vpop.permute.xlu0 %968
        %v971 = vmul.f32 %v953, %v969
        %973 = vrot.lane.b32.xlu0 %v971, 32
        %v974 = vpop.permute.xlu0 %973
        %976 = vst.msk [vmem:[#allocation4 + $0x1] sm:$0x1] %vm771, %v974
        %v977 = vld [vmem:[#allocation3 + $0x6] sm:$0x1]
        %v978 = vsel %vm668, %v871, 0
        %980 = vmatprep.subr.mxu0 0.0
        %981 = vmatpush1.msra.mxu0 %v663
        %982 = vmatprep.subr.mxu0 0.0
        %983 = vmatpush1.msra.mxu0 %v664
        %984 = vmatprep.subr.mxu0 0.0
        %985 = vmatpush1.msra.mxu0 %v665
        %986 = vmatprep.subr.mxu0 0.0
        %987 = vmatpush1.msra.mxu0 %v666
        %988 = vmatprep.subr.mxu0 0.0
        %989 = vmatpush1.msra.mxu0 0.0
        %990 = vmatprep.subr.mxu0 0.0
        %991 = vmatpush1.msra.mxu0 0.0
        %992 = vmatprep.subr.mxu0 0.0
        %993 = vmatpush1.msra.mxu0 0.0
        %994 = vmatprep.subr.mxu0 0.0
        %995 = vmatpush1.msra.mxu0 0.0
        %996 = vmatprep.subr.mxu0 0.0
        %997 = vmatpush1.msra.mxu0 0.0
        %998 = vmatprep.subr.mxu0 0.0
        %999 = vmatpush1.msra.mxu0 0.0
        %1000 = vmatprep.subr.mxu0 0.0
        %1001 = vmatpush1.msra.mxu0 0.0
        %1002 = vmatprep.subr.mxu0 0.0
        %1003 = vmatpush1.msra.mxu0 0.0
        %1004 = vmatprep.subr.mxu0 0.0
        %1005 = vmatpush1.msra.mxu0 0.0
        %1006 = vmatprep.subr.mxu0 0.0
        %1007 = vmatpush1.msra.mxu0 0.0
        %1008 = vmatprep.subr.mxu0 0.0
        %1009 = vmatpush1.msra.mxu0 0.0
        %1010 = vmatprep.subr.mxu0 0.0
        %1011 = vmatpush1.msra.mxu0 0.0
        %1012 = vmatprep.subr.mxu0 0.0
        %1013 = vmatpush1.msra.mxu0 0.0
        %1014 = vmatprep.subr.mxu0 0.0
        %1015 = vmatpush1.msra.mxu0 0.0
        %1016 = vmatprep.subr.mxu0 0.0
        %1017 = vmatpush1.msra.mxu0 0.0
        %1018 = vmatprep.subr.mxu0 0.0
        %1019 = vmatpush1.msra.mxu0 0.0
        %1020 = vmatprep.subr.mxu0 0.0
        %1021 = vmatpush1.msra.mxu0 0.0
        %1022 = vmatprep.subr.mxu0 0.0
        %1023 = vmatpush1.msra.mxu0 0.0
        %1024 = vmatprep.subr.mxu0 0.0
        %1025 = vmatpush1.msra.mxu0 0.0
        %1026 = vmatprep.subr.mxu0 0.0
        %1027 = vmatpush1.msra.mxu0 0.0
        %1028 = vmatprep.subr.mxu0 0.0
        %1029 = vmatpush1.msra.mxu0 0.0
        %1030 = vmatprep.subr.mxu0 0.0
        %1031 = vmatpush1.msra.mxu0 0.0
        %1032 = vmatprep.subr.mxu0 0.0
        %1033 = vmatpush1.msra.mxu0 0.0
        %1034 = vmatprep.subr.mxu0 0.0
        %1035 = vmatpush1.msra.mxu0 0.0
        %1036 = vmatprep.subr.mxu0 0.0
        %1037 = vmatpush1.msra.mxu0 0.0
        %1038 = vmatprep.subr.mxu0 0.0
        %1039 = vmatpush1.msra.mxu0 0.0
        %1040 = vmatprep.subr.mxu0 0.0
        %1041 = vmatpush1.msra.mxu0 0.0
        %1042 = vmatprep.subr.mxu0 0.0
        %1043 = vmatpush1.msra.mxu0 0.0
        %1044 = vmatprep.mubr.f32.mxu0 0.0
        %1045 = vmatmul.mubr.f32.gmra.mrb[0].mxu0 %v978
        %v1046 = vpop.f32.mrb[0].mxu0
        %v1047 = vadd.f32 0.0, %v1046
        %v1048 = vpop.f32.mrb[0].mxu0
        %1049 = vdwg.mxu0
        %v1050 = vadd.f32 %v977, %v1047
        %v1051 = vxor.u32 %v1050, 2147483648
        %v1052 = vmul.f32 %v1051, 1.442695
        %v1053 = vpow.pop %v1052
        %v1054 = vadd.f32 %v1053, 1.0
        %v1055 = vrcp.pop %v1054
        %v1056 = vmul.f32 1.0, %v1055
        %v1057 = vtanh.pop %v1050
        %v1058 = vmul.f32 %v1056, %v862
        %1060 = vrot.lane.b32.xlu0 %v1057, 64
        %v1061 = vpop.permute.xlu0 %1060
        %v1063 = vmul.f32 %v1056, %v1061
        %1065 = vrot.lane.b32.xlu0 %v1063, 32
        %v1066 = vpop.permute.xlu0 %1065
        %v1068 = vadd.f32 %v1058, %v1066
        %v1069 = vtanh.pop %v1068
        %1071 = vrot.lane.b32.xlu0 %v1069, 64
        %v1072 = vpop.permute.xlu0 %1071
        %v1074 = vmul.f32 %v1056, %v1072
        %1076 = vrot.lane.b32.xlu0 %v1074, 32
        %v1077 = vpop.permute.xlu0 %1076
        %1079 = vst.msk [vmem:[#allocation5 + $0x6] sm:$0x1] %vm771, %v1077
        %v1080 = vld [vmem:[#allocation2 + $0x2] sm:$0x1]
        %v1081 = vsel %vm668, %v974, 0
        %1083 = vmatprep.subr.mxu0 0.0
        %1084 = vmatpush1.msra.mxu0 %v658
        %1085 = vmatprep.subr.mxu0 0.0
        %1086 = vmatpush1.msra.mxu0 %v659
        %1087 = vmatprep.subr.mxu0 0.0
        %1088 = vmatpush1.msra.mxu0 %v660
        %1089 = vmatprep.subr.mxu0 0.0
        %1090 = vmatpush1.msra.mxu0 %v661
        %1091 = vmatprep.subr.mxu0 0.0
        %1092 = vmatpush1.msra.mxu0 0.0
        %1093 = vmatprep.subr.mxu0 0.0
        %1094 = vmatpush1.msra.mxu0 0.0
        %1095 = vmatprep.subr.mxu0 0.0
        %1096 = vmatpush1.msra.mxu0 0.0
        %1097 = vmatprep.subr.mxu0 0.0
        %1098 = vmatpush1.msra.mxu0 0.0
        %1099 = vmatprep.subr.mxu0 0.0
        %1100 = vmatpush1.msra.mxu0 0.0
        %1101 = vmatprep.subr.mxu0 0.0
        %1102 = vmatpush1.msra.mxu0 0.0
        %1103 = vmatprep.subr.mxu0 0.0
        %1104 = vmatpush1.msra.mxu0 0.0
        %1105 = vmatprep.subr.mxu0 0.0
        %1106 = vmatpush1.msra.mxu0 0.0
        %1107 = vmatprep.subr.mxu0 0.0
        %1108 = vmatpush1.msra.mxu0 0.0
        %1109 = vmatprep.subr.mxu0 0.0
        %1110 = vmatpush1.msra.mxu0 0.0
        %1111 = vmatprep.subr.mxu0 0.0
        %1112 = vmatpush1.msra.mxu0 0.0
        %1113 = vmatprep.subr.mxu0 0.0
        %1114 = vmatpush1.msra.mxu0 0.0
        %1115 = vmatprep.subr.mxu0 0.0
        %1116 = vmatpush1.msra.mxu0 0.0
        %1117 = vmatprep.subr.mxu0 0.0
        %1118 = vmatpush1.msra.mxu0 0.0
        %1119 = vmatprep.subr.mxu0 0.0
        %1120 = vmatpush1.msra.mxu0 0.0
        %1121 = vmatprep.subr.mxu0 0.0
        %1122 = vmatpush1.msra.mxu0 0.0
        %1123 = vmatprep.subr.mxu0 0.0
        %1124 = vmatpush1.msra.mxu0 0.0
        %1125 = vmatprep.subr.mxu0 0.0
        %1126 = vmatpush1.msra.mxu0 0.0
        %1127 = vmatprep.subr.mxu0 0.0
        %1128 = vmatpush1.msra.mxu0 0.0
        %1129 = vmatprep.subr.mxu0 0.0
        %1130 = vmatpush1.msra.mxu0 0.0
        %1131 = vmatprep.subr.mxu0 0.0
        %1132 = vmatpush1.msra.mxu0 0.0
        %1133 = vmatprep.subr.mxu0 0.0
        %1134 = vmatpush1.msra.mxu0 0.0
        %1135 = vmatprep.subr.mxu0 0.0
        %1136 = vmatpush1.msra.mxu0 0.0
        %1137 = vmatprep.subr.mxu0 0.0
        %1138 = vmatpush1.msra.mxu0 0.0
        %1139 = vmatprep.subr.mxu0 0.0
        %1140 = vmatpush1.msra.mxu0 0.0
        %1141 = vmatprep.subr.mxu0 0.0
        %1142 = vmatpush1.msra.mxu0 0.0
        %1143 = vmatprep.subr.mxu0 0.0
        %1144 = vmatpush1.msra.mxu0 0.0
        %1145 = vmatprep.subr.mxu0 0.0
        %1146 = vmatpush1.msra.mxu0 0.0
        %1147 = vmatprep.mubr.f32.mxu0 0.0
        %1148 = vmatmul.mubr.f32.gmra.mrb[0].mxu0 %v1081
        %v1149 = vpop.f32.mrb[0].mxu0
        %v1150 = vadd.f32 0.0, %v1149
        %v1151 = vpop.f32.mrb[0].mxu0
        %1152 = vdwg.mxu0
        %v1153 = vadd.f32 %v1080, %v1150
        %v1154 = vxor.u32 %v1153, 2147483648
        %v1155 = vmul.f32 %v1154, 1.442695
        %v1156 = vpow.pop %v1155
        %v1157 = vadd.f32 %v1156, 1.0
        %v1158 = vrcp.pop %v1157
        %v1159 = vmul.f32 1.0, %v1158
        %v1160 = vtanh.pop %v1153
        %v1161 = vmul.f32 %v1159, %v965
        %1163 = vrot.lane.b32.xlu0 %v1160, 64
        %v1164 = vpop.permute.xlu0 %1163
        %v1166 = vmul.f32 %v1159, %v1164
        %1168 = vrot.lane.b32.xlu0 %v1166, 32
        %v1169 = vpop.permute.xlu0 %1168
        %v1171 = vadd.f32 %v1161, %v1169
        %v1172 = vtanh.pop %v1171
        %1174 = vrot.lane.b32.xlu0 %v1172, 64
        %v1175 = vpop.permute.xlu0 %1174
        %v1177 = vmul.f32 %v1159, %v1175
        %1179 = vrot.lane.b32.xlu0 %v1177, 32
        %v1180 = vpop.permute.xlu0 %1179
        %1182 = vst.msk [vmem:[#allocation4 + $0x2] sm:$0x1] %vm771, %v1180
        %v1183 = vld [vmem:[#allocation3 + $0x5] sm:$0x1]
        %v1184 = vsel %vm668, %v1077, 0
        %1186 = vmatprep.subr.mxu0 0.0
        %1187 = vmatpush1.msra.mxu0 %v663
        %1188 = vmatprep.subr.mxu0 0.0
        %1189 = vmatpush1.msra.mxu0 %v664
        %1190 = vmatprep.subr.mxu0 0.0
        %1191 = vmatpush1.msra.mxu0 %v665
        %1192 = vmatprep.subr.mxu0 0.0
        %1193 = vmatpush1.msra.mxu0 %v666
        %1194 = vmatprep.subr.mxu0 0.0
        %1195 = vmatpush1.msra.mxu0 0.0
        %1196 = vmatprep.subr.mxu0 0.0
        %1197 = vmatpush1.msra.mxu0 0.0
        %1198 = vmatprep.subr.mxu0 0.0
        %1199 = vmatpush1.msra.mxu0 0.0
        %1200 = vmatprep.subr.mxu0 0.0
        %1201 = vmatpush1.msra.mxu0 0.0
        %1202 = vmatprep.subr.mxu0 0.0
        %1203 = vmatpush1.msra.mxu0 0.0
        %1204 = vmatprep.subr.mxu0 0.0
        %1205 = vmatpush1.msra.mxu0 0.0
        %1206 = vmatprep.subr.mxu0 0.0
        %1207 = vmatpush1.msra.mxu0 0.0
        %1208 = vmatprep.subr.mxu0 0.0
        %1209 = vmatpush1.msra.mxu0 0.0
        %1210 = vmatprep.subr.mxu0 0.0
        %1211 = vmatpush1.msra.mxu0 0.0
        %1212 = vmatprep.subr.mxu0 0.0
        %1213 = vmatpush1.msra.mxu0 0.0
        %1214 = vmatprep.subr.mxu0 0.0
        %1215 = vmatpush1.msra.mxu0 0.0
        %1216 = vmatprep.subr.mxu0 0.0
        %1217 = vmatpush1.msra.mxu0 0.0
        %1218 = vmatprep.subr.mxu0 0.0
        %1219 = vmatpush1.msra.mxu0 0.0
        %1220 = vmatprep.subr.mxu0 0.0
        %1221 = vmatpush1.msra.mxu0 0.0
        %1222 = vmatprep.subr.mxu0 0.0
        %1223 = vmatpush1.msra.mxu0 0.0
        %1224 = vmatprep.subr.mxu0 0.0
        %1225 = vmatpush1.msra.mxu0 0.0
        %1226 = vmatprep.subr.mxu0 0.0
        %1227 = vmatpush1.msra.mxu0 0.0
        %1228 = vmatprep.subr.mxu0 0.0
        %1229 = vmatpush1.msra.mxu0 0.0
        %1230 = vmatprep.subr.mxu0 0.0
        %1231 = vmatpush1.msra.mxu0 0.0
        %1232 = vmatprep.subr.mxu0 0.0
        %1233 = vmatpush1.msra.mxu0 0.0
        %1234 = vmatprep.subr.mxu0 0.0
        %1235 = vmatpush1.msra.mxu0 0.0
        %1236 = vmatprep.subr.mxu0 0.0
        %1237 = vmatpush1.msra.mxu0 0.0
        %1238 = vmatprep.subr.mxu0 0.0
        %1239 = vmatpush1.msra.mxu0 0.0
        %1240 = vmatprep.subr.mxu0 0.0
        %1241 = vmatpush1.msra.mxu0 0.0
        %1242 = vmatprep.subr.mxu0 0.0
        %1243 = vmatpush1.msra.mxu0 0.0
        %1244 = vmatprep.subr.mxu0 0.0
        %1245 = vmatpush1.msra.mxu0 0.0
        %1246 = vmatprep.subr.mxu0 0.0
        %1247 = vmatpush1.msra.mxu0 0.0
        %1248 = vmatprep.subr.mxu0 0.0
        %1249 = vmatpush1.msra.mxu0 0.0
        %1250 = vmatprep.mubr.f32.mxu0 0.0
        %1251 = vmatmul.mubr.f32.gmra.mrb[0].mxu0 %v1184
        %v1252 = vpop.f32.mrb[0].mxu0
        %v1253 = vadd.f32 0.0, %v1252
        %v1254 = vpop.f32.mrb[0].mxu0
        %1255 = vdwg.mxu0
        %v1256 = vadd.f32 %v1183, %v1253
        %v1257 = vxor.u32 %v1256, 2147483648
        %v1258 = vmul.f32 %v1257, 1.442695
        %v1259 = vpow.pop %v1258
        %v1260 = vadd.f32 %v1259, 1.0
        %v1261 = vrcp.pop %v1260
        %v1262 = vmul.f32 1.0, %v1261
        %v1263 = vtanh.pop %v1256
        %v1264 = vmul.f32 %v1262, %v1068
        %1266 = vrot.lane.b32.xlu0 %v1263, 64
        %v1267 = vpop.permute.xlu0 %1266
        %v1269 = vmul.f32 %v1262, %v1267
        %1271 = vrot.lane.b32.xlu0 %v1269, 32
        %v1272 = vpop.permute.xlu0 %1271
        %v1274 = vadd.f32 %v1264, %v1272
        %v1275 = vtanh.pop %v1274
        %1277 = vrot.lane.b32.xlu0 %v1275, 64
        %v1278 = vpop.permute.xlu0 %1277
        %v1280 = vmul.f32 %v1262, %v1278
        %1282 = vrot.lane.b32.xlu0 %v1280, 32
        %v1283 = vpop.permute.xlu0 %1282
        %1285 = vst.msk [vmem:[#allocation5 + $0x5] sm:$0x1] %vm771, %v1283
        %v1286 = vld [vmem:[#allocation2 + $0x3] sm:$0x1]
        %v1287 = vsel %vm668, %v1180, 0
        %1289 = vmatprep.subr.mxu0 0.0
        %1290 = vmatpush1.msra.mxu0 %v658
        %1291 = vmatprep.subr.mxu0 0.0
        %1292 = vmatpush1.msra.mxu0 %v659
        %1293 = vmatprep.subr.mxu0 0.0
        %1294 = vmatpush1.msra.mxu0 %v660
        %1295 = vmatprep.subr.mxu0 0.0
        %1296 = vmatpush1.msra.mxu0 %v661
        %1297 = vmatprep.subr.mxu0 0.0
        %1298 = vmatpush1.msra.mxu0 0.0
        %1299 = vmatprep.subr.mxu0 0.0
        %1300 = vmatpush1.msra.mxu0 0.0
        %1301 = vmatprep.subr.mxu0 0.0
        %1302 = vmatpush1.msra.mxu0 0.0
        %1303 = vmatprep.subr.mxu0 0.0
        %1304 = vmatpush1.msra.mxu0 0.0
        %1305 = vmatprep.subr.mxu0 0.0
        %1306 = vmatpush1.msra.mxu0 0.0
        %1307 = vmatprep.subr.mxu0 0.0
        %1308 = vmatpush1.msra.mxu0 0.0
        %1309 = vmatprep.subr.mxu0 0.0
        %1310 = vmatpush1.msra.mxu0 0.0
        %1311 = vmatprep.subr.mxu0 0.0
        %1312 = vmatpush1.msra.mxu0 0.0
        %1313 = vmatprep.subr.mxu0 0.0
        %1314 = vmatpush1.msra.mxu0 0.0
        %1315 = vmatprep.subr.mxu0 0.0
        %1316 = vmatpush1.msra.mxu0 0.0
        %1317 = vmatprep.subr.mxu0 0.0
        %1318 = vmatpush1.msra.mxu0 0.0
        %1319 = vmatprep.subr.mxu0 0.0
        %1320 = vmatpush1.msra.mxu0 0.0
        %1321 = vmatprep.subr.mxu0 0.0
        %1322 = vmatpush1.msra.mxu0 0.0
        %1323 = vmatprep.subr.mxu0 0.0
        %1324 = vmatpush1.msra.mxu0 0.0
        %1325 = vmatprep.subr.mxu0 0.0
        %1326 = vmatpush1.msra.mxu0 0.0
        %1327 = vmatprep.subr.mxu0 0.0
        %1328 = vmatpush1.msra.mxu0 0.0
        %1329 = vmatprep.subr.mxu0 0.0
        %1330 = vmatpush1.msra.mxu0 0.0
        %1331 = vmatprep.subr.mxu0 0.0
        %1332 = vmatpush1.msra.mxu0 0.0
        %1333 = vmatprep.subr.mxu0 0.0
        %1334 = vmatpush1.msra.mxu0 0.0
        %1335 = vmatprep.subr.mxu0 0.0
        %1336 = vmatpush1.msra.mxu0 0.0
        %1337 = vmatprep.subr.mxu0 0.0
        %1338 = vmatpush1.msra.mxu0 0.0
        %1339 = vmatprep.subr.mxu0 0.0
        %1340 = vmatpush1.msra.mxu0 0.0
        %1341 = vmatprep.subr.mxu0 0.0
        %1342 = vmatpush1.msra.mxu0 0.0
        %1343 = vmatprep.subr.mxu0 0.0
        %1344 = vmatpush1.msra.mxu0 0.0
        %1345 = vmatprep.subr.mxu0 0.0
        %1346 = vmatpush1.msra.mxu0 0.0
        %1347 = vmatprep.subr.mxu0 0.0
        %1348 = vmatpush1.msra.mxu0 0.0
        %1349 = vmatprep.subr.mxu0 0.0
        %1350 = vmatpush1.msra.mxu0 0.0
        %1351 = vmatprep.subr.mxu0 0.0
        %1352 = vmatpush1.msra.mxu0 0.0
        %1353 = vmatprep.mubr.f32.mxu0 0.0
        %1354 = vmatmul.mubr.f32.gmra.mrb[0].mxu0 %v1287
        %v1355 = vpop.f32.mrb[0].mxu0
        %v1356 = vadd.f32 0.0, %v1355
        %v1357 = vpop.f32.mrb[0].mxu0
        %1358 = vdwg.mxu0
        %v1359 = vadd.f32 %v1286, %v1356
        %v1360 = vxor.u32 %v1359, 2147483648
        %v1361 = vmul.f32 %v1360, 1.442695
        %v1362 = vpow.pop %v1361
        %v1363 = vadd.f32 %v1362, 1.0
        %v1364 = vrcp.pop %v1363
        %v1365 = vmul.f32 1.0, %v1364
        %v1366 = vtanh.pop %v1359
        %v1367 = vmul.f32 %v1365, %v1171
        %1369 = vrot.lane.b32.xlu0 %v1366, 64
        %v1370 = vpop.permute.xlu0 %1369
        %v1372 = vmul.f32 %v1365, %v1370
        %1374 = vrot.lane.b32.xlu0 %v1372, 32
        %v1375 = vpop.permute.xlu0 %1374
        %v1377 = vadd.f32 %v1367, %v1375
        %v1378 = vtanh.pop %v1377
        %1380 = vrot.lane.b32.xlu0 %v1378, 64
        %v1381 = vpop.permute.xlu0 %1380
        %v1383 = vmul.f32 %v1365, %v1381
        %1385 = vrot.lane.b32.xlu0 %v1383, 32
        %v1386 = vpop.permute.xlu0 %1385
        %1388 = vst.msk [vmem:[#allocation4 + $0x3] sm:$0x1] %vm771, %v1386
        %v1389 = vld [vmem:[#allocation3 + $0x4] sm:$0x1]
        %v1390 = vsel %vm668, %v1283, 0
        %1392 = vmatprep.subr.mxu0 0.0
        %1393 = vmatpush1.msra.mxu0 %v663
        %1394 = vmatprep.subr.mxu0 0.0
        %1395 = vmatpush1.msra.mxu0 %v664
        %1396 = vmatprep.subr.mxu0 0.0
        %1397 = vmatpush1.msra.mxu0 %v665
        %1398 = vmatprep.subr.mxu0 0.0
        %1399 = vmatpush1.msra.mxu0 %v666
        %1400 = vmatprep.subr.mxu0 0.0
        %1401 = vmatpush1.msra.mxu0 0.0
        %1402 = vmatprep.subr.mxu0 0.0
        %1403 = vmatpush1.msra.mxu0 0.0
        %1404 = vmatprep.subr.mxu0 0.0
        %1405 = vmatpush1.msra.mxu0 0.0
        %1406 = vmatprep.subr.mxu0 0.0
        %1407 = vmatpush1.msra.mxu0 0.0
        %1408 = vmatprep.subr.mxu0 0.0
        %1409 = vmatpush1.msra.mxu0 0.0
        %1410 = vmatprep.subr.mxu0 0.0
        %1411 = vmatpush1.msra.mxu0 0.0
        %1412 = vmatprep.subr.mxu0 0.0
        %1413 = vmatpush1.msra.mxu0 0.0
        %1414 = vmatprep.subr.mxu0 0.0
        %1415 = vmatpush1.msra.mxu0 0.0
        %1416 = vmatprep.subr.mxu0 0.0
        %1417 = vmatpush1.msra.mxu0 0.0
        %1418 = vmatprep.subr.mxu0 0.0
        %1419 = vmatpush1.msra.mxu0 0.0
        %1420 = vmatprep.subr.mxu0 0.0
        %1421 = vmatpush1.msra.mxu0 0.0
        %1422 = vmatprep.subr.mxu0 0.0
        %1423 = vmatpush1.msra.mxu0 0.0
        %1424 = vmatprep.subr.mxu0 0.0
        %1425 = vmatpush1.msra.mxu0 0.0
        %1426 = vmatprep.subr.mxu0 0.0
        %1427 = vmatpush1.msra.mxu0 0.0
        %1428 = vmatprep.subr.mxu0 0.0
        %1429 = vmatpush1.msra.mxu0 0.0
        %1430 = vmatprep.subr.mxu0 0.0
        %1431 = vmatpush1.msra.mxu0 0.0
        %1432 = vmatprep.subr.mxu0 0.0
        %1433 = vmatpush1.msra.mxu0 0.0
        %1434 = vmatprep.subr.mxu0 0.0
        %1435 = vmatpush1.msra.mxu0 0.0
        %1436 = vmatprep.subr.mxu0 0.0
        %1437 = vmatpush1.msra.mxu0 0.0
        %1438 = vmatprep.subr.mxu0 0.0
        %1439 = vmatpush1.msra.mxu0 0.0
        %1440 = vmatprep.subr.mxu0 0.0
        %1441 = vmatpush1.msra.mxu0 0.0
        %1442 = vmatprep.subr.mxu0 0.0
        %1443 = vmatpush1.msra.mxu0 0.0
        %1444 = vmatprep.subr.mxu0 0.0
        %1445 = vmatpush1.msra.mxu0 0.0
        %1446 = vmatprep.subr.mxu0 0.0
        %1447 = vmatpush1.msra.mxu0 0.0
        %1448 = vmatprep.subr.mxu0 0.0
        %1449 = vmatpush1.msra.mxu0 0.0
        %1450 = vmatprep.subr.mxu0 0.0
        %1451 = vmatpush1.msra.mxu0 0.0
        %1452 = vmatprep.subr.mxu0 0.0
        %1453 = vmatpush1.msra.mxu0 0.0
        %1454 = vmatprep.subr.mxu0 0.0
        %1455 = vmatpush1.msra.mxu0 0.0
        %1456 = vmatprep.mubr.f32.mxu0 0.0
        %1457 = vmatmul.mubr.f32.gmra.mrb[0].mxu0 %v1390
        %v1458 = vpop.f32.mrb[0].mxu0
        %v1459 = vadd.f32 0.0, %v1458
        %v1460 = vpop.f32.mrb[0].mxu0
        %1461 = vdwg.mxu0
        %v1462 = vadd.f32 %v1389, %v1459
        %v1463 = vxor.u32 %v1462, 2147483648
        %v1464 = vmul.f32 %v1463, 1.442695
        %v1465 = vpow.pop %v1464
        %v1466 = vadd.f32 %v1465, 1.0
        %v1467 = vrcp.pop %v1466
        %v1468 = vmul.f32 1.0, %v1467
        %v1469 = vtanh.pop %v1462
        %v1470 = vmul.f32 %v1468, %v1274
        %1472 = vrot.lane.b32.xlu0 %v1469, 64
        %v1473 = vpop.permute.xlu0 %1472
        %v1475 = vmul.f32 %v1468, %v1473
        %1477 = vrot.lane.b32.xlu0 %v1475, 32
        %v1478 = vpop.permute.xlu0 %1477
        %v1480 = vadd.f32 %v1470, %v1478
        %v1481 = vtanh.pop %v1480
        %1483 = vrot.lane.b32.xlu0 %v1481, 64
        %v1484 = vpop.permute.xlu0 %1483
        %v1486 = vmul.f32 %v1468, %v1484
        %1488 = vrot.lane.b32.xlu0 %v1486, 32
        %v1489 = vpop.permute.xlu0 %1488
        %1491 = vst.msk [vmem:[#allocation5 + $0x4] sm:$0x1] %vm771, %v1489
        %v1492 = vld [vmem:[#allocation2 + $0x4] sm:$0x1]
        %v1493 = vsel %vm668, %v1386, 0
        %1495 = vmatprep.subr.mxu0 0.0
        %1496 = vmatpush1.msra.mxu0 %v658
        %1497 = vmatprep.subr.mxu0 0.0
        %1498 = vmatpush1.msra.mxu0 %v659
        %1499 = vmatprep.subr.mxu0 0.0
        %1500 = vmatpush1.msra.mxu0 %v660
        %1501 = vmatprep.subr.mxu0 0.0
        %1502 = vmatpush1.msra.mxu0 %v661
        %1503 = vmatprep.subr.mxu0 0.0
        %1504 = vmatpush1.msra.mxu0 0.0
        %1505 = vmatprep.subr.mxu0 0.0
        %1506 = vmatpush1.msra.mxu0 0.0
        %1507 = vmatprep.subr.mxu0 0.0
        %1508 = vmatpush1.msra.mxu0 0.0
        %1509 = vmatprep.subr.mxu0 0.0
        %1510 = vmatpush1.msra.mxu0 0.0
        %1511 = vmatprep.subr.mxu0 0.0
        %1512 = vmatpush1.msra.mxu0 0.0
        %1513 = vmatprep.subr.mxu0 0.0
        %1514 = vmatpush1.msra.mxu0 0.0
        %1515 = vmatprep.subr.mxu0 0.0
        %1516 = vmatpush1.msra.mxu0 0.0
        %1517 = vmatprep.subr.mxu0 0.0
        %1518 = vmatpush1.msra.mxu0 0.0
        %1519 = vmatprep.subr.mxu0 0.0
        %1520 = vmatpush1.msra.mxu0 0.0
        %1521 = vmatprep.subr.mxu0 0.0
        %1522 = vmatpush1.msra.mxu0 0.0
        %1523 = vmatprep.subr.mxu0 0.0
        %1524 = vmatpush1.msra.mxu0 0.0
        %1525 = vmatprep.subr.mxu0 0.0
        %1526 = vmatpush1.msra.mxu0 0.0
        %1527 = vmatprep.subr.mxu0 0.0
        %1528 = vmatpush1.msra.mxu0 0.0
        %1529 = vmatprep.subr.mxu0 0.0
        %1530 = vmatpush1.msra.mxu0 0.0
        %1531 = vmatprep.subr.mxu0 0.0
        %1532 = vmatpush1.msra.mxu0 0.0
        %1533 = vmatprep.subr.mxu0 0.0
        %1534 = vmatpush1.msra.mxu0 0.0
        %1535 = vmatprep.subr.mxu0 0.0
        %1536 = vmatpush1.msra.mxu0 0.0
        %1537 = vmatprep.subr.mxu0 0.0
        %1538 = vmatpush1.msra.mxu0 0.0
        %1539 = vmatprep.subr.mxu0 0.0
        %1540 = vmatpush1.msra.mxu0 0.0
        %1541 = vmatprep.subr.mxu0 0.0
        %1542 = vmatpush1.msra.mxu0 0.0
        %1543 = vmatprep.subr.mxu0 0.0
        %1544 = vmatpush1.msra.mxu0 0.0
        %1545 = vmatprep.subr.mxu0 0.0
        %1546 = vmatpush1.msra.mxu0 0.0
        %1547 = vmatprep.subr.mxu0 0.0
        %1548 = vmatpush1.msra.mxu0 0.0
        %1549 = vmatprep.subr.mxu0 0.0
        %1550 = vmatpush1.msra.mxu0 0.0
        %1551 = vmatprep.subr.mxu0 0.0
        %1552 = vmatpush1.msra.mxu0 0.0
        %1553 = vmatprep.subr.mxu0 0.0
        %1554 = vmatpush1.msra.mxu0 0.0
        %1555 = vmatprep.subr.mxu0 0.0
        %1556 = vmatpush1.msra.mxu0 0.0
        %1557 = vmatprep.subr.mxu0 0.0
        %1558 = vmatpush1.msra.mxu0 0.0
        %1559 = vmatprep.mubr.f32.mxu0 0.0
        %1560 = vmatmul.mubr.f32.gmra.mrb[0].mxu0 %v1493
        %v1561 = vpop.f32.mrb[0].mxu0
        %v1562 = vadd.f32 0.0, %v1561
        %v1563 = vpop.f32.mrb[0].mxu0
        %1564 = vdwg.mxu0
        %v1565 = vadd.f32 %v1492, %v1562
        %v1566 = vxor.u32 %v1565, 2147483648
        %v1567 = vmul.f32 %v1566, 1.442695
        %v1568 = vpow.pop %v1567
        %v1569 = vadd.f32 %v1568, 1.0
        %v1570 = vrcp.pop %v1569
        %v1571 = vmul.f32 1.0, %v1570
        %v1572 = vtanh.pop %v1565
        %v1573 = vmul.f32 %v1571, %v1377
        %1575 = vrot.lane.b32.xlu0 %v1572, 64
        %v1576 = vpop.permute.xlu0 %1575
        %v1578 = vmul.f32 %v1571, %v1576
        %1580 = vrot.lane.b32.xlu0 %v1578, 32
        %v1581 = vpop.permute.xlu0 %1580
        %v1583 = vadd.f32 %v1573, %v1581
        %v1584 = vtanh.pop %v1583
        %1586 = vrot.lane.b32.xlu0 %v1584, 64
        %v1587 = vpop.permute.xlu0 %1586
        %v1589 = vmul.f32 %v1571, %v1587
        %1591 = vrot.lane.b32.xlu0 %v1589, 32
        %v1592 = vpop.permute.xlu0 %1591
        %1594 = vst.msk [vmem:[#allocation4 + $0x4] sm:$0x1] %vm771, %v1592
        %v1595 = vld [vmem:[#allocation3 + $0x3] sm:$0x1]
        %v1596 = vsel %vm668, %v1489, 0
        %1598 = vmatprep.subr.mxu0 0.0
        %1599 = vmatpush1.msra.mxu0 %v663
        %1600 = vmatprep.subr.mxu0 0.0
        %1601 = vmatpush1.msra.mxu0 %v664
        %1602 = vmatprep.subr.mxu0 0.0
        %1603 = vmatpush1.msra.mxu0 %v665
        %1604 = vmatprep.subr.mxu0 0.0
        %1605 = vmatpush1.msra.mxu0 %v666
        %1606 = vmatprep.subr.mxu0 0.0
        %1607 = vmatpush1.msra.mxu0 0.0
        %1608 = vmatprep.subr.mxu0 0.0
        %1609 = vmatpush1.msra.mxu0 0.0
        %1610 = vmatprep.subr.mxu0 0.0
        %1611 = vmatpush1.msra.mxu0 0.0
        %1612 = vmatprep.subr.mxu0 0.0
        %1613 = vmatpush1.msra.mxu0 0.0
        %1614 = vmatprep.subr.mxu0 0.0
        %1615 = vmatpush1.msra.mxu0 0.0
        %1616 = vmatprep.subr.mxu0 0.0
        %1617 = vmatpush1.msra.mxu0 0.0
        %1618 = vmatprep.subr.mxu0 0.0
        %1619 = vmatpush1.msra.mxu0 0.0
        %1620 = vmatprep.subr.mxu0 0.0
        %1621 = vmatpush1.msra.mxu0 0.0
        %1622 = vmatprep.subr.mxu0 0.0
        %1623 = vmatpush1.msra.mxu0 0.0
        %1624 = vmatprep.subr.mxu0 0.0
        %1625 = vmatpush1.msra.mxu0 0.0
        %1626 = vmatprep.subr.mxu0 0.0
        %1627 = vmatpush1.msra.mxu0 0.0
        %1628 = vmatprep.subr.mxu0 0.0
        %1629 = vmatpush1.msra.mxu0 0.0
        %1630 = vmatprep.subr.mxu0 0.0
        %1631 = vmatpush1.msra.mxu0 0.0
        %1632 = vmatprep.subr.mxu0 0.0
        %1633 = vmatpush1.msra.mxu0 0.0
        %1634 = vmatprep.subr.mxu0 0.0
        %1635 = vmatpush1.msra.mxu0 0.0
        %1636 = vmatprep.subr.mxu0 0.0
        %1637 = vmatpush1.msra.mxu0 0.0
        %1638 = vmatprep.subr.mxu0 0.0
        %1639 = vmatpush1.msra.mxu0 0.0
        %1640 = vmatprep.subr.mxu0 0.0
        %1641 = vmatpush1.msra.mxu0 0.0
        %1642 = vmatprep.subr.mxu0 0.0
        %1643 = vmatpush1.msra.mxu0 0.0
        %1644 = vmatprep.subr.mxu0 0.0
        %1645 = vmatpush1.msra.mxu0 0.0
        %1646 = vmatprep.subr.mxu0 0.0
        %1647 = vmatpush1.msra.mxu0 0.0
        %1648 = vmatprep.subr.mxu0 0.0
        %1649 = vmatpush1.msra.mxu0 0.0
        %1650 = vmatprep.subr.mxu0 0.0
        %1651 = vmatpush1.msra.mxu0 0.0
        %1652 = vmatprep.subr.mxu0 0.0
        %1653 = vmatpush1.msra.mxu0 0.0
        %1654 = vmatprep.subr.mxu0 0.0
        %1655 = vmatpush1.msra.mxu0 0.0
        %1656 = vmatprep.subr.mxu0 0.0
        %1657 = vmatpush1.msra.mxu0 0.0
        %1658 = vmatprep.subr.mxu0 0.0
        %1659 = vmatpush1.msra.mxu0 0.0
        %1660 = vmatprep.subr.mxu0 0.0
        %1661 = vmatpush1.msra.mxu0 0.0
        %1662 = vmatprep.mubr.f32.mxu0 0.0
        %1663 = vmatmul.mubr.f32.gmra.mrb[0].mxu0 %v1596
        %v1664 = vpop.f32.mrb[0].mxu0
        %v1665 = vadd.f32 0.0, %v1664
        %v1666 = vpop.f32.mrb[0].mxu0
        %1667 = vdwg.mxu0
        %v1668 = vadd.f32 %v1595, %v1665
        %v1669 = vxor.u32 %v1668, 2147483648
        %v1670 = vmul.f32 %v1669, 1.442695
        %v1671 = vpow.pop %v1670
        %v1672 = vadd.f32 %v1671, 1.0
        %v1673 = vrcp.pop %v1672
        %v1674 = vmul.f32 1.0, %v1673
        %v1675 = vtanh.pop %v1668
        %v1676 = vmul.f32 %v1674, %v1480
        %1678 = vrot.lane.b32.xlu0 %v1675, 64
        %v1679 = vpop.permute.xlu0 %1678
        %v1681 = vmul.f32 %v1674, %v1679
        %1683 = vrot.lane.b32.xlu0 %v1681, 32
        %v1684 = vpop.permute.xlu0 %1683
        %v1686 = vadd.f32 %v1676, %v1684
        %v1687 = vtanh.pop %v1686
        %1689 = vrot.lane.b32.xlu0 %v1687, 64
        %v1690 = vpop.permute.xlu0 %1689
        %v1692 = vmul.f32 %v1674, %v1690
        %1694 = vrot.lane.b32.xlu0 %v1692, 32
        %v1695 = vpop.permute.xlu0 %1694
        %1697 = vst.msk [vmem:[#allocation5 + $0x3] sm:$0x1] %vm771, %v1695
        %v1698 = vld [vmem:[#allocation2 + $0x5] sm:$0x1]
        %v1699 = vsel %vm668, %v1592, 0
        %1701 = vmatprep.subr.mxu0 0.0
        %1702 = vmatpush1.msra.mxu0 %v658
        %1703 = vmatprep.subr.mxu0 0.0
        %1704 = vmatpush1.msra.mxu0 %v659
        %1705 = vmatprep.subr.mxu0 0.0
        %1706 = vmatpush1.msra.mxu0 %v660
        %1707 = vmatprep.subr.mxu0 0.0
        %1708 = vmatpush1.msra.mxu0 %v661
        %1709 = vmatprep.subr.mxu0 0.0
        %1710 = vmatpush1.msra.mxu0 0.0
        %1711 = vmatprep.subr.mxu0 0.0
        %1712 = vmatpush1.msra.mxu0 0.0
        %1713 = vmatprep.subr.mxu0 0.0
        %1714 = vmatpush1.msra.mxu0 0.0
        %1715 = vmatprep.subr.mxu0 0.0
        %1716 = vmatpush1.msra.mxu0 0.0
        %1717 = vmatprep.subr.mxu0 0.0
        %1718 = vmatpush1.msra.mxu0 0.0
        %1719 = vmatprep.subr.mxu0 0.0
        %1720 = vmatpush1.msra.mxu0 0.0
        %1721 = vmatprep.subr.mxu0 0.0
        %1722 = vmatpush1.msra.mxu0 0.0
        %1723 = vmatprep.subr.mxu0 0.0
        %1724 = vmatpush1.msra.mxu0 0.0
        %1725 = vmatprep.subr.mxu0 0.0
        %1726 = vmatpush1.msra.mxu0 0.0
        %1727 = vmatprep.subr.mxu0 0.0
        %1728 = vmatpush1.msra.mxu0 0.0
        %1729 = vmatprep.subr.mxu0 0.0
        %1730 = vmatpush1.msra.mxu0 0.0
        %1731 = vmatprep.subr.mxu0 0.0
        %1732 = vmatpush1.msra.mxu0 0.0
        %1733 = vmatprep.subr.mxu0 0.0
        %1734 = vmatpush1.msra.mxu0 0.0
        %1735 = vmatprep.subr.mxu0 0.0
        %1736 = vmatpush1.msra.mxu0 0.0
        %1737 = vmatprep.subr.mxu0 0.0
        %1738 = vmatpush1.msra.mxu0 0.0
        %1739 = vmatprep.subr.mxu0 0.0
        %1740 = vmatpush1.msra.mxu0 0.0
        %1741 = vmatprep.subr.mxu0 0.0
        %1742 = vmatpush1.msra.mxu0 0.0
        %1743 = vmatprep.subr.mxu0 0.0
        %1744 = vmatpush1.msra.mxu0 0.0
        %1745 = vmatprep.subr.mxu0 0.0
        %1746 = vmatpush1.msra.mxu0 0.0
        %1747 = vmatprep.subr.mxu0 0.0
        %1748 = vmatpush1.msra.mxu0 0.0
        %1749 = vmatprep.subr.mxu0 0.0
        %1750 = vmatpush1.msra.mxu0 0.0
        %1751 = vmatprep.subr.mxu0 0.0
        %1752 = vmatpush1.msra.mxu0 0.0
        %1753 = vmatprep.subr.mxu0 0.0
        %1754 = vmatpush1.msra.mxu0 0.0
        %1755 = vmatprep.subr.mxu0 0.0
        %1756 = vmatpush1.msra.mxu0 0.0
        %1757 = vmatprep.subr.mxu0 0.0
        %1758 = vmatpush1.msra.mxu0 0.0
        %1759 = vmatprep.subr.mxu0 0.0
        %1760 = vmatpush1.msra.mxu0 0.0
        %1761 = vmatprep.subr.mxu0 0.0
        %1762 = vmatpush1.msra.mxu0 0.0
        %1763 = vmatprep.subr.mxu0 0.0
        %1764 = vmatpush1.msra.mxu0 0.0
        %1765 = vmatprep.mubr.f32.mxu0 0.0
        %1766 = vmatmul.mubr.f32.gmra.mrb[0].mxu0 %v1699
        %v1767 = vpop.f32.mrb[0].mxu0
        %v1768 = vadd.f32 0.0, %v1767
        %v1769 = vpop.f32.mrb[0].mxu0
        %1770 = vdwg.mxu0
        %v1771 = vadd.f32 %v1698, %v1768
        %v1772 = vxor.u32 %v1771, 2147483648
        %v1773 = vmul.f32 %v1772, 1.442695
        %v1774 = vpow.pop %v1773
        %v1775 = vadd.f32 %v1774, 1.0
        %v1776 = vrcp.pop %v1775
        %v1777 = vmul.f32 1.0, %v1776
        %v1778 = vtanh.pop %v1771
        %v1779 = vmul.f32 %v1777, %v1583
        %1781 = vrot.lane.b32.xlu0 %v1778, 64
        %v1782 = vpop.permute.xlu0 %1781
        %v1784 = vmul.f32 %v1777, %v1782
        %1786 = vrot.lane.b32.xlu0 %v1784, 32
        %v1787 = vpop.permute.xlu0 %1786
        %v1789 = vadd.f32 %v1779, %v1787
        %v1790 = vtanh.pop %v1789
        %1792 = vrot.lane.b32.xlu0 %v1790, 64
        %v1793 = vpop.permute.xlu0 %1792
        %v1795 = vmul.f32 %v1777, %v1793
        %1797 = vrot.lane.b32.xlu0 %v1795, 32
        %v1798 = vpop.permute.xlu0 %1797
        %1800 = vst.msk [vmem:[#allocation4 + $0x5] sm:$0x1] %vm771, %v1798
        %v1801 = vld [vmem:[#allocation3 + $0x2] sm:$0x1]
        %v1802 = vsel %vm668, %v1695, 0
        %1804 = vmatprep.subr.mxu0 0.0
        %1805 = vmatpush1.msra.mxu0 %v663
        %1806 = vmatprep.subr.mxu0 0.0
        %1807 = vmatpush1.msra.mxu0 %v664
        %1808 = vmatprep.subr.mxu0 0.0
        %1809 = vmatpush1.msra.mxu0 %v665
        %1810 = vmatprep.subr.mxu0 0.0
        %1811 = vmatpush1.msra.mxu0 %v666
        %1812 = vmatprep.subr.mxu0 0.0
        %1813 = vmatpush1.msra.mxu0 0.0
        %1814 = vmatprep.subr.mxu0 0.0
        %1815 = vmatpush1.msra.mxu0 0.0
        %1816 = vmatprep.subr.mxu0 0.0
        %1817 = vmatpush1.msra.mxu0 0.0
        %1818 = vmatprep.subr.mxu0 0.0
        %1819 = vmatpush1.msra.mxu0 0.0
        %1820 = vmatprep.subr.mxu0 0.0
        %1821 = vmatpush1.msra.mxu0 0.0
        %1822 = vmatprep.subr.mxu0 0.0
        %1823 = vmatpush1.msra.mxu0 0.0
        %1824 = vmatprep.subr.mxu0 0.0
        %1825 = vmatpush1.msra.mxu0 0.0
        %1826 = vmatprep.subr.mxu0 0.0
        %1827 = vmatpush1.msra.mxu0 0.0
        %1828 = vmatprep.subr.mxu0 0.0
        %1829 = vmatpush1.msra.mxu0 0.0
        %1830 = vmatprep.subr.mxu0 0.0
        %1831 = vmatpush1.msra.mxu0 0.0
        %1832 = vmatprep.subr.mxu0 0.0
        %1833 = vmatpush1.msra.mxu0 0.0
        %1834 = vmatprep.subr.mxu0 0.0
        %1835 = vmatpush1.msra.mxu0 0.0
        %1836 = vmatprep.subr.mxu0 0.0
        %1837 = vmatpush1.msra.mxu0 0.0
        %1838 = vmatprep.subr.mxu0 0.0
        %1839 = vmatpush1.msra.mxu0 0.0
        %1840 = vmatprep.subr.mxu0 0.0
        %1841 = vmatpush1.msra.mxu0 0.0
        %1842 = vmatprep.subr.mxu0 0.0
        %1843 = vmatpush1.msra.mxu0 0.0
        %1844 = vmatprep.subr.mxu0 0.0
        %1845 = vmatpush1.msra.mxu0 0.0
        %1846 = vmatprep.subr.mxu0 0.0
        %1847 = vmatpush1.msra.mxu0 0.0
        %1848 = vmatprep.subr.mxu0 0.0
        %1849 = vmatpush1.msra.mxu0 0.0
        %1850 = vmatprep.subr.mxu0 0.0
        %1851 = vmatpush1.msra.mxu0 0.0
        %1852 = vmatprep.subr.mxu0 0.0
        %1853 = vmatpush1.msra.mxu0 0.0
        %1854 = vmatprep.subr.mxu0 0.0
        %1855 = vmatpush1.msra.mxu0 0.0
        %1856 = vmatprep.subr.mxu0 0.0
        %1857 = vmatpush1.msra.mxu0 0.0
        %1858 = vmatprep.subr.mxu0 0.0
        %1859 = vmatpush1.msra.mxu0 0.0
        %1860 = vmatprep.subr.mxu0 0.0
        %1861 = vmatpush1.msra.mxu0 0.0
        %1862 = vmatprep.subr.mxu0 0.0
        %1863 = vmatpush1.msra.mxu0 0.0
        %1864 = vmatprep.subr.mxu0 0.0
        %1865 = vmatpush1.msra.mxu0 0.0
        %1866 = vmatprep.subr.mxu0 0.0
        %1867 = vmatpush1.msra.mxu0 0.0
        %1868 = vmatprep.mubr.f32.mxu0 0.0
        %1869 = vmatmul.mubr.f32.gmra.mrb[0].mxu0 %v1802
        %v1870 = vpop.f32.mrb[0].mxu0
        %v1871 = vadd.f32 0.0, %v1870
        %v1872 = vpop.f32.mrb[0].mxu0
        %1873 = vdwg.mxu0
        %v1874 = vadd.f32 %v1801, %v1871
        %v1875 = vxor.u32 %v1874, 2147483648
        %v1876 = vmul.f32 %v1875, 1.442695
        %v1877 = vpow.pop %v1876
        %v1878 = vadd.f32 %v1877, 1.0
        %v1879 = vrcp.pop %v1878
        %v1880 = vmul.f32 1.0, %v1879
        %v1881 = vtanh.pop %v1874
        %v1882 = vmul.f32 %v1880, %v1686
        %1884 = vrot.lane.b32.xlu0 %v1881, 64
        %v1885 = vpop.permute.xlu0 %1884
        %v1887 = vmul.f32 %v1880, %v1885
        %1889 = vrot.lane.b32.xlu0 %v1887, 32
        %v1890 = vpop.permute.xlu0 %1889
        %v1892 = vadd.f32 %v1882, %v1890
        %v1893 = vtanh.pop %v1892
        %1895 = vrot.lane.b32.xlu0 %v1893, 64
        %v1896 = vpop.permute.xlu0 %1895
        %v1898 = vmul.f32 %v1880, %v1896
        %1900 = vrot.lane.b32.xlu0 %v1898, 32
        %v1901 = vpop.permute.xlu0 %1900
        %1903 = vst.msk [vmem:[#allocation5 + $0x2] sm:$0x1] %vm771, %v1901
        %v1904 = vld [vmem:[#allocation2 + $0x6] sm:$0x1]
        %v1905 = vsel %vm668, %v1798, 0
        %1907 = vmatprep.subr.mxu0 0.0
        %1908 = vmatpush1.msra.mxu0 %v658
        %1909 = vmatprep.subr.mxu0 0.0
        %1910 = vmatpush1.msra.mxu0 %v659
        %1911 = vmatprep.subr.mxu0 0.0
        %1912 = vmatpush1.msra.mxu0 %v660
        %1913 = vmatprep.subr.mxu0 0.0
        %1914 = vmatpush1.msra.mxu0 %v661
        %1915 = vmatprep.subr.mxu0 0.0
        %1916 = vmatpush1.msra.mxu0 0.0
        %1917 = vmatprep.subr.mxu0 0.0
        %1918 = vmatpush1.msra.mxu0 0.0
        %1919 = vmatprep.subr.mxu0 0.0
        %1920 = vmatpush1.msra.mxu0 0.0
        %1921 = vmatprep.subr.mxu0 0.0
        %1922 = vmatpush1.msra.mxu0 0.0
        %1923 = vmatprep.subr.mxu0 0.0
        %1924 = vmatpush1.msra.mxu0 0.0
        %1925 = vmatprep.subr.mxu0 0.0
        %1926 = vmatpush1.msra.mxu0 0.0
        %1927 = vmatprep.subr.mxu0 0.0
        %1928 = vmatpush1.msra.mxu0 0.0
        %1929 = vmatprep.subr.mxu0 0.0
        %1930 = vmatpush1.msra.mxu0 0.0
        %1931 = vmatprep.subr.mxu0 0.0
        %1932 = vmatpush1.msra.mxu0 0.0
        %1933 = vmatprep.subr.mxu0 0.0
        %1934 = vmatpush1.msra.mxu0 0.0
        %1935 = vmatprep.subr.mxu0 0.0
        %1936 = vmatpush1.msra.mxu0 0.0
        %1937 = vmatprep.subr.mxu0 0.0
        %1938 = vmatpush1.msra.mxu0 0.0
        %1939 = vmatprep.subr.mxu0 0.0
        %1940 = vmatpush1.msra.mxu0 0.0
        %1941 = vmatprep.subr.mxu0 0.0
        %1942 = vmatpush1.msra.mxu0 0.0
        %1943 = vmatprep.subr.mxu0 0.0
        %1944 = vmatpush1.msra.mxu0 0.0
        %1945 = vmatprep.subr.mxu0 0.0
        %1946 = vmatpush1.msra.mxu0 0.0
        %1947 = vmatprep.subr.mxu0 0.0
        %1948 = vmatpush1.msra.mxu0 0.0
        %1949 = vmatprep.subr.mxu0 0.0
        %1950 = vmatpush1.msra.mxu0 0.0
        %1951 = vmatprep.subr.mxu0 0.0
        %1952 = vmatpush1.msra.mxu0 0.0
        %1953 = vmatprep.subr.mxu0 0.0
        %1954 = vmatpush1.msra.mxu0 0.0
        %1955 = vmatprep.subr.mxu0 0.0
        %1956 = vmatpush1.msra.mxu0 0.0
        %1957 = vmatprep.subr.mxu0 0.0
        %1958 = vmatpush1.msra.mxu0 0.0
        %1959 = vmatprep.subr.mxu0 0.0
        %1960 = vmatpush1.msra.mxu0 0.0
        %1961 = vmatprep.subr.mxu0 0.0
        %1962 = vmatpush1.msra.mxu0 0.0
        %1963 = vmatprep.subr.mxu0 0.0
        %1964 = vmatpush1.msra.mxu0 0.0
        %1965 = vmatprep.subr.mxu0 0.0
        %1966 = vmatpush1.msra.mxu0 0.0
        %1967 = vmatprep.subr.mxu0 0.0
        %1968 = vmatpush1.msra.mxu0 0.0
        %1969 = vmatprep.subr.mxu0 0.0
        %1970 = vmatpush1.msra.mxu0 0.0
        %1971 = vmatprep.mubr.f32.mxu0 0.0
        %1972 = vmatmul.mubr.f32.gmra.mrb[0].mxu0 %v1905
        %v1973 = vpop.f32.mrb[0].mxu0
        %v1974 = vadd.f32 0.0, %v1973
        %v1975 = vpop.f32.mrb[0].mxu0
        %1976 = vdwg.mxu0
        %v1977 = vadd.f32 %v1904, %v1974
        %v1978 = vxor.u32 %v1977, 2147483648
        %v1979 = vmul.f32 %v1978, 1.442695
        %v1980 = vpow.pop %v1979
        %v1981 = vadd.f32 %v1980, 1.0
        %v1982 = vrcp.pop %v1981
        %v1983 = vmul.f32 1.0, %v1982
        %v1984 = vtanh.pop %v1977
        %v1985 = vmul.f32 %v1983, %v1789
        %1987 = vrot.lane.b32.xlu0 %v1984, 64
        %v1988 = vpop.permute.xlu0 %1987
        %v1990 = vmul.f32 %v1983, %v1988
        %1992 = vrot.lane.b32.xlu0 %v1990, 32
        %v1993 = vpop.permute.xlu0 %1992
        %v1995 = vadd.f32 %v1985, %v1993
        %v1996 = vtanh.pop %v1995
        %1998 = vrot.lane.b32.xlu0 %v1996, 64
        %v1999 = vpop.permute.xlu0 %1998
        %v2001 = vmul.f32 %v1983, %v1999
        %2003 = vrot.lane.b32.xlu0 %v2001, 32
        %v2004 = vpop.permute.xlu0 %2003
        %2006 = vst.msk [vmem:[#allocation4 + $0x6] sm:$0x1] %vm771, %v2004
        %v2007 = vld [vmem:[#allocation3 + $0x1] sm:$0x1]
        %v2008 = vsel %vm668, %v1901, 0
        %2010 = vmatprep.subr.mxu0 0.0
        %2011 = vmatpush1.msra.mxu0 %v663
        %2012 = vmatprep.subr.mxu0 0.0
        %2013 = vmatpush1.msra.mxu0 %v664
        %2014 = vmatprep.subr.mxu0 0.0
        %2015 = vmatpush1.msra.mxu0 %v665
        %2016 = vmatprep.subr.mxu0 0.0
        %2017 = vmatpush1.msra.mxu0 %v666
        %2018 = vmatprep.subr.mxu0 0.0
        %2019 = vmatpush1.msra.mxu0 0.0
        %2020 = vmatprep.subr.mxu0 0.0
        %2021 = vmatpush1.msra.mxu0 0.0
        %2022 = vmatprep.subr.mxu0 0.0
        %2023 = vmatpush1.msra.mxu0 0.0
        %2024 = vmatprep.subr.mxu0 0.0
        %2025 = vmatpush1.msra.mxu0 0.0
        %2026 = vmatprep.subr.mxu0 0.0
        %2027 = vmatpush1.msra.mxu0 0.0
        %2028 = vmatprep.subr.mxu0 0.0
        %2029 = vmatpush1.msra.mxu0 0.0
        %2030 = vmatprep.subr.mxu0 0.0
        %2031 = vmatpush1.msra.mxu0 0.0
        %2032 = vmatprep.subr.mxu0 0.0
        %2033 = vmatpush1.msra.mxu0 0.0
        %2034 = vmatprep.subr.mxu0 0.0
        %2035 = vmatpush1.msra.mxu0 0.0
        %2036 = vmatprep.subr.mxu0 0.0
        %2037 = vmatpush1.msra.mxu0 0.0
        %2038 = vmatprep.subr.mxu0 0.0
        %2039 = vmatpush1.msra.mxu0 0.0
        %2040 = vmatprep.subr.mxu0 0.0
        %2041 = vmatpush1.msra.mxu0 0.0
        %2042 = vmatprep.subr.mxu0 0.0
        %2043 = vmatpush1.msra.mxu0 0.0
        %2044 = vmatprep.subr.mxu0 0.0
        %2045 = vmatpush1.msra.mxu0 0.0
        %2046 = vmatprep.subr.mxu0 0.0
        %2047 = vmatpush1.msra.mxu0 0.0
        %2048 = vmatprep.subr.mxu0 0.0
        %2049 = vmatpush1.msra.mxu0 0.0
        %2050 = vmatprep.subr.mxu0 0.0
        %2051 = vmatpush1.msra.mxu0 0.0
        %2052 = vmatprep.subr.mxu0 0.0
        %2053 = vmatpush1.msra.mxu0 0.0
        %2054 = vmatprep.subr.mxu0 0.0
        %2055 = vmatpush1.msra.mxu0 0.0
        %2056 = vmatprep.subr.mxu0 0.0
        %2057 = vmatpush1.msra.mxu0 0.0
        %2058 = vmatprep.subr.mxu0 0.0
        %2059 = vmatpush1.msra.mxu0 0.0
        %2060 = vmatprep.subr.mxu0 0.0
        %2061 = vmatpush1.msra.mxu0 0.0
        %2062 = vmatprep.subr.mxu0 0.0
        %2063 = vmatpush1.msra.mxu0 0.0
        %2064 = vmatprep.subr.mxu0 0.0
        %2065 = vmatpush1.msra.mxu0 0.0
        %2066 = vmatprep.subr.mxu0 0.0
        %2067 = vmatpush1.msra.mxu0 0.0
        %2068 = vmatprep.subr.mxu0 0.0
        %2069 = vmatpush1.msra.mxu0 0.0
        %2070 = vmatprep.subr.mxu0 0.0
        %2071 = vmatpush1.msra.mxu0 0.0
        %2072 = vmatprep.subr.mxu0 0.0
        %2073 = vmatpush1.msra.mxu0 0.0
        %2074 = vmatprep.mubr.f32.mxu0 0.0
        %2075 = vmatmul.mubr.f32.gmra.mrb[0].mxu0 %v2008
        %v2076 = vpop.f32.mrb[0].mxu0
        %v2077 = vadd.f32 0.0, %v2076
        %v2078 = vpop.f32.mrb[0].mxu0
        %2079 = vdwg.mxu0
        %v2080 = vadd.f32 %v2007, %v2077
        %v2081 = vxor.u32 %v2080, 2147483648
        %v2082 = vmul.f32 %v2081, 1.442695
        %v2083 = vpow.pop %v2082
        %v2084 = vadd.f32 %v2083, 1.0
        %v2085 = vrcp.pop %v2084
        %v2086 = vmul.f32 1.0, %v2085
        %v2087 = vtanh.pop %v2080
        %v2088 = vmul.f32 %v2086, %v1892
        %2090 = vrot.lane.b32.xlu0 %v2087, 64
        %v2091 = vpop.permute.xlu0 %2090
        %v2093 = vmul.f32 %v2086, %v2091
        %2095 = vrot.lane.b32.xlu0 %v2093, 32
        %v2096 = vpop.permute.xlu0 %2095
        %v2098 = vadd.f32 %v2088, %v2096
        %v2099 = vtanh.pop %v2098
        %2101 = vrot.lane.b32.xlu0 %v2099, 64
        %v2102 = vpop.permute.xlu0 %2101
        %v2104 = vmul.f32 %v2086, %v2102
        %2106 = vrot.lane.b32.xlu0 %v2104, 32
        %v2107 = vpop.permute.xlu0 %2106
        %2109 = vst.msk [vmem:[#allocation5 + $0x1] sm:$0x1] %vm771, %v2107
        %v2110 = vld [vmem:[#allocation2 + $0x7] sm:$0x1]
        %v2111 = vsel %vm668, %v2004, 0
        %2113 = vmatprep.subr.mxu0 0.0
        %2114 = vmatpush1.msra.mxu0 %v658
        %2115 = vmatprep.subr.mxu0 0.0
        %2116 = vmatpush1.msra.mxu0 %v659
        %2117 = vmatprep.subr.mxu0 0.0
        %2118 = vmatpush1.msra.mxu0 %v660
        %2119 = vmatprep.subr.mxu0 0.0
        %2120 = vmatpush1.msra.mxu0 %v661
        %2121 = vmatprep.subr.mxu0 0.0
        %2122 = vmatpush1.msra.mxu0 0.0
        %2123 = vmatprep.subr.mxu0 0.0
        %2124 = vmatpush1.msra.mxu0 0.0
        %2125 = vmatprep.subr.mxu0 0.0
        %2126 = vmatpush1.msra.mxu0 0.0
        %2127 = vmatprep.subr.mxu0 0.0
        %2128 = vmatpush1.msra.mxu0 0.0
        %2129 = vmatprep.subr.mxu0 0.0
        %2130 = vmatpush1.msra.mxu0 0.0
        %2131 = vmatprep.subr.mxu0 0.0
        %2132 = vmatpush1.msra.mxu0 0.0
        %2133 = vmatprep.subr.mxu0 0.0
        %2134 = vmatpush1.msra.mxu0 0.0
        %2135 = vmatprep.subr.mxu0 0.0
        %2136 = vmatpush1.msra.mxu0 0.0
        %2137 = vmatprep.subr.mxu0 0.0
        %2138 = vmatpush1.msra.mxu0 0.0
        %2139 = vmatprep.subr.mxu0 0.0
        %2140 = vmatpush1.msra.mxu0 0.0
        %2141 = vmatprep.subr.mxu0 0.0
        %2142 = vmatpush1.msra.mxu0 0.0
        %2143 = vmatprep.subr.mxu0 0.0
        %2144 = vmatpush1.msra.mxu0 0.0
        %2145 = vmatprep.subr.mxu0 0.0
        %2146 = vmatpush1.msra.mxu0 0.0
        %2147 = vmatprep.subr.mxu0 0.0
        %2148 = vmatpush1.msra.mxu0 0.0
        %2149 = vmatprep.subr.mxu0 0.0
        %2150 = vmatpush1.msra.mxu0 0.0
        %2151 = vmatprep.subr.mxu0 0.0
        %2152 = vmatpush1.msra.mxu0 0.0
        %2153 = vmatprep.subr.mxu0 0.0
        %2154 = vmatpush1.msra.mxu0 0.0
        %2155 = vmatprep.subr.mxu0 0.0
        %2156 = vmatpush1.msra.mxu0 0.0
        %2157 = vmatprep.subr.mxu0 0.0
        %2158 = vmatpush1.msra.mxu0 0.0
        %2159 = vmatprep.subr.mxu0 0.0
        %2160 = vmatpush1.msra.mxu0 0.0
        %2161 = vmatprep.subr.mxu0 0.0
        %2162 = vmatpush1.msra.mxu0 0.0
        %2163 = vmatprep.subr.mxu0 0.0
        %2164 = vmatpush1.msra.mxu0 0.0
        %2165 = vmatprep.subr.mxu0 0.0
        %2166 = vmatpush1.msra.mxu0 0.0
        %2167 = vmatprep.subr.mxu0 0.0
        %2168 = vmatpush1.msra.mxu0 0.0
        %2169 = vmatprep.subr.mxu0 0.0
        %2170 = vmatpush1.msra.mxu0 0.0
        %2171 = vmatprep.subr.mxu0 0.0
        %2172 = vmatpush1.msra.mxu0 0.0
        %2173 = vmatprep.subr.mxu0 0.0
        %2174 = vmatpush1.msra.mxu0 0.0
        %2175 = vmatprep.subr.mxu0 0.0
        %2176 = vmatpush1.msra.mxu0 0.0
        %2177 = vmatprep.mubr.f32.mxu0 0.0
        %2178 = vmatmul.mubr.f32.gmra.mrb[0].mxu0 %v2111
        %v2179 = vpop.f32.mrb[0].mxu0
        %v2180 = vadd.f32 0.0, %v2179
        %v2181 = vpop.f32.mrb[0].mxu0
        %2182 = vdwg.mxu0
        %v2183 = vadd.f32 %v2110, %v2180
        %v2184 = vxor.u32 %v2183, 2147483648
        %v2185 = vmul.f32 %v2184, 1.442695
        %v2186 = vpow.pop %v2185
        %v2187 = vadd.f32 %v2186, 1.0
        %v2188 = vrcp.pop %v2187
        %v2189 = vmul.f32 1.0, %v2188
        %v2190 = vtanh.pop %v2183
        %v2191 = vmul.f32 %v2189, %v1995
        %2193 = vrot.lane.b32.xlu0 %v2190, 64
        %v2194 = vpop.permute.xlu0 %2193
        %v2196 = vmul.f32 %v2189, %v2194
        %2198 = vrot.lane.b32.xlu0 %v2196, 32
        %v2199 = vpop.permute.xlu0 %2198
        %v2201 = vadd.f32 %v2191, %v2199
        %v2202 = vtanh.pop %v2201
        %2204 = vrot.lane.b32.xlu0 %v2202, 64
        %v2205 = vpop.permute.xlu0 %2204
        %v2207 = vmul.f32 %v2189, %v2205
        %2209 = vrot.lane.b32.xlu0 %v2207, 32
        %v2210 = vpop.permute.xlu0 %2209
        %2212 = vst.msk [vmem:[#allocation4 + $0x7] sm:$0x1] %vm771, %v2210
        %v2213 = vld [vmem:[#allocation3] sm:$0x1]
        %v2214 = vsel %vm668, %v2107, 0
        %2216 = vmatprep.subr.mxu0 0.0
        %2217 = vmatpush1.msra.mxu0 %v663
        %2218 = vmatprep.subr.mxu0 0.0
        %2219 = vmatpush1.msra.mxu0 %v664
        %2220 = vmatprep.subr.mxu0 0.0
        %2221 = vmatpush1.msra.mxu0 %v665
        %2222 = vmatprep.subr.mxu0 0.0
        %2223 = vmatpush1.msra.mxu0 %v666
        %2224 = vmatprep.subr.mxu0 0.0
        %2225 = vmatpush1.msra.mxu0 0.0
        %2226 = vmatprep.subr.mxu0 0.0
        %2227 = vmatpush1.msra.mxu0 0.0
        %2228 = vmatprep.subr.mxu0 0.0
        %2229 = vmatpush1.msra.mxu0 0.0
        %2230 = vmatprep.subr.mxu0 0.0
        %2231 = vmatpush1.msra.mxu0 0.0
        %2232 = vmatprep.subr.mxu0 0.0
        %2233 = vmatpush1.msra.mxu0 0.0
        %2234 = vmatprep.subr.mxu0 0.0
        %2235 = vmatpush1.msra.mxu0 0.0
        %2236 = vmatprep.subr.mxu0 0.0
        %2237 = vmatpush1.msra.mxu0 0.0
        %2238 = vmatprep.subr.mxu0 0.0
        %2239 = vmatpush1.msra.mxu0 0.0
        %2240 = vmatprep.subr.mxu0 0.0
        %2241 = vmatpush1.msra.mxu0 0.0
        %2242 = vmatprep.subr.mxu0 0.0
        %2243 = vmatpush1.msra.mxu0 0.0
        %2244 = vmatprep.subr.mxu0 0.0
        %2245 = vmatpush1.msra.mxu0 0.0
        %2246 = vmatprep.subr.mxu0 0.0
        %2247 = vmatpush1.msra.mxu0 0.0
        %2248 = vmatprep.subr.mxu0 0.0
        %2249 = vmatpush1.msra.mxu0 0.0
        %2250 = vmatprep.subr.mxu0 0.0
        %2251 = vmatpush1.msra.mxu0 0.0
        %2252 = vmatprep.subr.mxu0 0.0
        %2253 = vmatpush1.msra.mxu0 0.0
        %2254 = vmatprep.subr.mxu0 0.0
        %2255 = vmatpush1.msra.mxu0 0.0
        %2256 = vmatprep.subr.mxu0 0.0
        %2257 = vmatpush1.msra.mxu0 0.0
        %2258 = vmatprep.subr.mxu0 0.0
        %2259 = vmatpush1.msra.mxu0 0.0
        %2260 = vmatprep.subr.mxu0 0.0
        %2261 = vmatpush1.msra.mxu0 0.0
        %2262 = vmatprep.subr.mxu0 0.0
        %2263 = vmatpush1.msra.mxu0 0.0
        %2264 = vmatprep.subr.mxu0 0.0
        %2265 = vmatpush1.msra.mxu0 0.0
        %2266 = vmatprep.subr.mxu0 0.0
        %2267 = vmatpush1.msra.mxu0 0.0
        %2268 = vmatprep.subr.mxu0 0.0
        %2269 = vmatpush1.msra.mxu0 0.0
        %2270 = vmatprep.subr.mxu0 0.0
        %2271 = vmatpush1.msra.mxu0 0.0
        %2272 = vmatprep.subr.mxu0 0.0
        %2273 = vmatpush1.msra.mxu0 0.0
        %2274 = vmatprep.subr.mxu0 0.0
        %2275 = vmatpush1.msra.mxu0 0.0
        %2276 = vmatprep.subr.mxu0 0.0
        %2277 = vmatpush1.msra.mxu0 0.0
        %2278 = vmatprep.subr.mxu0 0.0
        %2279 = vmatpush1.msra.mxu0 0.0
        %2280 = vmatprep.mubr.f32.mxu0 0.0
        %2281 = vmatmul.mubr.f32.gmra.mrb[0].mxu0 %v2214
        %v2282 = vpop.f32.mrb[0].mxu0
        %v2283 = vadd.f32 0.0, %v2282
        %v2284 = vpop.f32.mrb[0].mxu0
        %2285 = vdwg.mxu0
        %v2286 = vadd.f32 %v2213, %v2283
        %v2287 = vxor.u32 %v2286, 2147483648
        %v2288 = vmul.f32 %v2287, 1.442695
        %v2289 = vpow.pop %v2288
        %v2290 = vadd.f32 %v2289, 1.0
        %v2291 = vrcp.pop %v2290
        %v2292 = vmul.f32 1.0, %v2291
        %v2293 = vtanh.pop %v2286
        %v2294 = vmul.f32 %v2292, %v2098
        %2296 = vrot.lane.b32.xlu0 %v2293, 64
        %v2297 = vpop.permute.xlu0 %2296
        %v2299 = vmul.f32 %v2292, %v2297
        %2301 = vrot.lane.b32.xlu0 %v2299, 32
        %v2302 = vpop.permute.xlu0 %2301
        %v2304 = vadd.f32 %v2294, %v2302
        %v2305 = vtanh.pop %v2304
        %2307 = vrot.lane.b32.xlu0 %v2305, 64
        %v2308 = vpop.permute.xlu0 %2307
        %v2310 = vmul.f32 %v2292, %v2308
        %2312 = vrot.lane.b32.xlu0 %v2310, 32
        %v2313 = vpop.permute.xlu0 %2312
        %2315 = vst.msk [vmem:[#allocation5] sm:$0x1] %vm771, %v2313
        %v2316 = vld [vmem:[#allocation4] sm:$0xff]
        %v2317 = vld [vmem:[#allocation5] sm:$0xff]
        %2319 = vrot.lane.b32.xlu0 %v2317, 32
        %v2320 = vpop.permute.xlu0 %2319
        %v2322 = vsel %vm668, %v2316, %v2320
        %v2323 = vld [vmem:[%s6] sm:$0xff]
        %v2324 = vld [vmem:[%s6 + $0x8] sm:$0xff]
        %v2325 = vld [vmem:[%s6 + $0x10] sm:$0xff]
        %v2326 = vld [vmem:[%s6 + $0x18] sm:$0xff]
        %v2327 = vld [vmem:[%s6 + $0x20] sm:$0xff]
        %v2328 = vld [vmem:[%s6 + $0x28] sm:$0xff]
        %v2329 = vld [vmem:[%s6 + $0x30] sm:$0xff]
        %v2330 = vld [vmem:[%s6 + $0x38] sm:$0xff]
        %v2331 = vld [vmem:[%s6 + $0x40] sm:$0xff]
        %v2332 = vld [vmem:[%s6 + $0x48] sm:$0xff]
        %v2333 = vld [vmem:[%s6 + $0x50] sm:$0xff]
        %v2334 = vld [vmem:[%s6 + $0x58] sm:$0xff]
        %v2335 = vld [vmem:[%s6 + $0x60] sm:$0xff]
        %v2336 = vld [vmem:[%s6 + $0x68] sm:$0xff]
        %v2337 = vld [vmem:[%s6 + $0x70] sm:$0xff]
        %v2338 = vld [vmem:[%s6 + $0x78] sm:$0xff]
        %v2339 = vld [vmem:[%s6 + $0x80] sm:$0xff]
        %v2340 = vld [vmem:[%s6 + $0x88] sm:$0xff]
        %v2341 = vld [vmem:[%s6 + $0x90] sm:$0xff]
        %v2342 = vld [vmem:[%s6 + $0x98] sm:$0xff]
        %v2343 = vld [vmem:[%s6 + $0xa0] sm:$0xff]
        %v2344 = vld [vmem:[%s6 + $0xa8] sm:$0xff]
        %v2345 = vld [vmem:[%s6 + $0xb0] sm:$0xff]
        %v2346 = vld [vmem:[%s6 + $0xb8] sm:$0xff]
        %v2347 = vld [vmem:[%s6 + $0xc0] sm:$0xff]
        %v2348 = vld [vmem:[%s6 + $0xc8] sm:$0xff]
        %v2349 = vld [vmem:[%s6 + $0xd0] sm:$0xff]
        %v2350 = vld [vmem:[%s6 + $0xd8] sm:$0xff]
        %v2351 = vld [vmem:[%s6 + $0xe0] sm:$0xff]
        %v2352 = vld [vmem:[%s6 + $0xe8] sm:$0xff]
        %v2353 = vld [vmem:[%s6 + $0xf0] sm:$0xff]
        %v2354 = vld [vmem:[%s6 + $0xf8] sm:$0xff]
        %v2355 = vld [vmem:[%s6 + $0x100] sm:$0xff]
        %v2356 = vld [vmem:[%s6 + $0x108] sm:$0xff]
        %v2357 = vld [vmem:[%s6 + $0x110] sm:$0xff]
        %v2358 = vld [vmem:[%s6 + $0x118] sm:$0xff]
        %v2359 = vld [vmem:[%s6 + $0x120] sm:$0xff]
        %v2360 = vld [vmem:[%s6 + $0x128] sm:$0xff]
        %v2361 = vld [vmem:[%s6 + $0x130] sm:$0xff]
        %v2362 = vld [vmem:[%s6 + $0x138] sm:$0xff]
        %v2363 = vld [vmem:[%s6 + $0x140] sm:$0xff]
        %v2364 = vld [vmem:[%s6 + $0x148] sm:$0xff]
        %v2365 = vld [vmem:[%s6 + $0x150] sm:$0xff]
        %v2366 = vld [vmem:[%s6 + $0x158] sm:$0xff]
        %v2367 = vld [vmem:[%s6 + $0x160] sm:$0xff]
        %v2368 = vld [vmem:[%s6 + $0x168] sm:$0xff]
        %v2369 = vld [vmem:[%s6 + $0x170] sm:$0xff]
        %v2370 = vld [vmem:[%s6 + $0x178] sm:$0xff]
        %v2371 = vld [vmem:[%s6 + $0x180] sm:$0xff]
        %v2372 = vld [vmem:[%s6 + $0x188] sm:$0xff]
        %v2373 = vld [vmem:[%s6 + $0x190] sm:$0xff]
        %v2374 = vld [vmem:[%s6 + $0x198] sm:$0xff]
        %v2375 = vld [vmem:[%s6 + $0x1a0] sm:$0xff]
        %v2376 = vld [vmem:[%s6 + $0x1a8] sm:$0xff]
        %v2377 = vld [vmem:[%s6 + $0x1b0] sm:$0xff]
        %v2378 = vld [vmem:[%s6 + $0x1b8] sm:$0xff]
        %v2379 = vld [vmem:[%s6 + $0x1c0] sm:$0xff]
        %v2380 = vld [vmem:[%s6 + $0x1c8] sm:$0xff]
        %v2381 = vld [vmem:[%s6 + $0x1d0] sm:$0xff]
        %v2382 = vld [vmem:[%s6 + $0x1d8] sm:$0xff]
        %v2383 = vld [vmem:[%s6 + $0x1e0] sm:$0xff]
        %v2384 = vld [vmem:[%s6 + $0x1e8] sm:$0xff]
        %v2385 = vld [vmem:[%s6 + $0x1f0] sm:$0xff]
        %v2386 = vld [vmem:[%s6 + $0x1f8] sm:$0xff]
        %s2387 = scalar_lea.vmem %s6, 512
        %v2388 = vld [vmem:[%s2387] sm:$0xff]
        %v2389 = vld [vmem:[%s2387 + $0x8] sm:$0xff]
        %v2390 = vld [vmem:[%s2387 + $0x10] sm:$0xff]
        %v2391 = vld [vmem:[%s2387 + $0x18] sm:$0xff]
        %v2392 = vld [vmem:[%s2387 + $0x20] sm:$0xff]
        %v2393 = vld [vmem:[%s2387 + $0x28] sm:$0xff]
        %v2394 = vld [vmem:[%s2387 + $0x30] sm:$0xff]
        %v2395 = vld [vmem:[%s2387 + $0x38] sm:$0xff]
        %v2396 = vld [vmem:[%s2387 + $0x40] sm:$0xff]
        %v2397 = vld [vmem:[%s2387 + $0x48] sm:$0xff]
        %v2398 = vld [vmem:[%s2387 + $0x50] sm:$0xff]
        %v2399 = vld [vmem:[%s2387 + $0x58] sm:$0xff]
        %v2400 = vld [vmem:[%s2387 + $0x60] sm:$0xff]
        %v2401 = vld [vmem:[%s2387 + $0x68] sm:$0xff]
        %v2402 = vld [vmem:[%s2387 + $0x70] sm:$0xff]
        %v2403 = vld [vmem:[%s2387 + $0x78] sm:$0xff]
        %v2404 = vld [vmem:[%s2387 + $0x80] sm:$0xff]
        %v2405 = vld [vmem:[%s2387 + $0x88] sm:$0xff]
        %v2406 = vld [vmem:[%s2387 + $0x90] sm:$0xff]
        %v2407 = vld [vmem:[%s2387 + $0x98] sm:$0xff]
        %v2408 = vld [vmem:[%s2387 + $0xa0] sm:$0xff]
        %v2409 = vld [vmem:[%s2387 + $0xa8] sm:$0xff]
        %v2410 = vld [vmem:[%s2387 + $0xb0] sm:$0xff]
        %v2411 = vld [vmem:[%s2387 + $0xb8] sm:$0xff]
        %v2412 = vld [vmem:[%s2387 + $0xc0] sm:$0xff]
        %v2413 = vld [vmem:[%s2387 + $0xc8] sm:$0xff]
        %v2414 = vld [vmem:[%s2387 + $0xd0] sm:$0xff]
        %v2415 = vld [vmem:[%s2387 + $0xd8] sm:$0xff]
        %v2416 = vld [vmem:[%s2387 + $0xe0] sm:$0xff]
        %v2417 = vld [vmem:[%s2387 + $0xe8] sm:$0xff]
        %v2418 = vld [vmem:[%s2387 + $0xf0] sm:$0xff]
        %v2419 = vld [vmem:[%s2387 + $0xf8] sm:$0xff]
        %v2420 = vld [vmem:[%s2387 + $0x100] sm:$0xff]
        %v2421 = vld [vmem:[%s2387 + $0x108] sm:$0xff]
        %v2422 = vld [vmem:[%s2387 + $0x110] sm:$0xff]
        %v2423 = vld [vmem:[%s2387 + $0x118] sm:$0xff]
        %v2424 = vld [vmem:[%s2387 + $0x120] sm:$0xff]
        %v2425 = vld [vmem:[%s2387 + $0x128] sm:$0xff]
        %v2426 = vld [vmem:[%s2387 + $0x130] sm:$0xff]
        %v2427 = vld [vmem:[%s2387 + $0x138] sm:$0xff]
        %v2428 = vld [vmem:[%s2387 + $0x140] sm:$0xff]
        %v2429 = vld [vmem:[%s2387 + $0x148] sm:$0xff]
        %v2430 = vld [vmem:[%s2387 + $0x150] sm:$0xff]
        %v2431 = vld [vmem:[%s2387 + $0x158] sm:$0xff]
        %v2432 = vld [vmem:[%s2387 + $0x160] sm:$0xff]
        %v2433 = vld [vmem:[%s2387 + $0x168] sm:$0xff]
        %v2434 = vld [vmem:[%s2387 + $0x170] sm:$0xff]
        %v2435 = vld [vmem:[%s2387 + $0x178] sm:$0xff]
        %v2436 = vld [vmem:[%s2387 + $0x180] sm:$0xff]
        %v2437 = vld [vmem:[%s2387 + $0x188] sm:$0xff]
        %v2438 = vld [vmem:[%s2387 + $0x190] sm:$0xff]
        %v2439 = vld [vmem:[%s2387 + $0x198] sm:$0xff]
        %v2440 = vld [vmem:[%s2387 + $0x1a0] sm:$0xff]
        %v2441 = vld [vmem:[%s2387 + $0x1a8] sm:$0xff]
        %v2442 = vld [vmem:[%s2387 + $0x1b0] sm:$0xff]
        %v2443 = vld [vmem:[%s2387 + $0x1b8] sm:$0xff]
        %v2444 = vld [vmem:[%s2387 + $0x1c0] sm:$0xff]
        %v2445 = vld [vmem:[%s2387 + $0x1c8] sm:$0xff]
        %v2446 = vld [vmem:[%s2387 + $0x1d0] sm:$0xff]
        %v2447 = vld [vmem:[%s2387 + $0x1d8] sm:$0xff]
        %v2448 = vld [vmem:[%s2387 + $0x1e0] sm:$0xff]
        %v2449 = vld [vmem:[%s2387 + $0x1e8] sm:$0xff]
        %v2450 = vld [vmem:[%s2387 + $0x1f0] sm:$0xff]
        %v2451 = vld [vmem:[%s2387 + $0x1f8] sm:$0xff]
        %v2452 = vld [vmem:[%s5] sm:$0xff]
        %v2453 = vld [vmem:[%s5 + $0x8] sm:$0xff]
        %v2454 = vld [vmem:[%s5 + $0x10] sm:$0xff]
        %v2455 = vld [vmem:[%s5 + $0x18] sm:$0xff]
        %v2456 = vld [vmem:[%s5 + $0x20] sm:$0xff]
        %v2457 = vld [vmem:[%s5 + $0x28] sm:$0xff]
        %v2458 = vld [vmem:[%s5 + $0x30] sm:$0xff]
        %v2459 = vld [vmem:[%s5 + $0x38] sm:$0xff]
        %s2460 = scalar_lea.vmem %s5, 64
        %v2461 = vld [vmem:[%s2460] sm:$0xff]
        %v2462 = vld [vmem:[%s2460 + $0x8] sm:$0xff]
        %v2463 = vld [vmem:[%s2460 + $0x10] sm:$0xff]
        %v2464 = vld [vmem:[%s2460 + $0x18] sm:$0xff]
        %v2465 = vld [vmem:[%s2460 + $0x20] sm:$0xff]
        %v2466 = vld [vmem:[%s2460 + $0x28] sm:$0xff]
        %v2467 = vld [vmem:[%s2460 + $0x30] sm:$0xff]
        %v2468 = vld [vmem:[%s2460 + $0x38] sm:$0xff]
        %s2469 = scalar_lea.vmem %s5, 128
        %v2470 = vld [vmem:[%s2469] sm:$0xff]
        %v2471 = vld [vmem:[%s2469 + $0x8] sm:$0xff]
        %v2472 = vld [vmem:[%s2469 + $0x10] sm:$0xff]
        %v2473 = vld [vmem:[%s2469 + $0x18] sm:$0xff]
        %v2474 = vld [vmem:[%s2469 + $0x20] sm:$0xff]
        %v2475 = vld [vmem:[%s2469 + $0x28] sm:$0xff]
        %v2476 = vld [vmem:[%s2469 + $0x30] sm:$0xff]
        %v2477 = vld [vmem:[%s2469 + $0x38] sm:$0xff]
        %v2478 = vsel %vm495, %v2322, 0.0
        %v2479 = vrot.slane %v2478, 4
        %v2480 = vadd.f32 %v2478, %v2479
        %v2481 = vrot.slane %v2480, 2
        %v2482 = vadd.f32 %v2480, %v2481
        %v2483 = vrot.slane %v2482, 1
        %v2484 = vadd.f32 %v2482, %v2483
        %v2485 = vrcp.pop 8.0
        %v2486 = vmul.f32 %v2484, %v2485
        %v2487 = vadd.f32 %v452, %v456
        %v2488 = vadd.f32 %v2487, %v460
        %v2489 = vadd.f32 %v2488, %v464
        %v2490 = vadd.f32 %v2489, %v468
        %v2491 = vadd.f32 %v2490, %v472
        %vm2492 = vcmask 1040384
        %v2493 = vsel %vm2492, %v476, 0.0
        %v2494 = vadd.f32 %v2491, %v2493
        %v2495 = vrot.slane %v2494, 4
        %v2496 = vadd.f32 %v2494, %v2495
        %v2497 = vrot.slane %v2496, 2
        %v2498 = vadd.f32 %v2496, %v2497
        %v2499 = vrot.slane %v2498, 1
        %v2500 = vadd.f32 %v2498, %v2499
        %v2501 = vadd.f32 %v453, %v457
        %v2502 = vadd.f32 %v2501, %v461
        %v2503 = vadd.f32 %v2502, %v465
        %v2504 = vadd.f32 %v2503, %v469
        %v2505 = vadd.f32 %v2504, %v473
        %v2506 = vsel %vm2492, %v477, 0.0
        %v2507 = vadd.f32 %v2505, %v2506
        %v2508 = vrot.slane %v2507, 4
        %v2509 = vadd.f32 %v2507, %v2508
        %v2510 = vrot.slane %v2509, 2
        %v2511 = vadd.f32 %v2509, %v2510
        %v2512 = vrot.slane %v2511, 1
        %v2513 = vadd.f32 %v2511, %v2512
        %v2514 = vadd.f32 %v454, %v458
        %v2515 = vadd.f32 %v2514, %v462
        %v2516 = vadd.f32 %v2515, %v466
        %v2517 = vadd.f32 %v2516, %v470
        %v2518 = vadd.f32 %v2517, %v474
        %v2519 = vsel %vm2492, %v478, 0.0
        %v2520 = vadd.f32 %v2518, %v2519
        %v2521 = vrot.slane %v2520, 4
        %v2522 = vadd.f32 %v2520, %v2521
        %v2523 = vrot.slane %v2522, 2
        %v2524 = vadd.f32 %v2522, %v2523
        %v2525 = vrot.slane %v2524, 1
        %v2526 = vadd.f32 %v2524, %v2525
        %v2527 = vadd.f32 %v455, %v459
        %v2528 = vadd.f32 %v2527, %v463
        %v2529 = vadd.f32 %v2528, %v467
        %v2530 = vadd.f32 %v2529, %v471
        %v2531 = vadd.f32 %v2530, %v475
        %v2532 = vsel %vm2492, %v479, 0.0
        %v2533 = vadd.f32 %v2531, %v2532
        %v2534 = vrot.slane %v2533, 4
        %v2535 = vadd.f32 %v2533, %v2534
        %v2536 = vrot.slane %v2535, 2
        %v2537 = vadd.f32 %v2535, %v2536
        %v2538 = vrot.slane %v2537, 1
        %v2539 = vadd.f32 %v2537, %v2538
        %v2540 = vrcp.pop 49.0
        %v2541 = vmul.f32 %v2500, %v2540
        %v2542 = vmul.f32 %v2513, %v2540
        %v2543 = vmul.f32 %v2526, %v2540
        %v2544 = vmul.f32 %v2539, %v2540
        %2545 = vmatprep.subr.mxu0 0.0
        %2546 = vmatpush1.msra.mxu0 %v2323
        %2547 = vmatprep.subr.mxu0 0.0
        %2548 = vmatpush1.msra.mxu0 %v2324
        %2549 = vmatprep.subr.mxu0 0.0
        %2550 = vmatpush1.msra.mxu0 %v2325
        %2551 = vmatprep.subr.mxu0 0.0
        %2552 = vmatpush1.msra.mxu0 %v2326
        %2553 = vmatprep.subr.mxu0 0.0
        %2554 = vmatpush1.msra.mxu0 %v2327
        %2555 = vmatprep.subr.mxu0 0.0
        %2556 = vmatpush1.msra.mxu0 %v2328
        %2557 = vmatprep.subr.mxu0 0.0
        %2558 = vmatpush1.msra.mxu0 %v2329
        %2559 = vmatprep.subr.mxu0 0.0
        %2560 = vmatpush1.msra.mxu0 %v2330
        %2561 = vmatprep.subr.mxu0 0.0
        %2562 = vmatpush1.msra.mxu0 %v2331
        %2563 = vmatprep.subr.mxu0 0.0
        %2564 = vmatpush1.msra.mxu0 %v2332
        %2565 = vmatprep.subr.mxu0 0.0
        %2566 = vmatpush1.msra.mxu0 %v2333
        %2567 = vmatprep.subr.mxu0 0.0
        %2568 = vmatpush1.msra.mxu0 %v2334
        %2569 = vmatprep.subr.mxu0 0.0
        %2570 = vmatpush1.msra.mxu0 %v2335
        %2571 = vmatprep.subr.mxu0 0.0
        %2572 = vmatpush1.msra.mxu0 %v2336
        %2573 = vmatprep.subr.mxu0 0.0
        %2574 = vmatpush1.msra.mxu0 %v2337
        %2575 = vmatprep.subr.mxu0 0.0
        %2576 = vmatpush1.msra.mxu0 %v2338
        %2577 = vmatprep.subr.mxu0 0.0
        %2578 = vmatpush1.msra.mxu0 %v2339
        %2579 = vmatprep.subr.mxu0 0.0
        %2580 = vmatpush1.msra.mxu0 %v2340
        %2581 = vmatprep.subr.mxu0 0.0
        %2582 = vmatpush1.msra.mxu0 %v2341
        %2583 = vmatprep.subr.mxu0 0.0
        %2584 = vmatpush1.msra.mxu0 %v2342
        %2585 = vmatprep.subr.mxu0 0.0
        %2586 = vmatpush1.msra.mxu0 %v2343
        %2587 = vmatprep.subr.mxu0 0.0
        %2588 = vmatpush1.msra.mxu0 %v2344
        %2589 = vmatprep.subr.mxu0 0.0
        %2590 = vmatpush1.msra.mxu0 %v2345
        %2591 = vmatprep.subr.mxu0 0.0
        %2592 = vmatpush1.msra.mxu0 %v2346
        %2593 = vmatprep.subr.mxu0 0.0
        %2594 = vmatpush1.msra.mxu0 %v2347
        %2595 = vmatprep.subr.mxu0 0.0
        %2596 = vmatpush1.msra.mxu0 %v2348
        %2597 = vmatprep.subr.mxu0 0.0
        %2598 = vmatpush1.msra.mxu0 %v2349
        %2599 = vmatprep.subr.mxu0 0.0
        %2600 = vmatpush1.msra.mxu0 %v2350
        %2601 = vmatprep.subr.mxu0 0.0
        %2602 = vmatpush1.msra.mxu0 %v2351
        %2603 = vmatprep.subr.mxu0 0.0
        %2604 = vmatpush1.msra.mxu0 %v2352
        %2605 = vmatprep.subr.mxu0 0.0
        %2606 = vmatpush1.msra.mxu0 %v2353
        %2607 = vmatprep.subr.mxu0 0.0
        %2608 = vmatpush1.msra.mxu0 %v2354
        %2609 = vmatprep.mubr.f32.mxu0 %v2542
        %2610 = vmatmul.mubr.f32.gmra.mrb[0].mxu0 %v2541
        %v2611 = vpop.f32.mrb[0].mxu0
        %v2612 = vadd.f32 0.0, %v2611
        %v2613 = vpop.f32.mrb[0].mxu0
        %2614 = vdwg.mxu0
        %2615 = vmatprep.subr.mxu0 0.0
        %2616 = vmatpush1.msra.mxu0 %v2355
        %2617 = vmatprep.subr.mxu0 0.0
        %2618 = vmatpush1.msra.mxu0 %v2356
        %2619 = vmatprep.subr.mxu0 0.0
        %2620 = vmatpush1.msra.mxu0 %v2357
        %2621 = vmatprep.subr.mxu0 0.0
        %2622 = vmatpush1.msra.mxu0 %v2358
        %2623 = vmatprep.subr.mxu0 0.0
        %2624 = vmatpush1.msra.mxu0 %v2359
        %2625 = vmatprep.subr.mxu0 0.0
        %2626 = vmatpush1.msra.mxu0 %v2360
        %2627 = vmatprep.subr.mxu0 0.0
        %2628 = vmatpush1.msra.mxu0 %v2361
        %2629 = vmatprep.subr.mxu0 0.0
        %2630 = vmatpush1.msra.mxu0 %v2362
        %2631 = vmatprep.subr.mxu0 0.0
        %2632 = vmatpush1.msra.mxu0 %v2363
        %2633 = vmatprep.subr.mxu0 0.0
        %2634 = vmatpush1.msra.mxu0 %v2364
        %2635 = vmatprep.subr.mxu0 0.0
        %2636 = vmatpush1.msra.mxu0 %v2365
        %2637 = vmatprep.subr.mxu0 0.0
        %2638 = vmatpush1.msra.mxu0 %v2366
        %2639 = vmatprep.subr.mxu0 0.0
        %2640 = vmatpush1.msra.mxu0 %v2367
        %2641 = vmatprep.subr.mxu0 0.0
        %2642 = vmatpush1.msra.mxu0 %v2368
        %2643 = vmatprep.subr.mxu0 0.0
        %2644 = vmatpush1.msra.mxu0 %v2369
        %2645 = vmatprep.subr.mxu0 0.0
        %2646 = vmatpush1.msra.mxu0 %v2370
        %2647 = vmatprep.subr.mxu0 0.0
        %2648 = vmatpush1.msra.mxu0 %v2371
        %2649 = vmatprep.subr.mxu0 0.0
        %2650 = vmatpush1.msra.mxu0 %v2372
        %2651 = vmatprep.subr.mxu0 0.0
        %2652 = vmatpush1.msra.mxu0 %v2373
        %2653 = vmatprep.subr.mxu0 0.0
        %2654 = vmatpush1.msra.mxu0 %v2374
        %2655 = vmatprep.subr.mxu0 0.0
        %2656 = vmatpush1.msra.mxu0 %v2375
        %2657 = vmatprep.subr.mxu0 0.0
        %2658 = vmatpush1.msra.mxu0 %v2376
        %2659 = vmatprep.subr.mxu0 0.0
        %2660 = vmatpush1.msra.mxu0 %v2377
        %2661 = vmatprep.subr.mxu0 0.0
        %2662 = vmatpush1.msra.mxu0 %v2378
        %2663 = vmatprep.subr.mxu0 0.0
        %2664 = vmatpush1.msra.mxu0 %v2379
        %2665 = vmatprep.subr.mxu0 0.0
        %2666 = vmatpush1.msra.mxu0 %v2380
        %2667 = vmatprep.subr.mxu0 0.0
        %2668 = vmatpush1.msra.mxu0 %v2381
        %2669 = vmatprep.subr.mxu0 0.0
        %2670 = vmatpush1.msra.mxu0 %v2382
        %2671 = vmatprep.subr.mxu0 0.0
        %2672 = vmatpush1.msra.mxu0 %v2383
        %2673 = vmatprep.subr.mxu0 0.0
        %2674 = vmatpush1.msra.mxu0 %v2384
        %2675 = vmatprep.subr.mxu0 0.0
        %2676 = vmatpush1.msra.mxu0 %v2385
        %2677 = vmatprep.subr.mxu0 0.0
        %2678 = vmatpush1.msra.mxu0 %v2386
        %2679 = vmatprep.mubr.f32.mxu0 %v2544
        %2680 = vmatmul.mubr.f32.gmra.mrb[0].mxu0 %v2543
        %v2681 = vpop.f32.mrb[0].mxu0
        %v2682 = vadd.f32 %v2612, %v2681
        %v2683 = vpop.f32.mrb[0].mxu0
        %2684 = vdwg.mxu0
        %v2685 = vtanh.pop %v2682
        %v2686 = vmul.f32 %v2486, %v2685
        %v2688 = vsel %vm495, %v2322, 0
        %2690 = vmatprep.subr.mxu0 0.0
        %2691 = vmatpush1.msra.mxu0 %v2452
        %2692 = vmatprep.subr.mxu0 0.0
        %2693 = vmatpush1.msra.mxu0 %v2453
        %2694 = vmatprep.subr.mxu0 0.0
        %2695 = vmatpush1.msra.mxu0 %v2454
        %2696 = vmatprep.subr.mxu0 0.0
        %2697 = vmatpush1.msra.mxu0 %v2455
        %2698 = vmatprep.subr.mxu0 0.0
        %2699 = vmatpush1.msra.mxu0 %v2456
        %2700 = vmatprep.subr.mxu0 0.0
        %2701 = vmatpush1.msra.mxu0 %v2457
        %2702 = vmatprep.subr.mxu0 0.0
        %2703 = vmatpush1.msra.mxu0 %v2458
        %2704 = vmatprep.subr.mxu0 0.0
        %2705 = vmatpush1.msra.mxu0 %v2459
        %2706 = vmatprep.subr.mxu0 0.0
        %2707 = vmatpush1.msra.mxu0 0.0
        %2708 = vmatprep.subr.mxu0 0.0
        %2709 = vmatpush1.msra.mxu0 0.0
        %2710 = vmatprep.subr.mxu0 0.0
        %2711 = vmatpush1.msra.mxu0 0.0
        %2712 = vmatprep.subr.mxu0 0.0
        %2713 = vmatpush1.msra.mxu0 0.0
        %2714 = vmatprep.subr.mxu0 0.0
        %2715 = vmatpush1.msra.mxu0 0.0
        %2716 = vmatprep.subr.mxu0 0.0
        %2717 = vmatpush1.msra.mxu0 0.0
        %2718 = vmatprep.subr.mxu0 0.0
        %2719 = vmatpush1.msra.mxu0 0.0
        %2720 = vmatprep.subr.mxu0 0.0
        %2721 = vmatpush1.msra.mxu0 0.0
        %2722 = vmatprep.subr.mxu0 0.0
        %2723 = vmatpush1.msra.mxu0 0.0
        %2724 = vmatprep.subr.mxu0 0.0
        %2725 = vmatpush1.msra.mxu0 0.0
        %2726 = vmatprep.subr.mxu0 0.0
        %2727 = vmatpush1.msra.mxu0 0.0
        %2728 = vmatprep.subr.mxu0 0.0
        %2729 = vmatpush1.msra.mxu0 0.0
        %2730 = vmatprep.subr.mxu0 0.0
        %2731 = vmatpush1.msra.mxu0 0.0
        %2732 = vmatprep.subr.mxu0 0.0
        %2733 = vmatpush1.msra.mxu0 0.0
        %2734 = vmatprep.subr.mxu0 0.0
        %2735 = vmatpush1.msra.mxu0 0.0
        %2736 = vmatprep.subr.mxu0 0.0
        %2737 = vmatpush1.msra.mxu0 0.0
        %2738 = vmatprep.subr.mxu0 0.0
        %2739 = vmatpush1.msra.mxu0 0.0
        %2740 = vmatprep.subr.mxu0 0.0
        %2741 = vmatpush1.msra.mxu0 0.0
        %2742 = vmatprep.subr.mxu0 0.0
        %2743 = vmatpush1.msra.mxu0 0.0
        %2744 = vmatprep.subr.mxu0 0.0
        %2745 = vmatpush1.msra.mxu0 0.0
        %2746 = vmatprep.subr.mxu0 0.0
        %2747 = vmatpush1.msra.mxu0 0.0
        %2748 = vmatprep.subr.mxu0 0.0
        %2749 = vmatpush1.msra.mxu0 0.0
        %2750 = vmatprep.subr.mxu0 0.0
        %2751 = vmatpush1.msra.mxu0 0.0
        %2752 = vmatprep.subr.mxu0 0.0
        %2753 = vmatpush1.msra.mxu0 0.0
        %2754 = vmatprep.mubr.f32.mxu0 0.0
        %2755 = vmatmul.mubr.f32.gmra.mrb[0].mxu0 %v2688
        %v2756 = vpop.f32.mrb[0].mxu0
        %v2757 = vadd.f32 0.0, %v2756
        %v2758 = vpop.f32.mrb[0].mxu0
        %2759 = vdwg.mxu0
        %v2760 = vtanh.pop %v2757
        %2761 = vst.msk [vmem:[#allocation6] sm:$0xff] %vm495, %v2760
        %2762 = vmatprep.subr.mxu0 0.0
        %2763 = vmatpush1.msra.mxu0 %v2388
        %2764 = vmatprep.subr.mxu0 0.0
        %2765 = vmatpush1.msra.mxu0 %v2389
        %2766 = vmatprep.subr.mxu0 0.0
        %2767 = vmatpush1.msra.mxu0 %v2390
        %2768 = vmatprep.subr.mxu0 0.0
        %2769 = vmatpush1.msra.mxu0 %v2391
        %2770 = vmatprep.subr.mxu0 0.0
        %2771 = vmatpush1.msra.mxu0 %v2392
        %2772 = vmatprep.subr.mxu0 0.0
        %2773 = vmatpush1.msra.mxu0 %v2393
        %2774 = vmatprep.subr.mxu0 0.0
        %2775 = vmatpush1.msra.mxu0 %v2394
        %2776 = vmatprep.subr.mxu0 0.0
        %2777 = vmatpush1.msra.mxu0 %v2395
        %2778 = vmatprep.subr.mxu0 0.0
        %2779 = vmatpush1.msra.mxu0 %v2396
        %2780 = vmatprep.subr.mxu0 0.0
        %2781 = vmatpush1.msra.mxu0 %v2397
        %2782 = vmatprep.subr.mxu0 0.0
        %2783 = vmatpush1.msra.mxu0 %v2398
        %2784 = vmatprep.subr.mxu0 0.0
        %2785 = vmatpush1.msra.mxu0 %v2399
        %2786 = vmatprep.subr.mxu0 0.0
        %2787 = vmatpush1.msra.mxu0 %v2400
        %2788 = vmatprep.subr.mxu0 0.0
        %2789 = vmatpush1.msra.mxu0 %v2401
        %2790 = vmatprep.subr.mxu0 0.0
        %2791 = vmatpush1.msra.mxu0 %v2402
        %2792 = vmatprep.subr.mxu0 0.0
        %2793 = vmatpush1.msra.mxu0 %v2403
        %2794 = vmatprep.subr.mxu0 0.0
        %2795 = vmatpush1.msra.mxu0 %v2404
        %2796 = vmatprep.subr.mxu0 0.0
        %2797 = vmatpush1.msra.mxu0 %v2405
        %2798 = vmatprep.subr.mxu0 0.0
        %2799 = vmatpush1.msra.mxu0 %v2406
        %2800 = vmatprep.subr.mxu0 0.0
        %2801 = vmatpush1.msra.mxu0 %v2407
        %2802 = vmatprep.subr.mxu0 0.0
        %2803 = vmatpush1.msra.mxu0 %v2408
        %2804 = vmatprep.subr.mxu0 0.0
        %2805 = vmatpush1.msra.mxu0 %v2409
        %2806 = vmatprep.subr.mxu0 0.0
        %2807 = vmatpush1.msra.mxu0 %v2410
        %2808 = vmatprep.subr.mxu0 0.0
        %2809 = vmatpush1.msra.mxu0 %v2411
        %2810 = vmatprep.subr.mxu0 0.0
        %2811 = vmatpush1.msra.mxu0 %v2412
        %2812 = vmatprep.subr.mxu0 0.0
        %2813 = vmatpush1.msra.mxu0 %v2413
        %2814 = vmatprep.subr.mxu0 0.0
        %2815 = vmatpush1.msra.mxu0 %v2414
        %2816 = vmatprep.subr.mxu0 0.0
        %2817 = vmatpush1.msra.mxu0 %v2415
        %2818 = vmatprep.subr.mxu0 0.0
        %2819 = vmatpush1.msra.mxu0 %v2416
        %2820 = vmatprep.subr.mxu0 0.0
        %2821 = vmatpush1.msra.mxu0 %v2417
        %2822 = vmatprep.subr.mxu0 0.0
        %2823 = vmatpush1.msra.mxu0 %v2418
        %2824 = vmatprep.subr.mxu0 0.0
        %2825 = vmatpush1.msra.mxu0 %v2419
        %2826 = vmatprep.mubr.f32.mxu0 %v453
        %2827 = vmatmul.mubr.f32.gmra.mrb[0].mxu0 %v452
        %v2828 = vpop.f32.mrb[0].mxu0
        %v2829 = vadd.f32 0.0, %v2828
        %v2830 = vpop.f32.mrb[0].mxu0
        %2831 = vmatprep.mubr.f32.mxu0 %v457
        %2832 = vmatmul.mubr.f32.gmra.mrb[0].mxu0 %v456
        %v2833 = vpop.f32.mrb[0].mxu0
        %v2834 = vadd.f32 0.0, %v2833
        %v2835 = vpop.f32.mrb[0].mxu0
        %2836 = vmatprep.mubr.f32.mxu0 %v461
        %2837 = vmatmul.mubr.f32.gmra.mrb[0].mxu0 %v460
        %v2838 = vpop.f32.mrb[0].mxu0
        %v2839 = vadd.f32 0.0, %v2838
        %v2840 = vpop.f32.mrb[0].mxu0
        %2841 = vmatprep.mubr.f32.mxu0 %v465
        %2842 = vmatmul.mubr.f32.gmra.mrb[0].mxu0 %v464
        %v2843 = vpop.f32.mrb[0].mxu0
        %v2844 = vadd.f32 0.0, %v2843
        %v2845 = vpop.f32.mrb[0].mxu0
        %2846 = vmatprep.mubr.f32.mxu0 %v469
        %2847 = vmatmul.mubr.f32.gmra.mrb[0].mxu0 %v468
        %v2848 = vpop.f32.mrb[0].mxu0
        %v2849 = vadd.f32 0.0, %v2848
        %v2850 = vpop.f32.mrb[0].mxu0
        %2851 = vmatprep.mubr.f32.mxu0 %v473
        %2852 = vmatmul.mubr.f32.gmra.mrb[0].mxu0 %v472
        %v2853 = vpop.f32.mrb[0].mxu0
        %v2854 = vadd.f32 0.0, %v2853
        %v2855 = vpop.f32.mrb[0].mxu0
        %2856 = vmatprep.mubr.f32.mxu0 %v477
        %2857 = vmatmul.mubr.f32.gmra.mrb[0].mxu0 %v476
        %v2858 = vpop.f32.mrb[0].mxu0
        %v2859 = vadd.f32 0.0, %v2858
        %v2860 = vpop.f32.mrb[0].mxu0
        %2861 = vdwg.mxu0
        %2862 = vmatprep.subr.mxu0 0.0
        %2863 = vmatpush1.msra.mxu0 %v2420
        %2864 = vmatprep.subr.mxu0 0.0
        %2865 = vmatpush1.msra.mxu0 %v2421
        %2866 = vmatprep.subr.mxu0 0.0
        %2867 = vmatpush1.msra.mxu0 %v2422
        %2868 = vmatprep.subr.mxu0 0.0
        %2869 = vmatpush1.msra.mxu0 %v2423
        %2870 = vmatprep.subr.mxu0 0.0
        %2871 = vmatpush1.msra.mxu0 %v2424
        %2872 = vmatprep.subr.mxu0 0.0
        %2873 = vmatpush1.msra.mxu0 %v2425
        %2874 = vmatprep.subr.mxu0 0.0
        %2875 = vmatpush1.msra.mxu0 %v2426
        %2876 = vmatprep.subr.mxu0 0.0
        %2877 = vmatpush1.msra.mxu0 %v2427
        %2878 = vmatprep.subr.mxu0 0.0
        %2879 = vmatpush1.msra.mxu0 %v2428
        %2880 = vmatprep.subr.mxu0 0.0
        %2881 = vmatpush1.msra.mxu0 %v2429
        %2882 = vmatprep.subr.mxu0 0.0
        %2883 = vmatpush1.msra.mxu0 %v2430
        %2884 = vmatprep.subr.mxu0 0.0
        %2885 = vmatpush1.msra.mxu0 %v2431
        %2886 = vmatprep.subr.mxu0 0.0
        %2887 = vmatpush1.msra.mxu0 %v2432
        %2888 = vmatprep.subr.mxu0 0.0
        %2889 = vmatpush1.msra.mxu0 %v2433
        %2890 = vmatprep.subr.mxu0 0.0
        %2891 = vmatpush1.msra.mxu0 %v2434
        %2892 = vmatprep.subr.mxu0 0.0
        %2893 = vmatpush1.msra.mxu0 %v2435
        %2894 = vmatprep.subr.mxu0 0.0
        %2895 = vmatpush1.msra.mxu0 %v2436
        %2896 = vmatprep.subr.mxu0 0.0
        %2897 = vmatpush1.msra.mxu0 %v2437
        %2898 = vmatprep.subr.mxu0 0.0
        %2899 = vmatpush1.msra.mxu0 %v2438
        %2900 = vmatprep.subr.mxu0 0.0
        %2901 = vmatpush1.msra.mxu0 %v2439
        %2902 = vmatprep.subr.mxu0 0.0
        %2903 = vmatpush1.msra.mxu0 %v2440
        %2904 = vmatprep.subr.mxu0 0.0
        %2905 = vmatpush1.msra.mxu0 %v2441
        %2906 = vmatprep.subr.mxu0 0.0
        %2907 = vmatpush1.msra.mxu0 %v2442
        %2908 = vmatprep.subr.mxu0 0.0
        %2909 = vmatpush1.msra.mxu0 %v2443
        %2910 = vmatprep.subr.mxu0 0.0
        %2911 = vmatpush1.msra.mxu0 %v2444
        %2912 = vmatprep.subr.mxu0 0.0
        %2913 = vmatpush1.msra.mxu0 %v2445
        %2914 = vmatprep.subr.mxu0 0.0
        %2915 = vmatpush1.msra.mxu0 %v2446
        %2916 = vmatprep.subr.mxu0 0.0
        %2917 = vmatpush1.msra.mxu0 %v2447
        %2918 = vmatprep.subr.mxu0 0.0
        %2919 = vmatpush1.msra.mxu0 %v2448
        %2920 = vmatprep.subr.mxu0 0.0
        %2921 = vmatpush1.msra.mxu0 %v2449
        %2922 = vmatprep.subr.mxu0 0.0
        %2923 = vmatpush1.msra.mxu0 %v2450
        %2924 = vmatprep.subr.mxu0 0.0
        %2925 = vmatpush1.msra.mxu0 %v2451
        %2926 = vmatprep.mubr.f32.mxu0 %v455
        %2927 = vmatmul.mubr.f32.gmra.mrb[0].mxu0 %v454
        %v2928 = vpop.f32.mrb[0].mxu0
        %v2929 = vadd.f32 %v2829, %v2928
        %v2930 = vpop.f32.mrb[0].mxu0
        %2931 = vmatprep.mubr.f32.mxu0 %v459
        %2932 = vmatmul.mubr.f32.gmra.mrb[0].mxu0 %v458
        %v2933 = vpop.f32.mrb[0].mxu0
        %v2934 = vadd.f32 %v2834, %v2933
        %v2935 = vpop.f32.mrb[0].mxu0
        %2936 = vmatprep.mubr.f32.mxu0 %v463
        %2937 = vmatmul.mubr.f32.gmra.mrb[0].mxu0 %v462
        %v2938 = vpop.f32.mrb[0].mxu0
        %v2939 = vadd.f32 %v2839, %v2938
        %v2940 = vpop.f32.mrb[0].mxu0
        %2941 = vmatprep.mubr.f32.mxu0 %v467
        %2942 = vmatmul.mubr.f32.gmra.mrb[0].mxu0 %v466
        %v2943 = vpop.f32.mrb[0].mxu0
        %v2944 = vadd.f32 %v2844, %v2943
        %v2945 = vpop.f32.mrb[0].mxu0
        %2946 = vmatprep.mubr.f32.mxu0 %v471
        %2947 = vmatmul.mubr.f32.gmra.mrb[0].mxu0 %v470
        %v2948 = vpop.f32.mrb[0].mxu0
        %v2949 = vadd.f32 %v2849, %v2948
        %v2950 = vpop.f32.mrb[0].mxu0
        %2951 = vmatprep.mubr.f32.mxu0 %v475
        %2952 = vmatmul.mubr.f32.gmra.mrb[0].mxu0 %v474
        %v2953 = vpop.f32.mrb[0].mxu0
        %v2954 = vadd.f32 %v2854, %v2953
        %v2955 = vpop.f32.mrb[0].mxu0
        %2956 = vmatprep.mubr.f32.mxu0 %v479
        %2957 = vmatmul.mubr.f32.gmra.mrb[0].mxu0 %v478
        %v2958 = vpop.f32.mrb[0].mxu0
        %v2959 = vadd.f32 %v2859, %v2958
        %v2960 = vpop.f32.mrb[0].mxu0
        %2961 = vdwg.mxu0
        %v2962 = vtanh.pop %v2929
        %v2963 = vtanh.pop %v2934
        %v2964 = vtanh.pop %v2939
        %v2965 = vtanh.pop %v2944
        %v2966 = vtanh.pop %v2949
        %v2967 = vtanh.pop %v2954
        %v2968 = vtanh.pop %v2959
        %2969 = vst.msk [vmem:[#allocation7] sm:$0xff] %vm495, %v2962
        %2970 = vst.msk [vmem:[#allocation7 + $0x8] sm:$0xff] %vm495, %v2963
        %2971 = vst.msk [vmem:[#allocation7 + $0x10] sm:$0xff] %vm495, %v2964
        %2972 = vst.msk [vmem:[#allocation7 + $0x18] sm:$0xff] %vm495, %v2965
        %2973 = vst.msk [vmem:[#allocation7 + $0x20] sm:$0xff] %vm495, %v2966
        %2974 = vst.msk [vmem:[#allocation7 + $0x28] sm:$0xff] %vm495, %v2967
        %vm2975 = vcmask 516096
        %2976 = vst.msk [vmem:[#allocation7 + $0x30] sm:$0x1] %vm2975, %v2968
        %2977 = vmatprep.subr.mxu0 0.0
        %2978 = vmatpush1.msra.mxu0 %v2323
        %2979 = vmatprep.subr.mxu0 0.0
        %2980 = vmatpush1.msra.mxu0 %v2324
        %2981 = vmatprep.subr.mxu0 0.0
        %2982 = vmatpush1.msra.mxu0 %v2325
        %2983 = vmatprep.subr.mxu0 0.0
        %2984 = vmatpush1.msra.mxu0 %v2326
        %2985 = vmatprep.subr.mxu0 0.0
        %2986 = vmatpush1.msra.mxu0 %v2327
        %2987 = vmatprep.subr.mxu0 0.0
        %2988 = vmatpush1.msra.mxu0 %v2328
        %2989 = vmatprep.subr.mxu0 0.0
        %2990 = vmatpush1.msra.mxu0 %v2329
        %2991 = vmatprep.subr.mxu0 0.0
        %2992 = vmatpush1.msra.mxu0 %v2330
        %2993 = vmatprep.subr.mxu0 0.0
        %2994 = vmatpush1.msra.mxu0 %v2331
        %2995 = vmatprep.subr.mxu0 0.0
        %2996 = vmatpush1.msra.mxu0 %v2332
        %2997 = vmatprep.subr.mxu0 0.0
        %2998 = vmatpush1.msra.mxu0 %v2333
        %2999 = vmatprep.subr.mxu0 0.0
        %3000 = vmatpush1.msra.mxu0 %v2334
        %3001 = vmatprep.subr.mxu0 0.0
        %3002 = vmatpush1.msra.mxu0 %v2335
        %3003 = vmatprep.subr.mxu0 0.0
        %3004 = vmatpush1.msra.mxu0 %v2336
        %3005 = vmatprep.subr.mxu0 0.0
        %3006 = vmatpush1.msra.mxu0 %v2337
        %3007 = vmatprep.subr.mxu0 0.0
        %3008 = vmatpush1.msra.mxu0 %v2338
        %3009 = vmatprep.subr.mxu0 0.0
        %3010 = vmatpush1.msra.mxu0 %v2339
        %3011 = vmatprep.subr.mxu0 0.0
        %3012 = vmatpush1.msra.mxu0 %v2340
        %3013 = vmatprep.subr.mxu0 0.0
        %3014 = vmatpush1.msra.mxu0 %v2341
        %3015 = vmatprep.subr.mxu0 0.0
        %3016 = vmatpush1.msra.mxu0 %v2342
        %3017 = vmatprep.subr.mxu0 0.0
        %3018 = vmatpush1.msra.mxu0 %v2343
        %3019 = vmatprep.subr.mxu0 0.0
        %3020 = vmatpush1.msra.mxu0 %v2344
        %3021 = vmatprep.subr.mxu0 0.0
        %3022 = vmatpush1.msra.mxu0 %v2345
        %3023 = vmatprep.subr.mxu0 0.0
        %3024 = vmatpush1.msra.mxu0 %v2346
        %3025 = vmatprep.subr.mxu0 0.0
        %3026 = vmatpush1.msra.mxu0 %v2347
        %3027 = vmatprep.subr.mxu0 0.0
        %3028 = vmatpush1.msra.mxu0 %v2348
        %3029 = vmatprep.subr.mxu0 0.0
        %3030 = vmatpush1.msra.mxu0 %v2349
        %3031 = vmatprep.subr.mxu0 0.0
        %3032 = vmatpush1.msra.mxu0 %v2350
        %3033 = vmatprep.subr.mxu0 0.0
        %3034 = vmatpush1.msra.mxu0 %v2351
        %3035 = vmatprep.subr.mxu0 0.0
        %3036 = vmatpush1.msra.mxu0 %v2352
        %3037 = vmatprep.subr.mxu0 0.0
        %3038 = vmatpush1.msra.mxu0 %v2353
        %3039 = vmatprep.subr.mxu0 0.0
        %3040 = vmatpush1.msra.mxu0 %v2354
        %3041 = vmatprep.mubr.f32.mxu0 %v453
        %3042 = vmatmul.mubr.f32.gmra.mrb[0].mxu0 %v452
        %v3043 = vpop.f32.mrb[0].mxu0
        %v3044 = vadd.f32 0.0, %v3043
        %v3045 = vpop.f32.mrb[0].mxu0
        %3046 = vmatprep.mubr.f32.mxu0 %v457
        %3047 = vmatmul.mubr.f32.gmra.mrb[0].mxu0 %v456
        %v3048 = vpop.f32.mrb[0].mxu0
        %v3049 = vadd.f32 0.0, %v3048
        %v3050 = vpop.f32.mrb[0].mxu0
        %3051 = vmatprep.mubr.f32.mxu0 %v461
        %3052 = vmatmul.mubr.f32.gmra.mrb[0].mxu0 %v460
        %v3053 = vpop.f32.mrb[0].mxu0
        %v3054 = vadd.f32 0.0, %v3053
        %v3055 = vpop.f32.mrb[0].mxu0
        %3056 = vmatprep.mubr.f32.mxu0 %v465
        %3057 = vmatmul.mubr.f32.gmra.mrb[0].mxu0 %v464
        %v3058 = vpop.f32.mrb[0].mxu0
        %v3059 = vadd.f32 0.0, %v3058
        %v3060 = vpop.f32.mrb[0].mxu0
        %3061 = vmatprep.mubr.f32.mxu0 %v469
        %3062 = vmatmul.mubr.f32.gmra.mrb[0].mxu0 %v468
        %v3063 = vpop.f32.mrb[0].mxu0
        %v3064 = vadd.f32 0.0, %v3063
        %v3065 = vpop.f32.mrb[0].mxu0
        %3066 = vmatprep.mubr.f32.mxu0 %v473
        %3067 = vmatmul.mubr.f32.gmra.mrb[0].mxu0 %v472
        %v3068 = vpop.f32.mrb[0].mxu0
        %v3069 = vadd.f32 0.0, %v3068
        %v3070 = vpop.f32.mrb[0].mxu0
        %3071 = vmatprep.mubr.f32.mxu0 %v477
        %3072 = vmatmul.mubr.f32.gmra.mrb[0].mxu0 %v476
        %v3073 = vpop.f32.mrb[0].mxu0
        %v3074 = vadd.f32 0.0, %v3073
        %v3075 = vpop.f32.mrb[0].mxu0
        %3076 = vdwg.mxu0
        %3077 = vmatprep.subr.mxu0 0.0
        %3078 = vmatpush1.msra.mxu0 %v2355
        %3079 = vmatprep.subr.mxu0 0.0
        %3080 = vmatpush1.msra.mxu0 %v2356
        %3081 = vmatprep.subr.mxu0 0.0
        %3082 = vmatpush1.msra.mxu0 %v2357
        %3083 = vmatprep.subr.mxu0 0.0
        %3084 = vmatpush1.msra.mxu0 %v2358
        %3085 = vmatprep.subr.mxu0 0.0
        %3086 = vmatpush1.msra.mxu0 %v2359
        %3087 = vmatprep.subr.mxu0 0.0
        %3088 = vmatpush1.msra.mxu0 %v2360
        %3089 = vmatprep.subr.mxu0 0.0
        %3090 = vmatpush1.msra.mxu0 %v2361
        %3091 = vmatprep.subr.mxu0 0.0
        %3092 = vmatpush1.msra.mxu0 %v2362
        %3093 = vmatprep.subr.mxu0 0.0
        %3094 = vmatpush1.msra.mxu0 %v2363
        %3095 = vmatprep.subr.mxu0 0.0
        %3096 = vmatpush1.msra.mxu0 %v2364
        %3097 = vmatprep.subr.mxu0 0.0
        %3098 = vmatpush1.msra.mxu0 %v2365
        %3099 = vmatprep.subr.mxu0 0.0
        %3100 = vmatpush1.msra.mxu0 %v2366
        %3101 = vmatprep.subr.mxu0 0.0
        %3102 = vmatpush1.msra.mxu0 %v2367
        %3103 = vmatprep.subr.mxu0 0.0
        %3104 = vmatpush1.msra.mxu0 %v2368
        %3105 = vmatprep.subr.mxu0 0.0
        %3106 = vmatpush1.msra.mxu0 %v2369
        %3107 = vmatprep.subr.mxu0 0.0
        %3108 = vmatpush1.msra.mxu0 %v2370
        %3109 = vmatprep.subr.mxu0 0.0
        %3110 = vmatpush1.msra.mxu0 %v2371
        %3111 = vmatprep.subr.mxu0 0.0
        %3112 = vmatpush1.msra.mxu0 %v2372
        %3113 = vmatprep.subr.mxu0 0.0
        %3114 = vmatpush1.msra.mxu0 %v2373
        %3115 = vmatprep.subr.mxu0 0.0
        %3116 = vmatpush1.msra.mxu0 %v2374
        %3117 = vmatprep.subr.mxu0 0.0
        %3118 = vmatpush1.msra.mxu0 %v2375
        %3119 = vmatprep.subr.mxu0 0.0
        %3120 = vmatpush1.msra.mxu0 %v2376
        %3121 = vmatprep.subr.mxu0 0.0
        %3122 = vmatpush1.msra.mxu0 %v2377
        %3123 = vmatprep.subr.mxu0 0.0
        %3124 = vmatpush1.msra.mxu0 %v2378
        %3125 = vmatprep.subr.mxu0 0.0
        %3126 = vmatpush1.msra.mxu0 %v2379
        %3127 = vmatprep.subr.mxu0 0.0
        %3128 = vmatpush1.msra.mxu0 %v2380
        %3129 = vmatprep.subr.mxu0 0.0
        %3130 = vmatpush1.msra.mxu0 %v2381
        %3131 = vmatprep.subr.mxu0 0.0
        %3132 = vmatpush1.msra.mxu0 %v2382
        %3133 = vmatprep.subr.mxu0 0.0
        %3134 = vmatpush1.msra.mxu0 %v2383
        %3135 = vmatprep.subr.mxu0 0.0
        %3136 = vmatpush1.msra.mxu0 %v2384
        %3137 = vmatprep.subr.mxu0 0.0
        %3138 = vmatpush1.msra.mxu0 %v2385
        %3139 = vmatprep.subr.mxu0 0.0
        %3140 = vmatpush1.msra.mxu0 %v2386
        %3141 = vmatprep.mubr.f32.mxu0 %v455
        %3142 = vmatmul.mubr.f32.gmra.mrb[0].mxu0 %v454
        %v3143 = vpop.f32.mrb[0].mxu0
        %v3144 = vadd.f32 %v3044, %v3143
        %v3145 = vpop.f32.mrb[0].mxu0
        %3146 = vmatprep.mubr.f32.mxu0 %v459
        %3147 = vmatmul.mubr.f32.gmra.mrb[0].mxu0 %v458
        %v3148 = vpop.f32.mrb[0].mxu0
        %v3149 = vadd.f32 %v3049, %v3148
        %v3150 = vpop.f32.mrb[0].mxu0
        %3151 = vmatprep.mubr.f32.mxu0 %v463
        %3152 = vmatmul.mubr.f32.gmra.mrb[0].mxu0 %v462
        %v3153 = vpop.f32.mrb[0].mxu0
        %v3154 = vadd.f32 %v3054, %v3153
        %v3155 = vpop.f32.mrb[0].mxu0
        %3156 = vmatprep.mubr.f32.mxu0 %v467
        %3157 = vmatmul.mubr.f32.gmra.mrb[0].mxu0 %v466
        %v3158 = vpop.f32.mrb[0].mxu0
        %v3159 = vadd.f32 %v3059, %v3158
        %v3160 = vpop.f32.mrb[0].mxu0
        %3161 = vmatprep.mubr.f32.mxu0 %v471
        %3162 = vmatmul.mubr.f32.gmra.mrb[0].mxu0 %v470
        %v3163 = vpop.f32.mrb[0].mxu0
        %v3164 = vadd.f32 %v3064, %v3163
        %v3165 = vpop.f32.mrb[0].mxu0
        %3166 = vmatprep.mubr.f32.mxu0 %v475
        %3167 = vmatmul.mubr.f32.gmra.mrb[0].mxu0 %v474
        %v3168 = vpop.f32.mrb[0].mxu0
        %v3169 = vadd.f32 %v3069, %v3168
        %v3170 = vpop.f32.mrb[0].mxu0
        %3171 = vmatprep.mubr.f32.mxu0 %v479
        %3172 = vmatmul.mubr.f32.gmra.mrb[0].mxu0 %v478
        %v3173 = vpop.f32.mrb[0].mxu0
        %v3174 = vadd.f32 %v3074, %v3173
        %v3175 = vpop.f32.mrb[0].mxu0
        %3176 = vdwg.mxu0
        %3177 = vst.msk [vmem:[#allocation8] sm:$0xff] %vm495, %v3144
        %3178 = vst.msk [vmem:[#allocation8 + $0x8] sm:$0xff] %vm495, %v3149
        %3179 = vst.msk [vmem:[#allocation8 + $0x10] sm:$0xff] %vm495, %v3154
        %3180 = vst.msk [vmem:[#allocation8 + $0x18] sm:$0xff] %vm495, %v3159
        %3181 = vst.msk [vmem:[#allocation8 + $0x20] sm:$0xff] %vm495, %v3164
        %3182 = vst.msk [vmem:[#allocation8 + $0x28] sm:$0xff] %vm495, %v3169
        %3183 = vst.msk [vmem:[#allocation8 + $0x30] sm:$0x1] %vm2975, %v3174
        %v3184 = vld [vmem:[#allocation8] sm:$0xff]
        %v3185 = vld [vmem:[#allocation8 + $0x8] sm:$0xff]
        %v3186 = vld [vmem:[#allocation8 + $0x10] sm:$0xff]
        %v3187 = vld [vmem:[#allocation8 + $0x18] sm:$0xff]
        %v3188 = vld [vmem:[#allocation8 + $0x20] sm:$0xff]
        %v3189 = vld [vmem:[#allocation8 + $0x28] sm:$0xff]
        %v3190 = vld [vmem:[#allocation8 + $0x30] sm:$0x1]
        %v3191 = vld [vmem:[%s7] sm:$0xff]
        %v3192 = vld [vmem:[%s7 + $0x8] sm:$0xff]
        %v3193 = vld [vmem:[%s7 + $0x10] sm:$0xff]
        %v3194 = vld [vmem:[%s7 + $0x18] sm:$0xff]
        %v3195 = vld [vmem:[%s7 + $0x20] sm:$0xff]
        %v3196 = vld [vmem:[%s7 + $0x28] sm:$0xff]
        %v3197 = vld [vmem:[%s7 + $0x30] sm:$0xff]
        %v3198 = vld [vmem:[%s7 + $0x38] sm:$0xff]
        %v3199 = vld [vmem:[%s8] sm:$0xff]
        %v3200 = vld [vmem:[%s8 + $0x8] sm:$0xff]
        %v3201 = vld [vmem:[%s8 + $0x10] sm:$0xff]
        %v3202 = vld [vmem:[%s8 + $0x18] sm:$0xff]
        %v3203 = vld [vmem:[%s8 + $0x20] sm:$0xff]
        %v3204 = vld [vmem:[%s8 + $0x28] sm:$0xff]
        %v3205 = vld [vmem:[%s8 + $0x30] sm:$0xff]
        %v3206 = vld [vmem:[%s8 + $0x38] sm:$0xff]
        %v3207 = vld [vmem:[#allocation6] sm:$0x1]
        %v3209 = vsel %vm495, %v2686, 0
        %3211 = vmatprep.subr.mxu0 0.0
        %3212 = vmatpush1.msra.mxu0 %v2461
        %3213 = vmatprep.subr.mxu0 0.0
        %3214 = vmatpush1.msra.mxu0 %v2462
        %3215 = vmatprep.subr.mxu0 0.0
        %3216 = vmatpush1.msra.mxu0 %v2463
        %3217 = vmatprep.subr.mxu0 0.0
        %3218 = vmatpush1.msra.mxu0 %v2464
        %3219 = vmatprep.subr.mxu0 0.0
        %3220 = vmatpush1.msra.mxu0 %v2465
        %3221 = vmatprep.subr.mxu0 0.0
        %3222 = vmatpush1.msra.mxu0 %v2466
        %3223 = vmatprep.subr.mxu0 0.0
        %3224 = vmatpush1.msra.mxu0 %v2467
        %3225 = vmatprep.subr.mxu0 0.0
        %3226 = vmatpush1.msra.mxu0 %v2468
        %3227 = vmatprep.subr.mxu0 0.0
        %3228 = vmatpush1.msra.mxu0 0.0
        %3229 = vmatprep.subr.mxu0 0.0
        %3230 = vmatpush1.msra.mxu0 0.0
        %3231 = vmatprep.subr.mxu0 0.0
        %3232 = vmatpush1.msra.mxu0 0.0
        %3233 = vmatprep.subr.mxu0 0.0
        %3234 = vmatpush1.msra.mxu0 0.0
        %3235 = vmatprep.subr.mxu0 0.0
        %3236 = vmatpush1.msra.mxu0 0.0
        %3237 = vmatprep.subr.mxu0 0.0
        %3238 = vmatpush1.msra.mxu0 0.0
        %3239 = vmatprep.subr.mxu0 0.0
        %3240 = vmatpush1.msra.mxu0 0.0
        %3241 = vmatprep.subr.mxu0 0.0
        %3242 = vmatpush1.msra.mxu0 0.0
        %3243 = vmatprep.subr.mxu0 0.0
        %3244 = vmatpush1.msra.mxu0 0.0
        %3245 = vmatprep.subr.mxu0 0.0
        %3246 = vmatpush1.msra.mxu0 0.0
        %3247 = vmatprep.subr.mxu0 0.0
        %3248 = vmatpush1.msra.mxu0 0.0
        %3249 = vmatprep.subr.mxu0 0.0
        %3250 = vmatpush1.msra.mxu0 0.0
        %3251 = vmatprep.subr.mxu0 0.0
        %3252 = vmatpush1.msra.mxu0 0.0
        %3253 = vmatprep.subr.mxu0 0.0
        %3254 = vmatpush1.msra.mxu0 0.0
        %3255 = vmatprep.subr.mxu0 0.0
        %3256 = vmatpush1.msra.mxu0 0.0
        %3257 = vmatprep.subr.mxu0 0.0
        %3258 = vmatpush1.msra.mxu0 0.0
        %3259 = vmatprep.subr.mxu0 0.0
        %3260 = vmatpush1.msra.mxu0 0.0
        %3261 = vmatprep.subr.mxu0 0.0
        %3262 = vmatpush1.msra.mxu0 0.0
        %3263 = vmatprep.subr.mxu0 0.0
        %3264 = vmatpush1.msra.mxu0 0.0
        %3265 = vmatprep.subr.mxu0 0.0
        %3266 = vmatpush1.msra.mxu0 0.0
        %3267 = vmatprep.subr.mxu0 0.0
        %3268 = vmatpush1.msra.mxu0 0.0
        %3269 = vmatprep.subr.mxu0 0.0
        %3270 = vmatpush1.msra.mxu0 0.0
        %3271 = vmatprep.subr.mxu0 0.0
        %3272 = vmatpush1.msra.mxu0 0.0
        %3273 = vmatprep.subr.mxu0 0.0
        %3274 = vmatpush1.msra.mxu0 0.0
        %3275 = vmatprep.mubr.f32.mxu0 0.0
        %3276 = vmatmul.mubr.f32.gmra.mrb[0].mxu0 %v3209
        %v3277 = vpop.f32.mrb[0].mxu0
        %v3278 = vadd.f32 0.0, %v3277
        %v3279 = vpop.f32.mrb[0].mxu0
        %3280 = vdwg.mxu0
        %v3281 = vtanh.pop %v3278
        %v3282 = vmul.f32 %v3207, %v3281
        %v3284 = vsel %vm495, %v3282, 0
        %3286 = vmatprep.subr.mxu0 0.0
        %3287 = vmatpush1.msra.mxu0 %v3191
        %3288 = vmatprep.subr.mxu0 0.0
        %3289 = vmatpush1.msra.mxu0 %v3192
        %3290 = vmatprep.subr.mxu0 0.0
        %3291 = vmatpush1.msra.mxu0 %v3193
        %3292 = vmatprep.subr.mxu0 0.0
        %3293 = vmatpush1.msra.mxu0 %v3194
        %3294 = vmatprep.subr.mxu0 0.0
        %3295 = vmatpush1.msra.mxu0 %v3195
        %3296 = vmatprep.subr.mxu0 0.0
        %3297 = vmatpush1.msra.mxu0 %v3196
        %3298 = vmatprep.subr.mxu0 0.0
        %3299 = vmatpush1.msra.mxu0 %v3197
        %3300 = vmatprep.subr.mxu0 0.0
        %3301 = vmatpush1.msra.mxu0 %v3198
        %3302 = vmatprep.subr.mxu0 0.0
        %3303 = vmatpush1.msra.mxu0 0.0
        %3304 = vmatprep.subr.mxu0 0.0
        %3305 = vmatpush1.msra.mxu0 0.0
        %3306 = vmatprep.subr.mxu0 0.0
        %3307 = vmatpush1.msra.mxu0 0.0
        %3308 = vmatprep.subr.mxu0 0.0
        %3309 = vmatpush1.msra.mxu0 0.0
        %3310 = vmatprep.subr.mxu0 0.0
        %3311 = vmatpush1.msra.mxu0 0.0
        %3312 = vmatprep.subr.mxu0 0.0
        %3313 = vmatpush1.msra.mxu0 0.0
        %3314 = vmatprep.subr.mxu0 0.0
        %3315 = vmatpush1.msra.mxu0 0.0
        %3316 = vmatprep.subr.mxu0 0.0
        %3317 = vmatpush1.msra.mxu0 0.0
        %3318 = vmatprep.subr.mxu0 0.0
        %3319 = vmatpush1.msra.mxu0 0.0
        %3320 = vmatprep.subr.mxu0 0.0
        %3321 = vmatpush1.msra.mxu0 0.0
        %3322 = vmatprep.subr.mxu0 0.0
        %3323 = vmatpush1.msra.mxu0 0.0
        %3324 = vmatprep.subr.mxu0 0.0
        %3325 = vmatpush1.msra.mxu0 0.0
        %3326 = vmatprep.subr.mxu0 0.0
        %3327 = vmatpush1.msra.mxu0 0.0
        %3328 = vmatprep.subr.mxu0 0.0
        %3329 = vmatpush1.msra.mxu0 0.0
        %3330 = vmatprep.subr.mxu0 0.0
        %3331 = vmatpush1.msra.mxu0 0.0
        %3332 = vmatprep.subr.mxu0 0.0
        %3333 = vmatpush1.msra.mxu0 0.0
        %3334 = vmatprep.subr.mxu0 0.0
        %3335 = vmatpush1.msra.mxu0 0.0
        %3336 = vmatprep.subr.mxu0 0.0
        %3337 = vmatpush1.msra.mxu0 0.0
        %3338 = vmatprep.subr.mxu0 0.0
        %3339 = vmatpush1.msra.mxu0 0.0
        %3340 = vmatprep.subr.mxu0 0.0
        %3341 = vmatpush1.msra.mxu0 0.0
        %3342 = vmatprep.subr.mxu0 0.0
        %3343 = vmatpush1.msra.mxu0 0.0
        %3344 = vmatprep.subr.mxu0 0.0
        %3345 = vmatpush1.msra.mxu0 0.0
        %3346 = vmatprep.subr.mxu0 0.0
        %3347 = vmatpush1.msra.mxu0 0.0
        %3348 = vmatprep.subr.mxu0 0.0
        %3349 = vmatpush1.msra.mxu0 0.0
        %3350 = vmatprep.mubr.f32.mxu0 0.0
        %3351 = vmatmul.mubr.f32.gmra.mrb[0].mxu0 %v3284
        %v3352 = vpop.f32.mrb[0].mxu0
        %v3353 = vadd.f32 0.0, %v3352
        %v3354 = vpop.f32.mrb[0].mxu0
        %3355 = vdwg.mxu0
        %vm3356 = vcmask 57344
        %v3357 = vsel %vm3356, %v3353, -inf
        %3358 = vmax.xlane.f32.xlu0 %v3357
        %v3359 = vpop.xlane.xlu0 %3358
        %v3360 = vsub.f32 %v3353, %v3359
        %v3361 = vmul.f32 %v3360, 1.442695
        %v3362 = vpow.pop %v3361
        %v3363 = vsel %vm3356, %v3362, 0.0
        %3364 = vadd.xlane.f32.xlu0 %v3363
        %v3365 = vpop.xlane.xlu0 %3364
        %v3366 = vrcp.pop %v3365
        %v3367 = vmul.f32 %v3362, %v3366
        %vm3368 = vcmask 64512
        %v3370 = vsel %vm3368, %v3367, 0
        %3372 = vmatprep.subr.mxu0 0.0
        %3373 = vmatpush1.msra.mxu0 %v2322
        %3374 = vmatprep.subr.mxu0 0.0
        %3375 = vmatpush1.msra.mxu0 0.0
        %3376 = vmatprep.subr.mxu0 0.0
        %3377 = vmatpush1.msra.mxu0 0.0
        %3378 = vmatprep.subr.mxu0 0.0
        %3379 = vmatpush1.msra.mxu0 0.0
        %3380 = vmatprep.subr.mxu0 0.0
        %3381 = vmatpush1.msra.mxu0 0.0
        %3382 = vmatprep.subr.mxu0 0.0
        %3383 = vmatpush1.msra.mxu0 0.0
        %3384 = vmatprep.subr.mxu0 0.0
        %3385 = vmatpush1.msra.mxu0 0.0
        %3386 = vmatprep.subr.mxu0 0.0
        %3387 = vmatpush1.msra.mxu0 0.0
        %3388 = vmatprep.subr.mxu0 0.0
        %3389 = vmatpush1.msra.mxu0 0.0
        %3390 = vmatprep.subr.mxu0 0.0
        %3391 = vmatpush1.msra.mxu0 0.0
        %3392 = vmatprep.subr.mxu0 0.0
        %3393 = vmatpush1.msra.mxu0 0.0
        %3394 = vmatprep.subr.mxu0 0.0
        %3395 = vmatpush1.msra.mxu0 0.0
        %3396 = vmatprep.subr.mxu0 0.0
        %3397 = vmatpush1.msra.mxu0 0.0
        %3398 = vmatprep.subr.mxu0 0.0
        %3399 = vmatpush1.msra.mxu0 0.0
        %3400 = vmatprep.subr.mxu0 0.0
        %3401 = vmatpush1.msra.mxu0 0.0
        %3402 = vmatprep.subr.mxu0 0.0
        %3403 = vmatpush1.msra.mxu0 0.0
        %3404 = vmatprep.subr.mxu0 0.0
        %3405 = vmatpush1.msra.mxu0 0.0
        %3406 = vmatprep.subr.mxu0 0.0
        %3407 = vmatpush1.msra.mxu0 0.0
        %3408 = vmatprep.subr.mxu0 0.0
        %3409 = vmatpush1.msra.mxu0 0.0
        %3410 = vmatprep.subr.mxu0 0.0
        %3411 = vmatpush1.msra.mxu0 0.0
        %3412 = vmatprep.subr.mxu0 0.0
        %3413 = vmatpush1.msra.mxu0 0.0
        %3414 = vmatprep.subr.mxu0 0.0
        %3415 = vmatpush1.msra.mxu0 0.0
        %3416 = vmatprep.subr.mxu0 0.0
        %3417 = vmatpush1.msra.mxu0 0.0
        %3418 = vmatprep.subr.mxu0 0.0
        %3419 = vmatpush1.msra.mxu0 0.0
        %3420 = vmatprep.subr.mxu0 0.0
        %3421 = vmatpush1.msra.mxu0 0.0
        %3422 = vmatprep.subr.mxu0 0.0
        %3423 = vmatpush1.msra.mxu0 0.0
        %3424 = vmatprep.subr.mxu0 0.0
        %3425 = vmatpush1.msra.mxu0 0.0
        %3426 = vmatprep.subr.mxu0 0.0
        %3427 = vmatpush1.msra.mxu0 0.0
        %3428 = vmatprep.subr.mxu0 0.0
        %3429 = vmatpush1.msra.mxu0 0.0
        %3430 = vmatprep.subr.mxu0 0.0
        %3431 = vmatpush1.msra.mxu0 0.0
        %3432 = vmatprep.subr.mxu0 0.0
        %3433 = vmatpush1.msra.mxu0 0.0
        %3434 = vmatprep.subr.mxu0 0.0
        %3435 = vmatpush1.msra.mxu0 0.0
        %3436 = vmatprep.mubr.f32.mxu0 0.0
        %3437 = vmatmul.mubr.f32.gmra.mrb[0].mxu0 %v3370
        %v3438 = vpop.f32.mrb[0].mxu0
        %v3439 = vadd.f32 0.0, %v3438
        %v3440 = vpop.f32.mrb[0].mxu0
        %3441 = vdwg.mxu0
        %v3442 = vadd.f32 %v2686, %v3439
        %v3443 = vld [vmem:[#allocation6 + $0x1] sm:$0x1]
        %v3445 = vsel %vm495, %v3442, 0
        %3447 = vmatprep.subr.mxu0 0.0
        %3448 = vmatpush1.msra.mxu0 %v2461
        %3449 = vmatprep.subr.mxu0 0.0
        %3450 = vmatpush1.msra.mxu0 %v2462
        %3451 = vmatprep.subr.mxu0 0.0
        %3452 = vmatpush1.msra.mxu0 %v2463
        %3453 = vmatprep.subr.mxu0 0.0
        %3454 = vmatpush1.msra.mxu0 %v2464
        %3455 = vmatprep.subr.mxu0 0.0
        %3456 = vmatpush1.msra.mxu0 %v2465
        %3457 = vmatprep.subr.mxu0 0.0
        %3458 = vmatpush1.msra.mxu0 %v2466
        %3459 = vmatprep.subr.mxu0 0.0
        %3460 = vmatpush1.msra.mxu0 %v2467
        %3461 = vmatprep.subr.mxu0 0.0
        %3462 = vmatpush1.msra.mxu0 %v2468
        %3463 = vmatprep.subr.mxu0 0.0
        %3464 = vmatpush1.msra.mxu0 0.0
        %3465 = vmatprep.subr.mxu0 0.0
        %3466 = vmatpush1.msra.mxu0 0.0
        %3467 = vmatprep.subr.mxu0 0.0
        %3468 = vmatpush1.msra.mxu0 0.0
        %3469 = vmatprep.subr.mxu0 0.0
        %3470 = vmatpush1.msra.mxu0 0.0
        %3471 = vmatprep.subr.mxu0 0.0
        %3472 = vmatpush1.msra.mxu0 0.0
        %3473 = vmatprep.subr.mxu0 0.0
        %3474 = vmatpush1.msra.mxu0 0.0
        %3475 = vmatprep.subr.mxu0 0.0
        %3476 = vmatpush1.msra.mxu0 0.0
        %3477 = vmatprep.subr.mxu0 0.0
        %3478 = vmatpush1.msra.mxu0 0.0
        %3479 = vmatprep.subr.mxu0 0.0
        %3480 = vmatpush1.msra.mxu0 0.0
        %3481 = vmatprep.subr.mxu0 0.0
        %3482 = vmatpush1.msra.mxu0 0.0
        %3483 = vmatprep.subr.mxu0 0.0
        %3484 = vmatpush1.msra.mxu0 0.0
        %3485 = vmatprep.subr.mxu0 0.0
        %3486 = vmatpush1.msra.mxu0 0.0
        %3487 = vmatprep.subr.mxu0 0.0
        %3488 = vmatpush1.msra.mxu0 0.0
        %3489 = vmatprep.subr.mxu0 0.0
        %3490 = vmatpush1.msra.mxu0 0.0
        %3491 = vmatprep.subr.mxu0 0.0
        %3492 = vmatpush1.msra.mxu0 0.0
        %3493 = vmatprep.subr.mxu0 0.0
        %3494 = vmatpush1.msra.mxu0 0.0
        %3495 = vmatprep.subr.mxu0 0.0
        %3496 = vmatpush1.msra.mxu0 0.0
        %3497 = vmatprep.subr.mxu0 0.0
        %3498 = vmatpush1.msra.mxu0 0.0
        %3499 = vmatprep.subr.mxu0 0.0
        %3500 = vmatpush1.msra.mxu0 0.0
        %3501 = vmatprep.subr.mxu0 0.0
        %3502 = vmatpush1.msra.mxu0 0.0
        %3503 = vmatprep.subr.mxu0 0.0
        %3504 = vmatpush1.msra.mxu0 0.0
        %3505 = vmatprep.subr.mxu0 0.0
        %3506 = vmatpush1.msra.mxu0 0.0
        %3507 = vmatprep.subr.mxu0 0.0
        %3508 = vmatpush1.msra.mxu0 0.0
        %3509 = vmatprep.subr.mxu0 0.0
        %3510 = vmatpush1.msra.mxu0 0.0
        %3511 = vmatprep.mubr.f32.mxu0 0.0
        %3512 = vmatmul.mubr.f32.gmra.mrb[0].mxu0 %v3445
        %v3513 = vpop.f32.mrb[0].mxu0
        %v3514 = vadd.f32 0.0, %v3513
        %v3515 = vpop.f32.mrb[0].mxu0
        %3516 = vdwg.mxu0
        %v3517 = vtanh.pop %v3514
        %v3518 = vmul.f32 %v3443, %v3517
        %v3520 = vsel %vm495, %v3518, 0
        %3522 = vmatprep.subr.mxu0 0.0
        %3523 = vmatpush1.msra.mxu0 %v3191
        %3524 = vmatprep.subr.mxu0 0.0
        %3525 = vmatpush1.msra.mxu0 %v3192
        %3526 = vmatprep.subr.mxu0 0.0
        %3527 = vmatpush1.msra.mxu0 %v3193
        %3528 = vmatprep.subr.mxu0 0.0
        %3529 = vmatpush1.msra.mxu0 %v3194
        %3530 = vmatprep.subr.mxu0 0.0
        %3531 = vmatpush1.msra.mxu0 %v3195
        %3532 = vmatprep.subr.mxu0 0.0
        %3533 = vmatpush1.msra.mxu0 %v3196
        %3534 = vmatprep.subr.mxu0 0.0
        %3535 = vmatpush1.msra.mxu0 %v3197
        %3536 = vmatprep.subr.mxu0 0.0
        %3537 = vmatpush1.msra.mxu0 %v3198
        %3538 = vmatprep.subr.mxu0 0.0
        %3539 = vmatpush1.msra.mxu0 0.0
        %3540 = vmatprep.subr.mxu0 0.0
        %3541 = vmatpush1.msra.mxu0 0.0
        %3542 = vmatprep.subr.mxu0 0.0
        %3543 = vmatpush1.msra.mxu0 0.0
        %3544 = vmatprep.subr.mxu0 0.0
        %3545 = vmatpush1.msra.mxu0 0.0
        %3546 = vmatprep.subr.mxu0 0.0
        %3547 = vmatpush1.msra.mxu0 0.0
        %3548 = vmatprep.subr.mxu0 0.0
        %3549 = vmatpush1.msra.mxu0 0.0
        %3550 = vmatprep.subr.mxu0 0.0
        %3551 = vmatpush1.msra.mxu0 0.0
        %3552 = vmatprep.subr.mxu0 0.0
        %3553 = vmatpush1.msra.mxu0 0.0
        %3554 = vmatprep.subr.mxu0 0.0
        %3555 = vmatpush1.msra.mxu0 0.0
        %3556 = vmatprep.subr.mxu0 0.0
        %3557 = vmatpush1.msra.mxu0 0.0
        %3558 = vmatprep.subr.mxu0 0.0
        %3559 = vmatpush1.msra.mxu0 0.0
        %3560 = vmatprep.subr.mxu0 0.0
        %3561 = vmatpush1.msra.mxu0 0.0
        %3562 = vmatprep.subr.mxu0 0.0
        %3563 = vmatpush1.msra.mxu0 0.0
        %3564 = vmatprep.subr.mxu0 0.0
        %3565 = vmatpush1.msra.mxu0 0.0
        %3566 = vmatprep.subr.mxu0 0.0
        %3567 = vmatpush1.msra.mxu0 0.0
        %3568 = vmatprep.subr.mxu0 0.0
        %3569 = vmatpush1.msra.mxu0 0.0
        %3570 = vmatprep.subr.mxu0 0.0
        %3571 = vmatpush1.msra.mxu0 0.0
        %3572 = vmatprep.subr.mxu0 0.0
        %3573 = vmatpush1.msra.mxu0 0.0
        %3574 = vmatprep.subr.mxu0 0.0
        %3575 = vmatpush1.msra.mxu0 0.0
        %3576 = vmatprep.subr.mxu0 0.0
        %3577 = vmatpush1.msra.mxu0 0.0
        %3578 = vmatprep.subr.mxu0 0.0
        %3579 = vmatpush1.msra.mxu0 0.0
        %3580 = vmatprep.subr.mxu0 0.0
        %3581 = vmatpush1.msra.mxu0 0.0
        %3582 = vmatprep.subr.mxu0 0.0
        %3583 = vmatpush1.msra.mxu0 0.0
        %3584 = vmatprep.subr.mxu0 0.0
        %3585 = vmatpush1.msra.mxu0 0.0
        %3586 = vmatprep.mubr.f32.mxu0 0.0
        %3587 = vmatmul.mubr.f32.gmra.mrb[0].mxu0 %v3520
        %v3588 = vpop.f32.mrb[0].mxu0
        %v3589 = vadd.f32 0.0, %v3588
        %v3590 = vpop.f32.mrb[0].mxu0
        %3591 = vdwg.mxu0
        %v3592 = vsel %vm3356, %v3589, -inf
        %3593 = vmax.xlane.f32.xlu0 %v3592
        %v3594 = vpop.xlane.xlu0 %3593
        %v3595 = vsub.f32 %v3589, %v3594
        %v3596 = vmul.f32 %v3595, 1.442695
        %v3597 = vpow.pop %v3596
        %v3598 = vsel %vm3356, %v3597, 0.0
        %3599 = vadd.xlane.f32.xlu0 %v3598
        %v3600 = vpop.xlane.xlu0 %3599
        %v3601 = vrcp.pop %v3600
        %v3602 = vmul.f32 %v3597, %v3601
        %v3604 = vsel %vm3368, %v3602, 0
        %3606 = vmatprep.subr.mxu0 0.0
        %3607 = vmatpush1.msra.mxu0 %v2322
        %3608 = vmatprep.subr.mxu0 0.0
        %3609 = vmatpush1.msra.mxu0 0.0
        %3610 = vmatprep.subr.mxu0 0.0
        %3611 = vmatpush1.msra.mxu0 0.0
        %3612 = vmatprep.subr.mxu0 0.0
        %3613 = vmatpush1.msra.mxu0 0.0
        %3614 = vmatprep.subr.mxu0 0.0
        %3615 = vmatpush1.msra.mxu0 0.0
        %3616 = vmatprep.subr.mxu0 0.0
        %3617 = vmatpush1.msra.mxu0 0.0
        %3618 = vmatprep.subr.mxu0 0.0
        %3619 = vmatpush1.msra.mxu0 0.0
        %3620 = vmatprep.subr.mxu0 0.0
        %3621 = vmatpush1.msra.mxu0 0.0
        %3622 = vmatprep.subr.mxu0 0.0
        %3623 = vmatpush1.msra.mxu0 0.0
        %3624 = vmatprep.subr.mxu0 0.0
        %3625 = vmatpush1.msra.mxu0 0.0
        %3626 = vmatprep.subr.mxu0 0.0
        %3627 = vmatpush1.msra.mxu0 0.0
        %3628 = vmatprep.subr.mxu0 0.0
        %3629 = vmatpush1.msra.mxu0 0.0
        %3630 = vmatprep.subr.mxu0 0.0
        %3631 = vmatpush1.msra.mxu0 0.0
        %3632 = vmatprep.subr.mxu0 0.0
        %3633 = vmatpush1.msra.mxu0 0.0
        %3634 = vmatprep.subr.mxu0 0.0
        %3635 = vmatpush1.msra.mxu0 0.0
        %3636 = vmatprep.subr.mxu0 0.0
        %3637 = vmatpush1.msra.mxu0 0.0
        %3638 = vmatprep.subr.mxu0 0.0
        %3639 = vmatpush1.msra.mxu0 0.0
        %3640 = vmatprep.subr.mxu0 0.0
        %3641 = vmatpush1.msra.mxu0 0.0
        %3642 = vmatprep.subr.mxu0 0.0
        %3643 = vmatpush1.msra.mxu0 0.0
        %3644 = vmatprep.subr.mxu0 0.0
        %3645 = vmatpush1.msra.mxu0 0.0
        %3646 = vmatprep.subr.mxu0 0.0
        %3647 = vmatpush1.msra.mxu0 0.0
        %3648 = vmatprep.subr.mxu0 0.0
        %3649 = vmatpush1.msra.mxu0 0.0
        %3650 = vmatprep.subr.mxu0 0.0
        %3651 = vmatpush1.msra.mxu0 0.0
        %3652 = vmatprep.subr.mxu0 0.0
        %3653 = vmatpush1.msra.mxu0 0.0
        %3654 = vmatprep.subr.mxu0 0.0
        %3655 = vmatpush1.msra.mxu0 0.0
        %3656 = vmatprep.subr.mxu0 0.0
        %3657 = vmatpush1.msra.mxu0 0.0
        %3658 = vmatprep.subr.mxu0 0.0
        %3659 = vmatpush1.msra.mxu0 0.0
        %3660 = vmatprep.subr.mxu0 0.0
        %3661 = vmatpush1.msra.mxu0 0.0
        %3662 = vmatprep.subr.mxu0 0.0
        %3663 = vmatpush1.msra.mxu0 0.0
        %3664 = vmatprep.subr.mxu0 0.0
        %3665 = vmatpush1.msra.mxu0 0.0
        %3666 = vmatprep.subr.mxu0 0.0
        %3667 = vmatpush1.msra.mxu0 0.0
        %3668 = vmatprep.subr.mxu0 0.0
        %3669 = vmatpush1.msra.mxu0 0.0
        %3670 = vmatprep.mubr.f32.mxu0 0.0
        %3671 = vmatmul.mubr.f32.gmra.mrb[0].mxu0 %v3604
        %v3672 = vpop.f32.mrb[0].mxu0
        %v3673 = vadd.f32 0.0, %v3672
        %v3674 = vpop.f32.mrb[0].mxu0
        %3675 = vdwg.mxu0
        %v3676 = vadd.f32 %v3442, %v3673
        %v3677 = vld [vmem:[#allocation6 + $0x2] sm:$0x1]
        %v3679 = vsel %vm495, %v3676, 0
        %3681 = vmatprep.subr.mxu0 0.0
        %3682 = vmatpush1.msra.mxu0 %v2461
        %3683 = vmatprep.subr.mxu0 0.0
        %3684 = vmatpush1.msra.mxu0 %v2462
        %3685 = vmatprep.subr.mxu0 0.0
        %3686 = vmatpush1.msra.mxu0 %v2463
        %3687 = vmatprep.subr.mxu0 0.0
        %3688 = vmatpush1.msra.mxu0 %v2464
        %3689 = vmatprep.subr.mxu0 0.0
        %3690 = vmatpush1.msra.mxu0 %v2465
        %3691 = vmatprep.subr.mxu0 0.0
        %3692 = vmatpush1.msra.mxu0 %v2466
        %3693 = vmatprep.subr.mxu0 0.0
        %3694 = vmatpush1.msra.mxu0 %v2467
        %3695 = vmatprep.subr.mxu0 0.0
        %3696 = vmatpush1.msra.mxu0 %v2468
        %3697 = vmatprep.subr.mxu0 0.0
        %3698 = vmatpush1.msra.mxu0 0.0
        %3699 = vmatprep.subr.mxu0 0.0
        %3700 = vmatpush1.msra.mxu0 0.0
        %3701 = vmatprep.subr.mxu0 0.0
        %3702 = vmatpush1.msra.mxu0 0.0
        %3703 = vmatprep.subr.mxu0 0.0
        %3704 = vmatpush1.msra.mxu0 0.0
        %3705 = vmatprep.subr.mxu0 0.0
        %3706 = vmatpush1.msra.mxu0 0.0
        %3707 = vmatprep.subr.mxu0 0.0
        %3708 = vmatpush1.msra.mxu0 0.0
        %3709 = vmatprep.subr.mxu0 0.0
        %3710 = vmatpush1.msra.mxu0 0.0
        %3711 = vmatprep.subr.mxu0 0.0
        %3712 = vmatpush1.msra.mxu0 0.0
        %3713 = vmatprep.subr.mxu0 0.0
        %3714 = vmatpush1.msra.mxu0 0.0
        %3715 = vmatprep.subr.mxu0 0.0
        %3716 = vmatpush1.msra.mxu0 0.0
        %3717 = vmatprep.subr.mxu0 0.0
        %3718 = vmatpush1.msra.mxu0 0.0
        %3719 = vmatprep.subr.mxu0 0.0
        %3720 = vmatpush1.msra.mxu0 0.0
        %3721 = vmatprep.subr.mxu0 0.0
        %3722 = vmatpush1.msra.mxu0 0.0
        %3723 = vmatprep.subr.mxu0 0.0
        %3724 = vmatpush1.msra.mxu0 0.0
        %3725 = vmatprep.subr.mxu0 0.0
        %3726 = vmatpush1.msra.mxu0 0.0
        %3727 = vmatprep.subr.mxu0 0.0
        %3728 = vmatpush1.msra.mxu0 0.0
        %3729 = vmatprep.subr.mxu0 0.0
        %3730 = vmatpush1.msra.mxu0 0.0
        %3731 = vmatprep.subr.mxu0 0.0
        %3732 = vmatpush1.msra.mxu0 0.0
        %3733 = vmatprep.subr.mxu0 0.0
        %3734 = vmatpush1.msra.mxu0 0.0
        %3735 = vmatprep.subr.mxu0 0.0
        %3736 = vmatpush1.msra.mxu0 0.0
        %3737 = vmatprep.subr.mxu0 0.0
        %3738 = vmatpush1.msra.mxu0 0.0
        %3739 = vmatprep.subr.mxu0 0.0
        %3740 = vmatpush1.msra.mxu0 0.0
        %3741 = vmatprep.subr.mxu0 0.0
        %3742 = vmatpush1.msra.mxu0 0.0
        %3743 = vmatprep.subr.mxu0 0.0
        %3744 = vmatpush1.msra.mxu0 0.0
        %3745 = vmatprep.mubr.f32.mxu0 0.0
        %3746 = vmatmul.mubr.f32.gmra.mrb[0].mxu0 %v3679
        %v3747 = vpop.f32.mrb[0].mxu0
        %v3748 = vadd.f32 0.0, %v3747
        %v3749 = vpop.f32.mrb[0].mxu0
        %3750 = vdwg.mxu0
        %v3751 = vtanh.pop %v3748
        %v3752 = vmul.f32 %v3677, %v3751
        %v3754 = vsel %vm495, %v3752, 0
        %3756 = vmatprep.subr.mxu0 0.0
        %3757 = vmatpush1.msra.mxu0 %v3191
        %3758 = vmatprep.subr.mxu0 0.0
        %3759 = vmatpush1.msra.mxu0 %v3192
        %3760 = vmatprep.subr.mxu0 0.0
        %3761 = vmatpush1.msra.mxu0 %v3193
        %3762 = vmatprep.subr.mxu0 0.0
        %3763 = vmatpush1.msra.mxu0 %v3194
        %3764 = vmatprep.subr.mxu0 0.0
        %3765 = vmatpush1.msra.mxu0 %v3195
        %3766 = vmatprep.subr.mxu0 0.0
        %3767 = vmatpush1.msra.mxu0 %v3196
        %3768 = vmatprep.subr.mxu0 0.0
        %3769 = vmatpush1.msra.mxu0 %v3197
        %3770 = vmatprep.subr.mxu0 0.0
        %3771 = vmatpush1.msra.mxu0 %v3198
        %3772 = vmatprep.subr.mxu0 0.0
        %3773 = vmatpush1.msra.mxu0 0.0
        %3774 = vmatprep.subr.mxu0 0.0
        %3775 = vmatpush1.msra.mxu0 0.0
        %3776 = vmatprep.subr.mxu0 0.0
        %3777 = vmatpush1.msra.mxu0 0.0
        %3778 = vmatprep.subr.mxu0 0.0
        %3779 = vmatpush1.msra.mxu0 0.0
        %3780 = vmatprep.subr.mxu0 0.0
        %3781 = vmatpush1.msra.mxu0 0.0
        %3782 = vmatprep.subr.mxu0 0.0
        %3783 = vmatpush1.msra.mxu0 0.0
        %3784 = vmatprep.subr.mxu0 0.0
        %3785 = vmatpush1.msra.mxu0 0.0
        %3786 = vmatprep.subr.mxu0 0.0
        %3787 = vmatpush1.msra.mxu0 0.0
        %3788 = vmatprep.subr.mxu0 0.0
        %3789 = vmatpush1.msra.mxu0 0.0
        %3790 = vmatprep.subr.mxu0 0.0
        %3791 = vmatpush1.msra.mxu0 0.0
        %3792 = vmatprep.subr.mxu0 0.0
        %3793 = vmatpush1.msra.mxu0 0.0
        %3794 = vmatprep.subr.mxu0 0.0
        %3795 = vmatpush1.msra.mxu0 0.0
        %3796 = vmatprep.subr.mxu0 0.0
        %3797 = vmatpush1.msra.mxu0 0.0
        %3798 = vmatprep.subr.mxu0 0.0
        %3799 = vmatpush1.msra.mxu0 0.0
        %3800 = vmatprep.subr.mxu0 0.0
        %3801 = vmatpush1.msra.mxu0 0.0
        %3802 = vmatprep.subr.mxu0 0.0
        %3803 = vmatpush1.msra.mxu0 0.0
        %3804 = vmatprep.subr.mxu0 0.0
        %3805 = vmatpush1.msra.mxu0 0.0
        %3806 = vmatprep.subr.mxu0 0.0
        %3807 = vmatpush1.msra.mxu0 0.0
        %3808 = vmatprep.subr.mxu0 0.0
        %3809 = vmatpush1.msra.mxu0 0.0
        %3810 = vmatprep.subr.mxu0 0.0
        %3811 = vmatpush1.msra.mxu0 0.0
        %3812 = vmatprep.subr.mxu0 0.0
        %3813 = vmatpush1.msra.mxu0 0.0
        %3814 = vmatprep.subr.mxu0 0.0
        %3815 = vmatpush1.msra.mxu0 0.0
        %3816 = vmatprep.subr.mxu0 0.0
        %3817 = vmatpush1.msra.mxu0 0.0
        %3818 = vmatprep.subr.mxu0 0.0
        %3819 = vmatpush1.msra.mxu0 0.0
        %3820 = vmatprep.mubr.f32.mxu0 0.0
        %3821 = vmatmul.mubr.f32.gmra.mrb[0].mxu0 %v3754
        %v3822 = vpop.f32.mrb[0].mxu0
        %v3823 = vadd.f32 0.0, %v3822
        %v3824 = vpop.f32.mrb[0].mxu0
        %3825 = vdwg.mxu0
        %v3826 = vsel %vm3356, %v3823, -inf
        %3827 = vmax.xlane.f32.xlu0 %v3826
        %v3828 = vpop.xlane.xlu0 %3827
        %v3829 = vsub.f32 %v3823, %v3828
        %v3830 = vmul.f32 %v3829, 1.442695
        %v3831 = vpow.pop %v3830
        %v3832 = vsel %vm3356, %v3831, 0.0
        %3833 = vadd.xlane.f32.xlu0 %v3832
        %v3834 = vpop.xlane.xlu0 %3833
        %v3835 = vrcp.pop %v3834
        %v3836 = vmul.f32 %v3831, %v3835
        %v3838 = vsel %vm3368, %v3836, 0
        %3840 = vmatprep.subr.mxu0 0.0
        %3841 = vmatpush1.msra.mxu0 %v2322
        %3842 = vmatprep.subr.mxu0 0.0
        %3843 = vmatpush1.msra.mxu0 0.0
        %3844 = vmatprep.subr.mxu0 0.0
        %3845 = vmatpush1.msra.mxu0 0.0
        %3846 = vmatprep.subr.mxu0 0.0
        %3847 = vmatpush1.msra.mxu0 0.0
        %3848 = vmatprep.subr.mxu0 0.0
        %3849 = vmatpush1.msra.mxu0 0.0
        %3850 = vmatprep.subr.mxu0 0.0
        %3851 = vmatpush1.msra.mxu0 0.0
        %3852 = vmatprep.subr.mxu0 0.0
        %3853 = vmatpush1.msra.mxu0 0.0
        %3854 = vmatprep.subr.mxu0 0.0
        %3855 = vmatpush1.msra.mxu0 0.0
        %3856 = vmatprep.subr.mxu0 0.0
        %3857 = vmatpush1.msra.mxu0 0.0
        %3858 = vmatprep.subr.mxu0 0.0
        %3859 = vmatpush1.msra.mxu0 0.0
        %3860 = vmatprep.subr.mxu0 0.0
        %3861 = vmatpush1.msra.mxu0 0.0
        %3862 = vmatprep.subr.mxu0 0.0
        %3863 = vmatpush1.msra.mxu0 0.0
        %3864 = vmatprep.subr.mxu0 0.0
        %3865 = vmatpush1.msra.mxu0 0.0
        %3866 = vmatprep.subr.mxu0 0.0
        %3867 = vmatpush1.msra.mxu0 0.0
        %3868 = vmatprep.subr.mxu0 0.0
        %3869 = vmatpush1.msra.mxu0 0.0
        %3870 = vmatprep.subr.mxu0 0.0
        %3871 = vmatpush1.msra.mxu0 0.0
        %3872 = vmatprep.subr.mxu0 0.0
        %3873 = vmatpush1.msra.mxu0 0.0
        %3874 = vmatprep.subr.mxu0 0.0
        %3875 = vmatpush1.msra.mxu0 0.0
        %3876 = vmatprep.subr.mxu0 0.0
        %3877 = vmatpush1.msra.mxu0 0.0
        %3878 = vmatprep.subr.mxu0 0.0
        %3879 = vmatpush1.msra.mxu0 0.0
        %3880 = vmatprep.subr.mxu0 0.0
        %3881 = vmatpush1.msra.mxu0 0.0
        %3882 = vmatprep.subr.mxu0 0.0
        %3883 = vmatpush1.msra.mxu0 0.0
        %3884 = vmatprep.subr.mxu0 0.0
        %3885 = vmatpush1.msra.mxu0 0.0
        %3886 = vmatprep.subr.mxu0 0.0
        %3887 = vmatpush1.msra.mxu0 0.0
        %3888 = vmatprep.subr.mxu0 0.0
        %3889 = vmatpush1.msra.mxu0 0.0
        %3890 = vmatprep.subr.mxu0 0.0
        %3891 = vmatpush1.msra.mxu0 0.0
        %3892 = vmatprep.subr.mxu0 0.0
        %3893 = vmatpush1.msra.mxu0 0.0
        %3894 = vmatprep.subr.mxu0 0.0
        %3895 = vmatpush1.msra.mxu0 0.0
        %3896 = vmatprep.subr.mxu0 0.0
        %3897 = vmatpush1.msra.mxu0 0.0
        %3898 = vmatprep.subr.mxu0 0.0
        %3899 = vmatpush1.msra.mxu0 0.0
        %3900 = vmatprep.subr.mxu0 0.0
        %3901 = vmatpush1.msra.mxu0 0.0
        %3902 = vmatprep.subr.mxu0 0.0
        %3903 = vmatpush1.msra.mxu0 0.0
        %3904 = vmatprep.mubr.f32.mxu0 0.0
        %3905 = vmatmul.mubr.f32.gmra.mrb[0].mxu0 %v3838
        %v3906 = vpop.f32.mrb[0].mxu0
        %v3907 = vadd.f32 0.0, %v3906
        %v3908 = vpop.f32.mrb[0].mxu0
        %3909 = vdwg.mxu0
        %v3910 = vadd.f32 %v3676, %v3907
        %v3911 = vld [vmem:[#allocation6 + $0x3] sm:$0x1]
        %v3913 = vsel %vm495, %v3910, 0
        %3915 = vmatprep.subr.mxu0 0.0
        %3916 = vmatpush1.msra.mxu0 %v2461
        %3917 = vmatprep.subr.mxu0 0.0
        %3918 = vmatpush1.msra.mxu0 %v2462
        %3919 = vmatprep.subr.mxu0 0.0
        %3920 = vmatpush1.msra.mxu0 %v2463
        %3921 = vmatprep.subr.mxu0 0.0
        %3922 = vmatpush1.msra.mxu0 %v2464
        %3923 = vmatprep.subr.mxu0 0.0
        %3924 = vmatpush1.msra.mxu0 %v2465
        %3925 = vmatprep.subr.mxu0 0.0
        %3926 = vmatpush1.msra.mxu0 %v2466
        %3927 = vmatprep.subr.mxu0 0.0
        %3928 = vmatpush1.msra.mxu0 %v2467
        %3929 = vmatprep.subr.mxu0 0.0
        %3930 = vmatpush1.msra.mxu0 %v2468
        %3931 = vmatprep.subr.mxu0 0.0
        %3932 = vmatpush1.msra.mxu0 0.0
        %3933 = vmatprep.subr.mxu0 0.0
        %3934 = vmatpush1.msra.mxu0 0.0
        %3935 = vmatprep.subr.mxu0 0.0
        %3936 = vmatpush1.msra.mxu0 0.0
        %3937 = vmatprep.subr.mxu0 0.0
        %3938 = vmatpush1.msra.mxu0 0.0
        %3939 = vmatprep.subr.mxu0 0.0
        %3940 = vmatpush1.msra.mxu0 0.0
        %3941 = vmatprep.subr.mxu0 0.0
        %3942 = vmatpush1.msra.mxu0 0.0
        %3943 = vmatprep.subr.mxu0 0.0
        %3944 = vmatpush1.msra.mxu0 0.0
        %3945 = vmatprep.subr.mxu0 0.0
        %3946 = vmatpush1.msra.mxu0 0.0
        %3947 = vmatprep.subr.mxu0 0.0
        %3948 = vmatpush1.msra.mxu0 0.0
        %3949 = vmatprep.subr.mxu0 0.0
        %3950 = vmatpush1.msra.mxu0 0.0
        %3951 = vmatprep.subr.mxu0 0.0
        %3952 = vmatpush1.msra.mxu0 0.0
        %3953 = vmatprep.subr.mxu0 0.0
        %3954 = vmatpush1.msra.mxu0 0.0
        %3955 = vmatprep.subr.mxu0 0.0
        %3956 = vmatpush1.msra.mxu0 0.0
        %3957 = vmatprep.subr.mxu0 0.0
        %3958 = vmatpush1.msra.mxu0 0.0
        %3959 = vmatprep.subr.mxu0 0.0
        %3960 = vmatpush1.msra.mxu0 0.0
        %3961 = vmatprep.subr.mxu0 0.0
        %3962 = vmatpush1.msra.mxu0 0.0
        %3963 = vmatprep.subr.mxu0 0.0
        %3964 = vmatpush1.msra.mxu0 0.0
        %3965 = vmatprep.subr.mxu0 0.0
        %3966 = vmatpush1.msra.mxu0 0.0
        %3967 = vmatprep.subr.mxu0 0.0
        %3968 = vmatpush1.msra.mxu0 0.0
        %3969 = vmatprep.subr.mxu0 0.0
        %3970 = vmatpush1.msra.mxu0 0.0
        %3971 = vmatprep.subr.mxu0 0.0
        %3972 = vmatpush1.msra.mxu0 0.0
        %3973 = vmatprep.subr.mxu0 0.0
        %3974 = vmatpush1.msra.mxu0 0.0
        %3975 = vmatprep.subr.mxu0 0.0
        %3976 = vmatpush1.msra.mxu0 0.0
        %3977 = vmatprep.subr.mxu0 0.0
        %3978 = vmatpush1.msra.mxu0 0.0
        %3979 = vmatprep.mubr.f32.mxu0 0.0
        %3980 = vmatmul.mubr.f32.gmra.mrb[0].mxu0 %v3913
        %v3981 = vpop.f32.mrb[0].mxu0
        %v3982 = vadd.f32 0.0, %v3981
        %v3983 = vpop.f32.mrb[0].mxu0
        %3984 = vdwg.mxu0
        %v3985 = vtanh.pop %v3982
        %v3986 = vmul.f32 %v3911, %v3985
        %v3988 = vsel %vm495, %v3986, 0
        %3990 = vmatprep.subr.mxu0 0.0
        %3991 = vmatpush1.msra.mxu0 %v3191
        %3992 = vmatprep.subr.mxu0 0.0
        %3993 = vmatpush1.msra.mxu0 %v3192
        %3994 = vmatprep.subr.mxu0 0.0
        %3995 = vmatpush1.msra.mxu0 %v3193
        %3996 = vmatprep.subr.mxu0 0.0
        %3997 = vmatpush1.msra.mxu0 %v3194
        %3998 = vmatprep.subr.mxu0 0.0
        %3999 = vmatpush1.msra.mxu0 %v3195
        %4000 = vmatprep.subr.mxu0 0.0
        %4001 = vmatpush1.msra.mxu0 %v3196
        %4002 = vmatprep.subr.mxu0 0.0
        %4003 = vmatpush1.msra.mxu0 %v3197
        %4004 = vmatprep.subr.mxu0 0.0
        %4005 = vmatpush1.msra.mxu0 %v3198
        %4006 = vmatprep.subr.mxu0 0.0
        %4007 = vmatpush1.msra.mxu0 0.0
        %4008 = vmatprep.subr.mxu0 0.0
        %4009 = vmatpush1.msra.mxu0 0.0
        %4010 = vmatprep.subr.mxu0 0.0
        %4011 = vmatpush1.msra.mxu0 0.0
        %4012 = vmatprep.subr.mxu0 0.0
        %4013 = vmatpush1.msra.mxu0 0.0
        %4014 = vmatprep.subr.mxu0 0.0
        %4015 = vmatpush1.msra.mxu0 0.0
        %4016 = vmatprep.subr.mxu0 0.0
        %4017 = vmatpush1.msra.mxu0 0.0
        %4018 = vmatprep.subr.mxu0 0.0
        %4019 = vmatpush1.msra.mxu0 0.0
        %4020 = vmatprep.subr.mxu0 0.0
        %4021 = vmatpush1.msra.mxu0 0.0
        %4022 = vmatprep.subr.mxu0 0.0
        %4023 = vmatpush1.msra.mxu0 0.0
        %4024 = vmatprep.subr.mxu0 0.0
        %4025 = vmatpush1.msra.mxu0 0.0
        %4026 = vmatprep.subr.mxu0 0.0
        %4027 = vmatpush1.msra.mxu0 0.0
        %4028 = vmatprep.subr.mxu0 0.0
        %4029 = vmatpush1.msra.mxu0 0.0
        %4030 = vmatprep.subr.mxu0 0.0
        %4031 = vmatpush1.msra.mxu0 0.0
        %4032 = vmatprep.subr.mxu0 0.0
        %4033 = vmatpush1.msra.mxu0 0.0
        %4034 = vmatprep.subr.mxu0 0.0
        %4035 = vmatpush1.msra.mxu0 0.0
        %4036 = vmatprep.subr.mxu0 0.0
        %4037 = vmatpush1.msra.mxu0 0.0
        %4038 = vmatprep.subr.mxu0 0.0
        %4039 = vmatpush1.msra.mxu0 0.0
        %4040 = vmatprep.subr.mxu0 0.0
        %4041 = vmatpush1.msra.mxu0 0.0
        %4042 = vmatprep.subr.mxu0 0.0
        %4043 = vmatpush1.msra.mxu0 0.0
        %4044 = vmatprep.subr.mxu0 0.0
        %4045 = vmatpush1.msra.mxu0 0.0
        %4046 = vmatprep.subr.mxu0 0.0
        %4047 = vmatpush1.msra.mxu0 0.0
        %4048 = vmatprep.subr.mxu0 0.0
        %4049 = vmatpush1.msra.mxu0 0.0
        %4050 = vmatprep.subr.mxu0 0.0
        %4051 = vmatpush1.msra.mxu0 0.0
        %4052 = vmatprep.subr.mxu0 0.0
        %4053 = vmatpush1.msra.mxu0 0.0
        %4054 = vmatprep.mubr.f32.mxu0 0.0
        %4055 = vmatmul.mubr.f32.gmra.mrb[0].mxu0 %v3988
        %v4056 = vpop.f32.mrb[0].mxu0
        %v4057 = vadd.f32 0.0, %v4056
        %v4058 = vpop.f32.mrb[0].mxu0
        %4059 = vdwg.mxu0
        %v4060 = vsel %vm3356, %v4057, -inf
        %4061 = vmax.xlane.f32.xlu0 %v4060
        %v4062 = vpop.xlane.xlu0 %4061
        %v4063 = vsub.f32 %v4057, %v4062
        %v4064 = vmul.f32 %v4063, 1.442695
        %v4065 = vpow.pop %v4064
        %v4066 = vsel %vm3356, %v4065, 0.0
        %4067 = vadd.xlane.f32.xlu0 %v4066
        %v4068 = vpop.xlane.xlu0 %4067
        %v4069 = vrcp.pop %v4068
        %v4070 = vmul.f32 %v4065, %v4069
        %v4072 = vsel %vm3368, %v4070, 0
        %4074 = vmatprep.subr.mxu0 0.0
        %4075 = vmatpush1.msra.mxu0 %v2322
        %4076 = vmatprep.subr.mxu0 0.0
        %4077 = vmatpush1.msra.mxu0 0.0
        %4078 = vmatprep.subr.mxu0 0.0
        %4079 = vmatpush1.msra.mxu0 0.0
        %4080 = vmatprep.subr.mxu0 0.0
        %4081 = vmatpush1.msra.mxu0 0.0
        %4082 = vmatprep.subr.mxu0 0.0
        %4083 = vmatpush1.msra.mxu0 0.0
        %4084 = vmatprep.subr.mxu0 0.0
        %4085 = vmatpush1.msra.mxu0 0.0
        %4086 = vmatprep.subr.mxu0 0.0
        %4087 = vmatpush1.msra.mxu0 0.0
        %4088 = vmatprep.subr.mxu0 0.0
        %4089 = vmatpush1.msra.mxu0 0.0
        %4090 = vmatprep.subr.mxu0 0.0
        %4091 = vmatpush1.msra.mxu0 0.0
        %4092 = vmatprep.subr.mxu0 0.0
        %4093 = vmatpush1.msra.mxu0 0.0
        %4094 = vmatprep.subr.mxu0 0.0
        %4095 = vmatpush1.msra.mxu0 0.0
        %4096 = vmatprep.subr.mxu0 0.0
        %4097 = vmatpush1.msra.mxu0 0.0
        %4098 = vmatprep.subr.mxu0 0.0
        %4099 = vmatpush1.msra.mxu0 0.0
        %4100 = vmatprep.subr.mxu0 0.0
        %4101 = vmatpush1.msra.mxu0 0.0
        %4102 = vmatprep.subr.mxu0 0.0
        %4103 = vmatpush1.msra.mxu0 0.0
        %4104 = vmatprep.subr.mxu0 0.0
        %4105 = vmatpush1.msra.mxu0 0.0
        %4106 = vmatprep.subr.mxu0 0.0
        %4107 = vmatpush1.msra.mxu0 0.0
        %4108 = vmatprep.subr.mxu0 0.0
        %4109 = vmatpush1.msra.mxu0 0.0
        %4110 = vmatprep.subr.mxu0 0.0
        %4111 = vmatpush1.msra.mxu0 0.0
        %4112 = vmatprep.subr.mxu0 0.0
        %4113 = vmatpush1.msra.mxu0 0.0
        %4114 = vmatprep.subr.mxu0 0.0
        %4115 = vmatpush1.msra.mxu0 0.0
        %4116 = vmatprep.subr.mxu0 0.0
        %4117 = vmatpush1.msra.mxu0 0.0
        %4118 = vmatprep.subr.mxu0 0.0
        %4119 = vmatpush1.msra.mxu0 0.0
        %4120 = vmatprep.subr.mxu0 0.0
        %4121 = vmatpush1.msra.mxu0 0.0
        %4122 = vmatprep.subr.mxu0 0.0
        %4123 = vmatpush1.msra.mxu0 0.0
        %4124 = vmatprep.subr.mxu0 0.0
        %4125 = vmatpush1.msra.mxu0 0.0
        %4126 = vmatprep.subr.mxu0 0.0
        %4127 = vmatpush1.msra.mxu0 0.0
        %4128 = vmatprep.subr.mxu0 0.0
        %4129 = vmatpush1.msra.mxu0 0.0
        %4130 = vmatprep.subr.mxu0 0.0
        %4131 = vmatpush1.msra.mxu0 0.0
        %4132 = vmatprep.subr.mxu0 0.0
        %4133 = vmatpush1.msra.mxu0 0.0
        %4134 = vmatprep.subr.mxu0 0.0
        %4135 = vmatpush1.msra.mxu0 0.0
        %4136 = vmatprep.subr.mxu0 0.0
        %4137 = vmatpush1.msra.mxu0 0.0
        %4138 = vmatprep.mubr.f32.mxu0 0.0
        %4139 = vmatmul.mubr.f32.gmra.mrb[0].mxu0 %v4072
        %v4140 = vpop.f32.mrb[0].mxu0
        %v4141 = vadd.f32 0.0, %v4140
        %v4142 = vpop.f32.mrb[0].mxu0
        %4143 = vdwg.mxu0
        %v4144 = vadd.f32 %v3910, %v4141
        %v4145 = vld [vmem:[#allocation6 + $0x4] sm:$0x1]
        %v4147 = vsel %vm495, %v4144, 0
        %4149 = vmatprep.subr.mxu0 0.0
        %4150 = vmatpush1.msra.mxu0 %v2461
        %4151 = vmatprep.subr.mxu0 0.0
        %4152 = vmatpush1.msra.mxu0 %v2462
        %4153 = vmatprep.subr.mxu0 0.0
        %4154 = vmatpush1.msra.mxu0 %v2463
        %4155 = vmatprep.subr.mxu0 0.0
        %4156 = vmatpush1.msra.mxu0 %v2464
        %4157 = vmatprep.subr.mxu0 0.0
        %4158 = vmatpush1.msra.mxu0 %v2465
        %4159 = vmatprep.subr.mxu0 0.0
        %4160 = vmatpush1.msra.mxu0 %v2466
        %4161 = vmatprep.subr.mxu0 0.0
        %4162 = vmatpush1.msra.mxu0 %v2467
        %4163 = vmatprep.subr.mxu0 0.0
        %4164 = vmatpush1.msra.mxu0 %v2468
        %4165 = vmatprep.subr.mxu0 0.0
        %4166 = vmatpush1.msra.mxu0 0.0
        %4167 = vmatprep.subr.mxu0 0.0
        %4168 = vmatpush1.msra.mxu0 0.0
        %4169 = vmatprep.subr.mxu0 0.0
        %4170 = vmatpush1.msra.mxu0 0.0
        %4171 = vmatprep.subr.mxu0 0.0
        %4172 = vmatpush1.msra.mxu0 0.0
        %4173 = vmatprep.subr.mxu0 0.0
        %4174 = vmatpush1.msra.mxu0 0.0
        %4175 = vmatprep.subr.mxu0 0.0
        %4176 = vmatpush1.msra.mxu0 0.0
        %4177 = vmatprep.subr.mxu0 0.0
        %4178 = vmatpush1.msra.mxu0 0.0
        %4179 = vmatprep.subr.mxu0 0.0
        %4180 = vmatpush1.msra.mxu0 0.0
        %4181 = vmatprep.subr.mxu0 0.0
        %4182 = vmatpush1.msra.mxu0 0.0
        %4183 = vmatprep.subr.mxu0 0.0
        %4184 = vmatpush1.msra.mxu0 0.0
        %4185 = vmatprep.subr.mxu0 0.0
        %4186 = vmatpush1.msra.mxu0 0.0
        %4187 = vmatprep.subr.mxu0 0.0
        %4188 = vmatpush1.msra.mxu0 0.0
        %4189 = vmatprep.subr.mxu0 0.0
        %4190 = vmatpush1.msra.mxu0 0.0
        %4191 = vmatprep.subr.mxu0 0.0
        %4192 = vmatpush1.msra.mxu0 0.0
        %4193 = vmatprep.subr.mxu0 0.0
        %4194 = vmatpush1.msra.mxu0 0.0
        %4195 = vmatprep.subr.mxu0 0.0
        %4196 = vmatpush1.msra.mxu0 0.0
        %4197 = vmatprep.subr.mxu0 0.0
        %4198 = vmatpush1.msra.mxu0 0.0
        %4199 = vmatprep.subr.mxu0 0.0
        %4200 = vmatpush1.msra.mxu0 0.0
        %4201 = vmatprep.subr.mxu0 0.0
        %4202 = vmatpush1.msra.mxu0 0.0
        %4203 = vmatprep.subr.mxu0 0.0
        %4204 = vmatpush1.msra.mxu0 0.0
        %4205 = vmatprep.subr.mxu0 0.0
        %4206 = vmatpush1.msra.mxu0 0.0
        %4207 = vmatprep.subr.mxu0 0.0
        %4208 = vmatpush1.msra.mxu0 0.0
        %4209 = vmatprep.subr.mxu0 0.0
        %4210 = vmatpush1.msra.mxu0 0.0
        %4211 = vmatprep.subr.mxu0 0.0
        %4212 = vmatpush1.msra.mxu0 0.0
        %4213 = vmatprep.mubr.f32.mxu0 0.0
        %4214 = vmatmul.mubr.f32.gmra.mrb[0].mxu0 %v4147
        %v4215 = vpop.f32.mrb[0].mxu0
        %v4216 = vadd.f32 0.0, %v4215
        %v4217 = vpop.f32.mrb[0].mxu0
        %4218 = vdwg.mxu0
        %v4219 = vtanh.pop %v4216
        %v4220 = vmul.f32 %v4145, %v4219
        %v4222 = vsel %vm495, %v4220, 0
        %4224 = vmatprep.subr.mxu0 0.0
        %4225 = vmatpush1.msra.mxu0 %v3191
        %4226 = vmatprep.subr.mxu0 0.0
        %4227 = vmatpush1.msra.mxu0 %v3192
        %4228 = vmatprep.subr.mxu0 0.0
        %4229 = vmatpush1.msra.mxu0 %v3193
        %4230 = vmatprep.subr.mxu0 0.0
        %4231 = vmatpush1.msra.mxu0 %v3194
        %4232 = vmatprep.subr.mxu0 0.0
        %4233 = vmatpush1.msra.mxu0 %v3195
        %4234 = vmatprep.subr.mxu0 0.0
        %4235 = vmatpush1.msra.mxu0 %v3196
        %4236 = vmatprep.subr.mxu0 0.0
        %4237 = vmatpush1.msra.mxu0 %v3197
        %4238 = vmatprep.subr.mxu0 0.0
        %4239 = vmatpush1.msra.mxu0 %v3198
        %4240 = vmatprep.subr.mxu0 0.0
        %4241 = vmatpush1.msra.mxu0 0.0
        %4242 = vmatprep.subr.mxu0 0.0
        %4243 = vmatpush1.msra.mxu0 0.0
        %4244 = vmatprep.subr.mxu0 0.0
        %4245 = vmatpush1.msra.mxu0 0.0
        %4246 = vmatprep.subr.mxu0 0.0
        %4247 = vmatpush1.msra.mxu0 0.0
        %4248 = vmatprep.subr.mxu0 0.0
        %4249 = vmatpush1.msra.mxu0 0.0
        %4250 = vmatprep.subr.mxu0 0.0
        %4251 = vmatpush1.msra.mxu0 0.0
        %4252 = vmatprep.subr.mxu0 0.0
        %4253 = vmatpush1.msra.mxu0 0.0
        %4254 = vmatprep.subr.mxu0 0.0
        %4255 = vmatpush1.msra.mxu0 0.0
        %4256 = vmatprep.subr.mxu0 0.0
        %4257 = vmatpush1.msra.mxu0 0.0
        %4258 = vmatprep.subr.mxu0 0.0
        %4259 = vmatpush1.msra.mxu0 0.0
        %4260 = vmatprep.subr.mxu0 0.0
        %4261 = vmatpush1.msra.mxu0 0.0
        %4262 = vmatprep.subr.mxu0 0.0
        %4263 = vmatpush1.msra.mxu0 0.0
        %4264 = vmatprep.subr.mxu0 0.0
        %4265 = vmatpush1.msra.mxu0 0.0
        %4266 = vmatprep.subr.mxu0 0.0
        %4267 = vmatpush1.msra.mxu0 0.0
        %4268 = vmatprep.subr.mxu0 0.0
        %4269 = vmatpush1.msra.mxu0 0.0
        %4270 = vmatprep.subr.mxu0 0.0
        %4271 = vmatpush1.msra.mxu0 0.0
        %4272 = vmatprep.subr.mxu0 0.0
        %4273 = vmatpush1.msra.mxu0 0.0
        %4274 = vmatprep.subr.mxu0 0.0
        %4275 = vmatpush1.msra.mxu0 0.0
        %4276 = vmatprep.subr.mxu0 0.0
        %4277 = vmatpush1.msra.mxu0 0.0
        %4278 = vmatprep.subr.mxu0 0.0
        %4279 = vmatpush1.msra.mxu0 0.0
        %4280 = vmatprep.subr.mxu0 0.0
        %4281 = vmatpush1.msra.mxu0 0.0
        %4282 = vmatprep.subr.mxu0 0.0
        %4283 = vmatpush1.msra.mxu0 0.0
        %4284 = vmatprep.subr.mxu0 0.0
        %4285 = vmatpush1.msra.mxu0 0.0
        %4286 = vmatprep.subr.mxu0 0.0
        %4287 = vmatpush1.msra.mxu0 0.0
        %4288 = vmatprep.mubr.f32.mxu0 0.0
        %4289 = vmatmul.mubr.f32.gmra.mrb[0].mxu0 %v4222
        %v4290 = vpop.f32.mrb[0].mxu0
        %v4291 = vadd.f32 0.0, %v4290
        %v4292 = vpop.f32.mrb[0].mxu0
        %4293 = vdwg.mxu0
        %v4294 = vsel %vm3356, %v4291, -inf
        %4295 = vmax.xlane.f32.xlu0 %v4294
        %v4296 = vpop.xlane.xlu0 %4295
        %v4297 = vsub.f32 %v4291, %v4296
        %v4298 = vmul.f32 %v4297, 1.442695
        %v4299 = vpow.pop %v4298
        %v4300 = vsel %vm3356, %v4299, 0.0
        %4301 = vadd.xlane.f32.xlu0 %v4300
        %v4302 = vpop.xlane.xlu0 %4301
        %v4303 = vrcp.pop %v4302
        %v4304 = vmul.f32 %v4299, %v4303
        %v4306 = vsel %vm3368, %v4304, 0
        %4308 = vmatprep.subr.mxu0 0.0
        %4309 = vmatpush1.msra.mxu0 %v2322
        %4310 = vmatprep.subr.mxu0 0.0
        %4311 = vmatpush1.msra.mxu0 0.0
        %4312 = vmatprep.subr.mxu0 0.0
        %4313 = vmatpush1.msra.mxu0 0.0
        %4314 = vmatprep.subr.mxu0 0.0
        %4315 = vmatpush1.msra.mxu0 0.0
        %4316 = vmatprep.subr.mxu0 0.0
        %4317 = vmatpush1.msra.mxu0 0.0
        %4318 = vmatprep.subr.mxu0 0.0
        %4319 = vmatpush1.msra.mxu0 0.0
        %4320 = vmatprep.subr.mxu0 0.0
        %4321 = vmatpush1.msra.mxu0 0.0
        %4322 = vmatprep.subr.mxu0 0.0
        %4323 = vmatpush1.msra.mxu0 0.0
        %4324 = vmatprep.subr.mxu0 0.0
        %4325 = vmatpush1.msra.mxu0 0.0
        %4326 = vmatprep.subr.mxu0 0.0
        %4327 = vmatpush1.msra.mxu0 0.0
        %4328 = vmatprep.subr.mxu0 0.0
        %4329 = vmatpush1.msra.mxu0 0.0
        %4330 = vmatprep.subr.mxu0 0.0
        %4331 = vmatpush1.msra.mxu0 0.0
        %4332 = vmatprep.subr.mxu0 0.0
        %4333 = vmatpush1.msra.mxu0 0.0
        %4334 = vmatprep.subr.mxu0 0.0
        %4335 = vmatpush1.msra.mxu0 0.0
        %4336 = vmatprep.subr.mxu0 0.0
        %4337 = vmatpush1.msra.mxu0 0.0
        %4338 = vmatprep.subr.mxu0 0.0
        %4339 = vmatpush1.msra.mxu0 0.0
        %4340 = vmatprep.subr.mxu0 0.0
        %4341 = vmatpush1.msra.mxu0 0.0
        %4342 = vmatprep.subr.mxu0 0.0
        %4343 = vmatpush1.msra.mxu0 0.0
        %4344 = vmatprep.subr.mxu0 0.0
        %4345 = vmatpush1.msra.mxu0 0.0
        %4346 = vmatprep.subr.mxu0 0.0
        %4347 = vmatpush1.msra.mxu0 0.0
        %4348 = vmatprep.subr.mxu0 0.0
        %4349 = vmatpush1.msra.mxu0 0.0
        %4350 = vmatprep.subr.mxu0 0.0
        %4351 = vmatpush1.msra.mxu0 0.0
        %4352 = vmatprep.subr.mxu0 0.0
        %4353 = vmatpush1.msra.mxu0 0.0
        %4354 = vmatprep.subr.mxu0 0.0
        %4355 = vmatpush1.msra.mxu0 0.0
        %4356 = vmatprep.subr.mxu0 0.0
        %4357 = vmatpush1.msra.mxu0 0.0
        %4358 = vmatprep.subr.mxu0 0.0
        %4359 = vmatpush1.msra.mxu0 0.0
        %4360 = vmatprep.subr.mxu0 0.0
        %4361 = vmatpush1.msra.mxu0 0.0
        %4362 = vmatprep.subr.mxu0 0.0
        %4363 = vmatpush1.msra.mxu0 0.0
        %4364 = vmatprep.subr.mxu0 0.0
        %4365 = vmatpush1.msra.mxu0 0.0
        %4366 = vmatprep.subr.mxu0 0.0
        %4367 = vmatpush1.msra.mxu0 0.0
        %4368 = vmatprep.subr.mxu0 0.0
        %4369 = vmatpush1.msra.mxu0 0.0
        %4370 = vmatprep.subr.mxu0 0.0
        %4371 = vmatpush1.msra.mxu0 0.0
        %4372 = vmatprep.mubr.f32.mxu0 0.0
        %4373 = vmatmul.mubr.f32.gmra.mrb[0].mxu0 %v4306
        %v4374 = vpop.f32.mrb[0].mxu0
        %v4375 = vadd.f32 0.0, %v4374
        %v4376 = vpop.f32.mrb[0].mxu0
        %4377 = vdwg.mxu0
        %v4378 = vadd.f32 %v4144, %v4375
        %v4379 = vld [vmem:[#allocation6 + $0x5] sm:$0x1]
        %v4381 = vsel %vm495, %v4378, 0
        %4383 = vmatprep.subr.mxu0 0.0
        %4384 = vmatpush1.msra.mxu0 %v2461
        %4385 = vmatprep.subr.mxu0 0.0
        %4386 = vmatpush1.msra.mxu0 %v2462
        %4387 = vmatprep.subr.mxu0 0.0
        %4388 = vmatpush1.msra.mxu0 %v2463
        %4389 = vmatprep.subr.mxu0 0.0
        %4390 = vmatpush1.msra.mxu0 %v2464
        %4391 = vmatprep.subr.mxu0 0.0
        %4392 = vmatpush1.msra.mxu0 %v2465
        %4393 = vmatprep.subr.mxu0 0.0
        %4394 = vmatpush1.msra.mxu0 %v2466
        %4395 = vmatprep.subr.mxu0 0.0
        %4396 = vmatpush1.msra.mxu0 %v2467
        %4397 = vmatprep.subr.mxu0 0.0
        %4398 = vmatpush1.msra.mxu0 %v2468
        %4399 = vmatprep.subr.mxu0 0.0
        %4400 = vmatpush1.msra.mxu0 0.0
        %4401 = vmatprep.subr.mxu0 0.0
        %4402 = vmatpush1.msra.mxu0 0.0
        %4403 = vmatprep.subr.mxu0 0.0
        %4404 = vmatpush1.msra.mxu0 0.0
        %4405 = vmatprep.subr.mxu0 0.0
        %4406 = vmatpush1.msra.mxu0 0.0
        %4407 = vmatprep.subr.mxu0 0.0
        %4408 = vmatpush1.msra.mxu0 0.0
        %4409 = vmatprep.subr.mxu0 0.0
        %4410 = vmatpush1.msra.mxu0 0.0
        %4411 = vmatprep.subr.mxu0 0.0
        %4412 = vmatpush1.msra.mxu0 0.0
        %4413 = vmatprep.subr.mxu0 0.0
        %4414 = vmatpush1.msra.mxu0 0.0
        %4415 = vmatprep.subr.mxu0 0.0
        %4416 = vmatpush1.msra.mxu0 0.0
        %4417 = vmatprep.subr.mxu0 0.0
        %4418 = vmatpush1.msra.mxu0 0.0
        %4419 = vmatprep.subr.mxu0 0.0
        %4420 = vmatpush1.msra.mxu0 0.0
        %4421 = vmatprep.subr.mxu0 0.0
        %4422 = vmatpush1.msra.mxu0 0.0
        %4423 = vmatprep.subr.mxu0 0.0
        %4424 = vmatpush1.msra.mxu0 0.0
        %4425 = vmatprep.subr.mxu0 0.0
        %4426 = vmatpush1.msra.mxu0 0.0
        %4427 = vmatprep.subr.mxu0 0.0
        %4428 = vmatpush1.msra.mxu0 0.0
        %4429 = vmatprep.subr.mxu0 0.0
        %4430 = vmatpush1.msra.mxu0 0.0
        %4431 = vmatprep.subr.mxu0 0.0
        %4432 = vmatpush1.msra.mxu0 0.0
        %4433 = vmatprep.subr.mxu0 0.0
        %4434 = vmatpush1.msra.mxu0 0.0
        %4435 = vmatprep.subr.mxu0 0.0
        %4436 = vmatpush1.msra.mxu0 0.0
        %4437 = vmatprep.subr.mxu0 0.0
        %4438 = vmatpush1.msra.mxu0 0.0
        %4439 = vmatprep.subr.mxu0 0.0
        %4440 = vmatpush1.msra.mxu0 0.0
        %4441 = vmatprep.subr.mxu0 0.0
        %4442 = vmatpush1.msra.mxu0 0.0
        %4443 = vmatprep.subr.mxu0 0.0
        %4444 = vmatpush1.msra.mxu0 0.0
        %4445 = vmatprep.subr.mxu0 0.0
        %4446 = vmatpush1.msra.mxu0 0.0
        %4447 = vmatprep.mubr.f32.mxu0 0.0
        %4448 = vmatmul.mubr.f32.gmra.mrb[0].mxu0 %v4381
        %v4449 = vpop.f32.mrb[0].mxu0
        %v4450 = vadd.f32 0.0, %v4449
        %v4451 = vpop.f32.mrb[0].mxu0
        %4452 = vdwg.mxu0
        %v4453 = vtanh.pop %v4450
        %v4454 = vmul.f32 %v4379, %v4453
        %v4456 = vsel %vm495, %v4454, 0
        %4458 = vmatprep.subr.mxu0 0.0
        %4459 = vmatpush1.msra.mxu0 %v3191
        %4460 = vmatprep.subr.mxu0 0.0
        %4461 = vmatpush1.msra.mxu0 %v3192
        %4462 = vmatprep.subr.mxu0 0.0
        %4463 = vmatpush1.msra.mxu0 %v3193
        %4464 = vmatprep.subr.mxu0 0.0
        %4465 = vmatpush1.msra.mxu0 %v3194
        %4466 = vmatprep.subr.mxu0 0.0
        %4467 = vmatpush1.msra.mxu0 %v3195
        %4468 = vmatprep.subr.mxu0 0.0
        %4469 = vmatpush1.msra.mxu0 %v3196
        %4470 = vmatprep.subr.mxu0 0.0
        %4471 = vmatpush1.msra.mxu0 %v3197
        %4472 = vmatprep.subr.mxu0 0.0
        %4473 = vmatpush1.msra.mxu0 %v3198
        %4474 = vmatprep.subr.mxu0 0.0
        %4475 = vmatpush1.msra.mxu0 0.0
        %4476 = vmatprep.subr.mxu0 0.0
        %4477 = vmatpush1.msra.mxu0 0.0
        %4478 = vmatprep.subr.mxu0 0.0
        %4479 = vmatpush1.msra.mxu0 0.0
        %4480 = vmatprep.subr.mxu0 0.0
        %4481 = vmatpush1.msra.mxu0 0.0
        %4482 = vmatprep.subr.mxu0 0.0
        %4483 = vmatpush1.msra.mxu0 0.0
        %4484 = vmatprep.subr.mxu0 0.0
        %4485 = vmatpush1.msra.mxu0 0.0
        %4486 = vmatprep.subr.mxu0 0.0
        %4487 = vmatpush1.msra.mxu0 0.0
        %4488 = vmatprep.subr.mxu0 0.0
        %4489 = vmatpush1.msra.mxu0 0.0
        %4490 = vmatprep.subr.mxu0 0.0
        %4491 = vmatpush1.msra.mxu0 0.0
        %4492 = vmatprep.subr.mxu0 0.0
        %4493 = vmatpush1.msra.mxu0 0.0
        %4494 = vmatprep.subr.mxu0 0.0
        %4495 = vmatpush1.msra.mxu0 0.0
        %4496 = vmatprep.subr.mxu0 0.0
        %4497 = vmatpush1.msra.mxu0 0.0
        %4498 = vmatprep.subr.mxu0 0.0
        %4499 = vmatpush1.msra.mxu0 0.0
        %4500 = vmatprep.subr.mxu0 0.0
        %4501 = vmatpush1.msra.mxu0 0.0
        %4502 = vmatprep.subr.mxu0 0.0
        %4503 = vmatpush1.msra.mxu0 0.0
        %4504 = vmatprep.subr.mxu0 0.0
        %4505 = vmatpush1.msra.mxu0 0.0
        %4506 = vmatprep.subr.mxu0 0.0
        %4507 = vmatpush1.msra.mxu0 0.0
        %4508 = vmatprep.subr.mxu0 0.0
        %4509 = vmatpush1.msra.mxu0 0.0
        %4510 = vmatprep.subr.mxu0 0.0
        %4511 = vmatpush1.msra.mxu0 0.0
        %4512 = vmatprep.subr.mxu0 0.0
        %4513 = vmatpush1.msra.mxu0 0.0
        %4514 = vmatprep.subr.mxu0 0.0
        %4515 = vmatpush1.msra.mxu0 0.0
        %4516 = vmatprep.subr.mxu0 0.0
        %4517 = vmatpush1.msra.mxu0 0.0
        %4518 = vmatprep.subr.mxu0 0.0
        %4519 = vmatpush1.msra.mxu0 0.0
        %4520 = vmatprep.subr.mxu0 0.0
        %4521 = vmatpush1.msra.mxu0 0.0
        %4522 = vmatprep.mubr.f32.mxu0 0.0
        %4523 = vmatmul.mubr.f32.gmra.mrb[0].mxu0 %v4456
        %v4524 = vpop.f32.mrb[0].mxu0
        %v4525 = vadd.f32 0.0, %v4524
        %v4526 = vpop.f32.mrb[0].mxu0
        %4527 = vdwg.mxu0
        %v4528 = vsel %vm3356, %v4525, -inf
        %4529 = vmax.xlane.f32.xlu0 %v4528
        %v4530 = vpop.xlane.xlu0 %4529
        %v4531 = vsub.f32 %v4525, %v4530
        %v4532 = vmul.f32 %v4531, 1.442695
        %v4533 = vpow.pop %v4532
        %v4534 = vsel %vm3356, %v4533, 0.0
        %4535 = vadd.xlane.f32.xlu0 %v4534
        %v4536 = vpop.xlane.xlu0 %4535
        %v4537 = vrcp.pop %v4536
        %v4538 = vmul.f32 %v4533, %v4537
        %v4540 = vsel %vm3368, %v4538, 0
        %4542 = vmatprep.subr.mxu0 0.0
        %4543 = vmatpush1.msra.mxu0 %v2322
        %4544 = vmatprep.subr.mxu0 0.0
        %4545 = vmatpush1.msra.mxu0 0.0
        %4546 = vmatprep.subr.mxu0 0.0
        %4547 = vmatpush1.msra.mxu0 0.0
        %4548 = vmatprep.subr.mxu0 0.0
        %4549 = vmatpush1.msra.mxu0 0.0
        %4550 = vmatprep.subr.mxu0 0.0
        %4551 = vmatpush1.msra.mxu0 0.0
        %4552 = vmatprep.subr.mxu0 0.0
        %4553 = vmatpush1.msra.mxu0 0.0
        %4554 = vmatprep.subr.mxu0 0.0
        %4555 = vmatpush1.msra.mxu0 0.0
        %4556 = vmatprep.subr.mxu0 0.0
        %4557 = vmatpush1.msra.mxu0 0.0
        %4558 = vmatprep.subr.mxu0 0.0
        %4559 = vmatpush1.msra.mxu0 0.0
        %4560 = vmatprep.subr.mxu0 0.0
        %4561 = vmatpush1.msra.mxu0 0.0
        %4562 = vmatprep.subr.mxu0 0.0
        %4563 = vmatpush1.msra.mxu0 0.0
        %4564 = vmatprep.subr.mxu0 0.0
        %4565 = vmatpush1.msra.mxu0 0.0
        %4566 = vmatprep.subr.mxu0 0.0
        %4567 = vmatpush1.msra.mxu0 0.0
        %4568 = vmatprep.subr.mxu0 0.0
        %4569 = vmatpush1.msra.mxu0 0.0
        %4570 = vmatprep.subr.mxu0 0.0
        %4571 = vmatpush1.msra.mxu0 0.0
        %4572 = vmatprep.subr.mxu0 0.0
        %4573 = vmatpush1.msra.mxu0 0.0
        %4574 = vmatprep.subr.mxu0 0.0
        %4575 = vmatpush1.msra.mxu0 0.0
        %4576 = vmatprep.subr.mxu0 0.0
        %4577 = vmatpush1.msra.mxu0 0.0
        %4578 = vmatprep.subr.mxu0 0.0
        %4579 = vmatpush1.msra.mxu0 0.0
        %4580 = vmatprep.subr.mxu0 0.0
        %4581 = vmatpush1.msra.mxu0 0.0
        %4582 = vmatprep.subr.mxu0 0.0
        %4583 = vmatpush1.msra.mxu0 0.0
        %4584 = vmatprep.subr.mxu0 0.0
        %4585 = vmatpush1.msra.mxu0 0.0
        %4586 = vmatprep.subr.mxu0 0.0
        %4587 = vmatpush1.msra.mxu0 0.0
        %4588 = vmatprep.subr.mxu0 0.0
        %4589 = vmatpush1.msra.mxu0 0.0
        %4590 = vmatprep.subr.mxu0 0.0
        %4591 = vmatpush1.msra.mxu0 0.0
        %4592 = vmatprep.subr.mxu0 0.0
        %4593 = vmatpush1.msra.mxu0 0.0
        %4594 = vmatprep.subr.mxu0 0.0
        %4595 = vmatpush1.msra.mxu0 0.0
        %4596 = vmatprep.subr.mxu0 0.0
        %4597 = vmatpush1.msra.mxu0 0.0
        %4598 = vmatprep.subr.mxu0 0.0
        %4599 = vmatpush1.msra.mxu0 0.0
        %4600 = vmatprep.subr.mxu0 0.0
        %4601 = vmatpush1.msra.mxu0 0.0
        %4602 = vmatprep.subr.mxu0 0.0
        %4603 = vmatpush1.msra.mxu0 0.0
        %4604 = vmatprep.subr.mxu0 0.0
        %4605 = vmatpush1.msra.mxu0 0.0
        %4606 = vmatprep.mubr.f32.mxu0 0.0
        %4607 = vmatmul.mubr.f32.gmra.mrb[0].mxu0 %v4540
        %v4608 = vpop.f32.mrb[0].mxu0
        %v4609 = vadd.f32 0.0, %v4608
        %v4610 = vpop.f32.mrb[0].mxu0
        %4611 = vdwg.mxu0
        %v4612 = vadd.f32 %v4378, %v4609
        %v4613 = vld [vmem:[#allocation6 + $0x6] sm:$0x1]
        %v4615 = vsel %vm495, %v4612, 0
        %4617 = vmatprep.subr.mxu0 0.0
        %4618 = vmatpush1.msra.mxu0 %v2461
        %4619 = vmatprep.subr.mxu0 0.0
        %4620 = vmatpush1.msra.mxu0 %v2462
        %4621 = vmatprep.subr.mxu0 0.0
        %4622 = vmatpush1.msra.mxu0 %v2463
        %4623 = vmatprep.subr.mxu0 0.0
        %4624 = vmatpush1.msra.mxu0 %v2464
        %4625 = vmatprep.subr.mxu0 0.0
        %4626 = vmatpush1.msra.mxu0 %v2465
        %4627 = vmatprep.subr.mxu0 0.0
        %4628 = vmatpush1.msra.mxu0 %v2466
        %4629 = vmatprep.subr.mxu0 0.0
        %4630 = vmatpush1.msra.mxu0 %v2467
        %4631 = vmatprep.subr.mxu0 0.0
        %4632 = vmatpush1.msra.mxu0 %v2468
        %4633 = vmatprep.subr.mxu0 0.0
        %4634 = vmatpush1.msra.mxu0 0.0
        %4635 = vmatprep.subr.mxu0 0.0
        %4636 = vmatpush1.msra.mxu0 0.0
        %4637 = vmatprep.subr.mxu0 0.0
        %4638 = vmatpush1.msra.mxu0 0.0
        %4639 = vmatprep.subr.mxu0 0.0
        %4640 = vmatpush1.msra.mxu0 0.0
        %4641 = vmatprep.subr.mxu0 0.0
        %4642 = vmatpush1.msra.mxu0 0.0
        %4643 = vmatprep.subr.mxu0 0.0
        %4644 = vmatpush1.msra.mxu0 0.0
        %4645 = vmatprep.subr.mxu0 0.0
        %4646 = vmatpush1.msra.mxu0 0.0
        %4647 = vmatprep.subr.mxu0 0.0
        %4648 = vmatpush1.msra.mxu0 0.0
        %4649 = vmatprep.subr.mxu0 0.0
        %4650 = vmatpush1.msra.mxu0 0.0
        %4651 = vmatprep.subr.mxu0 0.0
        %4652 = vmatpush1.msra.mxu0 0.0
        %4653 = vmatprep.subr.mxu0 0.0
        %4654 = vmatpush1.msra.mxu0 0.0
        %4655 = vmatprep.subr.mxu0 0.0
        %4656 = vmatpush1.msra.mxu0 0.0
        %4657 = vmatprep.subr.mxu0 0.0
        %4658 = vmatpush1.msra.mxu0 0.0
        %4659 = vmatprep.subr.mxu0 0.0
        %4660 = vmatpush1.msra.mxu0 0.0
        %4661 = vmatprep.subr.mxu0 0.0
        %4662 = vmatpush1.msra.mxu0 0.0
        %4663 = vmatprep.subr.mxu0 0.0
        %4664 = vmatpush1.msra.mxu0 0.0
        %4665 = vmatprep.subr.mxu0 0.0
        %4666 = vmatpush1.msra.mxu0 0.0
        %4667 = vmatprep.subr.mxu0 0.0
        %4668 = vmatpush1.msra.mxu0 0.0
        %4669 = vmatprep.subr.mxu0 0.0
        %4670 = vmatpush1.msra.mxu0 0.0
        %4671 = vmatprep.subr.mxu0 0.0
        %4672 = vmatpush1.msra.mxu0 0.0
        %4673 = vmatprep.subr.mxu0 0.0
        %4674 = vmatpush1.msra.mxu0 0.0
        %4675 = vmatprep.subr.mxu0 0.0
        %4676 = vmatpush1.msra.mxu0 0.0
        %4677 = vmatprep.subr.mxu0 0.0
        %4678 = vmatpush1.msra.mxu0 0.0
        %4679 = vmatprep.subr.mxu0 0.0
        %4680 = vmatpush1.msra.mxu0 0.0
        %4681 = vmatprep.mubr.f32.mxu0 0.0
        %4682 = vmatmul.mubr.f32.gmra.mrb[0].mxu0 %v4615
        %v4683 = vpop.f32.mrb[0].mxu0
        %v4684 = vadd.f32 0.0, %v4683
        %v4685 = vpop.f32.mrb[0].mxu0
        %4686 = vdwg.mxu0
        %v4687 = vtanh.pop %v4684
        %v4688 = vmul.f32 %v4613, %v4687
        %v4690 = vsel %vm495, %v4688, 0
        %4692 = vmatprep.subr.mxu0 0.0
        %4693 = vmatpush1.msra.mxu0 %v3191
        %4694 = vmatprep.subr.mxu0 0.0
        %4695 = vmatpush1.msra.mxu0 %v3192
        %4696 = vmatprep.subr.mxu0 0.0
        %4697 = vmatpush1.msra.mxu0 %v3193
        %4698 = vmatprep.subr.mxu0 0.0
        %4699 = vmatpush1.msra.mxu0 %v3194
        %4700 = vmatprep.subr.mxu0 0.0
        %4701 = vmatpush1.msra.mxu0 %v3195
        %4702 = vmatprep.subr.mxu0 0.0
        %4703 = vmatpush1.msra.mxu0 %v3196
        %4704 = vmatprep.subr.mxu0 0.0
        %4705 = vmatpush1.msra.mxu0 %v3197
        %4706 = vmatprep.subr.mxu0 0.0
        %4707 = vmatpush1.msra.mxu0 %v3198
        %4708 = vmatprep.subr.mxu0 0.0
        %4709 = vmatpush1.msra.mxu0 0.0
        %4710 = vmatprep.subr.mxu0 0.0
        %4711 = vmatpush1.msra.mxu0 0.0
        %4712 = vmatprep.subr.mxu0 0.0
        %4713 = vmatpush1.msra.mxu0 0.0
        %4714 = vmatprep.subr.mxu0 0.0
        %4715 = vmatpush1.msra.mxu0 0.0
        %4716 = vmatprep.subr.mxu0 0.0
        %4717 = vmatpush1.msra.mxu0 0.0
        %4718 = vmatprep.subr.mxu0 0.0
        %4719 = vmatpush1.msra.mxu0 0.0
        %4720 = vmatprep.subr.mxu0 0.0
        %4721 = vmatpush1.msra.mxu0 0.0
        %4722 = vmatprep.subr.mxu0 0.0
        %4723 = vmatpush1.msra.mxu0 0.0
        %4724 = vmatprep.subr.mxu0 0.0
        %4725 = vmatpush1.msra.mxu0 0.0
        %4726 = vmatprep.subr.mxu0 0.0
        %4727 = vmatpush1.msra.mxu0 0.0
        %4728 = vmatprep.subr.mxu0 0.0
        %4729 = vmatpush1.msra.mxu0 0.0
        %4730 = vmatprep.subr.mxu0 0.0
        %4731 = vmatpush1.msra.mxu0 0.0
        %4732 = vmatprep.subr.mxu0 0.0
        %4733 = vmatpush1.msra.mxu0 0.0
        %4734 = vmatprep.subr.mxu0 0.0
        %4735 = vmatpush1.msra.mxu0 0.0
        %4736 = vmatprep.subr.mxu0 0.0
        %4737 = vmatpush1.msra.mxu0 0.0
        %4738 = vmatprep.subr.mxu0 0.0
        %4739 = vmatpush1.msra.mxu0 0.0
        %4740 = vmatprep.subr.mxu0 0.0
        %4741 = vmatpush1.msra.mxu0 0.0
        %4742 = vmatprep.subr.mxu0 0.0
        %4743 = vmatpush1.msra.mxu0 0.0
        %4744 = vmatprep.subr.mxu0 0.0
        %4745 = vmatpush1.msra.mxu0 0.0
        %4746 = vmatprep.subr.mxu0 0.0
        %4747 = vmatpush1.msra.mxu0 0.0
        %4748 = vmatprep.subr.mxu0 0.0
        %4749 = vmatpush1.msra.mxu0 0.0
        %4750 = vmatprep.subr.mxu0 0.0
        %4751 = vmatpush1.msra.mxu0 0.0
        %4752 = vmatprep.subr.mxu0 0.0
        %4753 = vmatpush1.msra.mxu0 0.0
        %4754 = vmatprep.subr.mxu0 0.0
        %4755 = vmatpush1.msra.mxu0 0.0
        %4756 = vmatprep.mubr.f32.mxu0 0.0
        %4757 = vmatmul.mubr.f32.gmra.mrb[0].mxu0 %v4690
        %v4758 = vpop.f32.mrb[0].mxu0
        %v4759 = vadd.f32 0.0, %v4758
        %v4760 = vpop.f32.mrb[0].mxu0
        %4761 = vdwg.mxu0
        %v4762 = vsel %vm3356, %v4759, -inf
        %4763 = vmax.xlane.f32.xlu0 %v4762
        %v4764 = vpop.xlane.xlu0 %4763
        %v4765 = vsub.f32 %v4759, %v4764
        %v4766 = vmul.f32 %v4765, 1.442695
        %v4767 = vpow.pop %v4766
        %v4768 = vsel %vm3356, %v4767, 0.0
        %4769 = vadd.xlane.f32.xlu0 %v4768
        %v4770 = vpop.xlane.xlu0 %4769
        %v4771 = vrcp.pop %v4770
        %v4772 = vmul.f32 %v4767, %v4771
        %v4774 = vsel %vm3368, %v4772, 0
        %4776 = vmatprep.subr.mxu0 0.0
        %4777 = vmatpush1.msra.mxu0 %v2322
        %4778 = vmatprep.subr.mxu0 0.0
        %4779 = vmatpush1.msra.mxu0 0.0
        %4780 = vmatprep.subr.mxu0 0.0
        %4781 = vmatpush1.msra.mxu0 0.0
        %4782 = vmatprep.subr.mxu0 0.0
        %4783 = vmatpush1.msra.mxu0 0.0
        %4784 = vmatprep.subr.mxu0 0.0
        %4785 = vmatpush1.msra.mxu0 0.0
        %4786 = vmatprep.subr.mxu0 0.0
        %4787 = vmatpush1.msra.mxu0 0.0
        %4788 = vmatprep.subr.mxu0 0.0
        %4789 = vmatpush1.msra.mxu0 0.0
        %4790 = vmatprep.subr.mxu0 0.0
        %4791 = vmatpush1.msra.mxu0 0.0
        %4792 = vmatprep.subr.mxu0 0.0
        %4793 = vmatpush1.msra.mxu0 0.0
        %4794 = vmatprep.subr.mxu0 0.0
        %4795 = vmatpush1.msra.mxu0 0.0
        %4796 = vmatprep.subr.mxu0 0.0
        %4797 = vmatpush1.msra.mxu0 0.0
        %4798 = vmatprep.subr.mxu0 0.0
        %4799 = vmatpush1.msra.mxu0 0.0
        %4800 = vmatprep.subr.mxu0 0.0
        %4801 = vmatpush1.msra.mxu0 0.0
        %4802 = vmatprep.subr.mxu0 0.0
        %4803 = vmatpush1.msra.mxu0 0.0
        %4804 = vmatprep.subr.mxu0 0.0
        %4805 = vmatpush1.msra.mxu0 0.0
        %4806 = vmatprep.subr.mxu0 0.0
        %4807 = vmatpush1.msra.mxu0 0.0
        %4808 = vmatprep.subr.mxu0 0.0
        %4809 = vmatpush1.msra.mxu0 0.0
        %4810 = vmatprep.subr.mxu0 0.0
        %4811 = vmatpush1.msra.mxu0 0.0
        %4812 = vmatprep.subr.mxu0 0.0
        %4813 = vmatpush1.msra.mxu0 0.0
        %4814 = vmatprep.subr.mxu0 0.0
        %4815 = vmatpush1.msra.mxu0 0.0
        %4816 = vmatprep.subr.mxu0 0.0
        %4817 = vmatpush1.msra.mxu0 0.0
        %4818 = vmatprep.subr.mxu0 0.0
        %4819 = vmatpush1.msra.mxu0 0.0
        %4820 = vmatprep.subr.mxu0 0.0
        %4821 = vmatpush1.msra.mxu0 0.0
        %4822 = vmatprep.subr.mxu0 0.0
        %4823 = vmatpush1.msra.mxu0 0.0
        %4824 = vmatprep.subr.mxu0 0.0
        %4825 = vmatpush1.msra.mxu0 0.0
        %4826 = vmatprep.subr.mxu0 0.0
        %4827 = vmatpush1.msra.mxu0 0.0
        %4828 = vmatprep.subr.mxu0 0.0
        %4829 = vmatpush1.msra.mxu0 0.0
        %4830 = vmatprep.subr.mxu0 0.0
        %4831 = vmatpush1.msra.mxu0 0.0
        %4832 = vmatprep.subr.mxu0 0.0
        %4833 = vmatpush1.msra.mxu0 0.0
        %4834 = vmatprep.subr.mxu0 0.0
        %4835 = vmatpush1.msra.mxu0 0.0
        %4836 = vmatprep.subr.mxu0 0.0
        %4837 = vmatpush1.msra.mxu0 0.0
        %4838 = vmatprep.subr.mxu0 0.0
        %4839 = vmatpush1.msra.mxu0 0.0
        %4840 = vmatprep.mubr.f32.mxu0 0.0
        %4841 = vmatmul.mubr.f32.gmra.mrb[0].mxu0 %v4774
        %v4842 = vpop.f32.mrb[0].mxu0
        %v4843 = vadd.f32 0.0, %v4842
        %v4844 = vpop.f32.mrb[0].mxu0
        %4845 = vdwg.mxu0
        %v4846 = vadd.f32 %v4612, %v4843
        %v4847 = vld [vmem:[#allocation6 + $0x7] sm:$0x1]
        %v4849 = vsel %vm495, %v4846, 0
        %4851 = vmatprep.subr.mxu0 0.0
        %4852 = vmatpush1.msra.mxu0 %v2461
        %4853 = vmatprep.subr.mxu0 0.0
        %4854 = vmatpush1.msra.mxu0 %v2462
        %4855 = vmatprep.subr.mxu0 0.0
        %4856 = vmatpush1.msra.mxu0 %v2463
        %4857 = vmatprep.subr.mxu0 0.0
        %4858 = vmatpush1.msra.mxu0 %v2464
        %4859 = vmatprep.subr.mxu0 0.0
        %4860 = vmatpush1.msra.mxu0 %v2465
        %4861 = vmatprep.subr.mxu0 0.0
        %4862 = vmatpush1.msra.mxu0 %v2466
        %4863 = vmatprep.subr.mxu0 0.0
        %4864 = vmatpush1.msra.mxu0 %v2467
        %4865 = vmatprep.subr.mxu0 0.0
        %4866 = vmatpush1.msra.mxu0 %v2468
        %4867 = vmatprep.subr.mxu0 0.0
        %4868 = vmatpush1.msra.mxu0 0.0
        %4869 = vmatprep.subr.mxu0 0.0
        %4870 = vmatpush1.msra.mxu0 0.0
        %4871 = vmatprep.subr.mxu0 0.0
        %4872 = vmatpush1.msra.mxu0 0.0
        %4873 = vmatprep.subr.mxu0 0.0
        %4874 = vmatpush1.msra.mxu0 0.0
        %4875 = vmatprep.subr.mxu0 0.0
        %4876 = vmatpush1.msra.mxu0 0.0
        %4877 = vmatprep.subr.mxu0 0.0
        %4878 = vmatpush1.msra.mxu0 0.0
        %4879 = vmatprep.subr.mxu0 0.0
        %4880 = vmatpush1.msra.mxu0 0.0
        %4881 = vmatprep.subr.mxu0 0.0
        %4882 = vmatpush1.msra.mxu0 0.0
        %4883 = vmatprep.subr.mxu0 0.0
        %4884 = vmatpush1.msra.mxu0 0.0
        %4885 = vmatprep.subr.mxu0 0.0
        %4886 = vmatpush1.msra.mxu0 0.0
        %4887 = vmatprep.subr.mxu0 0.0
        %4888 = vmatpush1.msra.mxu0 0.0
        %4889 = vmatprep.subr.mxu0 0.0
        %4890 = vmatpush1.msra.mxu0 0.0
        %4891 = vmatprep.subr.mxu0 0.0
        %4892 = vmatpush1.msra.mxu0 0.0
        %4893 = vmatprep.subr.mxu0 0.0
        %4894 = vmatpush1.msra.mxu0 0.0
        %4895 = vmatprep.subr.mxu0 0.0
        %4896 = vmatpush1.msra.mxu0 0.0
        %4897 = vmatprep.subr.mxu0 0.0
        %4898 = vmatpush1.msra.mxu0 0.0
        %4899 = vmatprep.subr.mxu0 0.0
        %4900 = vmatpush1.msra.mxu0 0.0
        %4901 = vmatprep.subr.mxu0 0.0
        %4902 = vmatpush1.msra.mxu0 0.0
        %4903 = vmatprep.subr.mxu0 0.0
        %4904 = vmatpush1.msra.mxu0 0.0
        %4905 = vmatprep.subr.mxu0 0.0
        %4906 = vmatpush1.msra.mxu0 0.0
        %4907 = vmatprep.subr.mxu0 0.0
        %4908 = vmatpush1.msra.mxu0 0.0
        %4909 = vmatprep.subr.mxu0 0.0
        %4910 = vmatpush1.msra.mxu0 0.0
        %4911 = vmatprep.subr.mxu0 0.0
        %4912 = vmatpush1.msra.mxu0 0.0
        %4913 = vmatprep.subr.mxu0 0.0
        %4914 = vmatpush1.msra.mxu0 0.0
        %4915 = vmatprep.mubr.f32.mxu0 0.0
        %4916 = vmatmul.mubr.f32.gmra.mrb[0].mxu0 %v4849
        %v4917 = vpop.f32.mrb[0].mxu0
        %v4918 = vadd.f32 0.0, %v4917
        %v4919 = vpop.f32.mrb[0].mxu0
        %4920 = vdwg.mxu0
        %v4921 = vtanh.pop %v4918
        %v4922 = vmul.f32 %v4847, %v4921
        %v4924 = vsel %vm495, %v4922, 0
        %4926 = vmatprep.subr.mxu0 0.0
        %4927 = vmatpush1.msra.mxu0 %v3191
        %4928 = vmatprep.subr.mxu0 0.0
        %4929 = vmatpush1.msra.mxu0 %v3192
        %4930 = vmatprep.subr.mxu0 0.0
        %4931 = vmatpush1.msra.mxu0 %v3193
        %4932 = vmatprep.subr.mxu0 0.0
        %4933 = vmatpush1.msra.mxu0 %v3194
        %4934 = vmatprep.subr.mxu0 0.0
        %4935 = vmatpush1.msra.mxu0 %v3195
        %4936 = vmatprep.subr.mxu0 0.0
        %4937 = vmatpush1.msra.mxu0 %v3196
        %4938 = vmatprep.subr.mxu0 0.0
        %4939 = vmatpush1.msra.mxu0 %v3197
        %4940 = vmatprep.subr.mxu0 0.0
        %4941 = vmatpush1.msra.mxu0 %v3198
        %4942 = vmatprep.subr.mxu0 0.0
        %4943 = vmatpush1.msra.mxu0 0.0
        %4944 = vmatprep.subr.mxu0 0.0
        %4945 = vmatpush1.msra.mxu0 0.0
        %4946 = vmatprep.subr.mxu0 0.0
        %4947 = vmatpush1.msra.mxu0 0.0
        %4948 = vmatprep.subr.mxu0 0.0
        %4949 = vmatpush1.msra.mxu0 0.0
        %4950 = vmatprep.subr.mxu0 0.0
        %4951 = vmatpush1.msra.mxu0 0.0
        %4952 = vmatprep.subr.mxu0 0.0
        %4953 = vmatpush1.msra.mxu0 0.0
        %4954 = vmatprep.subr.mxu0 0.0
        %4955 = vmatpush1.msra.mxu0 0.0
        %4956 = vmatprep.subr.mxu0 0.0
        %4957 = vmatpush1.msra.mxu0 0.0
        %4958 = vmatprep.subr.mxu0 0.0
        %4959 = vmatpush1.msra.mxu0 0.0
        %4960 = vmatprep.subr.mxu0 0.0
        %4961 = vmatpush1.msra.mxu0 0.0
        %4962 = vmatprep.subr.mxu0 0.0
        %4963 = vmatpush1.msra.mxu0 0.0
        %4964 = vmatprep.subr.mxu0 0.0
        %4965 = vmatpush1.msra.mxu0 0.0
        %4966 = vmatprep.subr.mxu0 0.0
        %4967 = vmatpush1.msra.mxu0 0.0
        %4968 = vmatprep.subr.mxu0 0.0
        %4969 = vmatpush1.msra.mxu0 0.0
        %4970 = vmatprep.subr.mxu0 0.0
        %4971 = vmatpush1.msra.mxu0 0.0
        %4972 = vmatprep.subr.mxu0 0.0
        %4973 = vmatpush1.msra.mxu0 0.0
        %4974 = vmatprep.subr.mxu0 0.0
        %4975 = vmatpush1.msra.mxu0 0.0
        %4976 = vmatprep.subr.mxu0 0.0
        %4977 = vmatpush1.msra.mxu0 0.0
        %4978 = vmatprep.subr.mxu0 0.0
        %4979 = vmatpush1.msra.mxu0 0.0
        %4980 = vmatprep.subr.mxu0 0.0
        %4981 = vmatpush1.msra.mxu0 0.0
        %4982 = vmatprep.subr.mxu0 0.0
        %4983 = vmatpush1.msra.mxu0 0.0
        %4984 = vmatprep.subr.mxu0 0.0
        %4985 = vmatpush1.msra.mxu0 0.0
        %4986 = vmatprep.subr.mxu0 0.0
        %4987 = vmatpush1.msra.mxu0 0.0
        %4988 = vmatprep.subr.mxu0 0.0
        %4989 = vmatpush1.msra.mxu0 0.0
        %4990 = vmatprep.mubr.f32.mxu0 0.0
        %4991 = vmatmul.mubr.f32.gmra.mrb[0].mxu0 %v4924
        %v4992 = vpop.f32.mrb[0].mxu0
        %v4993 = vadd.f32 0.0, %v4992
        %v4994 = vpop.f32.mrb[0].mxu0
        %4995 = vdwg.mxu0
        %v4996 = vsel %vm3356, %v4993, -inf
        %4997 = vmax.xlane.f32.xlu0 %v4996
        %v4998 = vpop.xlane.xlu0 %4997
        %v4999 = vsub.f32 %v4993, %v4998
        %v5000 = vmul.f32 %v4999, 1.442695
        %v5001 = vpow.pop %v5000
        %v5002 = vsel %vm3356, %v5001, 0.0
        %5003 = vadd.xlane.f32.xlu0 %v5002
        %v5004 = vpop.xlane.xlu0 %5003
        %v5005 = vrcp.pop %v5004
        %v5006 = vmul.f32 %v5001, %v5005
        %v5008 = vsel %vm3368, %v5006, 0
        %5010 = vmatprep.subr.mxu0 0.0
        %5011 = vmatpush1.msra.mxu0 %v2322
        %5012 = vmatprep.subr.mxu0 0.0
        %5013 = vmatpush1.msra.mxu0 0.0
        %5014 = vmatprep.subr.mxu0 0.0
        %5015 = vmatpush1.msra.mxu0 0.0
        %5016 = vmatprep.subr.mxu0 0.0
        %5017 = vmatpush1.msra.mxu0 0.0
        %5018 = vmatprep.subr.mxu0 0.0
        %5019 = vmatpush1.msra.mxu0 0.0
        %5020 = vmatprep.subr.mxu0 0.0
        %5021 = vmatpush1.msra.mxu0 0.0
        %5022 = vmatprep.subr.mxu0 0.0
        %5023 = vmatpush1.msra.mxu0 0.0
        %5024 = vmatprep.subr.mxu0 0.0
        %5025 = vmatpush1.msra.mxu0 0.0
        %5026 = vmatprep.subr.mxu0 0.0
        %5027 = vmatpush1.msra.mxu0 0.0
        %5028 = vmatprep.subr.mxu0 0.0
        %5029 = vmatpush1.msra.mxu0 0.0
        %5030 = vmatprep.subr.mxu0 0.0
        %5031 = vmatpush1.msra.mxu0 0.0
        %5032 = vmatprep.subr.mxu0 0.0
        %5033 = vmatpush1.msra.mxu0 0.0
        %5034 = vmatprep.subr.mxu0 0.0
        %5035 = vmatpush1.msra.mxu0 0.0
        %5036 = vmatprep.subr.mxu0 0.0
        %5037 = vmatpush1.msra.mxu0 0.0
        %5038 = vmatprep.subr.mxu0 0.0
        %5039 = vmatpush1.msra.mxu0 0.0
        %5040 = vmatprep.subr.mxu0 0.0
        %5041 = vmatpush1.msra.mxu0 0.0
        %5042 = vmatprep.subr.mxu0 0.0
        %5043 = vmatpush1.msra.mxu0 0.0
        %5044 = vmatprep.subr.mxu0 0.0
        %5045 = vmatpush1.msra.mxu0 0.0
        %5046 = vmatprep.subr.mxu0 0.0
        %5047 = vmatpush1.msra.mxu0 0.0
        %5048 = vmatprep.subr.mxu0 0.0
        %5049 = vmatpush1.msra.mxu0 0.0
        %5050 = vmatprep.subr.mxu0 0.0
        %5051 = vmatpush1.msra.mxu0 0.0
        %5052 = vmatprep.subr.mxu0 0.0
        %5053 = vmatpush1.msra.mxu0 0.0
        %5054 = vmatprep.subr.mxu0 0.0
        %5055 = vmatpush1.msra.mxu0 0.0
        %5056 = vmatprep.subr.mxu0 0.0
        %5057 = vmatpush1.msra.mxu0 0.0
        %5058 = vmatprep.subr.mxu0 0.0
        %5059 = vmatpush1.msra.mxu0 0.0
        %5060 = vmatprep.subr.mxu0 0.0
        %5061 = vmatpush1.msra.mxu0 0.0
        %5062 = vmatprep.subr.mxu0 0.0
        %5063 = vmatpush1.msra.mxu0 0.0
        %5064 = vmatprep.subr.mxu0 0.0
        %5065 = vmatpush1.msra.mxu0 0.0
        %5066 = vmatprep.subr.mxu0 0.0
        %5067 = vmatpush1.msra.mxu0 0.0
        %5068 = vmatprep.subr.mxu0 0.0
        %5069 = vmatpush1.msra.mxu0 0.0
        %5070 = vmatprep.subr.mxu0 0.0
        %5071 = vmatpush1.msra.mxu0 0.0
        %5072 = vmatprep.subr.mxu0 0.0
        %5073 = vmatpush1.msra.mxu0 0.0
        %5074 = vmatprep.mubr.f32.mxu0 0.0
        %5075 = vmatmul.mubr.f32.gmra.mrb[0].mxu0 %v5008
        %v5076 = vpop.f32.mrb[0].mxu0
        %v5077 = vadd.f32 0.0, %v5076
        %v5078 = vpop.f32.mrb[0].mxu0
        %5079 = vdwg.mxu0
        %v5080 = vadd.f32 %v4846, %v5077
        loop: start=0, step=1, limit=49
        $region77: #{tpu_custom_call.1} parent=71 // loop_pre_header
          _
        $region78: #{tpu_custom_call.1} parent=71 // loop_header
          %s5082 = sphi 0, %s5086
          %p5083 = scmp.ge.s32.totalorder %s5082, 49
          %v5087 = vphi %v2686, %v5328
        $region79: #{tpu_custom_call.1} parent=71 // loop_header_branch
          %5085 = sbr.rel (%p5083) target = $region83
        $region80: #{tpu_custom_call.1} parent=71 // loop_body
          %s5088 = scalar_lea.vmem [#allocation7], %s5082
          %v5089 = vld [vmem:[%s5088] sm:$0x1]
          %v5091 = vsel %vm495, %v5087, 0
          %5093 = vmatprep.subr.mxu0 0.0
          %5094 = vmatpush1.msra.mxu0 %v2470
          %5095 = vmatprep.subr.mxu0 0.0
          %5096 = vmatpush1.msra.mxu0 %v2471
          %5097 = vmatprep.subr.mxu0 0.0
          %5098 = vmatpush1.msra.mxu0 %v2472
          %5099 = vmatprep.subr.mxu0 0.0
          %5100 = vmatpush1.msra.mxu0 %v2473
          %5101 = vmatprep.subr.mxu0 0.0
          %5102 = vmatpush1.msra.mxu0 %v2474
          %5103 = vmatprep.subr.mxu0 0.0
          %5104 = vmatpush1.msra.mxu0 %v2475
          %5105 = vmatprep.subr.mxu0 0.0
          %5106 = vmatpush1.msra.mxu0 %v2476
          %5107 = vmatprep.subr.mxu0 0.0
          %5108 = vmatpush1.msra.mxu0 %v2477
          %5109 = vmatprep.subr.mxu0 0.0
          %5110 = vmatpush1.msra.mxu0 0.0
          %5111 = vmatprep.subr.mxu0 0.0
          %5112 = vmatpush1.msra.mxu0 0.0
          %5113 = vmatprep.subr.mxu0 0.0
          %5114 = vmatpush1.msra.mxu0 0.0
          %5115 = vmatprep.subr.mxu0 0.0
          %5116 = vmatpush1.msra.mxu0 0.0
          %5117 = vmatprep.subr.mxu0 0.0
          %5118 = vmatpush1.msra.mxu0 0.0
          %5119 = vmatprep.subr.mxu0 0.0
          %5120 = vmatpush1.msra.mxu0 0.0
          %5121 = vmatprep.subr.mxu0 0.0
          %5122 = vmatpush1.msra.mxu0 0.0
          %5123 = vmatprep.subr.mxu0 0.0
          %5124 = vmatpush1.msra.mxu0 0.0
          %5125 = vmatprep.subr.mxu0 0.0
          %5126 = vmatpush1.msra.mxu0 0.0
          %5127 = vmatprep.subr.mxu0 0.0
          %5128 = vmatpush1.msra.mxu0 0.0
          %5129 = vmatprep.subr.mxu0 0.0
          %5130 = vmatpush1.msra.mxu0 0.0
          %5131 = vmatprep.subr.mxu0 0.0
          %5132 = vmatpush1.msra.mxu0 0.0
          %5133 = vmatprep.subr.mxu0 0.0
          %5134 = vmatpush1.msra.mxu0 0.0
          %5135 = vmatprep.subr.mxu0 0.0
          %5136 = vmatpush1.msra.mxu0 0.0
          %5137 = vmatprep.subr.mxu0 0.0
          %5138 = vmatpush1.msra.mxu0 0.0
          %5139 = vmatprep.subr.mxu0 0.0
          %5140 = vmatpush1.msra.mxu0 0.0
          %5141 = vmatprep.subr.mxu0 0.0
          %5142 = vmatpush1.msra.mxu0 0.0
          %5143 = vmatprep.subr.mxu0 0.0
          %5144 = vmatpush1.msra.mxu0 0.0
          %5145 = vmatprep.subr.mxu0 0.0
          %5146 = vmatpush1.msra.mxu0 0.0
          %5147 = vmatprep.subr.mxu0 0.0
          %5148 = vmatpush1.msra.mxu0 0.0
          %5149 = vmatprep.subr.mxu0 0.0
          %5150 = vmatpush1.msra.mxu0 0.0
          %5151 = vmatprep.subr.mxu0 0.0
          %5152 = vmatpush1.msra.mxu0 0.0
          %5153 = vmatprep.subr.mxu0 0.0
          %5154 = vmatpush1.msra.mxu0 0.0
          %5155 = vmatprep.subr.mxu0 0.0
          %5156 = vmatpush1.msra.mxu0 0.0
          %5157 = vmatprep.mubr.f32.mxu0 0.0
          %5158 = vmatmul.mubr.f32.gmra.mrb[0].mxu0 %v5091
          %v5159 = vpop.f32.mrb[0].mxu0
          %v5160 = vadd.f32 0.0, %v5159
          %v5161 = vpop.f32.mrb[0].mxu0
          %5162 = vdwg.mxu0
          %v5163 = vtanh.pop %v5160
          %v5164 = vmul.f32 %v5089, %v5163
          %v5166 = vsel %vm495, %v5164, 0
          %5168 = vmatprep.subr.mxu0 0.0
          %5169 = vmatpush1.msra.mxu0 %v3199
          %5170 = vmatprep.subr.mxu0 0.0
          %5171 = vmatpush1.msra.mxu0 %v3200
          %5172 = vmatprep.subr.mxu0 0.0
          %5173 = vmatpush1.msra.mxu0 %v3201
          %5174 = vmatprep.subr.mxu0 0.0
          %5175 = vmatpush1.msra.mxu0 %v3202
          %5176 = vmatprep.subr.mxu0 0.0
          %5177 = vmatpush1.msra.mxu0 %v3203
          %5178 = vmatprep.subr.mxu0 0.0
          %5179 = vmatpush1.msra.mxu0 %v3204
          %5180 = vmatprep.subr.mxu0 0.0
          %5181 = vmatpush1.msra.mxu0 %v3205
          %5182 = vmatprep.subr.mxu0 0.0
          %5183 = vmatpush1.msra.mxu0 %v3206
          %5184 = vmatprep.subr.mxu0 0.0
          %5185 = vmatpush1.msra.mxu0 0.0
          %5186 = vmatprep.subr.mxu0 0.0
          %5187 = vmatpush1.msra.mxu0 0.0
          %5188 = vmatprep.subr.mxu0 0.0
          %5189 = vmatpush1.msra.mxu0 0.0
          %5190 = vmatprep.subr.mxu0 0.0
          %5191 = vmatpush1.msra.mxu0 0.0
          %5192 = vmatprep.subr.mxu0 0.0
          %5193 = vmatpush1.msra.mxu0 0.0
          %5194 = vmatprep.subr.mxu0 0.0
          %5195 = vmatpush1.msra.mxu0 0.0
          %5196 = vmatprep.subr.mxu0 0.0
          %5197 = vmatpush1.msra.mxu0 0.0
          %5198 = vmatprep.subr.mxu0 0.0
          %5199 = vmatpush1.msra.mxu0 0.0
          %5200 = vmatprep.subr.mxu0 0.0
          %5201 = vmatpush1.msra.mxu0 0.0
          %5202 = vmatprep.subr.mxu0 0.0
          %5203 = vmatpush1.msra.mxu0 0.0
          %5204 = vmatprep.subr.mxu0 0.0
          %5205 = vmatpush1.msra.mxu0 0.0
          %5206 = vmatprep.subr.mxu0 0.0
          %5207 = vmatpush1.msra.mxu0 0.0
          %5208 = vmatprep.subr.mxu0 0.0
          %5209 = vmatpush1.msra.mxu0 0.0
          %5210 = vmatprep.subr.mxu0 0.0
          %5211 = vmatpush1.msra.mxu0 0.0
          %5212 = vmatprep.subr.mxu0 0.0
          %5213 = vmatpush1.msra.mxu0 0.0
          %5214 = vmatprep.subr.mxu0 0.0
          %5215 = vmatpush1.msra.mxu0 0.0
          %5216 = vmatprep.subr.mxu0 0.0
          %5217 = vmatpush1.msra.mxu0 0.0
          %5218 = vmatprep.subr.mxu0 0.0
          %5219 = vmatpush1.msra.mxu0 0.0
          %5220 = vmatprep.subr.mxu0 0.0
          %5221 = vmatpush1.msra.mxu0 0.0
          %5222 = vmatprep.subr.mxu0 0.0
          %5223 = vmatpush1.msra.mxu0 0.0
          %5224 = vmatprep.subr.mxu0 0.0
          %5225 = vmatpush1.msra.mxu0 0.0
          %5226 = vmatprep.subr.mxu0 0.0
          %5227 = vmatpush1.msra.mxu0 0.0
          %5228 = vmatprep.subr.mxu0 0.0
          %5229 = vmatpush1.msra.mxu0 0.0
          %5230 = vmatprep.subr.mxu0 0.0
          %5231 = vmatpush1.msra.mxu0 0.0
          %5232 = vmatprep.mubr.f32.mxu0 0.0
          %5233 = vmatmul.mubr.f32.gmra.mrb[0].mxu0 %v5166
          %v5234 = vpop.f32.mrb[0].mxu0
          %v5235 = vadd.f32 0.0, %v5234
          %v5236 = vpop.f32.mrb[0].mxu0
          %5237 = vdwg.mxu0
          %vm5238 = vcmask 393216
          %v5239 = vsel %vm5238, %v5235, -inf
          %5240 = vmax.xlane.f32.xlu0 %v5239
          %v5241 = vpop.xlane.xlu0 %5240
          %v5242 = vsub.f32 %v5235, %v5241
          %v5243 = vmul.f32 %v5242, 1.442695
          %v5244 = vpow.pop %v5243
          %v5245 = vsel %vm5238, %v5244, 0.0
          %5246 = vadd.xlane.f32.xlu0 %v5245
          %v5247 = vpop.xlane.xlu0 %5246
          %v5248 = vrcp.pop %v5247
          %v5249 = vmul.f32 %v5244, %v5248
          %vm5250 = vcmask 400384
          %v5252 = vsel %vm5250, %v5249, 0
          %v5255 = vsel %vm2492, %v3190, 0
          %5257 = vmatprep.subr.mxu0 0.0
          %5258 = vmatpush1.msra.mxu0 %v3184
          %5259 = vmatprep.subr.mxu0 0.0
          %5260 = vmatpush1.msra.mxu0 %v3185
          %5261 = vmatprep.subr.mxu0 0.0
          %5262 = vmatpush1.msra.mxu0 %v3186
          %5263 = vmatprep.subr.mxu0 0.0
          %5264 = vmatpush1.msra.mxu0 %v3187
          %5265 = vmatprep.subr.mxu0 0.0
          %5266 = vmatpush1.msra.mxu0 %v3188
          %5267 = vmatprep.subr.mxu0 0.0
          %5268 = vmatpush1.msra.mxu0 %v3189
          %5269 = vmatprep.subr.mxu0 0.0
          %5270 = vmatpush1.msra.mxu0 %v5255
          %5271 = vmatprep.subr.mxu0 0.0
          %5272 = vmatpush1.msra.mxu0 0.0
          %5273 = vmatprep.subr.mxu0 0.0
          %5274 = vmatpush1.msra.mxu0 0.0
          %5275 = vmatprep.subr.mxu0 0.0
          %5276 = vmatpush1.msra.mxu0 0.0
          %5277 = vmatprep.subr.mxu0 0.0
          %5278 = vmatpush1.msra.mxu0 0.0
          %5279 = vmatprep.subr.mxu0 0.0
          %5280 = vmatpush1.msra.mxu0 0.0
          %5281 = vmatprep.subr.mxu0 0.0
          %5282 = vmatpush1.msra.mxu0 0.0
          %5283 = vmatprep.subr.mxu0 0.0
          %5284 = vmatpush1.msra.mxu0 0.0
          %5285 = vmatprep.subr.mxu0 0.0
          %5286 = vmatpush1.msra.mxu0 0.0
          %5287 = vmatprep.subr.mxu0 0.0
          %5288 = vmatpush1.msra.mxu0 0.0
          %5289 = vmatprep.subr.mxu0 0.0
          %5290 = vmatpush1.msra.mxu0 0.0
          %5291 = vmatprep.subr.mxu0 0.0
          %5292 = vmatpush1.msra.mxu0 0.0
          %5293 = vmatprep.subr.mxu0 0.0
          %5294 = vmatpush1.msra.mxu0 0.0
          %5295 = vmatprep.subr.mxu0 0.0
          %5296 = vmatpush1.msra.mxu0 0.0
          %5297 = vmatprep.subr.mxu0 0.0
          %5298 = vmatpush1.msra.mxu0 0.0
          %5299 = vmatprep.subr.mxu0 0.0
          %5300 = vmatpush1.msra.mxu0 0.0
          %5301 = vmatprep.subr.mxu0 0.0
          %5302 = vmatpush1.msra.mxu0 0.0
          %5303 = vmatprep.subr.mxu0 0.0
          %5304 = vmatpush1.msra.mxu0 0.0
          %5305 = vmatprep.subr.mxu0 0.0
          %5306 = vmatpush1.msra.mxu0 0.0
          %5307 = vmatprep.subr.mxu0 0.0
          %5308 = vmatpush1.msra.mxu0 0.0
          %5309 = vmatprep.subr.mxu0 0.0
          %5310 = vmatpush1.msra.mxu0 0.0
          %5311 = vmatprep.subr.mxu0 0.0
          %5312 = vmatpush1.msra.mxu0 0.0
          %5313 = vmatprep.subr.mxu0 0.0
          %5314 = vmatpush1.msra.mxu0 0.0
          %5315 = vmatprep.subr.mxu0 0.0
          %5316 = vmatpush1.msra.mxu0 0.0
          %5317 = vmatprep.subr.mxu0 0.0
          %5318 = vmatpush1.msra.mxu0 0.0
          %5319 = vmatprep.subr.mxu0 0.0
          %5320 = vmatpush1.msra.mxu0 0.0
          %5321 = vmatprep.mubr.f32.mxu0 0.0
          %5322 = vmatmul.mubr.f32.gmra.mrb[0].mxu0 %v5252
          %v5323 = vpop.f32.mrb[0].mxu0
          %v5324 = vadd.f32 0.0, %v5323
          %v5325 = vpop.f32.mrb[0].mxu0
          %5326 = vdwg.mxu0
          %v5327 = vtanh.pop %v5324
          %v5328 = vadd.f32 %v5087, %v5327
        $region81: #{tpu_custom_call.1} parent=71 // loop_footer
          %s5086 = sadd.s32 1, %s5082
        $region82: #{tpu_custom_call.1} parent=71 // loop_footer_branch
          %5081 = sbr.rel target = $region78
        $region83: #{tpu_custom_call.1} parent=71 // loop_exit
          _
        %v5329 = vld [vmem:[#allocation9] sm:$0x1]
        %v5330 = vadd.f32 %v5329, %v5080
        %5331 = vst.msk [vmem:[#allocation9] sm:$0x1] %vm2975, %v5330
        %v5332 = vld [vmem:[#allocation10] sm:$0x1]
        %v5333 = vadd.f32 %v5332, %v5087
        %5334 = vst.msk [vmem:[#allocation10] sm:$0x1] %vm2975, %v5333
        %p5335 = scmp.eq.s32.totalorder %s25, 2
        // Predicated region
        $region84: #{tpu_custom_call.1} parent=71 // pred_check
          %p5336 = pneg %p5335
        $region85: #{tpu_custom_call.1} parent=71 // pred_check_branch
          %5338 = sbr.rel (%p5336) target = $region87
        $region86: #{tpu_custom_call.1} parent=71 // pred_region
          %v5339 = vld [vmem:[#allocation9] sm:$0x1]
          %v5340 = vmul.f32 %v5339, 0.33333334
          %v5341 = vld [vmem:[#allocation10] sm:$0x1]
          %v5342 = vmul.f32 %v5341, 0.33333334
          %v5343 = vld [vmem:[%s9] sm:$0xff]
          %v5344 = vld [vmem:[%s9 + $0x8] sm:$0xff]
          %v5345 = vld [vmem:[%s9 + $0x10] sm:$0xff]
          %v5346 = vld [vmem:[%s9 + $0x18] sm:$0xff]
          %v5347 = vld [vmem:[%s9 + $0x20] sm:$0xff]
          %v5348 = vld [vmem:[%s9 + $0x28] sm:$0xff]
          %v5349 = vld [vmem:[%s9 + $0x30] sm:$0xff]
          %v5350 = vld [vmem:[%s9 + $0x38] sm:$0xff]
          %v5351 = vld [vmem:[%s9 + $0x40] sm:$0xff]
          %v5352 = vld [vmem:[%s9 + $0x48] sm:$0xff]
          %v5353 = vld [vmem:[%s9 + $0x50] sm:$0xff]
          %v5354 = vld [vmem:[%s9 + $0x58] sm:$0xff]
          %v5355 = vld [vmem:[%s9 + $0x60] sm:$0xff]
          %v5356 = vld [vmem:[%s9 + $0x68] sm:$0xff]
          %v5357 = vld [vmem:[%s9 + $0x70] sm:$0xff]
          %v5358 = vld [vmem:[%s9 + $0x78] sm:$0xff]
          %v5360 = vsel %vm495, %v5342, 0
          %5362 = vmatprep.subr.mxu0 0.0
          %5363 = vmatpush1.msra.mxu0 %v5351
          %5364 = vmatprep.subr.mxu0 0.0
          %5365 = vmatpush1.msra.mxu0 %v5352
          %5366 = vmatprep.subr.mxu0 0.0
          %5367 = vmatpush1.msra.mxu0 %v5353
          %5368 = vmatprep.subr.mxu0 0.0
          %5369 = vmatpush1.msra.mxu0 %v5354
          %5370 = vmatprep.subr.mxu0 0.0
          %5371 = vmatpush1.msra.mxu0 %v5355
          %5372 = vmatprep.subr.mxu0 0.0
          %5373 = vmatpush1.msra.mxu0 %v5356
          %5374 = vmatprep.subr.mxu0 0.0
          %5375 = vmatpush1.msra.mxu0 %v5357
          %5376 = vmatprep.subr.mxu0 0.0
          %5377 = vmatpush1.msra.mxu0 %v5358
          %5378 = vmatprep.subr.mxu0 0.0
          %5379 = vmatpush1.msra.mxu0 0.0
          %5380 = vmatprep.subr.mxu0 0.0
          %5381 = vmatpush1.msra.mxu0 0.0
          %5382 = vmatprep.subr.mxu0 0.0
          %5383 = vmatpush1.msra.mxu0 0.0
          %5384 = vmatprep.subr.mxu0 0.0
          %5385 = vmatpush1.msra.mxu0 0.0
          %5386 = vmatprep.subr.mxu0 0.0
          %5387 = vmatpush1.msra.mxu0 0.0
          %5388 = vmatprep.subr.mxu0 0.0
          %5389 = vmatpush1.msra.mxu0 0.0
          %5390 = vmatprep.subr.mxu0 0.0
          %5391 = vmatpush1.msra.mxu0 0.0
          %5392 = vmatprep.subr.mxu0 0.0
          %5393 = vmatpush1.msra.mxu0 0.0
          %5394 = vmatprep.subr.mxu0 0.0
          %5395 = vmatpush1.msra.mxu0 0.0
          %5396 = vmatprep.subr.mxu0 0.0
          %5397 = vmatpush1.msra.mxu0 0.0
          %5398 = vmatprep.subr.mxu0 0.0
          %5399 = vmatpush1.msra.mxu0 0.0
          %5400 = vmatprep.subr.mxu0 0.0
          %5401 = vmatpush1.msra.mxu0 0.0
          %5402 = vmatprep.subr.mxu0 0.0
          %5403 = vmatpush1.msra.mxu0 0.0
          %5404 = vmatprep.subr.mxu0 0.0
          %5405 = vmatpush1.msra.mxu0 0.0
          %5406 = vmatprep.subr.mxu0 0.0
          %5407 = vmatpush1.msra.mxu0 0.0
          %5408 = vmatprep.subr.mxu0 0.0
          %5409 = vmatpush1.msra.mxu0 0.0
          %5410 = vmatprep.subr.mxu0 0.0
          %5411 = vmatpush1.msra.mxu0 0.0
          %5412 = vmatprep.subr.mxu0 0.0
          %5413 = vmatpush1.msra.mxu0 0.0
          %5414 = vmatprep.subr.mxu0 0.0
          %5415 = vmatpush1.msra.mxu0 0.0
          %5416 = vmatprep.subr.mxu0 0.0
          %5417 = vmatpush1.msra.mxu0 0.0
          %5418 = vmatprep.subr.mxu0 0.0
          %5419 = vmatpush1.msra.mxu0 0.0
          %5420 = vmatprep.subr.mxu0 0.0
          %5421 = vmatpush1.msra.mxu0 0.0
          %5422 = vmatprep.subr.mxu0 0.0
          %5423 = vmatpush1.msra.mxu0 0.0
          %5424 = vmatprep.subr.mxu0 0.0
          %5425 = vmatpush1.msra.mxu0 0.0
          %5426 = vmatprep.mubr.f32.mxu0 0.0
          %5427 = vmatmul.mubr.f32.gmra.mrb[0].mxu0 %v5360
          %v5428 = vpop.f32.mrb[0].mxu0
          %v5429 = vadd.f32 0.0, %v5428
          %v5430 = vpop.f32.mrb[0].mxu0
          %5431 = vdwg.mxu0
          %v5433 = vsel %vm495, %v5340, 0
          %5435 = vmatprep.subr.mxu0 0.0
          %5436 = vmatpush1.msra.mxu0 %v5343
          %5437 = vmatprep.subr.mxu0 0.0
          %5438 = vmatpush1.msra.mxu0 %v5344
          %5439 = vmatprep.subr.mxu0 0.0
          %5440 = vmatpush1.msra.mxu0 %v5345
          %5441 = vmatprep.subr.mxu0 0.0
          %5442 = vmatpush1.msra.mxu0 %v5346
          %5443 = vmatprep.subr.mxu0 0.0
          %5444 = vmatpush1.msra.mxu0 %v5347
          %5445 = vmatprep.subr.mxu0 0.0
          %5446 = vmatpush1.msra.mxu0 %v5348
          %5447 = vmatprep.subr.mxu0 0.0
          %5448 = vmatpush1.msra.mxu0 %v5349
          %5449 = vmatprep.subr.mxu0 0.0
          %5450 = vmatpush1.msra.mxu0 %v5350
          %5451 = vmatprep.subr.mxu0 0.0
          %5452 = vmatpush1.msra.mxu0 0.0
          %5453 = vmatprep.subr.mxu0 0.0
          %5454 = vmatpush1.msra.mxu0 0.0
          %5455 = vmatprep.subr.mxu0 0.0
          %5456 = vmatpush1.msra.mxu0 0.0
          %5457 = vmatprep.subr.mxu0 0.0
          %5458 = vmatpush1.msra.mxu0 0.0
          %5459 = vmatprep.subr.mxu0 0.0
          %5460 = vmatpush1.msra.mxu0 0.0
          %5461 = vmatprep.subr.mxu0 0.0
          %5462 = vmatpush1.msra.mxu0 0.0
          %5463 = vmatprep.subr.mxu0 0.0
          %5464 = vmatpush1.msra.mxu0 0.0
          %5465 = vmatprep.subr.mxu0 0.0
          %5466 = vmatpush1.msra.mxu0 0.0
          %5467 = vmatprep.subr.mxu0 0.0
          %5468 = vmatpush1.msra.mxu0 0.0
          %5469 = vmatprep.subr.mxu0 0.0
          %5470 = vmatpush1.msra.mxu0 0.0
          %5471 = vmatprep.subr.mxu0 0.0
          %5472 = vmatpush1.msra.mxu0 0.0
          %5473 = vmatprep.subr.mxu0 0.0
          %5474 = vmatpush1.msra.mxu0 0.0
          %5475 = vmatprep.subr.mxu0 0.0
          %5476 = vmatpush1.msra.mxu0 0.0
          %5477 = vmatprep.subr.mxu0 0.0
          %5478 = vmatpush1.msra.mxu0 0.0
          %5479 = vmatprep.subr.mxu0 0.0
          %5480 = vmatpush1.msra.mxu0 0.0
          %5481 = vmatprep.subr.mxu0 0.0
          %5482 = vmatpush1.msra.mxu0 0.0
          %5483 = vmatprep.subr.mxu0 0.0
          %5484 = vmatpush1.msra.mxu0 0.0
          %5485 = vmatprep.subr.mxu0 0.0
          %5486 = vmatpush1.msra.mxu0 0.0
          %5487 = vmatprep.subr.mxu0 0.0
          %5488 = vmatpush1.msra.mxu0 0.0
          %5489 = vmatprep.subr.mxu0 0.0
          %5490 = vmatpush1.msra.mxu0 0.0
          %5491 = vmatprep.subr.mxu0 0.0
          %5492 = vmatpush1.msra.mxu0 0.0
          %5493 = vmatprep.subr.mxu0 0.0
          %5494 = vmatpush1.msra.mxu0 0.0
          %5495 = vmatprep.subr.mxu0 0.0
          %5496 = vmatpush1.msra.mxu0 0.0
          %5497 = vmatprep.subr.mxu0 0.0
          %5498 = vmatpush1.msra.mxu0 0.0
          %5499 = vmatprep.mubr.f32.mxu0 0.0
          %5500 = vmatmul.mubr.f32.gmra.mrb[0].mxu0 %v5433
          %v5501 = vpop.f32.mrb[0].mxu0
          %v5502 = vadd.f32 %v5429, %v5501
          %v5503 = vpop.f32.mrb[0].mxu0
          %5504 = vdwg.mxu0
          %v5505 = vld [vmem:[%s10] sm:$0x1]
          %v5506 = vadd.f32 %v5502, %v5505
          %v5507 = vmax.f32 %v5506, 0.0
          %v5508 = vld [vmem:[%s11] sm:$0xff]
          %v5509 = vld [vmem:[%s11 + $0x8] sm:$0xff]
          %v5510 = vld [vmem:[%s11 + $0x10] sm:$0xff]
          %v5511 = vld [vmem:[%s11 + $0x18] sm:$0xff]
          %v5512 = vld [vmem:[%s11 + $0x20] sm:$0xff]
          %v5513 = vld [vmem:[%s11 + $0x28] sm:$0xff]
          %v5514 = vld [vmem:[%s11 + $0x30] sm:$0xff]
          %v5515 = vld [vmem:[%s11 + $0x38] sm:$0xff]
          %v5516 = vld [vmem:[%s12] sm:$0x1]
          %v5518 = vsel %vm495, %v5507, 0
          %5520 = vmatprep.subr.mxu0 0.0
          %5521 = vmatpush1.msra.mxu0 %v5508
          %5522 = vmatprep.subr.mxu0 0.0
          %5523 = vmatpush1.msra.mxu0 %v5509
          %5524 = vmatprep.subr.mxu0 0.0
          %5525 = vmatpush1.msra.mxu0 %v5510
          %5526 = vmatprep.subr.mxu0 0.0
          %5527 = vmatpush1.msra.mxu0 %v5511
          %5528 = vmatprep.subr.mxu0 0.0
          %5529 = vmatpush1.msra.mxu0 %v5512
          %5530 = vmatprep.subr.mxu0 0.0
          %5531 = vmatpush1.msra.mxu0 %v5513
          %5532 = vmatprep.subr.mxu0 0.0
          %5533 = vmatpush1.msra.mxu0 %v5514
          %5534 = vmatprep.subr.mxu0 0.0
          %5535 = vmatpush1.msra.mxu0 %v5515
          %5536 = vmatprep.subr.mxu0 0.0
          %5537 = vmatpush1.msra.mxu0 0.0
          %5538 = vmatprep.subr.mxu0 0.0
          %5539 = vmatpush1.msra.mxu0 0.0
          %5540 = vmatprep.subr.mxu0 0.0
          %5541 = vmatpush1.msra.mxu0 0.0
          %5542 = vmatprep.subr.mxu0 0.0
          %5543 = vmatpush1.msra.mxu0 0.0
          %5544 = vmatprep.subr.mxu0 0.0
          %5545 = vmatpush1.msra.mxu0 0.0
          %5546 = vmatprep.subr.mxu0 0.0
          %5547 = vmatpush1.msra.mxu0 0.0
          %5548 = vmatprep.subr.mxu0 0.0
          %5549 = vmatpush1.msra.mxu0 0.0
          %5550 = vmatprep.subr.mxu0 0.0
          %5551 = vmatpush1.msra.mxu0 0.0
          %5552 = vmatprep.subr.mxu0 0.0
          %5553 = vmatpush1.msra.mxu0 0.0
          %5554 = vmatprep.subr.mxu0 0.0
          %5555 = vmatpush1.msra.mxu0 0.0
          %5556 = vmatprep.subr.mxu0 0.0
          %5557 = vmatpush1.msra.mxu0 0.0
          %5558 = vmatprep.subr.mxu0 0.0
          %5559 = vmatpush1.msra.mxu0 0.0
          %5560 = vmatprep.subr.mxu0 0.0
          %5561 = vmatpush1.msra.mxu0 0.0
          %5562 = vmatprep.subr.mxu0 0.0
          %5563 = vmatpush1.msra.mxu0 0.0
          %5564 = vmatprep.subr.mxu0 0.0
          %5565 = vmatpush1.msra.mxu0 0.0
          %5566 = vmatprep.subr.mxu0 0.0
          %5567 = vmatpush1.msra.mxu0 0.0
          %5568 = vmatprep.subr.mxu0 0.0
          %5569 = vmatpush1.msra.mxu0 0.0
          %5570 = vmatprep.subr.mxu0 0.0
          %5571 = vmatpush1.msra.mxu0 0.0
          %5572 = vmatprep.subr.mxu0 0.0
          %5573 = vmatpush1.msra.mxu0 0.0
          %5574 = vmatprep.subr.mxu0 0.0
          %5575 = vmatpush1.msra.mxu0 0.0
          %5576 = vmatprep.subr.mxu0 0.0
          %5577 = vmatpush1.msra.mxu0 0.0
          %5578 = vmatprep.subr.mxu0 0.0
          %5579 = vmatpush1.msra.mxu0 0.0
          %5580 = vmatprep.subr.mxu0 0.0
          %5581 = vmatpush1.msra.mxu0 0.0
          %5582 = vmatprep.subr.mxu0 0.0
          %5583 = vmatpush1.msra.mxu0 0.0
          %5584 = vmatprep.mubr.f32.mxu0 0.0
          %5585 = vmatmul.mubr.f32.gmra.mrb[0].mxu0 %v5518
          %v5586 = vpop.f32.mrb[0].mxu0
          %v5587 = vadd.f32 %v5516, %v5586
          %v5588 = vpop.f32.mrb[0].mxu0
          %5589 = vdwg.mxu0
          %vm5590 = vcmask 8192
          %5591 = vst.msk [vmem:[#allocation11] sm:$0x1] %vm5590, %v5587
        $region87: #{tpu_custom_call.1} parent=71 // pred_fallthru
          _
        // Predicated region
        $region88: #{tpu_custom_call.1} parent=71 // pred_check
          %p5592 = pneg %p321
        $region89: #{tpu_custom_call.1} parent=71 // pred_check_branch
          %5594 = sbr.rel (%p5592) target = $region91
        $region90: #{tpu_custom_call.1} parent=71 // pred_region
          %s5596 = ssub.s32 16, 16
          %5597 = vsyncadd [#allocation12], %s5596
          %s5599 = sshll.u32 [#allocation11], 4
          %s5600 = int_to_ptr.vmem [resolvable:$true] %s5599
          %5602 = dma.vmem_to_hbm [thread:$0]  %s5600, 16, %s13, [#allocation12]
        $region91: #{tpu_custom_call.1} parent=71 // pred_fallthru
          _
        // Predicated region
        $region92: #{tpu_custom_call.1} parent=71 // pred_check
          %p5603 = pneg %p321
        $region93: #{tpu_custom_call.1} parent=71 // pred_check_branch
          %5605 = sbr.rel (%p5603) target = $region95
        $region94: #{tpu_custom_call.1} parent=71 // pred_region
          %5606 = dma.done [#allocation12], 16
        $region95: #{tpu_custom_call.1} parent=71 // pred_fallthru
          _
      $region72: #{tpu_custom_call.1} parent=5 // pred_fallthru
        _
      %p5607 = scmp.le.s32.totalorder 2, %s20
      // Predicated region
      $region96: #{tpu_custom_call.1} parent=5 // pred_check
        %p5608 = pneg %p5607
      $region97: #{tpu_custom_call.1} parent=5 // pred_check_branch
        %5610 = sbr.rel (%p5608) target = $region99
      $region98: #{tpu_custom_call.1} parent=5 // pred_region
        %s5611 = ssub.s32 %s20, 2
      $region99: #{tpu_custom_call.1} parent=5 // pred_fallthru
        _
    $region6: #{tpu_custom_call.1} parent=1 // loop_footer
      %s24 = sadd.s32 1, %s20
    $region7: #{tpu_custom_call.1} parent=1 // loop_footer_branch
      %19 = sbr.rel target = $region3
    $region8: #{tpu_custom_call.1} parent=1 // loop_exit
      _
    %5612 = vsyncpa [#allocation12], 1
    %s5613 = scalar_lea.sflag [#allocation12], 1
    %5614 = vsyncpa %s5613, 1

</llo_original>
